<compile_context>
chip_gen: v6e
topology: v6e:2x2x1
jax: 0.10.0
libtpu: 0.0.40
codegen_flags: <defaults>
</compile_context>

<pallas_src>
import jax
import jax.numpy as jnp
from jax.experimental import pallas as pl
from jax.experimental.pallas import tpu as pltpu

HIDDEN = 512
NUM_HIDDEN = 20
LAYERS_PER_STEP = 10                       # fused hidden layers per grid step
NUM_STEPS = NUM_HIDDEN // LAYERS_PER_STEP  # 2 grid steps
LN_EPS = 1e-5

assert NUM_HIDDEN % LAYERS_PER_STEP == 0


def deep_model_kernel(x_ref, w_in_ref, b_in_ref, w_h_ref, b_h_ref,
                      gamma_ref, beta_ref, w_out_ref, b_out_ref,
                      out_ref, acc_ref):
    k = pl.program_id(0)

    # The activation lives in a VMEM scratch accumulator that persists across
    # grid steps; the grid streams groups of fused hidden-layer weights.
    @pl.when(k == 0)
    def _():
        # input layer (no activation, matches the PyTorch forward), full f32
        acc_ref[...] = (
            jnp.dot(x_ref[...], w_in_ref[...], preferred_element_type=jnp.float32)
            + b_in_ref[...]
        )

    # LAYERS_PER_STEP fused hidden layers: tanh(h @ W_l + b_l).
    # Static Python unroll -> zero-cost static slices into the fused VMEM block.
    # Weights are bf16 (native MXU operand); accumulation and the carried
    # activation stay f32.
    h = acc_ref[...]
    for l in range(LAYERS_PER_STEP):
        z = (
            jnp.dot(h.astype(jnp.bfloat16), w_h_ref[l],
                    preferred_element_type=jnp.float32)
            + b_h_ref[0, l]
        )
        h = jnp.tanh(z)
    acc_ref[...] = h

    @pl.when(k == pl.num_programs(0) - 1)
    def _():
        y = acc_ref[...]
        # LayerNorm over the feature dim (biased variance, eps=1e-5, like torch)
        mean = jnp.mean(y, axis=-1, keepdims=True)
        var = jnp.mean((y - mean) ** 2, axis=-1, keepdims=True)
        yn = (y - mean) * jax.lax.rsqrt(var + LN_EPS)
        yn = yn * gamma_ref[...] + beta_ref[...]
        # output layer (f32)
        out_ref[...] = (
            jnp.dot(yn, w_out_ref[...], preferred_element_type=jnp.float32)
            + b_out_ref[...]
        )


def deep_model_forward(x, params):
    B, dim_in = x.shape
    dim_out = params["w_out"].shape[1]

    # b_h: (20, 512) -> (NUM_STEPS, LAYERS_PER_STEP, 512) so each grid step's
    # bias block covers the full last-two extents (no sub-tile blocking).
    b_h_steps = params["b_h"].reshape(NUM_STEPS, LAYERS_PER_STEP, HIDDEN)

    grid = (NUM_STEPS,)
    in_specs = [
        pl.BlockSpec((B, dim_in), lambda k: (0, 0)),                        # x
        pl.BlockSpec((dim_in, HIDDEN), lambda k: (0, 0)),                   # w_in
        pl.BlockSpec((1, HIDDEN), lambda k: (0, 0)),                        # b_in
        pl.BlockSpec((LAYERS_PER_STEP, HIDDEN, HIDDEN),
                     lambda k: (k, 0, 0)),                                  # w_h (bf16, 5 MiB/step)
        pl.BlockSpec((1, LAYERS_PER_STEP, HIDDEN), lambda k: (k, 0, 0)),    # b_h (full-extent block)
        pl.BlockSpec((1, HIDDEN), lambda k: (0, 0)),                        # gamma
        pl.BlockSpec((1, HIDDEN), lambda k: (0, 0)),                        # beta
        pl.BlockSpec((HIDDEN, dim_out), lambda k: (0, 0)),                  # w_out
        pl.BlockSpec((1, dim_out), lambda k: (0, 0)),                       # b_out
    ]
    out_specs = pl.BlockSpec((B, dim_out), lambda k: (0, 0))

    return pl.pallas_call(
        deep_model_kernel,
        out_shape=jax.ShapeDtypeStruct((B, dim_out), jnp.float32),
        grid_spec=pltpu.PrefetchScalarGridSpec(
            num_scalar_prefetch=0,
            grid=grid,
            in_specs=in_specs,
            out_specs=out_specs,
            scratch_shapes=[pltpu.VMEM((B, HIDDEN), jnp.float32)],
        ),
        compiler_params=pltpu.CompilerParams(
            dimension_semantics=("arbitrary",),   # sequential layer chain
            # 2 x 5 MiB double-buffered bf16 weight blocks + small operands
            # (~10.5 MiB total): above v5e's 16 MiB scoped default only if the
            # fusion depth is raised, but explicit anyway; well under v7x's
            # 64 MiB physical VMEM.
            vmem_limit_bytes=32 << 20,
        ),
    )(
        x,
        params["w_in"], params["b_in"],
        params["w_h"], b_h_steps,
        params["gamma"], params["beta"],
        params["w_out"], params["b_out"],
    )


def init_params(key, dim_in, dim_out):
    """Deterministic init mimicking PyTorch's default U(-1/sqrt(fan_in), 1/sqrt(fan_in)).

    Hidden-layer weights are stored in bf16 (HBM-bandwidth-bound kernel); all
    other parameters stay f32.
    """
    ks = jax.random.split(key, 8)

    def uni(k, shape, fan_in):
        bound = 1.0 / jnp.sqrt(jnp.float32(fan_in))
        return jax.random.uniform(k, shape, jnp.float32, -bound, bound)

    return {
        "w_in": uni(ks[0], (dim_in, HIDDEN), dim_in),
        "b_in": uni(ks[1], (1, HIDDEN), dim_in),
        "w_h": uni(ks[2], (NUM_HIDDEN, HIDDEN, HIDDEN), HIDDEN).astype(jnp.bfloat16),
        "b_h": uni(ks[3], (NUM_HIDDEN, HIDDEN), HIDDEN),
        "gamma": jnp.ones((1, HIDDEN), jnp.float32),
        "beta": jnp.zeros((1, HIDDEN), jnp.float32),
        "w_out": uni(ks[4], (HIDDEN, dim_out), HIDDEN),
        "b_out": uni(ks[5], (1, dim_out), HIDDEN),
    }


def reference_forward(x, p):
    """Pure-JAX reference mirroring the kernel's math (bf16 weights, f32 accum)."""
    h = x @ p["w_in"] + p["b_in"]
    for i in range(NUM_HIDDEN):
        z = (
            jnp.dot(h.astype(jnp.bfloat16), p["w_h"][i],
                    preferred_element_type=jnp.float32)
            + p["b_h"][i]
        )
        h = jnp.tanh(z)
    mean = h.mean(-1, keepdims=True)
    var = ((h - mean) ** 2).mean(-1, keepdims=True)
    h = (h - mean) / jnp.sqrt(var + LN_EPS) * p["gamma"] + p["beta"]
    return h @ p["w_out"] + p["b_out"]


if __name__ == "__main__":
    key = jax.random.PRNGKey(0)
    k_x, k_p = jax.random.split(key)

    batch, dim_in, dim_out = 8, 16, 4
    x = jax.random.normal(k_x, (batch, dim_in), jnp.float32)
    params = init_params(k_p, dim_in, dim_out)

    out = deep_model_forward(x, params)
    out = jax.block_until_ready(out)

    ref = reference_forward(x, params)
    assert out.shape == (batch, dim_out)
    # Tolerance accounts for tiny tanh/accumulation-order differences compounding
    # through 20 layers of bf16-weight matmuls (reference uses identical bf16 math).
    assert jnp.allclose(out, ref, atol=5e-3, rtol=5e-3), "mismatch vs JAX reference"

    print("KERNEL_OK")
</pallas_src>

<mosaic_0001>
module attributes {stable_mosaic.version = 11 : i64} {
  func.func @deep_model_kernel(%arg0: i32, %arg1: memref<8x16xf32, #tpu.memory_space<vmem>>, %arg2: memref<16x512xf32, #tpu.memory_space<vmem>>, %arg3: memref<1x512xf32, #tpu.memory_space<vmem>>, %arg4: memref<10x512x512xbf16, #tpu.memory_space<vmem>>, %arg5: memref<1x10x512xf32, #tpu.memory_space<vmem>>, %arg6: memref<1x512xf32, #tpu.memory_space<vmem>>, %arg7: memref<1x512xf32, #tpu.memory_space<vmem>>, %arg8: memref<512x4xf32, #tpu.memory_space<vmem>>, %arg9: memref<1x4xf32, #tpu.memory_space<vmem>>, %arg10: memref<8x4xf32, #tpu.memory_space<vmem>>, %arg11: memref<8x512xf32, #tpu.memory_space<vmem>>) attributes {dimension_semantics = [#tpu.dimension_semantics<arbitrary>], iteration_bounds = array<i64: 2>, scalar_prefetch = 0 : i64, scratch_operands = 1 : i64, tpu.core_type = #tpu.core_type<tc>, window_params = [{pipeline_mode = #tpu.pipeline_mode<synchronous>, transform_indices = @transform_0, window_bounds = array<i64: 8, 16>}, {pipeline_mode = #tpu.pipeline_mode<synchronous>, transform_indices = @transform_1, window_bounds = array<i64: 16, 512>}, {pipeline_mode = #tpu.pipeline_mode<synchronous>, transform_indices = @transform_2, window_bounds = array<i64: 1, 512>}, {transform_indices = @transform_3, window_bounds = array<i64: 10, 512, 512>}, {transform_indices = @transform_4, window_bounds = array<i64: 1, 10, 512>}, {pipeline_mode = #tpu.pipeline_mode<synchronous>, transform_indices = @transform_5, window_bounds = array<i64: 1, 512>}, {pipeline_mode = #tpu.pipeline_mode<synchronous>, transform_indices = @transform_6, window_bounds = array<i64: 1, 512>}, {pipeline_mode = #tpu.pipeline_mode<synchronous>, transform_indices = @transform_7, window_bounds = array<i64: 512, 4>}, {pipeline_mode = #tpu.pipeline_mode<synchronous>, transform_indices = @transform_8, window_bounds = array<i64: 1, 4>}, {pipeline_mode = #tpu.pipeline_mode<synchronous>, transform_indices = @transform_9, window_bounds = array<i64: 8, 4>}]} {
    %c0_i32 = arith.constant 0 : i32
    %0 = arith.cmpi eq, %arg0, %c0_i32 : i32
    %1 = arith.extui %0 : i1 to i32
    %c0_i32_0 = arith.constant 0 : i32
    %2 = arith.cmpi ne, %1, %c0_i32_0 : i32
    scf.if %2 {
      %c0_65 = arith.constant 0 : index
      %c0_66 = arith.constant 0 : index
      %108 = vector.load %arg1[%c0_65, %c0_66] : memref<8x16xf32, #tpu.memory_space<vmem>>, vector<8x16xf32>
      %c0_67 = arith.constant 0 : index
      %c0_68 = arith.constant 0 : index
      %109 = vector.load %arg2[%c0_67, %c0_68] : memref<16x512xf32, #tpu.memory_space<vmem>>, vector<16x512xf32>
      %cst_69 = arith.constant dense<0.000000e+00> : vector<8x512xf32>
      %110 = tpu.matmul %108, %109, %cst_69 {dimension_numbers = #tpu.dot_dimension_numbers<[1], [0], [0], [1], [0, 0, 1, 1], [], []>} : vector<8x16xf32>, vector<16x512xf32>, vector<8x512xf32> -> vector<8x512xf32>
      %c0_70 = arith.constant 0 : index
      %c0_71 = arith.constant 0 : index
      %111 = vector.load %arg3[%c0_70, %c0_71] : memref<1x512xf32, #tpu.memory_space<vmem>>, vector<1x512xf32>
      %112 = vector.broadcast %111 : vector<1x512xf32> to vector<8x512xf32>
      %113 = arith.addf %110, %112 : vector<8x512xf32>
      %c0_72 = arith.constant 0 : index
      %c0_73 = arith.constant 0 : index
      %114 = vector.load %arg11[%c0_72, %c0_73] : memref<8x512xf32, #tpu.memory_space<vmem>>, vector<8x512xf32>
      tpu.vector_store %arg11[%c0_72, %c0_73], %113 {strides = array<i32>} : memref<8x512xf32, #tpu.memory_space<vmem>>, vector<8x512xf32>,
    } else {
    }
    %c0 = arith.constant 0 : index
    %c0_1 = arith.constant 0 : index
    %3 = vector.load %arg11[%c0, %c0_1] : memref<8x512xf32, #tpu.memory_space<vmem>>, vector<8x512xf32>
    %4 = arith.truncf %3 : vector<8x512xf32> to vector<8x512xbf16>
    %c0_2 = arith.constant 0 : index
    %c0_3 = arith.constant 0 : index
    %c0_4 = arith.constant 0 : index
    %5 = vector.load %arg4[%c0_2, %c0_3, %c0_4] : memref<10x512x512xbf16, #tpu.memory_space<vmem>>, vector<1x512x512xbf16>
    %6 = vector.shape_cast %5 : vector<1x512x512xbf16> to vector<512x512xbf16>
    %cst = arith.constant dense<0.000000e+00> : vector<8x512xf32>
    %7 = tpu.matmul %4, %6, %cst {dimension_numbers = #tpu.dot_dimension_numbers<[1], [0], [0], [1], [0, 0, 1, 1], [], []>} : vector<8x512xbf16>, vector<512x512xbf16>, vector<8x512xf32> -> vector<8x512xf32>
    %c0_5 = arith.constant 0 : index
    %c0_6 = arith.constant 0 : index
    %c0_7 = arith.constant 0 : index
    %8 = vector.load %arg5[%c0_5, %c0_6, %c0_7] : memref<1x10x512xf32, #tpu.memory_space<vmem>>, vector<1x1x512xf32>
    %9 = vector.shape_cast %8 : vector<1x1x512xf32> to vector<512xf32>
    %10 = vector.shape_cast %9 : vector<512xf32> to vector<1x512xf32>
    %11 = vector.broadcast %10 : vector<1x512xf32> to vector<8x512xf32>
    %12 = arith.addf %7, %11 : vector<8x512xf32>
    %13 = math.tanh %12 : vector<8x512xf32>
    %14 = arith.truncf %13 : vector<8x512xf32> to vector<8x512xbf16>
    %c1 = arith.constant 1 : index
    %c0_8 = arith.constant 0 : index
    %c0_9 = arith.constant 0 : index
    %15 = vector.load %arg4[%c1, %c0_8, %c0_9] : memref<10x512x512xbf16, #tpu.memory_space<vmem>>, vector<1x512x512xbf16>
    %16 = vector.shape_cast %15 : vector<1x512x512xbf16> to vector<512x512xbf16>
    %cst_10 = arith.constant dense<0.000000e+00> : vector<8x512xf32>
    %17 = tpu.matmul %14, %16, %cst_10 {dimension_numbers = #tpu.dot_dimension_numbers<[1], [0], [0], [1], [0, 0, 1, 1], [], []>} : vector<8x512xbf16>, vector<512x512xbf16>, vector<8x512xf32> -> vector<8x512xf32>
    %c0_11 = arith.constant 0 : index
    %c1_12 = arith.constant 1 : index
    %c0_13 = arith.constant 0 : index
    %18 = vector.load %arg5[%c0_11, %c1_12, %c0_13] : memref<1x10x512xf32, #tpu.memory_space<vmem>>, vector<1x1x512xf32>
    %19 = vector.shape_cast %18 : vector<1x1x512xf32> to vector<512xf32>
    %20 = vector.shape_cast %19 : vector<512xf32> to vector<1x512xf32>
    %21 = vector.broadcast %20 : vector<1x512xf32> to vector<8x512xf32>
    %22 = arith.addf %17, %21 : vector<8x512xf32>
    %23 = math.tanh %22 : vector<8x512xf32>
    %24 = arith.truncf %23 : vector<8x512xf32> to vector<8x512xbf16>
    %c2 = arith.constant 2 : index
    %c0_14 = arith.constant 0 : index
    %c0_15 = arith.constant 0 : index
    %25 = vector.load %arg4[%c2, %c0_14, %c0_15] : memref<10x512x512xbf16, #tpu.memory_space<vmem>>, vector<1x512x512xbf16>
    %26 = vector.shape_cast %25 : vector<1x512x512xbf16> to vector<512x512xbf16>
    %cst_16 = arith.constant dense<0.000000e+00> : vector<8x512xf32>
    %27 = tpu.matmul %24, %26, %cst_16 {dimension_numbers = #tpu.dot_dimension_numbers<[1], [0], [0], [1], [0, 0, 1, 1], [], []>} : vector<8x512xbf16>, vector<512x512xbf16>, vector<8x512xf32> -> vector<8x512xf32>
    %c0_17 = arith.constant 0 : index
    %c2_18 = arith.constant 2 : index
    %c0_19 = arith.constant 0 : index
    %28 = vector.load %arg5[%c0_17, %c2_18, %c0_19] : memref<1x10x512xf32, #tpu.memory_space<vmem>>, vector<1x1x512xf32>
    %29 = vector.shape_cast %28 : vector<1x1x512xf32> to vector<512xf32>
    %30 = vector.shape_cast %29 : vector<512xf32> to vector<1x512xf32>
    %31 = vector.broadcast %30 : vector<1x512xf32> to vector<8x512xf32>
    %32 = arith.addf %27, %31 : vector<8x512xf32>
    %33 = math.tanh %32 : vector<8x512xf32>
    %34 = arith.truncf %33 : vector<8x512xf32> to vector<8x512xbf16>
    %c3 = arith.constant 3 : index
    %c0_20 = arith.constant 0 : index
    %c0_21 = arith.constant 0 : index
    %35 = vector.load %arg4[%c3, %c0_20, %c0_21] : memref<10x512x512xbf16, #tpu.memory_space<vmem>>, vector<1x512x512xbf16>
    %36 = vector.shape_cast %35 : vector<1x512x512xbf16> to vector<512x512xbf16>
    %cst_22 = arith.constant dense<0.000000e+00> : vector<8x512xf32>
    %37 = tpu.matmul %34, %36, %cst_22 {dimension_numbers = #tpu.dot_dimension_numbers<[1], [0], [0], [1], [0, 0, 1, 1], [], []>} : vector<8x512xbf16>, vector<512x512xbf16>, vector<8x512xf32> -> vector<8x512xf32>
    %c0_23 = arith.constant 0 : index
    %c3_24 = arith.constant 3 : index
    %c0_25 = arith.constant 0 : index
    %38 = vector.load %arg5[%c0_23, %c3_24, %c0_25] : memref<1x10x512xf32, #tpu.memory_space<vmem>>, vector<1x1x512xf32>
    %39 = vector.shape_cast %38 : vector<1x1x512xf32> to vector<512xf32>
    %40 = vector.shape_cast %39 : vector<512xf32> to vector<1x512xf32>
    %41 = vector.broadcast %40 : vector<1x512xf32> to vector<8x512xf32>
    %42 = arith.addf %37, %41 : vector<8x512xf32>
    %43 = math.tanh %42 : vector<8x512xf32>
    %44 = arith.truncf %43 : vector<8x512xf32> to vector<8x512xbf16>
    %c4 = arith.constant 4 : index
    %c0_26 = arith.constant 0 : index
    %c0_27 = arith.constant 0 : index
    %45 = vector.load %arg4[%c4, %c0_26, %c0_27] : memref<10x512x512xbf16, #tpu.memory_space<vmem>>, vector<1x512x512xbf16>
    %46 = vector.shape_cast %45 : vector<1x512x512xbf16> to vector<512x512xbf16>
    %cst_28 = arith.constant dense<0.000000e+00> : vector<8x512xf32>
    %47 = tpu.matmul %44, %46, %cst_28 {dimension_numbers = #tpu.dot_dimension_numbers<[1], [0], [0], [1], [0, 0, 1, 1], [], []>} : vector<8x512xbf16>, vector<512x512xbf16>, vector<8x512xf32> -> vector<8x512xf32>
    %c0_29 = arith.constant 0 : index
    %c4_30 = arith.constant 4 : index
    %c0_31 = arith.constant 0 : index
    %48 = vector.load %arg5[%c0_29, %c4_30, %c0_31] : memref<1x10x512xf32, #tpu.memory_space<vmem>>, vector<1x1x512xf32>
    %49 = vector.shape_cast %48 : vector<1x1x512xf32> to vector<512xf32>
    %50 = vector.shape_cast %49 : vector<512xf32> to vector<1x512xf32>
    %51 = vector.broadcast %50 : vector<1x512xf32> to vector<8x512xf32>
    %52 = arith.addf %47, %51 : vector<8x512xf32>
    %53 = math.tanh %52 : vector<8x512xf32>
    %54 = arith.truncf %53 : vector<8x512xf32> to vector<8x512xbf16>
    %c5 = arith.constant 5 : index
    %c0_32 = arith.constant 0 : index
    %c0_33 = arith.constant 0 : index
    %55 = vector.load %arg4[%c5, %c0_32, %c0_33] : memref<10x512x512xbf16, #tpu.memory_space<vmem>>, vector<1x512x512xbf16>
    %56 = vector.shape_cast %55 : vector<1x512x512xbf16> to vector<512x512xbf16>
    %cst_34 = arith.constant dense<0.000000e+00> : vector<8x512xf32>
    %57 = tpu.matmul %54, %56, %cst_34 {dimension_numbers = #tpu.dot_dimension_numbers<[1], [0], [0], [1], [0, 0, 1, 1], [], []>} : vector<8x512xbf16>, vector<512x512xbf16>, vector<8x512xf32> -> vector<8x512xf32>
    %c0_35 = arith.constant 0 : index
    %c5_36 = arith.constant 5 : index
    %c0_37 = arith.constant 0 : index
    %58 = vector.load %arg5[%c0_35, %c5_36, %c0_37] : memref<1x10x512xf32, #tpu.memory_space<vmem>>, vector<1x1x512xf32>
    %59 = vector.shape_cast %58 : vector<1x1x512xf32> to vector<512xf32>
    %60 = vector.shape_cast %59 : vector<512xf32> to vector<1x512xf32>
    %61 = vector.broadcast %60 : vector<1x512xf32> to vector<8x512xf32>
    %62 = arith.addf %57, %61 : vector<8x512xf32>
    %63 = math.tanh %62 : vector<8x512xf32>
    %64 = arith.truncf %63 : vector<8x512xf32> to vector<8x512xbf16>
    %c6 = arith.constant 6 : index
    %c0_38 = arith.constant 0 : index
    %c0_39 = arith.constant 0 : index
    %65 = vector.load %arg4[%c6, %c0_38, %c0_39] : memref<10x512x512xbf16, #tpu.memory_space<vmem>>, vector<1x512x512xbf16>
    %66 = vector.shape_cast %65 : vector<1x512x512xbf16> to vector<512x512xbf16>
    %cst_40 = arith.constant dense<0.000000e+00> : vector<8x512xf32>
    %67 = tpu.matmul %64, %66, %cst_40 {dimension_numbers = #tpu.dot_dimension_numbers<[1], [0], [0], [1], [0, 0, 1, 1], [], []>} : vector<8x512xbf16>, vector<512x512xbf16>, vector<8x512xf32> -> vector<8x512xf32>
    %c0_41 = arith.constant 0 : index
    %c6_42 = arith.constant 6 : index
    %c0_43 = arith.constant 0 : index
    %68 = vector.load %arg5[%c0_41, %c6_42, %c0_43] : memref<1x10x512xf32, #tpu.memory_space<vmem>>, vector<1x1x512xf32>
    %69 = vector.shape_cast %68 : vector<1x1x512xf32> to vector<512xf32>
    %70 = vector.shape_cast %69 : vector<512xf32> to vector<1x512xf32>
    %71 = vector.broadcast %70 : vector<1x512xf32> to vector<8x512xf32>
    %72 = arith.addf %67, %71 : vector<8x512xf32>
    %73 = math.tanh %72 : vector<8x512xf32>
    %74 = arith.truncf %73 : vector<8x512xf32> to vector<8x512xbf16>
    %c7 = arith.constant 7 : index
    %c0_44 = arith.constant 0 : index
    %c0_45 = arith.constant 0 : index
    %75 = vector.load %arg4[%c7, %c0_44, %c0_45] : memref<10x512x512xbf16, #tpu.memory_space<vmem>>, vector<1x512x512xbf16>
    %76 = vector.shape_cast %75 : vector<1x512x512xbf16> to vector<512x512xbf16>
    %cst_46 = arith.constant dense<0.000000e+00> : vector<8x512xf32>
    %77 = tpu.matmul %74, %76, %cst_46 {dimension_numbers = #tpu.dot_dimension_numbers<[1], [0], [0], [1], [0, 0, 1, 1], [], []>} : vector<8x512xbf16>, vector<512x512xbf16>, vector<8x512xf32> -> vector<8x512xf32>
    %c0_47 = arith.constant 0 : index
    %c7_48 = arith.constant 7 : index
    %c0_49 = arith.constant 0 : index
    %78 = vector.load %arg5[%c0_47, %c7_48, %c0_49] : memref<1x10x512xf32, #tpu.memory_space<vmem>>, vector<1x1x512xf32>
    %79 = vector.shape_cast %78 : vector<1x1x512xf32> to vector<512xf32>
    %80 = vector.shape_cast %79 : vector<512xf32> to vector<1x512xf32>
    %81 = vector.broadcast %80 : vector<1x512xf32> to vector<8x512xf32>
    %82 = arith.addf %77, %81 : vector<8x512xf32>
    %83 = math.tanh %82 : vector<8x512xf32>
    %84 = arith.truncf %83 : vector<8x512xf32> to vector<8x512xbf16>
    %c8 = arith.constant 8 : index
    %c0_50 = arith.constant 0 : index
    %c0_51 = arith.constant 0 : index
    %85 = vector.load %arg4[%c8, %c0_50, %c0_51] : memref<10x512x512xbf16, #tpu.memory_space<vmem>>, vector<1x512x512xbf16>
    %86 = vector.shape_cast %85 : vector<1x512x512xbf16> to vector<512x512xbf16>
    %cst_52 = arith.constant dense<0.000000e+00> : vector<8x512xf32>
    %87 = tpu.matmul %84, %86, %cst_52 {dimension_numbers = #tpu.dot_dimension_numbers<[1], [0], [0], [1], [0, 0, 1, 1], [], []>} : vector<8x512xbf16>, vector<512x512xbf16>, vector<8x512xf32> -> vector<8x512xf32>
    %c0_53 = arith.constant 0 : index
    %c8_54 = arith.constant 8 : index
    %c0_55 = arith.constant 0 : index
    %88 = vector.load %arg5[%c0_53, %c8_54, %c0_55] : memref<1x10x512xf32, #tpu.memory_space<vmem>>, vector<1x1x512xf32>
    %89 = vector.shape_cast %88 : vector<1x1x512xf32> to vector<512xf32>
    %90 = vector.shape_cast %89 : vector<512xf32> to vector<1x512xf32>
    %91 = vector.broadcast %90 : vector<1x512xf32> to vector<8x512xf32>
    %92 = arith.addf %87, %91 : vector<8x512xf32>
    %93 = math.tanh %92 : vector<8x512xf32>
    %94 = arith.truncf %93 : vector<8x512xf32> to vector<8x512xbf16>
    %c9 = arith.constant 9 : index
    %c0_56 = arith.constant 0 : index
    %c0_57 = arith.constant 0 : index
    %95 = vector.load %arg4[%c9, %c0_56, %c0_57] : memref<10x512x512xbf16, #tpu.memory_space<vmem>>, vector<1x512x512xbf16>
    %96 = vector.shape_cast %95 : vector<1x512x512xbf16> to vector<512x512xbf16>
    %cst_58 = arith.constant dense<0.000000e+00> : vector<8x512xf32>
    %97 = tpu.matmul %94, %96, %cst_58 {dimension_numbers = #tpu.dot_dimension_numbers<[1], [0], [0], [1], [0, 0, 1, 1], [], []>} : vector<8x512xbf16>, vector<512x512xbf16>, vector<8x512xf32> -> vector<8x512xf32>
    %c0_59 = arith.constant 0 : index
    %c9_60 = arith.constant 9 : index
    %c0_61 = arith.constant 0 : index
    %98 = vector.load %arg5[%c0_59, %c9_60, %c0_61] : memref<1x10x512xf32, #tpu.memory_space<vmem>>, vector<1x1x512xf32>
    %99 = vector.shape_cast %98 : vector<1x1x512xf32> to vector<512xf32>
    %100 = vector.shape_cast %99 : vector<512xf32> to vector<1x512xf32>
    %101 = vector.broadcast %100 : vector<1x512xf32> to vector<8x512xf32>
    %102 = arith.addf %97, %101 : vector<8x512xf32>
    %103 = math.tanh %102 : vector<8x512xf32>
    %c0_62 = arith.constant 0 : index
    %c0_63 = arith.constant 0 : index
    %104 = vector.load %arg11[%c0_62, %c0_63] : memref<8x512xf32, #tpu.memory_space<vmem>>, vector<8x512xf32>
    tpu.vector_store %arg11[%c0_62, %c0_63], %103 {strides = array<i32>} : memref<8x512xf32, #tpu.memory_space<vmem>>, vector<8x512xf32>,
    %c1_i32 = arith.constant 1 : i32
    %105 = arith.cmpi eq, %arg0, %c1_i32 : i32
    %106 = arith.extui %105 : i1 to i32
    %c0_i32_64 = arith.constant 0 : i32
    %107 = arith.cmpi ne, %106, %c0_i32_64 : i32
    scf.if %107 {
      %c0_65 = arith.constant 0 : index
      %c0_66 = arith.constant 0 : index
      %108 = vector.load %arg11[%c0_65, %c0_66] : memref<8x512xf32, #tpu.memory_space<vmem>>, vector<8x512xf32>
      %cst_67 = arith.constant dense<0.000000e+00> : vector<8xf32>
      %109 = vector.multi_reduction <add>, %108, %cst_67 [1] : vector<8x512xf32> to vector<8xf32>
      %110 = vector.shape_cast %109 : vector<8xf32> to vector<8x1xf32>
      %cst_68 = arith.constant 5.120000e+02 : f32
      %111 = vector.broadcast %cst_68 : f32 to vector<8x1xf32>
      %112 = arith.divf %110, %111 : vector<8x1xf32>
      %113 = vector.broadcast %112 : vector<8x1xf32> to vector<8x512xf32>
      %114 = arith.subf %108, %113 : vector<8x512xf32>
      %115 = arith.mulf %114, %114 : vector<8x512xf32>
      %cst_69 = arith.constant dense<0.000000e+00> : vector<8xf32>
      %116 = vector.multi_reduction <add>, %115, %cst_69 [1] : vector<8x512xf32> to vector<8xf32>
      %117 = vector.shape_cast %116 : vector<8xf32> to vector<8x1xf32>
      %cst_70 = arith.constant 5.120000e+02 : f32
      %118 = vector.broadcast %cst_70 : f32 to vector<8x1xf32>
      %119 = arith.divf %117, %118 : vector<8x1xf32>
      %120 = vector.broadcast %112 : vector<8x1xf32> to vector<8x512xf32>
      %121 = arith.subf %108, %120 : vector<8x512xf32>
      %cst_71 = arith.constant 9.99999974E-6 : f32
      %122 = vector.broadcast %cst_71 : f32 to vector<8x1xf32>
      %123 = arith.addf %119, %122 : vector<8x1xf32>
      %124 = math.rsqrt %123 : vector<8x1xf32>
      %125 = vector.broadcast %124 : vector<8x1xf32> to vector<8x512xf32>
      %126 = arith.mulf %121, %125 : vector<8x512xf32>
      %c0_72 = arith.constant 0 : index
      %c0_73 = arith.constant 0 : index
      %127 = vector.load %arg6[%c0_72, %c0_73] : memref<1x512xf32, #tpu.memory_space<vmem>>, vector<1x512xf32>
      %128 = vector.broadcast %127 : vector<1x512xf32> to vector<8x512xf32>
      %129 = arith.mulf %126, %128 : vector<8x512xf32>
      %c0_74 = arith.constant 0 : index
      %c0_75 = arith.constant 0 : index
      %130 = vector.load %arg7[%c0_74, %c0_75] : memref<1x512xf32, #tpu.memory_space<vmem>>, vector<1x512xf32>
      %131 = vector.broadcast %130 : vector<1x512xf32> to vector<8x512xf32>
      %132 = arith.addf %129, %131 : vector<8x512xf32>
      %c0_76 = arith.constant 0 : index
      %c0_77 = arith.constant 0 : index
      %133 = vector.load %arg8[%c0_76, %c0_77] : memref<512x4xf32, #tpu.memory_space<vmem>>, vector<512x4xf32>
      %cst_78 = arith.constant dense<0.000000e+00> : vector<8x4xf32>
      %134 = tpu.matmul %132, %133, %cst_78 {dimension_numbers = #tpu.dot_dimension_numbers<[1], [0], [0], [1], [0, 0, 1, 1], [], []>} : vector<8x512xf32>, vector<512x4xf32>, vector<8x4xf32> -> vector<8x4xf32>
      %c0_79 = arith.constant 0 : index
      %c0_80 = arith.constant 0 : index
      %135 = vector.load %arg9[%c0_79, %c0_80] : memref<1x4xf32, #tpu.memory_space<vmem>>, vector<1x4xf32>
      %136 = vector.broadcast %135 : vector<1x4xf32> to vector<8x4xf32>
      %137 = arith.addf %134, %136 : vector<8x4xf32>
      %c0_81 = arith.constant 0 : index
      %c0_82 = arith.constant 0 : index
      %138 = vector.load %arg10[%c0_81, %c0_82] : memref<8x4xf32, #tpu.memory_space<vmem>>, vector<8x4xf32>
      tpu.vector_store %arg10[%c0_81, %c0_82], %137 {strides = array<i32>} : memref<8x4xf32, #tpu.memory_space<vmem>>, vector<8x4xf32>,
    } else {
    }
    return
  }
  func.func @transform_0(%arg0: i32) -> (i32, i32) {
    %c0_i32 = arith.constant 0 : i32
    %c0_i32_0 = arith.constant 0 : i32
    %c0_i32_1 = arith.constant 0 : i32
    return %c0_i32, %c0_i32_0 : i32, i32
  }
  func.func @transform_1(%arg0: i32) -> (i32, i32) {
    %c0_i32 = arith.constant 0 : i32
    %c0_i32_0 = arith.constant 0 : i32
    %c0_i32_1 = arith.constant 0 : i32
    return %c0_i32, %c0_i32_0 : i32, i32
  }
  func.func @transform_2(%arg0: i32) -> (i32, i32) {
    %c0_i32 = arith.constant 0 : i32
    %c0_i32_0 = arith.constant 0 : i32
    %c0_i32_1 = arith.constant 0 : i32
    return %c0_i32, %c0_i32_0 : i32, i32
  }
  func.func @transform_3(%arg0: i32) -> (i32, i32, i32) {
    %c0_i32 = arith.constant 0 : i32
    %c0_i32_0 = arith.constant 0 : i32
    %c0_i32_1 = arith.constant 0 : i32
    return %arg0, %c0_i32, %c0_i32_0 : i32, i32, i32
  }
  func.func @transform_4(%arg0: i32) -> (i32, i32, i32) {
    %c0_i32 = arith.constant 0 : i32
    %c0_i32_0 = arith.constant 0 : i32
    %c0_i32_1 = arith.constant 0 : i32
    return %arg0, %c0_i32, %c0_i32_0 : i32, i32, i32
  }
  func.func @transform_5(%arg0: i32) -> (i32, i32) {
    %c0_i32 = arith.constant 0 : i32
    %c0_i32_0 = arith.constant 0 : i32
    %c0_i32_1 = arith.constant 0 : i32
    return %c0_i32, %c0_i32_0 : i32, i32
  }
  func.func @transform_6(%arg0: i32) -> (i32, i32) {
    %c0_i32 = arith.constant 0 : i32
    %c0_i32_0 = arith.constant 0 : i32
    %c0_i32_1 = arith.constant 0 : i32
    return %c0_i32, %c0_i32_0 : i32, i32
  }
  func.func @transform_7(%arg0: i32) -> (i32, i32) {
    %c0_i32 = arith.constant 0 : i32
    %c0_i32_0 = arith.constant 0 : i32
    %c0_i32_1 = arith.constant 0 : i32
    return %c0_i32, %c0_i32_0 : i32, i32
  }
  func.func @transform_8(%arg0: i32) -> (i32, i32) {
    %c0_i32 = arith.constant 0 : i32
    %c0_i32_0 = arith.constant 0 : i32
    %c0_i32_1 = arith.constant 0 : i32
    return %c0_i32, %c0_i32_0 : i32, i32
  }
  func.func @transform_9(%arg0: i32) -> (i32, i32) {
    %c0_i32 = arith.constant 0 : i32
    %c0_i32_0 = arith.constant 0 : i32
    %c0_i32_1 = arith.constant 0 : i32
    return %c0_i32, %c0_i32_0 : i32, i32
  }
}

</mosaic_0001>

<llo_original>
// kernel: tpu_custom_call.1
$region0: #{tpu_custom_call.1}
  #allocation0 [shape = 'u32[]', space=smem, size = 0x4, offset = 0x4, fixed_abs, tag = 'smem constant byte address 0x4 - core index']
  #allocation1 [shape = 'u32[144,128]{1,0:T(1,128)}', space=vmem, size = 0x12000, scoped, tag = 'internal scratch']
  #allocation2 [shape = 'f32[8,512]{1,0:T(8,128)}', space=vmem, size = 0x4000, scoped, tag = 'scratch operand']
  %s0 = inlined_call_operand.hbm [shape: f32[8,16], index: 0, kind: input, shape index: {}]
  %s1 = inlined_call_operand.hbm [shape: f32[16,512], index: 1, kind: input, shape index: {}]
  %s2 = inlined_call_operand.hbm [shape: f32[1,512], index: 2, kind: input, shape index: {}]
  %s3 = inlined_call_operand.hbm [shape: bf16[20,512,512], index: 3, kind: input, shape index: {}]
  %s4 = inlined_call_operand.vmem [shape: f32[2,10,512], index: 4, kind: input, shape index: {}]
  %s5 = inlined_call_operand.hbm [shape: f32[1,512], index: 5, kind: input, shape index: {}]
  %s6 = inlined_call_operand.hbm [shape: f32[1,512], index: 6, kind: input, shape index: {}]
  %s7 = inlined_call_operand.vmem [shape: f32[512,4], index: 7, kind: input, shape index: {}]
  %s8 = inlined_call_operand.hbm [shape: f32[1,4], index: 8, kind: input, shape index: {}]
  %s9 = inlined_call_operand.vmem [shape: f32[8,4], index: 9, kind: output, shape index: {}]
  %s10 = sld [smem:[#allocation0]]
  $region105: #{tpu_custom_call.1} parent=0
    _
  %s12 = ssub.s32 1, %s10
  %s13 = scalar_select 0, %s12, %s10
  $region1: #{tpu_custom_call.1} parent=0
    #allocation3 [shape = 'u8[4096]{0}', space=vmem, size = 0x1000, scoped, tag = 'input window, operand 0, single buffered']
    #allocation4 [shape = 's32[2]{0}', space=sflag, size = 0x8, scoped, tag = 'scoped memory for tpu_custom_call.1']
    #allocation5 [shape = 'u8[32768]{0}', space=vmem, size = 0x8000, scoped, tag = 'input window, operand 1, single buffered']
    #allocation6 [shape = 's32[1]{0}', space=sflag, size = 0x4, scoped, tag = 'scoped memory for tpu_custom_call.1']
    #allocation7 [shape = 'u8[2048]{0}', space=vmem, size = 0x800, scoped, tag = 'input window, operand 2, single buffered']
    #allocation8 [shape = 'u8[10485760]{0}', space=vmem, size = 0xa00000, scoped, tag = 'input window, operand 3']
    #allocation9 [shape = 's32[2]{0}', space=sflag, size = 0x8, scoped, tag = 'scoped memory for tpu_custom_call.1']
    #allocation10 [shape = 'u8[2048]{0}', space=vmem, size = 0x800, scoped, tag = 'input window, operand 5, single buffered']
    #allocation11 [shape = 'u8[2048]{0}', space=vmem, size = 0x800, scoped, tag = 'input window, operand 6, single buffered']
    #allocation12 [shape = 's32[1]{0}', space=sflag, size = 0x4, scoped, tag = 'scoped memory for tpu_custom_call.1']
    #allocation13 [shape = 'u8[512]{0}', space=vmem, size = 0x400, scoped, tag = 'input window, operand 8, single buffered']
    %14 = vsyncpa [#allocation4], 0
    %15 = vsyncpa [#allocation6], 0
    %16 = vsyncpa [#allocation9], 0
    %s17 = scalar_lea.sflag [#allocation9], 1
    %18 = vsyncpa %s17, 0
    %19 = vsyncpa [#allocation12], 0
    loop: start=0, step=1, limit=4
    $region2: #{tpu_custom_call.1} parent=1 // loop_pre_header
      _
    $region3: #{tpu_custom_call.1} parent=1 // loop_header
      %s21 = sphi 0, %s25
      %p22 = scmp.ge.s32.totalorder %s21, 4
      %s29 = sphi 0, %s29
      %s31 = sphi 0, %s29
      %s32 = sphi 0, %s31
      %s46 = sphi 0, %s32
      %s50 = sphi 0, %s50
      %s52 = sphi 0, %s50
      %s53 = sphi 0, %s52
      %s67 = sphi 0, %s53
      %s71 = sphi 0, %s71
      %s73 = sphi 0, %s71
      %s74 = sphi 0, %s73
      %s88 = sphi 0, %s74
      %s94 = sphi 0, %s96
      %s97 = sphi 0, %s94
      %s98 = sphi 0, %s97
      %s114 = sphi 0, %s98
      %s120 = sphi 0, %s122
      %s123 = sphi 0, %s120
      %s124 = sphi 0, %s123
      %s140 = sphi 0, %s124
      %s144 = sphi 0, %s144
      %s146 = sphi 0, %s144
      %s147 = sphi 0, %s146
      %s161 = sphi 0, %s147
      %s165 = sphi 0, %s165
      %s167 = sphi 0, %s165
      %s168 = sphi 0, %s167
      %s182 = sphi 0, %s168
      %s186 = sphi 0, %s186
      %s188 = sphi 0, %s186
      %s189 = sphi 0, %s188
      %s203 = sphi 0, %s189
      %s207 = sphi 0, %s207
      %s209 = sphi 0, %s207
      %s210 = sphi 0, %s209
      %s224 = sphi 0, %s210
      %s228 = sphi 0, %s228
      %s230 = sphi 0, %s228
      %s231 = sphi 0, %s230
      %s245 = sphi 0, %s231
    $region4: #{tpu_custom_call.1} parent=1 // loop_header_branch
      %24 = sbr.rel (%p22) target = $region8
    $region5: #{tpu_custom_call.1} parent=1 // loop_body
      %s26 = ssub.s32 %s21, 1
      %s27 = ssub.s32 %s21, 2
      %s28 = sadd.s32 %s21, 1
      %s30 = sadd.s32 %s29, 1
      %p33 = scmp.eq.s32.totalorder %s21, 1
      %p34 = scmp.ne.s32.totalorder %s29, %s31
      %p35 = scmp.eq.s32.totalorder %s21, 0
      %p36 = por %p34, %p35
      %p37 = scmp.ne.s32.totalorder %s29, %s31
      %p38 = scmp.eq.s32.totalorder %s26, 1
      %p39 = por %p37, %p38
      %p40 = scmp.ne.s32.totalorder %s31, %s32
      %p41 = scmp.eq.s32.totalorder %s26, 0
      %p42 = por %p40, %p41
      %p43 = scmp.ne.s32.totalorder %s31, %s32
      %p44 = scmp.eq.s32.totalorder %s27, 1
      %p45 = por %p43, %p44
      %p47 = scmp.ne.s32.totalorder %s32, %s46
      %p48 = scmp.eq.s32.totalorder %s27, 0
      %p49 = por %p47, %p48
      %s51 = sadd.s32 %s50, 1
      %p54 = scmp.eq.s32.totalorder %s21, 1
      %p55 = scmp.ne.s32.totalorder %s50, %s52
      %p56 = scmp.eq.s32.totalorder %s21, 0
      %p57 = por %p55, %p56
      %p58 = scmp.ne.s32.totalorder %s50, %s52
      %p59 = scmp.eq.s32.totalorder %s26, 1
      %p60 = por %p58, %p59
      %p61 = scmp.ne.s32.totalorder %s52, %s53
      %p62 = scmp.eq.s32.totalorder %s26, 0
      %p63 = por %p61, %p62
      %p64 = scmp.ne.s32.totalorder %s52, %s53
      %p65 = scmp.eq.s32.totalorder %s27, 1
      %p66 = por %p64, %p65
      %p68 = scmp.ne.s32.totalorder %s53, %s67
      %p69 = scmp.eq.s32.totalorder %s27, 0
      %p70 = por %p68, %p69
      %s72 = sadd.s32 %s71, 1
      %p75 = scmp.eq.s32.totalorder %s21, 1
      %p76 = scmp.ne.s32.totalorder %s71, %s73
      %p77 = scmp.eq.s32.totalorder %s21, 0
      %p78 = por %p76, %p77
      %p79 = scmp.ne.s32.totalorder %s71, %s73
      %p80 = scmp.eq.s32.totalorder %s26, 1
      %p81 = por %p79, %p80
      %p82 = scmp.ne.s32.totalorder %s73, %s74
      %p83 = scmp.eq.s32.totalorder %s26, 0
      %p84 = por %p82, %p83
      %p85 = scmp.ne.s32.totalorder %s73, %s74
      %p86 = scmp.eq.s32.totalorder %s27, 1
      %p87 = por %p85, %p86
      %p89 = scmp.ne.s32.totalorder %s74, %s88
      %p90 = scmp.eq.s32.totalorder %s27, 0
      %p91 = por %p89, %p90
      %s92 = ssub.s32 %s21, %s28
      %p93 = scmp.eq.s32.totalorder %s92, 0
      %s95 = sadd.s32 %s94, 1
      %s96 = scalar_select %p93, %s94, %s95
      %p99 = pneg %p93
      %p100 = scmp.eq.s32.totalorder %s21, 1
      %p101 = por %p99, %p100
      %p102 = scmp.ne.s32.totalorder %s94, %s97
      %p103 = scmp.eq.s32.totalorder %s21, 0
      %p104 = por %p102, %p103
      %p105 = scmp.ne.s32.totalorder %s94, %s97
      %p106 = scmp.eq.s32.totalorder %s26, 1
      %p107 = por %p105, %p106
      %p108 = scmp.ne.s32.totalorder %s97, %s98
      %p109 = scmp.eq.s32.totalorder %s26, 0
      %p110 = por %p108, %p109
      %p111 = scmp.ne.s32.totalorder %s97, %s98
      %p112 = scmp.eq.s32.totalorder %s27, 1
      %p113 = por %p111, %p112
      %p115 = scmp.ne.s32.totalorder %s98, %s114
      %p116 = scmp.eq.s32.totalorder %s27, 0
      %p117 = por %p115, %p116
      %s118 = ssub.s32 %s21, %s28
      %p119 = scmp.eq.s32.totalorder %s118, 0
      %s121 = sadd.s32 %s120, 1
      %s122 = scalar_select %p119, %s120, %s121
      %p125 = pneg %p119
      %p126 = scmp.eq.s32.totalorder %s21, 1
      %p127 = por %p125, %p126
      %p128 = scmp.ne.s32.totalorder %s120, %s123
      %p129 = scmp.eq.s32.totalorder %s21, 0
      %p130 = por %p128, %p129
      %p131 = scmp.ne.s32.totalorder %s120, %s123
      %p132 = scmp.eq.s32.totalorder %s26, 1
      %p133 = por %p131, %p132
      %p134 = scmp.ne.s32.totalorder %s123, %s124
      %p135 = scmp.eq.s32.totalorder %s26, 0
      %p136 = por %p134, %p135
      %p137 = scmp.ne.s32.totalorder %s123, %s124
      %p138 = scmp.eq.s32.totalorder %s27, 1
      %p139 = por %p137, %p138
      %p141 = scmp.ne.s32.totalorder %s124, %s140
      %p142 = scmp.eq.s32.totalorder %s27, 0
      %p143 = por %p141, %p142
      %s145 = sadd.s32 %s144, 1
      %p148 = scmp.eq.s32.totalorder %s21, 1
      %p149 = scmp.ne.s32.totalorder %s144, %s146
      %p150 = scmp.eq.s32.totalorder %s21, 0
      %p151 = por %p149, %p150
      %p152 = scmp.ne.s32.totalorder %s144, %s146
      %p153 = scmp.eq.s32.totalorder %s26, 1
      %p154 = por %p152, %p153
      %p155 = scmp.ne.s32.totalorder %s146, %s147
      %p156 = scmp.eq.s32.totalorder %s26, 0
      %p157 = por %p155, %p156
      %p158 = scmp.ne.s32.totalorder %s146, %s147
      %p159 = scmp.eq.s32.totalorder %s27, 1
      %p160 = por %p158, %p159
      %p162 = scmp.ne.s32.totalorder %s147, %s161
      %p163 = scmp.eq.s32.totalorder %s27, 0
      %p164 = por %p162, %p163
      %s166 = sadd.s32 %s165, 1
      %p169 = scmp.eq.s32.totalorder %s21, 1
      %p170 = scmp.ne.s32.totalorder %s165, %s167
      %p171 = scmp.eq.s32.totalorder %s21, 0
      %p172 = por %p170, %p171
      %p173 = scmp.ne.s32.totalorder %s165, %s167
      %p174 = scmp.eq.s32.totalorder %s26, 1
      %p175 = por %p173, %p174
      %p176 = scmp.ne.s32.totalorder %s167, %s168
      %p177 = scmp.eq.s32.totalorder %s26, 0
      %p178 = por %p176, %p177
      %p179 = scmp.ne.s32.totalorder %s167, %s168
      %p180 = scmp.eq.s32.totalorder %s27, 1
      %p181 = por %p179, %p180
      %p183 = scmp.ne.s32.totalorder %s168, %s182
      %p184 = scmp.eq.s32.totalorder %s27, 0
      %p185 = por %p183, %p184
      %s187 = sadd.s32 %s186, 1
      %p190 = scmp.eq.s32.totalorder %s21, 1
      %p191 = scmp.ne.s32.totalorder %s186, %s188
      %p192 = scmp.eq.s32.totalorder %s21, 0
      %p193 = por %p191, %p192
      %p194 = scmp.ne.s32.totalorder %s186, %s188
      %p195 = scmp.eq.s32.totalorder %s26, 1
      %p196 = por %p194, %p195
      %p197 = scmp.ne.s32.totalorder %s188, %s189
      %p198 = scmp.eq.s32.totalorder %s26, 0
      %p199 = por %p197, %p198
      %p200 = scmp.ne.s32.totalorder %s188, %s189
      %p201 = scmp.eq.s32.totalorder %s27, 1
      %p202 = por %p200, %p201
      %p204 = scmp.ne.s32.totalorder %s189, %s203
      %p205 = scmp.eq.s32.totalorder %s27, 0
      %p206 = por %p204, %p205
      %s208 = sadd.s32 %s207, 1
      %p211 = scmp.eq.s32.totalorder %s21, 1
      %p212 = scmp.ne.s32.totalorder %s207, %s209
      %p213 = scmp.eq.s32.totalorder %s21, 0
      %p214 = por %p212, %p213
      %p215 = scmp.ne.s32.totalorder %s207, %s209
      %p216 = scmp.eq.s32.totalorder %s26, 1
      %p217 = por %p215, %p216
      %p218 = scmp.ne.s32.totalorder %s209, %s210
      %p219 = scmp.eq.s32.totalorder %s26, 0
      %p220 = por %p218, %p219
      %p221 = scmp.ne.s32.totalorder %s209, %s210
      %p222 = scmp.eq.s32.totalorder %s27, 1
      %p223 = por %p221, %p222
      %p225 = scmp.ne.s32.totalorder %s210, %s224
      %p226 = scmp.eq.s32.totalorder %s27, 0
      %p227 = por %p225, %p226
      %s229 = sadd.s32 %s228, 1
      %p232 = scmp.eq.s32.totalorder %s21, 1
      %p233 = scmp.ne.s32.totalorder %s228, %s230
      %p234 = scmp.eq.s32.totalorder %s21, 0
      %p235 = por %p233, %p234
      %p236 = scmp.ne.s32.totalorder %s228, %s230
      %p237 = scmp.eq.s32.totalorder %s26, 1
      %p238 = por %p236, %p237
      %p239 = scmp.ne.s32.totalorder %s230, %s231
      %p240 = scmp.eq.s32.totalorder %s26, 0
      %p241 = por %p239, %p240
      %p242 = scmp.ne.s32.totalorder %s230, %s231
      %p243 = scmp.eq.s32.totalorder %s27, 1
      %p244 = por %p242, %p243
      %p246 = scmp.ne.s32.totalorder %s231, %s245
      %p247 = scmp.eq.s32.totalorder %s27, 0
      %p248 = por %p246, %p247
      %p249 = scmp.le.s32.totalorder 1, %s21
      %p250 = scmp.lt.s32.totalorder %s21, 3
      %p251 = pnand %p249, %p250
      %p252 = pneg %p251
      // Predicated region
      $region9: #{tpu_custom_call.1} parent=5 // pred_check
        _
      $region10: #{tpu_custom_call.1} parent=5 // pred_check_branch
        %254 = sbr.rel (%p251) target = $region12
      $region11: #{tpu_custom_call.1} parent=5 // pred_region
        %s255 = ssub.s32 %s21, 1
        // Predicated region
        $region13: #{tpu_custom_call.1} parent=11 // pred_check
          %p256 = pneg %p42
        $region14: #{tpu_custom_call.1} parent=11 // pred_check_branch
          %258 = sbr.rel (%p256) target = $region16
        $region15: #{tpu_custom_call.1} parent=11 // pred_region
          %s260 = ssub.s32 128, 128
          %261 = vsyncadd [#allocation4], %s260
          %s263 = sshll.u32 [#allocation3], 4
          %s264 = int_to_ptr.vmem [resolvable:$true] %s263
          %266 = dma.hbm_to_vmem [thread:$0]  %s0, 128, %s264, [#allocation4]
        $region16: #{tpu_custom_call.1} parent=11 // pred_fallthru
          _
        // Predicated region
        $region17: #{tpu_custom_call.1} parent=11 // pred_check
          %p267 = pneg %p63
        $region18: #{tpu_custom_call.1} parent=11 // pred_check_branch
          %269 = sbr.rel (%p267) target = $region20
        $region19: #{tpu_custom_call.1} parent=11 // pred_region
          %s271 = ssub.s32 1024, 1024
          %272 = vsyncadd [#allocation6], %s271
          %s273 = sshll.u32 [#allocation5], 4
          %s274 = int_to_ptr.vmem [resolvable:$true] %s273
          %279 = dma.hbm_to_vmem [thread:$0]  %s1, 1024, %s274, [#allocation6], 512, 512, 32
        $region20: #{tpu_custom_call.1} parent=11 // pred_fallthru
          _
        // Predicated region
        $region21: #{tpu_custom_call.1} parent=11 // pred_check
          %p280 = pneg %p84
        $region22: #{tpu_custom_call.1} parent=11 // pred_check_branch
          %282 = sbr.rel (%p280) target = $region24
        $region23: #{tpu_custom_call.1} parent=11 // pred_region
          %s284 = ssub.s32 64, 64
          %285 = vsyncadd [#allocation6], %s284
          %s287 = sshll.u32 [#allocation7], 4
          %s288 = int_to_ptr.vmem [resolvable:$true] %s287
          %290 = dma.hbm_to_vmem [thread:$0]  %s2, 64, %s288, [#allocation6]
        $region24: #{tpu_custom_call.1} parent=11 // pred_fallthru
          _
        // Predicated region
        $region25: #{tpu_custom_call.1} parent=11 // pred_check
          %p291 = pneg %p157
        $region26: #{tpu_custom_call.1} parent=11 // pred_check_branch
          %293 = sbr.rel (%p291) target = $region28
        $region27: #{tpu_custom_call.1} parent=11 // pred_region
          %s295 = ssub.s32 64, 64
          %296 = vsyncadd [#allocation9], %s295
          %s298 = sshll.u32 [#allocation10], 4
          %s299 = int_to_ptr.vmem [resolvable:$true] %s298
          %301 = dma.hbm_to_vmem [thread:$0]  %s5, 64, %s299, [#allocation9]
        $region28: #{tpu_custom_call.1} parent=11 // pred_fallthru
          _
        // Predicated region
        $region29: #{tpu_custom_call.1} parent=11 // pred_check
          %p302 = pneg %p178
        $region30: #{tpu_custom_call.1} parent=11 // pred_check_branch
          %304 = sbr.rel (%p302) target = $region32
        $region31: #{tpu_custom_call.1} parent=11 // pred_region
          %s306 = ssub.s32 64, 64
          %307 = vsyncadd [#allocation12], %s306
          %s309 = sshll.u32 [#allocation11], 4
          %s310 = int_to_ptr.vmem [resolvable:$true] %s309
          %312 = dma.hbm_to_vmem [thread:$0]  %s6, 64, %s310, [#allocation12]
        $region32: #{tpu_custom_call.1} parent=11 // pred_fallthru
          _
        // Predicated region
        $region33: #{tpu_custom_call.1} parent=11 // pred_check
          %p313 = pneg %p199
        $region34: #{tpu_custom_call.1} parent=11 // pred_check_branch
          %315 = sbr.rel (%p313) target = $region36
        $region35: #{tpu_custom_call.1} parent=11 // pred_region
          _
        $region36: #{tpu_custom_call.1} parent=11 // pred_fallthru
          _
        // Predicated region
        $region37: #{tpu_custom_call.1} parent=11 // pred_check
          %p316 = pneg %p220
        $region38: #{tpu_custom_call.1} parent=11 // pred_check_branch
          %318 = sbr.rel (%p316) target = $region40
        $region39: #{tpu_custom_call.1} parent=11 // pred_region
          %s320 = ssub.s32 16, 16
          %321 = vsyncadd [#allocation12], %s320
          %s323 = sshll.u32 [#allocation13], 4
          %s324 = int_to_ptr.vmem [resolvable:$true] %s323
          %326 = dma.hbm_to_vmem [thread:$0]  %s8, 16, %s324, [#allocation12]
        $region40: #{tpu_custom_call.1} parent=11 // pred_fallthru
          _
      $region12: #{tpu_custom_call.1} parent=5 // pred_fallthru
        _
      %p327 = scmp.lt.s32.totalorder %s21, 2
      // Predicated region
      $region41: #{tpu_custom_call.1} parent=5 // pred_check
        %p328 = pneg %p327
      $region42: #{tpu_custom_call.1} parent=5 // pred_check_branch
        %330 = sbr.rel (%p328) target = $region44
      $region43: #{tpu_custom_call.1} parent=5 // pred_region
        // Predicated region
        $region45: #{tpu_custom_call.1} parent=43 // pred_check
          %p331 = pneg %p104
        $region46: #{tpu_custom_call.1} parent=43 // pred_check_branch
          %333 = sbr.rel (%p331) target = $region48
        $region47: #{tpu_custom_call.1} parent=43 // pred_region
          %s334 = sand.u32 %s21, 1
          %s335 = scalar_lea.sflag [#allocation9], %s334
          %s336 = sand.u32 %s94, 1
          %s337 = smul.addr %s336, 10240
          %s338 = scalar_lea.vmem [#allocation8], %s337
          %s339 = smul.u32 10, %s21
          %s341 = ssub.s32 163840, 163840
          %342 = vsyncadd %s335, %s341
          %s343 = smul.addr %s339, 256
          %s344 = smul.addr %s343, 64
          %s345 = scalar_lea.hbm %s3, %s344
          %s346 = sshll.u32 %s338, 4
          %s347 = int_to_ptr.vmem [resolvable:$true] %s346
          %352 = dma.hbm_to_vmem [thread:$0]  %s345, 163840, %s347, %s335, 256, 256, 16
        $region48: #{tpu_custom_call.1} parent=43 // pred_fallthru
          _
        // Predicated region
        $region49: #{tpu_custom_call.1} parent=43 // pred_check
          %p353 = pneg %p130
        $region50: #{tpu_custom_call.1} parent=43 // pred_check_branch
          %355 = sbr.rel (%p353) target = $region52
        $region51: #{tpu_custom_call.1} parent=43 // pred_region
          %p356 = scmp.lt.s32.totalorder %s21, 1
          %s357 = scalar_select %p356, %s21, 1
          %s358 = smul.addr %s357, 8
          %s359 = smul.addr %s358, 8
          %s360 = scalar_lea.vmem %s4, %s359
        $region52: #{tpu_custom_call.1} parent=43 // pred_fallthru
          _
      $region44: #{tpu_custom_call.1} parent=5 // pred_fallthru
        _
      %p361 = scmp.le.s32.totalorder 1, %s21
      %p362 = scmp.lt.s32.totalorder %s21, 3
      %p363 = pnand %p361, %p362
      %p364 = pneg %p363
      // Predicated region
      $region53: #{tpu_custom_call.1} parent=5 // pred_check
        _
      $region54: #{tpu_custom_call.1} parent=5 // pred_check_branch
        %366 = sbr.rel (%p363) target = $region56
      $region55: #{tpu_custom_call.1} parent=5 // pred_region
        %s367 = ssub.s32 %s21, 1
        // Predicated region
        $region57: #{tpu_custom_call.1} parent=55 // pred_check
          %p368 = pneg %p42
        $region58: #{tpu_custom_call.1} parent=55 // pred_check_branch
          %370 = sbr.rel (%p368) target = $region60
        $region59: #{tpu_custom_call.1} parent=55 // pred_region
          %371 = dma.done [#allocation4], 128
        $region60: #{tpu_custom_call.1} parent=55 // pred_fallthru
          _
        // Predicated region
        $region61: #{tpu_custom_call.1} parent=55 // pred_check
          %p372 = pneg %p63
        $region62: #{tpu_custom_call.1} parent=55 // pred_check_branch
          %374 = sbr.rel (%p372) target = $region64
        $region63: #{tpu_custom_call.1} parent=55 // pred_region
          %375 = dma.done [#allocation6], 1024
        $region64: #{tpu_custom_call.1} parent=55 // pred_fallthru
          _
        // Predicated region
        $region65: #{tpu_custom_call.1} parent=55 // pred_check
          %p376 = pneg %p84
        $region66: #{tpu_custom_call.1} parent=55 // pred_check_branch
          %378 = sbr.rel (%p376) target = $region68
        $region67: #{tpu_custom_call.1} parent=55 // pred_region
          %379 = dma.done [#allocation6], 64
        $region68: #{tpu_custom_call.1} parent=55 // pred_fallthru
          _
        %s380 = sand.u32 %s26, 1
        %s381 = scalar_lea.sflag [#allocation9], %s380
        %s382 = sand.u32 %s97, 1
        %s383 = smul.addr %s382, 10240
        %s384 = scalar_lea.vmem [#allocation8], %s383
        // Predicated region
        $region69: #{tpu_custom_call.1} parent=55 // pred_check
          %p385 = pneg %p110
        $region70: #{tpu_custom_call.1} parent=55 // pred_check_branch
          %387 = sbr.rel (%p385) target = $region72
        $region71: #{tpu_custom_call.1} parent=55 // pred_region
          %388 = dma.done %s381, 163840
        $region72: #{tpu_custom_call.1} parent=55 // pred_fallthru
          _
        // Predicated region
        $region73: #{tpu_custom_call.1} parent=55 // pred_check
          %p389 = pneg %p157
        $region74: #{tpu_custom_call.1} parent=55 // pred_check_branch
          %391 = sbr.rel (%p389) target = $region76
        $region75: #{tpu_custom_call.1} parent=55 // pred_region
          %392 = dma.done [#allocation9], 64
        $region76: #{tpu_custom_call.1} parent=55 // pred_fallthru
          _
        // Predicated region
        $region77: #{tpu_custom_call.1} parent=55 // pred_check
          %p393 = pneg %p178
        $region78: #{tpu_custom_call.1} parent=55 // pred_check_branch
          %395 = sbr.rel (%p393) target = $region80
        $region79: #{tpu_custom_call.1} parent=55 // pred_region
          %396 = dma.done [#allocation12], 64
        $region80: #{tpu_custom_call.1} parent=55 // pred_fallthru
          _
        // Predicated region
        $region81: #{tpu_custom_call.1} parent=55 // pred_check
          %p397 = pneg %p220
        $region82: #{tpu_custom_call.1} parent=55 // pred_check_branch
          %399 = sbr.rel (%p397) target = $region84
        $region83: #{tpu_custom_call.1} parent=55 // pred_region
          %400 = dma.done [#allocation12], 16
        $region84: #{tpu_custom_call.1} parent=55 // pred_fallthru
          _
        %p401 = pneg %p42
        %p402 = pneg %p39
        %p403 = pneg %p63
        %p404 = pneg %p60
        %p405 = pneg %p84
        %p406 = pneg %p81
        %s407 = sand.u32 %s26, 1
        %s408 = scalar_lea.sflag [#allocation9], %s407
        %s409 = sand.u32 %s97, 1
        %s410 = smul.addr %s409, 10240
        %s411 = scalar_lea.vmem [#allocation8], %s410
        %p412 = pneg %p110
        %p413 = pneg %p107
        %p414 = scmp.lt.s32.totalorder %s26, 1
        %s415 = scalar_select %p414, %s26, 1
        %s416 = smul.addr %s415, 8
        %s417 = smul.addr %s416, 8
        %s418 = scalar_lea.vmem %s4, %s417
        %p419 = pneg %p136
        %p420 = pneg %p133
        %p421 = pneg %p157
        %p422 = pneg %p154
        %p423 = pneg %p178
        %p424 = pneg %p175
        %p425 = pneg %p199
        %p426 = pneg %p196
        %p427 = pneg %p220
        %p428 = pneg %p217
        %p429 = pneg %p241
        %p430 = pneg %p238
        %s431 = smul.u32 10, %s26
        %p432 = scmp.lt.s32.totalorder %s26, 1
        %s433 = scalar_select %p432, %s26, 1
        %s434 = smul.addr %s433, 8
        %s435 = smul.addr %s434, 8
        %s436 = scalar_lea.vmem %s4, %s435
        %p437 = scmp.eq.s32.totalorder %s26, 0
        // Predicated region
        $region85: #{tpu_custom_call.1} parent=55 // pred_check
          %p438 = pneg %p437
        $region86: #{tpu_custom_call.1} parent=55 // pred_check_branch
          %440 = sbr.rel (%p438) target = $region88
        $region87: #{tpu_custom_call.1} parent=55 // pred_region
          %v441 = vld [vmem:[#allocation3] sm:$0xff]
          %v442 = vld [vmem:[#allocation5] sm:$0xff]
          %v443 = vld [vmem:[#allocation5 + $0x8] sm:$0xff]
          %v444 = vld [vmem:[#allocation5 + $0x10] sm:$0xff]
          %v445 = vld [vmem:[#allocation5 + $0x18] sm:$0xff]
          %v446 = vld [vmem:[#allocation5 + $0x20] sm:$0xff]
          %v447 = vld [vmem:[#allocation5 + $0x28] sm:$0xff]
          %v448 = vld [vmem:[#allocation5 + $0x30] sm:$0xff]
          %v449 = vld [vmem:[#allocation5 + $0x38] sm:$0xff]
          %v450 = vld [vmem:[#allocation7] sm:$0xf]
          %v452 = vlaneseq
          %v453 = vshrl.u32 %v452, 7
          %v454 = vsub.s32 0, %v453
          %v455 = vrot.slane %v450, %v454
          %v456 = vlaneseq
          %v457 = vshrl.u32 %v456, 7
          %v458 = vsub.s32 1, %v457
          %v459 = vrot.slane %v450, %v458
          %v460 = vlaneseq
          %v461 = vshrl.u32 %v460, 7
          %v462 = vsub.s32 2, %v461
          %v463 = vrot.slane %v450, %v462
          %v464 = vlaneseq
          %v465 = vshrl.u32 %v464, 7
          %v466 = vsub.s32 3, %v465
          %v467 = vrot.slane %v450, %v466
          %vm472 = vcmask 130048
          %v474 = vsel %vm472, %v441, 0
          %476 = vmatprep.subr.mxu0 0.0
          %477 = vmatpush1.msra.mxu0 0.0
          %478 = vmatprep.subr.mxu0 0.0
          %479 = vmatpush1.msra.mxu0 0.0
          %480 = vmatprep.subr.mxu0 0.0
          %481 = vmatpush1.msra.mxu0 0.0
          %482 = vmatprep.subr.mxu0 0.0
          %483 = vmatpush1.msra.mxu0 0.0
          %484 = vmatprep.subr.mxu0 0.0
          %485 = vmatpush1.msra.mxu0 0.0
          %486 = vmatprep.subr.mxu0 0.0
          %487 = vmatpush1.msra.mxu0 0.0
          %488 = vmatprep.subr.mxu0 0.0
          %489 = vmatpush1.msra.mxu0 0.0
          %490 = vmatprep.subr.mxu0 0.0
          %491 = vmatpush1.msra.mxu0 0.0
          %492 = vmatprep.subr.mxu0 0.0
          %493 = vmatpush1.msra.mxu0 0.0
          %494 = vmatprep.subr.mxu0 0.0
          %495 = vmatpush1.msra.mxu0 0.0
          %496 = vmatprep.subr.mxu0 0.0
          %497 = vmatpush1.msra.mxu0 0.0
          %498 = vmatprep.subr.mxu0 0.0
          %499 = vmatpush1.msra.mxu0 0.0
          %500 = vmatprep.subr.mxu0 0.0
          %501 = vmatpush1.msra.mxu0 0.0
          %502 = vmatprep.subr.mxu0 0.0
          %503 = vmatpush1.msra.mxu0 0.0
          %504 = vmatprep.subr.mxu0 %v447
          %505 = vmatpush1.msra.mxu0 %v446
          %506 = vmatprep.subr.mxu0 %v443
          %507 = vmatpush1.msra.mxu0 %v442
          %508 = vmatprep.subr.mxu0 0.0
          %509 = vmatpush2.msra.mxu0 0.0
          %510 = vmatprep.subr.mxu0 0.0
          %511 = vmatpush2.msra.mxu0 0.0
          %512 = vmatprep.subr.mxu0 0.0
          %513 = vmatpush2.msra.mxu0 0.0
          %514 = vmatprep.subr.mxu0 0.0
          %515 = vmatpush2.msra.mxu0 0.0
          %516 = vmatprep.subr.mxu0 0.0
          %517 = vmatpush2.msra.mxu0 0.0
          %518 = vmatprep.subr.mxu0 0.0
          %519 = vmatpush2.msra.mxu0 0.0
          %520 = vmatprep.subr.mxu0 0.0
          %521 = vmatpush2.msra.mxu0 0.0
          %522 = vmatprep.subr.mxu0 0.0
          %523 = vmatpush2.msra.mxu0 0.0
          %524 = vmatprep.subr.mxu0 0.0
          %525 = vmatpush2.msra.mxu0 0.0
          %526 = vmatprep.subr.mxu0 0.0
          %527 = vmatpush2.msra.mxu0 0.0
          %528 = vmatprep.subr.mxu0 0.0
          %529 = vmatpush2.msra.mxu0 0.0
          %530 = vmatprep.subr.mxu0 0.0
          %531 = vmatpush2.msra.mxu0 0.0
          %532 = vmatprep.subr.mxu0 0.0
          %533 = vmatpush2.msra.mxu0 0.0
          %534 = vmatprep.subr.mxu0 0.0
          %535 = vmatpush2.msra.mxu0 0.0
          %536 = vmatprep.subr.mxu0 0.0
          %537 = vmatpush2.msra.mxu0 0.0
          %538 = vmatprep.subr.mxu0 0.0
          %539 = vmatpush2.msra.mxu0 0.0
          %540 = vmatprep.mubr.f32.mxu0 0.0
          %541 = vmatmul.mubr.f32.gmra.mxu0 %v474
          %v542 = vpop.f32.mrf.mxu0
          %v543 = vadd.f32 %v455, %v542
          %v544 = vpop.f32.mrf.mxu0
          %v545 = vadd.f32 %v459, %v544
          %546 = vdwg.mxu0
          %547 = vmatprep.subr.mxu0 0.0
          %548 = vmatpush1.msra.mxu0 0.0
          %549 = vmatprep.subr.mxu0 0.0
          %550 = vmatpush1.msra.mxu0 0.0
          %551 = vmatprep.subr.mxu0 0.0
          %552 = vmatpush1.msra.mxu0 0.0
          %553 = vmatprep.subr.mxu0 0.0
          %554 = vmatpush1.msra.mxu0 0.0
          %555 = vmatprep.subr.mxu0 0.0
          %556 = vmatpush1.msra.mxu0 0.0
          %557 = vmatprep.subr.mxu0 0.0
          %558 = vmatpush1.msra.mxu0 0.0
          %559 = vmatprep.subr.mxu0 0.0
          %560 = vmatpush1.msra.mxu0 0.0
          %561 = vmatprep.subr.mxu0 0.0
          %562 = vmatpush1.msra.mxu0 0.0
          %563 = vmatprep.subr.mxu0 0.0
          %564 = vmatpush1.msra.mxu0 0.0
          %565 = vmatprep.subr.mxu0 0.0
          %566 = vmatpush1.msra.mxu0 0.0
          %567 = vmatprep.subr.mxu0 0.0
          %568 = vmatpush1.msra.mxu0 0.0
          %569 = vmatprep.subr.mxu0 0.0
          %570 = vmatpush1.msra.mxu0 0.0
          %571 = vmatprep.subr.mxu0 0.0
          %572 = vmatpush1.msra.mxu0 0.0
          %573 = vmatprep.subr.mxu0 0.0
          %574 = vmatpush1.msra.mxu0 0.0
          %575 = vmatprep.subr.mxu0 %v449
          %576 = vmatpush1.msra.mxu0 %v448
          %577 = vmatprep.subr.mxu0 %v445
          %578 = vmatpush1.msra.mxu0 %v444
          %579 = vmatprep.subr.mxu0 0.0
          %580 = vmatpush2.msra.mxu0 0.0
          %581 = vmatprep.subr.mxu0 0.0
          %582 = vmatpush2.msra.mxu0 0.0
          %583 = vmatprep.subr.mxu0 0.0
          %584 = vmatpush2.msra.mxu0 0.0
          %585 = vmatprep.subr.mxu0 0.0
          %586 = vmatpush2.msra.mxu0 0.0
          %587 = vmatprep.subr.mxu0 0.0
          %588 = vmatpush2.msra.mxu0 0.0
          %589 = vmatprep.subr.mxu0 0.0
          %590 = vmatpush2.msra.mxu0 0.0
          %591 = vmatprep.subr.mxu0 0.0
          %592 = vmatpush2.msra.mxu0 0.0
          %593 = vmatprep.subr.mxu0 0.0
          %594 = vmatpush2.msra.mxu0 0.0
          %595 = vmatprep.subr.mxu0 0.0
          %596 = vmatpush2.msra.mxu0 0.0
          %597 = vmatprep.subr.mxu0 0.0
          %598 = vmatpush2.msra.mxu0 0.0
          %599 = vmatprep.subr.mxu0 0.0
          %600 = vmatpush2.msra.mxu0 0.0
          %601 = vmatprep.subr.mxu0 0.0
          %602 = vmatpush2.msra.mxu0 0.0
          %603 = vmatprep.subr.mxu0 0.0
          %604 = vmatpush2.msra.mxu0 0.0
          %605 = vmatprep.subr.mxu0 0.0
          %606 = vmatpush2.msra.mxu0 0.0
          %607 = vmatprep.subr.mxu0 0.0
          %608 = vmatpush2.msra.mxu0 0.0
          %609 = vmatprep.subr.mxu0 0.0
          %610 = vmatpush2.msra.mxu0 0.0
          %611 = vmatprep.mubr.f32.mxu0 0.0
          %612 = vmatmul.mubr.f32.gmra.mxu0 %v474
          %v613 = vpop.f32.mrf.mxu0
          %v614 = vadd.f32 %v463, %v613
          %v615 = vpop.f32.mrf.mxu0
          %v616 = vadd.f32 %v467, %v615
          %617 = vdwg.mxu0
          %618 = vst [vmem:[#allocation2] sm:$0xff] %v543
          %619 = vst [vmem:[#allocation2 + $0x8] sm:$0xff] %v545
          %620 = vst [vmem:[#allocation2 + $0x10] sm:$0xff] %v614
          %621 = vst [vmem:[#allocation2 + $0x18] sm:$0xff] %v616
        $region88: #{tpu_custom_call.1} parent=55 // pred_fallthru
          _
        %v622 = vld [vmem:[#allocation2] sm:$0xff]
        %v623 = vld [vmem:[#allocation2 + $0x8] sm:$0xff]
        %v624 = vld [vmem:[#allocation2 + $0x10] sm:$0xff]
        %v625 = vld [vmem:[#allocation2 + $0x18] sm:$0xff]
        %v626 = vpack.c.bf16 %v622, %v622
        %v627 = vpack.c.bf16 %v623, %v623
        %v628 = vpack.c.bf16 %v624, %v624
        %v629 = vpack.c.bf16 %v625, %v625
        %v630 = vld [vmem:[%s384] sm:$0xff]
        %v631 = vld [vmem:[%s384 + $0x8] sm:$0xff]
        %v632 = vld [vmem:[%s384 + $0x10] sm:$0xff]
        %v633 = vld [vmem:[%s384 + $0x18] sm:$0xff]
        %v634 = vld [vmem:[%s384 + $0x20] sm:$0xff]
        %v635 = vld [vmem:[%s384 + $0x28] sm:$0xff]
        %v636 = vld [vmem:[%s384 + $0x30] sm:$0xff]
        %v637 = vld [vmem:[%s384 + $0x38] sm:$0xff]
        %v638 = vld [vmem:[%s384 + $0x40] sm:$0xff]
        %v639 = vld [vmem:[%s384 + $0x48] sm:$0xff]
        %v640 = vld [vmem:[%s384 + $0x50] sm:$0xff]
        %v641 = vld [vmem:[%s384 + $0x58] sm:$0xff]
        %v642 = vld [vmem:[%s384 + $0x60] sm:$0xff]
        %v643 = vld [vmem:[%s384 + $0x68] sm:$0xff]
        %v644 = vld [vmem:[%s384 + $0x70] sm:$0xff]
        %v645 = vld [vmem:[%s384 + $0x78] sm:$0xff]
        %v646 = vld [vmem:[%s384 + $0x80] sm:$0xff]
        %v647 = vld [vmem:[%s384 + $0x88] sm:$0xff]
        %v648 = vld [vmem:[%s384 + $0x90] sm:$0xff]
        %v649 = vld [vmem:[%s384 + $0x98] sm:$0xff]
        %v650 = vld [vmem:[%s384 + $0xa0] sm:$0xff]
        %v651 = vld [vmem:[%s384 + $0xa8] sm:$0xff]
        %v652 = vld [vmem:[%s384 + $0xb0] sm:$0xff]
        %v653 = vld [vmem:[%s384 + $0xb8] sm:$0xff]
        %v654 = vld [vmem:[%s384 + $0xc0] sm:$0xff]
        %v655 = vld [vmem:[%s384 + $0xc8] sm:$0xff]
        %v656 = vld [vmem:[%s384 + $0xd0] sm:$0xff]
        %v657 = vld [vmem:[%s384 + $0xd8] sm:$0xff]
        %v658 = vld [vmem:[%s384 + $0xe0] sm:$0xff]
        %v659 = vld [vmem:[%s384 + $0xe8] sm:$0xff]
        %v660 = vld [vmem:[%s384 + $0xf0] sm:$0xff]
        %v661 = vld [vmem:[%s384 + $0xf8] sm:$0xff]
        %v662 = vld [vmem:[%s384 + $0x100] sm:$0xff]
        %v663 = vld [vmem:[%s384 + $0x108] sm:$0xff]
        %v664 = vld [vmem:[%s384 + $0x110] sm:$0xff]
        %v665 = vld [vmem:[%s384 + $0x118] sm:$0xff]
        %v666 = vld [vmem:[%s384 + $0x120] sm:$0xff]
        %v667 = vld [vmem:[%s384 + $0x128] sm:$0xff]
        %v668 = vld [vmem:[%s384 + $0x130] sm:$0xff]
        %v669 = vld [vmem:[%s384 + $0x138] sm:$0xff]
        %v670 = vld [vmem:[%s384 + $0x140] sm:$0xff]
        %v671 = vld [vmem:[%s384 + $0x148] sm:$0xff]
        %v672 = vld [vmem:[%s384 + $0x150] sm:$0xff]
        %v673 = vld [vmem:[%s384 + $0x158] sm:$0xff]
        %v674 = vld [vmem:[%s384 + $0x160] sm:$0xff]
        %v675 = vld [vmem:[%s384 + $0x168] sm:$0xff]
        %v676 = vld [vmem:[%s384 + $0x170] sm:$0xff]
        %v677 = vld [vmem:[%s384 + $0x178] sm:$0xff]
        %v678 = vld [vmem:[%s384 + $0x180] sm:$0xff]
        %v679 = vld [vmem:[%s384 + $0x188] sm:$0xff]
        %v680 = vld [vmem:[%s384 + $0x190] sm:$0xff]
        %v681 = vld [vmem:[%s384 + $0x198] sm:$0xff]
        %v682 = vld [vmem:[%s384 + $0x1a0] sm:$0xff]
        %v683 = vld [vmem:[%s384 + $0x1a8] sm:$0xff]
        %v684 = vld [vmem:[%s384 + $0x1b0] sm:$0xff]
        %v685 = vld [vmem:[%s384 + $0x1b8] sm:$0xff]
        %v686 = vld [vmem:[%s384 + $0x1c0] sm:$0xff]
        %v687 = vld [vmem:[%s384 + $0x1c8] sm:$0xff]
        %v688 = vld [vmem:[%s384 + $0x1d0] sm:$0xff]
        %v689 = vld [vmem:[%s384 + $0x1d8] sm:$0xff]
        %v690 = vld [vmem:[%s384 + $0x1e0] sm:$0xff]
        %v691 = vld [vmem:[%s384 + $0x1e8] sm:$0xff]
        %v692 = vld [vmem:[%s384 + $0x1f0] sm:$0xff]
        %v693 = vld [vmem:[%s384 + $0x1f8] sm:$0xff]
        %v694 = vld [vmem:[%s384 + $0x200] sm:$0xff]
        %v695 = vld [vmem:[%s384 + $0x208] sm:$0xff]
        %v696 = vld [vmem:[%s384 + $0x210] sm:$0xff]
        %v697 = vld [vmem:[%s384 + $0x218] sm:$0xff]
        %v698 = vld [vmem:[%s384 + $0x220] sm:$0xff]
        %v699 = vld [vmem:[%s384 + $0x228] sm:$0xff]
        %v700 = vld [vmem:[%s384 + $0x230] sm:$0xff]
        %v701 = vld [vmem:[%s384 + $0x238] sm:$0xff]
        %v702 = vld [vmem:[%s384 + $0x240] sm:$0xff]
        %v703 = vld [vmem:[%s384 + $0x248] sm:$0xff]
        %v704 = vld [vmem:[%s384 + $0x250] sm:$0xff]
        %v705 = vld [vmem:[%s384 + $0x258] sm:$0xff]
        %v706 = vld [vmem:[%s384 + $0x260] sm:$0xff]
        %v707 = vld [vmem:[%s384 + $0x268] sm:$0xff]
        %v708 = vld [vmem:[%s384 + $0x270] sm:$0xff]
        %v709 = vld [vmem:[%s384 + $0x278] sm:$0xff]
        %v710 = vld [vmem:[%s384 + $0x280] sm:$0xff]
        %v711 = vld [vmem:[%s384 + $0x288] sm:$0xff]
        %v712 = vld [vmem:[%s384 + $0x290] sm:$0xff]
        %v713 = vld [vmem:[%s384 + $0x298] sm:$0xff]
        %v714 = vld [vmem:[%s384 + $0x2a0] sm:$0xff]
        %v715 = vld [vmem:[%s384 + $0x2a8] sm:$0xff]
        %v716 = vld [vmem:[%s384 + $0x2b0] sm:$0xff]
        %v717 = vld [vmem:[%s384 + $0x2b8] sm:$0xff]
        %v718 = vld [vmem:[%s384 + $0x2c0] sm:$0xff]
        %v719 = vld [vmem:[%s384 + $0x2c8] sm:$0xff]
        %v720 = vld [vmem:[%s384 + $0x2d0] sm:$0xff]
        %v721 = vld [vmem:[%s384 + $0x2d8] sm:$0xff]
        %v722 = vld [vmem:[%s384 + $0x2e0] sm:$0xff]
        %v723 = vld [vmem:[%s384 + $0x2e8] sm:$0xff]
        %v724 = vld [vmem:[%s384 + $0x2f0] sm:$0xff]
        %v725 = vld [vmem:[%s384 + $0x2f8] sm:$0xff]
        %v726 = vld [vmem:[%s384 + $0x300] sm:$0xff]
        %v727 = vld [vmem:[%s384 + $0x308] sm:$0xff]
        %v728 = vld [vmem:[%s384 + $0x310] sm:$0xff]
        %v729 = vld [vmem:[%s384 + $0x318] sm:$0xff]
        %v730 = vld [vmem:[%s384 + $0x320] sm:$0xff]
        %v731 = vld [vmem:[%s384 + $0x328] sm:$0xff]
        %v732 = vld [vmem:[%s384 + $0x330] sm:$0xff]
        %v733 = vld [vmem:[%s384 + $0x338] sm:$0xff]
        %v734 = vld [vmem:[%s384 + $0x340] sm:$0xff]
        %v735 = vld [vmem:[%s384 + $0x348] sm:$0xff]
        %v736 = vld [vmem:[%s384 + $0x350] sm:$0xff]
        %v737 = vld [vmem:[%s384 + $0x358] sm:$0xff]
        %v738 = vld [vmem:[%s384 + $0x360] sm:$0xff]
        %v739 = vld [vmem:[%s384 + $0x368] sm:$0xff]
        %v740 = vld [vmem:[%s384 + $0x370] sm:$0xff]
        %v741 = vld [vmem:[%s384 + $0x378] sm:$0xff]
        %v742 = vld [vmem:[%s384 + $0x380] sm:$0xff]
        %v743 = vld [vmem:[%s384 + $0x388] sm:$0xff]
        %v744 = vld [vmem:[%s384 + $0x390] sm:$0xff]
        %v745 = vld [vmem:[%s384 + $0x398] sm:$0xff]
        %v746 = vld [vmem:[%s384 + $0x3a0] sm:$0xff]
        %v747 = vld [vmem:[%s384 + $0x3a8] sm:$0xff]
        %v748 = vld [vmem:[%s384 + $0x3b0] sm:$0xff]
        %v749 = vld [vmem:[%s384 + $0x3b8] sm:$0xff]
        %v750 = vld [vmem:[%s384 + $0x3c0] sm:$0xff]
        %v751 = vld [vmem:[%s384 + $0x3c8] sm:$0xff]
        %v752 = vld [vmem:[%s384 + $0x3d0] sm:$0xff]
        %v753 = vld [vmem:[%s384 + $0x3d8] sm:$0xff]
        %v754 = vld [vmem:[%s384 + $0x3e0] sm:$0xff]
        %v755 = vld [vmem:[%s384 + $0x3e8] sm:$0xff]
        %v756 = vld [vmem:[%s384 + $0x3f0] sm:$0xff]
        %v757 = vld [vmem:[%s384 + $0x3f8] sm:$0xff]
        %v758 = vld [vmem:[%s436] ss:$8 sm:$0xf]
        %v760 = vlaneseq
        %v761 = vshrl.u32 %v760, 7
        %v762 = vsub.s32 0, %v761
        %v763 = vrot.slane %v758, %v762
        %v764 = vlaneseq
        %v765 = vshrl.u32 %v764, 7
        %v766 = vsub.s32 1, %v765
        %v767 = vrot.slane %v758, %v766
        %v768 = vlaneseq
        %v769 = vshrl.u32 %v768, 7
        %v770 = vsub.s32 2, %v769
        %v771 = vrot.slane %v758, %v770
        %v772 = vlaneseq
        %v773 = vshrl.u32 %v772, 7
        %v774 = vsub.s32 3, %v773
        %v775 = vrot.slane %v758, %v774
        %v908 = vunpack.c.l.b16 %v630
        %v909 = vunpack.c.h.b16 %v630
        %v910 = vunpack.c.l.b16 %v631
        %v911 = vunpack.c.h.b16 %v631
        %v912 = vunpack.c.l.b16 %v632
        %v913 = vunpack.c.h.b16 %v632
        %v914 = vunpack.c.l.b16 %v633
        %v915 = vunpack.c.h.b16 %v633
        %v916 = vunpack.c.l.b16 %v634
        %v917 = vunpack.c.h.b16 %v634
        %v918 = vunpack.c.l.b16 %v635
        %v919 = vunpack.c.h.b16 %v635
        %v920 = vunpack.c.l.b16 %v636
        %v921 = vunpack.c.h.b16 %v636
        %v922 = vunpack.c.l.b16 %v637
        %v923 = vunpack.c.h.b16 %v637
        %v924 = vunpack.c.l.b16 %v638
        %v925 = vunpack.c.h.b16 %v638
        %v926 = vunpack.c.l.b16 %v639
        %v927 = vunpack.c.h.b16 %v639
        %v928 = vunpack.c.l.b16 %v640
        %v929 = vunpack.c.h.b16 %v640
        %v930 = vunpack.c.l.b16 %v641
        %v931 = vunpack.c.h.b16 %v641
        %v932 = vunpack.c.l.b16 %v642
        %v933 = vunpack.c.h.b16 %v642
        %v934 = vunpack.c.l.b16 %v643
        %v935 = vunpack.c.h.b16 %v643
        %v936 = vunpack.c.l.b16 %v644
        %v937 = vunpack.c.h.b16 %v644
        %v938 = vunpack.c.l.b16 %v645
        %v939 = vunpack.c.h.b16 %v645
        %v940 = vunpack.c.l.b16 %v646
        %v941 = vunpack.c.h.b16 %v646
        %v942 = vunpack.c.l.b16 %v647
        %v943 = vunpack.c.h.b16 %v647
        %v944 = vunpack.c.l.b16 %v648
        %v945 = vunpack.c.h.b16 %v648
        %v946 = vunpack.c.l.b16 %v649
        %v947 = vunpack.c.h.b16 %v649
        %v948 = vunpack.c.l.b16 %v650
        %v949 = vunpack.c.h.b16 %v650
        %v950 = vunpack.c.l.b16 %v651
        %v951 = vunpack.c.h.b16 %v651
        %v952 = vunpack.c.l.b16 %v652
        %v953 = vunpack.c.h.b16 %v652
        %v954 = vunpack.c.l.b16 %v653
        %v955 = vunpack.c.h.b16 %v653
        %v956 = vunpack.c.l.b16 %v654
        %v957 = vunpack.c.h.b16 %v654
        %v958 = vunpack.c.l.b16 %v655
        %v959 = vunpack.c.h.b16 %v655
        %v960 = vunpack.c.l.b16 %v656
        %v961 = vunpack.c.h.b16 %v656
        %v962 = vunpack.c.l.b16 %v657
        %v963 = vunpack.c.h.b16 %v657
        %v964 = vunpack.c.l.b16 %v658
        %v965 = vunpack.c.h.b16 %v658
        %v966 = vunpack.c.l.b16 %v659
        %v967 = vunpack.c.h.b16 %v659
        %v968 = vunpack.c.l.b16 %v660
        %v969 = vunpack.c.h.b16 %v660
        %v970 = vunpack.c.l.b16 %v661
        %v971 = vunpack.c.h.b16 %v661
        %v972 = vunpack.c.l.b16 %v662
        %v973 = vunpack.c.h.b16 %v662
        %v974 = vunpack.c.l.b16 %v663
        %v975 = vunpack.c.h.b16 %v663
        %v976 = vunpack.c.l.b16 %v664
        %v977 = vunpack.c.h.b16 %v664
        %v978 = vunpack.c.l.b16 %v665
        %v979 = vunpack.c.h.b16 %v665
        %v980 = vunpack.c.l.b16 %v666
        %v981 = vunpack.c.h.b16 %v666
        %v982 = vunpack.c.l.b16 %v667
        %v983 = vunpack.c.h.b16 %v667
        %v984 = vunpack.c.l.b16 %v668
        %v985 = vunpack.c.h.b16 %v668
        %v986 = vunpack.c.l.b16 %v669
        %v987 = vunpack.c.h.b16 %v669
        %v988 = vunpack.c.l.b16 %v670
        %v989 = vunpack.c.h.b16 %v670
        %v990 = vunpack.c.l.b16 %v671
        %v991 = vunpack.c.h.b16 %v671
        %v992 = vunpack.c.l.b16 %v672
        %v993 = vunpack.c.h.b16 %v672
        %v994 = vunpack.c.l.b16 %v673
        %v995 = vunpack.c.h.b16 %v673
        %v996 = vunpack.c.l.b16 %v674
        %v997 = vunpack.c.h.b16 %v674
        %v998 = vunpack.c.l.b16 %v675
        %v999 = vunpack.c.h.b16 %v675
        %v1000 = vunpack.c.l.b16 %v676
        %v1001 = vunpack.c.h.b16 %v676
        %v1002 = vunpack.c.l.b16 %v677
        %v1003 = vunpack.c.h.b16 %v677
        %v1004 = vunpack.c.l.b16 %v678
        %v1005 = vunpack.c.h.b16 %v678
        %v1006 = vunpack.c.l.b16 %v679
        %v1007 = vunpack.c.h.b16 %v679
        %v1008 = vunpack.c.l.b16 %v680
        %v1009 = vunpack.c.h.b16 %v680
        %v1010 = vunpack.c.l.b16 %v681
        %v1011 = vunpack.c.h.b16 %v681
        %v1012 = vunpack.c.l.b16 %v682
        %v1013 = vunpack.c.h.b16 %v682
        %v1014 = vunpack.c.l.b16 %v683
        %v1015 = vunpack.c.h.b16 %v683
        %v1016 = vunpack.c.l.b16 %v684
        %v1017 = vunpack.c.h.b16 %v684
        %v1018 = vunpack.c.l.b16 %v685
        %v1019 = vunpack.c.h.b16 %v685
        %v1020 = vunpack.c.l.b16 %v686
        %v1021 = vunpack.c.h.b16 %v686
        %v1022 = vunpack.c.l.b16 %v687
        %v1023 = vunpack.c.h.b16 %v687
        %v1024 = vunpack.c.l.b16 %v688
        %v1025 = vunpack.c.h.b16 %v688
        %v1026 = vunpack.c.l.b16 %v689
        %v1027 = vunpack.c.h.b16 %v689
        %v1028 = vunpack.c.l.b16 %v690
        %v1029 = vunpack.c.h.b16 %v690
        %v1030 = vunpack.c.l.b16 %v691
        %v1031 = vunpack.c.h.b16 %v691
        %v1032 = vunpack.c.l.b16 %v692
        %v1033 = vunpack.c.h.b16 %v692
        %v1034 = vunpack.c.l.b16 %v693
        %v1035 = vunpack.c.h.b16 %v693
        %v1036 = vunpack.c.l.b16 %v694
        %v1037 = vunpack.c.h.b16 %v694
        %v1038 = vunpack.c.l.b16 %v695
        %v1039 = vunpack.c.h.b16 %v695
        %v1040 = vunpack.c.l.b16 %v696
        %v1041 = vunpack.c.h.b16 %v696
        %v1042 = vunpack.c.l.b16 %v697
        %v1043 = vunpack.c.h.b16 %v697
        %v1044 = vunpack.c.l.b16 %v698
        %v1045 = vunpack.c.h.b16 %v698
        %v1046 = vunpack.c.l.b16 %v699
        %v1047 = vunpack.c.h.b16 %v699
        %v1048 = vunpack.c.l.b16 %v700
        %v1049 = vunpack.c.h.b16 %v700
        %v1050 = vunpack.c.l.b16 %v701
        %v1051 = vunpack.c.h.b16 %v701
        %v1052 = vunpack.c.l.b16 %v702
        %v1053 = vunpack.c.h.b16 %v702
        %v1054 = vunpack.c.l.b16 %v703
        %v1055 = vunpack.c.h.b16 %v703
        %v1056 = vunpack.c.l.b16 %v704
        %v1057 = vunpack.c.h.b16 %v704
        %v1058 = vunpack.c.l.b16 %v705
        %v1059 = vunpack.c.h.b16 %v705
        %v1060 = vunpack.c.l.b16 %v706
        %v1061 = vunpack.c.h.b16 %v706
        %v1062 = vunpack.c.l.b16 %v707
        %v1063 = vunpack.c.h.b16 %v707
        %v1064 = vunpack.c.l.b16 %v708
        %v1065 = vunpack.c.h.b16 %v708
        %v1066 = vunpack.c.l.b16 %v709
        %v1067 = vunpack.c.h.b16 %v709
        %v1068 = vunpack.c.l.b16 %v710
        %v1069 = vunpack.c.h.b16 %v710
        %v1070 = vunpack.c.l.b16 %v711
        %v1071 = vunpack.c.h.b16 %v711
        %v1072 = vunpack.c.l.b16 %v712
        %v1073 = vunpack.c.h.b16 %v712
        %v1074 = vunpack.c.l.b16 %v713
        %v1075 = vunpack.c.h.b16 %v713
        %v1076 = vunpack.c.l.b16 %v714
        %v1077 = vunpack.c.h.b16 %v714
        %v1078 = vunpack.c.l.b16 %v715
        %v1079 = vunpack.c.h.b16 %v715
        %v1080 = vunpack.c.l.b16 %v716
        %v1081 = vunpack.c.h.b16 %v716
        %v1082 = vunpack.c.l.b16 %v717
        %v1083 = vunpack.c.h.b16 %v717
        %v1084 = vunpack.c.l.b16 %v718
        %v1085 = vunpack.c.h.b16 %v718
        %v1086 = vunpack.c.l.b16 %v719
        %v1087 = vunpack.c.h.b16 %v719
        %v1088 = vunpack.c.l.b16 %v720
        %v1089 = vunpack.c.h.b16 %v720
        %v1090 = vunpack.c.l.b16 %v721
        %v1091 = vunpack.c.h.b16 %v721
        %v1092 = vunpack.c.l.b16 %v722
        %v1093 = vunpack.c.h.b16 %v722
        %v1094 = vunpack.c.l.b16 %v723
        %v1095 = vunpack.c.h.b16 %v723
        %v1096 = vunpack.c.l.b16 %v724
        %v1097 = vunpack.c.h.b16 %v724
        %v1098 = vunpack.c.l.b16 %v725
        %v1099 = vunpack.c.h.b16 %v725
        %v1100 = vunpack.c.l.b16 %v726
        %v1101 = vunpack.c.h.b16 %v726
        %v1102 = vunpack.c.l.b16 %v727
        %v1103 = vunpack.c.h.b16 %v727
        %v1104 = vunpack.c.l.b16 %v728
        %v1105 = vunpack.c.h.b16 %v728
        %v1106 = vunpack.c.l.b16 %v729
        %v1107 = vunpack.c.h.b16 %v729
        %v1108 = vunpack.c.l.b16 %v730
        %v1109 = vunpack.c.h.b16 %v730
        %v1110 = vunpack.c.l.b16 %v731
        %v1111 = vunpack.c.h.b16 %v731
        %v1112 = vunpack.c.l.b16 %v732
        %v1113 = vunpack.c.h.b16 %v732
        %v1114 = vunpack.c.l.b16 %v733
        %v1115 = vunpack.c.h.b16 %v733
        %v1116 = vunpack.c.l.b16 %v734
        %v1117 = vunpack.c.h.b16 %v734
        %v1118 = vunpack.c.l.b16 %v735
        %v1119 = vunpack.c.h.b16 %v735
        %v1120 = vunpack.c.l.b16 %v736
        %v1121 = vunpack.c.h.b16 %v736
        %v1122 = vunpack.c.l.b16 %v737
        %v1123 = vunpack.c.h.b16 %v737
        %v1124 = vunpack.c.l.b16 %v738
        %v1125 = vunpack.c.h.b16 %v738
        %v1126 = vunpack.c.l.b16 %v739
        %v1127 = vunpack.c.h.b16 %v739
        %v1128 = vunpack.c.l.b16 %v740
        %v1129 = vunpack.c.h.b16 %v740
        %v1130 = vunpack.c.l.b16 %v741
        %v1131 = vunpack.c.h.b16 %v741
        %v1132 = vunpack.c.l.b16 %v742
        %v1133 = vunpack.c.h.b16 %v742
        %v1134 = vunpack.c.l.b16 %v743
        %v1135 = vunpack.c.h.b16 %v743
        %v1136 = vunpack.c.l.b16 %v744
        %v1137 = vunpack.c.h.b16 %v744
        %v1138 = vunpack.c.l.b16 %v745
        %v1139 = vunpack.c.h.b16 %v745
        %v1140 = vunpack.c.l.b16 %v746
        %v1141 = vunpack.c.h.b16 %v746
        %v1142 = vunpack.c.l.b16 %v747
        %v1143 = vunpack.c.h.b16 %v747
        %v1144 = vunpack.c.l.b16 %v748
        %v1145 = vunpack.c.h.b16 %v748
        %v1146 = vunpack.c.l.b16 %v749
        %v1147 = vunpack.c.h.b16 %v749
        %v1148 = vunpack.c.l.b16 %v750
        %v1149 = vunpack.c.h.b16 %v750
        %v1150 = vunpack.c.l.b16 %v751
        %v1151 = vunpack.c.h.b16 %v751
        %v1152 = vunpack.c.l.b16 %v752
        %v1153 = vunpack.c.h.b16 %v752
        %v1154 = vunpack.c.l.b16 %v753
        %v1155 = vunpack.c.h.b16 %v753
        %v1156 = vunpack.c.l.b16 %v754
        %v1157 = vunpack.c.h.b16 %v754
        %v1158 = vunpack.c.l.b16 %v755
        %v1159 = vunpack.c.h.b16 %v755
        %v1160 = vunpack.c.l.b16 %v756
        %v1161 = vunpack.c.h.b16 %v756
        %v1162 = vunpack.c.l.b16 %v757
        %v1163 = vunpack.c.h.b16 %v757
        %v1164 = vpack.c.b16 %v912, %v908
        %v1165 = vpack.c.b16 %v913, %v909
        %v1166 = vpack.c.b16 %v914, %v910
        %v1167 = vpack.c.b16 %v915, %v911
        %v1168 = vpack.c.b16 %v920, %v916
        %v1169 = vpack.c.b16 %v921, %v917
        %v1170 = vpack.c.b16 %v922, %v918
        %v1171 = vpack.c.b16 %v923, %v919
        %v1172 = vpack.c.b16 %v928, %v924
        %v1173 = vpack.c.b16 %v929, %v925
        %v1174 = vpack.c.b16 %v930, %v926
        %v1175 = vpack.c.b16 %v931, %v927
        %v1176 = vpack.c.b16 %v936, %v932
        %v1177 = vpack.c.b16 %v937, %v933
        %v1178 = vpack.c.b16 %v938, %v934
        %v1179 = vpack.c.b16 %v939, %v935
        %v1180 = vpack.c.b16 %v944, %v940
        %v1181 = vpack.c.b16 %v945, %v941
        %v1182 = vpack.c.b16 %v946, %v942
        %v1183 = vpack.c.b16 %v947, %v943
        %v1184 = vpack.c.b16 %v952, %v948
        %v1185 = vpack.c.b16 %v953, %v949
        %v1186 = vpack.c.b16 %v954, %v950
        %v1187 = vpack.c.b16 %v955, %v951
        %v1188 = vpack.c.b16 %v960, %v956
        %v1189 = vpack.c.b16 %v961, %v957
        %v1190 = vpack.c.b16 %v962, %v958
        %v1191 = vpack.c.b16 %v963, %v959
        %v1192 = vpack.c.b16 %v968, %v964
        %v1193 = vpack.c.b16 %v969, %v965
        %v1194 = vpack.c.b16 %v970, %v966
        %v1195 = vpack.c.b16 %v971, %v967
        %v1196 = vpack.c.b16 %v976, %v972
        %v1197 = vpack.c.b16 %v977, %v973
        %v1198 = vpack.c.b16 %v978, %v974
        %v1199 = vpack.c.b16 %v979, %v975
        %v1200 = vpack.c.b16 %v984, %v980
        %v1201 = vpack.c.b16 %v985, %v981
        %v1202 = vpack.c.b16 %v986, %v982
        %v1203 = vpack.c.b16 %v987, %v983
        %v1204 = vpack.c.b16 %v992, %v988
        %v1205 = vpack.c.b16 %v993, %v989
        %v1206 = vpack.c.b16 %v994, %v990
        %v1207 = vpack.c.b16 %v995, %v991
        %v1208 = vpack.c.b16 %v1000, %v996
        %v1209 = vpack.c.b16 %v1001, %v997
        %v1210 = vpack.c.b16 %v1002, %v998
        %v1211 = vpack.c.b16 %v1003, %v999
        %v1212 = vpack.c.b16 %v1008, %v1004
        %v1213 = vpack.c.b16 %v1009, %v1005
        %v1214 = vpack.c.b16 %v1010, %v1006
        %v1215 = vpack.c.b16 %v1011, %v1007
        %v1216 = vpack.c.b16 %v1016, %v1012
        %v1217 = vpack.c.b16 %v1017, %v1013
        %v1218 = vpack.c.b16 %v1018, %v1014
        %v1219 = vpack.c.b16 %v1019, %v1015
        %v1220 = vpack.c.b16 %v1024, %v1020
        %v1221 = vpack.c.b16 %v1025, %v1021
        %v1222 = vpack.c.b16 %v1026, %v1022
        %v1223 = vpack.c.b16 %v1027, %v1023
        %v1224 = vpack.c.b16 %v1032, %v1028
        %v1225 = vpack.c.b16 %v1033, %v1029
        %v1226 = vpack.c.b16 %v1034, %v1030
        %v1227 = vpack.c.b16 %v1035, %v1031
        %v1228 = vpack.c.b16 %v1040, %v1036
        %v1229 = vpack.c.b16 %v1041, %v1037
        %v1230 = vpack.c.b16 %v1042, %v1038
        %v1231 = vpack.c.b16 %v1043, %v1039
        %v1232 = vpack.c.b16 %v1048, %v1044
        %v1233 = vpack.c.b16 %v1049, %v1045
        %v1234 = vpack.c.b16 %v1050, %v1046
        %v1235 = vpack.c.b16 %v1051, %v1047
        %v1236 = vpack.c.b16 %v1056, %v1052
        %v1237 = vpack.c.b16 %v1057, %v1053
        %v1238 = vpack.c.b16 %v1058, %v1054
        %v1239 = vpack.c.b16 %v1059, %v1055
        %v1240 = vpack.c.b16 %v1064, %v1060
        %v1241 = vpack.c.b16 %v1065, %v1061
        %v1242 = vpack.c.b16 %v1066, %v1062
        %v1243 = vpack.c.b16 %v1067, %v1063
        %v1244 = vpack.c.b16 %v1072, %v1068
        %v1245 = vpack.c.b16 %v1073, %v1069
        %v1246 = vpack.c.b16 %v1074, %v1070
        %v1247 = vpack.c.b16 %v1075, %v1071
        %v1248 = vpack.c.b16 %v1080, %v1076
        %v1249 = vpack.c.b16 %v1081, %v1077
        %v1250 = vpack.c.b16 %v1082, %v1078
        %v1251 = vpack.c.b16 %v1083, %v1079
        %v1252 = vpack.c.b16 %v1088, %v1084
        %v1253 = vpack.c.b16 %v1089, %v1085
        %v1254 = vpack.c.b16 %v1090, %v1086
        %v1255 = vpack.c.b16 %v1091, %v1087
        %v1256 = vpack.c.b16 %v1096, %v1092
        %v1257 = vpack.c.b16 %v1097, %v1093
        %v1258 = vpack.c.b16 %v1098, %v1094
        %v1259 = vpack.c.b16 %v1099, %v1095
        %v1260 = vpack.c.b16 %v1104, %v1100
        %v1261 = vpack.c.b16 %v1105, %v1101
        %v1262 = vpack.c.b16 %v1106, %v1102
        %v1263 = vpack.c.b16 %v1107, %v1103
        %v1264 = vpack.c.b16 %v1112, %v1108
        %v1265 = vpack.c.b16 %v1113, %v1109
        %v1266 = vpack.c.b16 %v1114, %v1110
        %v1267 = vpack.c.b16 %v1115, %v1111
        %v1268 = vpack.c.b16 %v1120, %v1116
        %v1269 = vpack.c.b16 %v1121, %v1117
        %v1270 = vpack.c.b16 %v1122, %v1118
        %v1271 = vpack.c.b16 %v1123, %v1119
        %v1272 = vpack.c.b16 %v1128, %v1124
        %v1273 = vpack.c.b16 %v1129, %v1125
        %v1274 = vpack.c.b16 %v1130, %v1126
        %v1275 = vpack.c.b16 %v1131, %v1127
        %v1276 = vpack.c.b16 %v1136, %v1132
        %v1277 = vpack.c.b16 %v1137, %v1133
        %v1278 = vpack.c.b16 %v1138, %v1134
        %v1279 = vpack.c.b16 %v1139, %v1135
        %v1280 = vpack.c.b16 %v1144, %v1140
        %v1281 = vpack.c.b16 %v1145, %v1141
        %v1282 = vpack.c.b16 %v1146, %v1142
        %v1283 = vpack.c.b16 %v1147, %v1143
        %v1284 = vpack.c.b16 %v1152, %v1148
        %v1285 = vpack.c.b16 %v1153, %v1149
        %v1286 = vpack.c.b16 %v1154, %v1150
        %v1287 = vpack.c.b16 %v1155, %v1151
        %v1288 = vpack.c.b16 %v1160, %v1156
        %v1289 = vpack.c.b16 %v1161, %v1157
        %v1290 = vpack.c.b16 %v1162, %v1158
        %v1291 = vpack.c.b16 %v1163, %v1159
        %1420 = vmatprep.subr.bf16.mxu0 %v1193
        %1421 = vmatpush1.bf16.msra.mxu0 %v1192
        %1422 = vmatprep.subr.bf16.mxu0 %v1189
        %1423 = vmatpush1.bf16.msra.mxu0 %v1188
        %1424 = vmatprep.subr.bf16.mxu0 %v1185
        %1425 = vmatpush1.bf16.msra.mxu0 %v1184
        %1426 = vmatprep.subr.bf16.mxu0 %v1181
        %1427 = vmatpush1.bf16.msra.mxu0 %v1180
        %1428 = vmatprep.subr.bf16.mxu0 %v1177
        %1429 = vmatpush1.bf16.msra.mxu0 %v1176
        %1430 = vmatprep.subr.bf16.mxu0 %v1173
        %1431 = vmatpush1.bf16.msra.mxu0 %v1172
        %1432 = vmatprep.subr.bf16.mxu0 %v1169
        %1433 = vmatpush1.bf16.msra.mxu0 %v1168
        %1434 = vmatprep.subr.bf16.mxu0 %v1165
        %1435 = vmatpush1.bf16.msra.mxu0 %v1164
        %1436 = vmatprep.subr.bf16.mxu0 %v1225
        %1437 = vmatpush2.bf16.msra.mxu0 %v1224
        %1438 = vmatprep.subr.bf16.mxu0 %v1221
        %1439 = vmatpush2.bf16.msra.mxu0 %v1220
        %1440 = vmatprep.subr.bf16.mxu0 %v1217
        %1441 = vmatpush2.bf16.msra.mxu0 %v1216
        %1442 = vmatprep.subr.bf16.mxu0 %v1213
        %1443 = vmatpush2.bf16.msra.mxu0 %v1212
        %1444 = vmatprep.subr.bf16.mxu0 %v1209
        %1445 = vmatpush2.bf16.msra.mxu0 %v1208
        %1446 = vmatprep.subr.bf16.mxu0 %v1205
        %1447 = vmatpush2.bf16.msra.mxu0 %v1204
        %1448 = vmatprep.subr.bf16.mxu0 %v1201
        %1449 = vmatpush2.bf16.msra.mxu0 %v1200
        %1450 = vmatprep.subr.bf16.mxu0 %v1197
        %1451 = vmatpush2.bf16.msra.mxu0 %v1196
        %1452 = vmatprep.mubr.bf16.mxu0 %v627
        %1453 = vmatmul.mubr.bf16.gmra.mxu0 %v626
        %v1454 = vpop.f32.mrf.mxu0
        %v1455 = vadd.f32 %v763, %v1454
        %v1456 = vpop.f32.mrf.mxu0
        %v1457 = vadd.f32 %v767, %v1456
        %v1458 = vpop.f32.mrf.mxu0
        %v1459 = vpop.f32.mrf.mxu0
        %1460 = vdwg.mxu0
        %1461 = vmatprep.subr.bf16.mxu0 %v1257
        %1462 = vmatpush1.bf16.msra.mxu0 %v1256
        %1463 = vmatprep.subr.bf16.mxu0 %v1253
        %1464 = vmatpush1.bf16.msra.mxu0 %v1252
        %1465 = vmatprep.subr.bf16.mxu0 %v1249
        %1466 = vmatpush1.bf16.msra.mxu0 %v1248
        %1467 = vmatprep.subr.bf16.mxu0 %v1245
        %1468 = vmatpush1.bf16.msra.mxu0 %v1244
        %1469 = vmatprep.subr.bf16.mxu0 %v1241
        %1470 = vmatpush1.bf16.msra.mxu0 %v1240
        %1471 = vmatprep.subr.bf16.mxu0 %v1237
        %1472 = vmatpush1.bf16.msra.mxu0 %v1236
        %1473 = vmatprep.subr.bf16.mxu0 %v1233
        %1474 = vmatpush1.bf16.msra.mxu0 %v1232
        %1475 = vmatprep.subr.bf16.mxu0 %v1229
        %1476 = vmatpush1.bf16.msra.mxu0 %v1228
        %1477 = vmatprep.subr.bf16.mxu0 %v1289
        %1478 = vmatpush2.bf16.msra.mxu0 %v1288
        %1479 = vmatprep.subr.bf16.mxu0 %v1285
        %1480 = vmatpush2.bf16.msra.mxu0 %v1284
        %1481 = vmatprep.subr.bf16.mxu0 %v1281
        %1482 = vmatpush2.bf16.msra.mxu0 %v1280
        %1483 = vmatprep.subr.bf16.mxu0 %v1277
        %1484 = vmatpush2.bf16.msra.mxu0 %v1276
        %1485 = vmatprep.subr.bf16.mxu0 %v1273
        %1486 = vmatpush2.bf16.msra.mxu0 %v1272
        %1487 = vmatprep.subr.bf16.mxu0 %v1269
        %1488 = vmatpush2.bf16.msra.mxu0 %v1268
        %1489 = vmatprep.subr.bf16.mxu0 %v1265
        %1490 = vmatpush2.bf16.msra.mxu0 %v1264
        %1491 = vmatprep.subr.bf16.mxu0 %v1261
        %1492 = vmatpush2.bf16.msra.mxu0 %v1260
        %1493 = vmatprep.mubr.bf16.mxu0 %v629
        %1494 = vmatmul.mubr.bf16.gmra.mxu0 %v628
        %v1495 = vpop.f32.mrf.mxu0
        %v1496 = vadd.f32 %v1455, %v1495
        %v1497 = vpop.f32.mrf.mxu0
        %v1498 = vadd.f32 %v1457, %v1497
        %v1499 = vpop.f32.mrf.mxu0
        %v1500 = vpop.f32.mrf.mxu0
        %1501 = vdwg.mxu0
        %1502 = vmatprep.subr.bf16.mxu0 %v1195
        %1503 = vmatpush1.bf16.msra.mxu0 %v1194
        %1504 = vmatprep.subr.bf16.mxu0 %v1191
        %1505 = vmatpush1.bf16.msra.mxu0 %v1190
        %1506 = vmatprep.subr.bf16.mxu0 %v1187
        %1507 = vmatpush1.bf16.msra.mxu0 %v1186
        %1508 = vmatprep.subr.bf16.mxu0 %v1183
        %1509 = vmatpush1.bf16.msra.mxu0 %v1182
        %1510 = vmatprep.subr.bf16.mxu0 %v1179
        %1511 = vmatpush1.bf16.msra.mxu0 %v1178
        %1512 = vmatprep.subr.bf16.mxu0 %v1175
        %1513 = vmatpush1.bf16.msra.mxu0 %v1174
        %1514 = vmatprep.subr.bf16.mxu0 %v1171
        %1515 = vmatpush1.bf16.msra.mxu0 %v1170
        %1516 = vmatprep.subr.bf16.mxu0 %v1167
        %1517 = vmatpush1.bf16.msra.mxu0 %v1166
        %1518 = vmatprep.subr.bf16.mxu0 %v1227
        %1519 = vmatpush2.bf16.msra.mxu0 %v1226
        %1520 = vmatprep.subr.bf16.mxu0 %v1223
        %1521 = vmatpush2.bf16.msra.mxu0 %v1222
        %1522 = vmatprep.subr.bf16.mxu0 %v1219
        %1523 = vmatpush2.bf16.msra.mxu0 %v1218
        %1524 = vmatprep.subr.bf16.mxu0 %v1215
        %1525 = vmatpush2.bf16.msra.mxu0 %v1214
        %1526 = vmatprep.subr.bf16.mxu0 %v1211
        %1527 = vmatpush2.bf16.msra.mxu0 %v1210
        %1528 = vmatprep.subr.bf16.mxu0 %v1207
        %1529 = vmatpush2.bf16.msra.mxu0 %v1206
        %1530 = vmatprep.subr.bf16.mxu0 %v1203
        %1531 = vmatpush2.bf16.msra.mxu0 %v1202
        %1532 = vmatprep.subr.bf16.mxu0 %v1199
        %1533 = vmatpush2.bf16.msra.mxu0 %v1198
        %1534 = vmatprep.mubr.bf16.mxu0 %v627
        %1535 = vmatmul.mubr.bf16.gmra.mxu0 %v626
        %v1536 = vpop.f32.mrf.mxu0
        %v1537 = vadd.f32 %v771, %v1536
        %v1538 = vpop.f32.mrf.mxu0
        %v1539 = vadd.f32 %v775, %v1538
        %v1540 = vpop.f32.mrf.mxu0
        %v1541 = vpop.f32.mrf.mxu0
        %1542 = vdwg.mxu0
        %1543 = vmatprep.subr.bf16.mxu0 %v1259
        %1544 = vmatpush1.bf16.msra.mxu0 %v1258
        %1545 = vmatprep.subr.bf16.mxu0 %v1255
        %1546 = vmatpush1.bf16.msra.mxu0 %v1254
        %1547 = vmatprep.subr.bf16.mxu0 %v1251
        %1548 = vmatpush1.bf16.msra.mxu0 %v1250
        %1549 = vmatprep.subr.bf16.mxu0 %v1247
        %1550 = vmatpush1.bf16.msra.mxu0 %v1246
        %1551 = vmatprep.subr.bf16.mxu0 %v1243
        %1552 = vmatpush1.bf16.msra.mxu0 %v1242
        %1553 = vmatprep.subr.bf16.mxu0 %v1239
        %1554 = vmatpush1.bf16.msra.mxu0 %v1238
        %1555 = vmatprep.subr.bf16.mxu0 %v1235
        %1556 = vmatpush1.bf16.msra.mxu0 %v1234
        %1557 = vmatprep.subr.bf16.mxu0 %v1231
        %1558 = vmatpush1.bf16.msra.mxu0 %v1230
        %1559 = vmatprep.subr.bf16.mxu0 %v1291
        %1560 = vmatpush2.bf16.msra.mxu0 %v1290
        %1561 = vmatprep.subr.bf16.mxu0 %v1287
        %1562 = vmatpush2.bf16.msra.mxu0 %v1286
        %1563 = vmatprep.subr.bf16.mxu0 %v1283
        %1564 = vmatpush2.bf16.msra.mxu0 %v1282
        %1565 = vmatprep.subr.bf16.mxu0 %v1279
        %1566 = vmatpush2.bf16.msra.mxu0 %v1278
        %1567 = vmatprep.subr.bf16.mxu0 %v1275
        %1568 = vmatpush2.bf16.msra.mxu0 %v1274
        %1569 = vmatprep.subr.bf16.mxu0 %v1271
        %1570 = vmatpush2.bf16.msra.mxu0 %v1270
        %1571 = vmatprep.subr.bf16.mxu0 %v1267
        %1572 = vmatpush2.bf16.msra.mxu0 %v1266
        %1573 = vmatprep.subr.bf16.mxu0 %v1263
        %1574 = vmatpush2.bf16.msra.mxu0 %v1262
        %1575 = vmatprep.mubr.bf16.mxu0 %v629
        %1576 = vmatmul.mubr.bf16.gmra.mxu0 %v628
        %v1577 = vpop.f32.mrf.mxu0
        %v1578 = vadd.f32 %v1537, %v1577
        %v1579 = vpop.f32.mrf.mxu0
        %v1580 = vadd.f32 %v1539, %v1579
        %v1581 = vpop.f32.mrf.mxu0
        %v1582 = vpop.f32.mrf.mxu0
        %1583 = vdwg.mxu0
        %v1584 = vtanh.pop %v1496
        %v1585 = vtanh.pop %v1498
        %v1586 = vtanh.pop %v1578
        %v1587 = vtanh.pop %v1580
        %v1588 = vpack.c.bf16 %v1584, %v1584
        %v1589 = vpack.c.bf16 %v1585, %v1585
        %v1590 = vpack.c.bf16 %v1586, %v1586
        %v1591 = vpack.c.bf16 %v1587, %v1587
        %s1592 = scalar_lea.vmem %s384, 1024 [#allocation8]
        %v1593 = vld [vmem:[%s1592] sm:$0xff]
        %v1594 = vld [vmem:[%s1592 + $0x8] sm:$0xff]
        %v1595 = vld [vmem:[%s1592 + $0x10] sm:$0xff]
        %v1596 = vld [vmem:[%s1592 + $0x18] sm:$0xff]
        %v1597 = vld [vmem:[%s1592 + $0x20] sm:$0xff]
        %v1598 = vld [vmem:[%s1592 + $0x28] sm:$0xff]
        %v1599 = vld [vmem:[%s1592 + $0x30] sm:$0xff]
        %v1600 = vld [vmem:[%s1592 + $0x38] sm:$0xff]
        %v1601 = vld [vmem:[%s1592 + $0x40] sm:$0xff]
        %v1602 = vld [vmem:[%s1592 + $0x48] sm:$0xff]
        %v1603 = vld [vmem:[%s1592 + $0x50] sm:$0xff]
        %v1604 = vld [vmem:[%s1592 + $0x58] sm:$0xff]
        %v1605 = vld [vmem:[%s1592 + $0x60] sm:$0xff]
        %v1606 = vld [vmem:[%s1592 + $0x68] sm:$0xff]
        %v1607 = vld [vmem:[%s1592 + $0x70] sm:$0xff]
        %v1608 = vld [vmem:[%s1592 + $0x78] sm:$0xff]
        %v1609 = vld [vmem:[%s1592 + $0x80] sm:$0xff]
        %v1610 = vld [vmem:[%s1592 + $0x88] sm:$0xff]
        %v1611 = vld [vmem:[%s1592 + $0x90] sm:$0xff]
        %v1612 = vld [vmem:[%s1592 + $0x98] sm:$0xff]
        %v1613 = vld [vmem:[%s1592 + $0xa0] sm:$0xff]
        %v1614 = vld [vmem:[%s1592 + $0xa8] sm:$0xff]
        %v1615 = vld [vmem:[%s1592 + $0xb0] sm:$0xff]
        %v1616 = vld [vmem:[%s1592 + $0xb8] sm:$0xff]
        %v1617 = vld [vmem:[%s1592 + $0xc0] sm:$0xff]
        %v1618 = vld [vmem:[%s1592 + $0xc8] sm:$0xff]
        %v1619 = vld [vmem:[%s1592 + $0xd0] sm:$0xff]
        %v1620 = vld [vmem:[%s1592 + $0xd8] sm:$0xff]
        %v1621 = vld [vmem:[%s1592 + $0xe0] sm:$0xff]
        %v1622 = vld [vmem:[%s1592 + $0xe8] sm:$0xff]
        %v1623 = vld [vmem:[%s1592 + $0xf0] sm:$0xff]
        %v1624 = vld [vmem:[%s1592 + $0xf8] sm:$0xff]
        %v1625 = vld [vmem:[%s1592 + $0x100] sm:$0xff]
        %v1626 = vld [vmem:[%s1592 + $0x108] sm:$0xff]
        %v1627 = vld [vmem:[%s1592 + $0x110] sm:$0xff]
        %v1628 = vld [vmem:[%s1592 + $0x118] sm:$0xff]
        %v1629 = vld [vmem:[%s1592 + $0x120] sm:$0xff]
        %v1630 = vld [vmem:[%s1592 + $0x128] sm:$0xff]
        %v1631 = vld [vmem:[%s1592 + $0x130] sm:$0xff]
        %v1632 = vld [vmem:[%s1592 + $0x138] sm:$0xff]
        %v1633 = vld [vmem:[%s1592 + $0x140] sm:$0xff]
        %v1634 = vld [vmem:[%s1592 + $0x148] sm:$0xff]
        %v1635 = vld [vmem:[%s1592 + $0x150] sm:$0xff]
        %v1636 = vld [vmem:[%s1592 + $0x158] sm:$0xff]
        %v1637 = vld [vmem:[%s1592 + $0x160] sm:$0xff]
        %v1638 = vld [vmem:[%s1592 + $0x168] sm:$0xff]
        %v1639 = vld [vmem:[%s1592 + $0x170] sm:$0xff]
        %v1640 = vld [vmem:[%s1592 + $0x178] sm:$0xff]
        %v1641 = vld [vmem:[%s1592 + $0x180] sm:$0xff]
        %v1642 = vld [vmem:[%s1592 + $0x188] sm:$0xff]
        %v1643 = vld [vmem:[%s1592 + $0x190] sm:$0xff]
        %v1644 = vld [vmem:[%s1592 + $0x198] sm:$0xff]
        %v1645 = vld [vmem:[%s1592 + $0x1a0] sm:$0xff]
        %v1646 = vld [vmem:[%s1592 + $0x1a8] sm:$0xff]
        %v1647 = vld [vmem:[%s1592 + $0x1b0] sm:$0xff]
        %v1648 = vld [vmem:[%s1592 + $0x1b8] sm:$0xff]
        %v1649 = vld [vmem:[%s1592 + $0x1c0] sm:$0xff]
        %v1650 = vld [vmem:[%s1592 + $0x1c8] sm:$0xff]
        %v1651 = vld [vmem:[%s1592 + $0x1d0] sm:$0xff]
        %v1652 = vld [vmem:[%s1592 + $0x1d8] sm:$0xff]
        %v1653 = vld [vmem:[%s1592 + $0x1e0] sm:$0xff]
        %v1654 = vld [vmem:[%s1592 + $0x1e8] sm:$0xff]
        %v1655 = vld [vmem:[%s1592 + $0x1f0] sm:$0xff]
        %v1656 = vld [vmem:[%s1592 + $0x1f8] sm:$0xff]
        %v1657 = vld [vmem:[%s1592 + $0x200] sm:$0xff]
        %v1658 = vld [vmem:[%s1592 + $0x208] sm:$0xff]
        %v1659 = vld [vmem:[%s1592 + $0x210] sm:$0xff]
        %v1660 = vld [vmem:[%s1592 + $0x218] sm:$0xff]
        %v1661 = vld [vmem:[%s1592 + $0x220] sm:$0xff]
        %v1662 = vld [vmem:[%s1592 + $0x228] sm:$0xff]
        %v1663 = vld [vmem:[%s1592 + $0x230] sm:$0xff]
        %v1664 = vld [vmem:[%s1592 + $0x238] sm:$0xff]
        %v1665 = vld [vmem:[%s1592 + $0x240] sm:$0xff]
        %v1666 = vld [vmem:[%s1592 + $0x248] sm:$0xff]
        %v1667 = vld [vmem:[%s1592 + $0x250] sm:$0xff]
        %v1668 = vld [vmem:[%s1592 + $0x258] sm:$0xff]
        %v1669 = vld [vmem:[%s1592 + $0x260] sm:$0xff]
        %v1670 = vld [vmem:[%s1592 + $0x268] sm:$0xff]
        %v1671 = vld [vmem:[%s1592 + $0x270] sm:$0xff]
        %v1672 = vld [vmem:[%s1592 + $0x278] sm:$0xff]
        %v1673 = vld [vmem:[%s1592 + $0x280] sm:$0xff]
        %v1674 = vld [vmem:[%s1592 + $0x288] sm:$0xff]
        %v1675 = vld [vmem:[%s1592 + $0x290] sm:$0xff]
        %v1676 = vld [vmem:[%s1592 + $0x298] sm:$0xff]
        %v1677 = vld [vmem:[%s1592 + $0x2a0] sm:$0xff]
        %v1678 = vld [vmem:[%s1592 + $0x2a8] sm:$0xff]
        %v1679 = vld [vmem:[%s1592 + $0x2b0] sm:$0xff]
        %v1680 = vld [vmem:[%s1592 + $0x2b8] sm:$0xff]
        %v1681 = vld [vmem:[%s1592 + $0x2c0] sm:$0xff]
        %v1682 = vld [vmem:[%s1592 + $0x2c8] sm:$0xff]
        %v1683 = vld [vmem:[%s1592 + $0x2d0] sm:$0xff]
        %v1684 = vld [vmem:[%s1592 + $0x2d8] sm:$0xff]
        %v1685 = vld [vmem:[%s1592 + $0x2e0] sm:$0xff]
        %v1686 = vld [vmem:[%s1592 + $0x2e8] sm:$0xff]
        %v1687 = vld [vmem:[%s1592 + $0x2f0] sm:$0xff]
        %v1688 = vld [vmem:[%s1592 + $0x2f8] sm:$0xff]
        %v1689 = vld [vmem:[%s1592 + $0x300] sm:$0xff]
        %v1690 = vld [vmem:[%s1592 + $0x308] sm:$0xff]
        %v1691 = vld [vmem:[%s1592 + $0x310] sm:$0xff]
        %v1692 = vld [vmem:[%s1592 + $0x318] sm:$0xff]
        %v1693 = vld [vmem:[%s1592 + $0x320] sm:$0xff]
        %v1694 = vld [vmem:[%s1592 + $0x328] sm:$0xff]
        %v1695 = vld [vmem:[%s1592 + $0x330] sm:$0xff]
        %v1696 = vld [vmem:[%s1592 + $0x338] sm:$0xff]
        %v1697 = vld [vmem:[%s1592 + $0x340] sm:$0xff]
        %v1698 = vld [vmem:[%s1592 + $0x348] sm:$0xff]
        %v1699 = vld [vmem:[%s1592 + $0x350] sm:$0xff]
        %v1700 = vld [vmem:[%s1592 + $0x358] sm:$0xff]
        %v1701 = vld [vmem:[%s1592 + $0x360] sm:$0xff]
        %v1702 = vld [vmem:[%s1592 + $0x368] sm:$0xff]
        %v1703 = vld [vmem:[%s1592 + $0x370] sm:$0xff]
        %v1704 = vld [vmem:[%s1592 + $0x378] sm:$0xff]
        %v1705 = vld [vmem:[%s1592 + $0x380] sm:$0xff]
        %v1706 = vld [vmem:[%s1592 + $0x388] sm:$0xff]
        %v1707 = vld [vmem:[%s1592 + $0x390] sm:$0xff]
        %v1708 = vld [vmem:[%s1592 + $0x398] sm:$0xff]
        %v1709 = vld [vmem:[%s1592 + $0x3a0] sm:$0xff]
        %v1710 = vld [vmem:[%s1592 + $0x3a8] sm:$0xff]
        %v1711 = vld [vmem:[%s1592 + $0x3b0] sm:$0xff]
        %v1712 = vld [vmem:[%s1592 + $0x3b8] sm:$0xff]
        %v1713 = vld [vmem:[%s1592 + $0x3c0] sm:$0xff]
        %v1714 = vld [vmem:[%s1592 + $0x3c8] sm:$0xff]
        %v1715 = vld [vmem:[%s1592 + $0x3d0] sm:$0xff]
        %v1716 = vld [vmem:[%s1592 + $0x3d8] sm:$0xff]
        %v1717 = vld [vmem:[%s1592 + $0x3e0] sm:$0xff]
        %v1718 = vld [vmem:[%s1592 + $0x3e8] sm:$0xff]
        %v1719 = vld [vmem:[%s1592 + $0x3f0] sm:$0xff]
        %v1720 = vld [vmem:[%s1592 + $0x3f8] sm:$0xff]
        %s1721 = scalar_lea.vmem %s436, 1
        %v1722 = vld [vmem:[%s1721] ss:$8 sm:$0xf]
        %v1724 = vlaneseq
        %v1725 = vshrl.u32 %v1724, 7
        %v1726 = vsub.s32 0, %v1725
        %v1727 = vrot.slane %v1722, %v1726
        %v1728 = vlaneseq
        %v1729 = vshrl.u32 %v1728, 7
        %v1730 = vsub.s32 1, %v1729
        %v1731 = vrot.slane %v1722, %v1730
        %v1732 = vlaneseq
        %v1733 = vshrl.u32 %v1732, 7
        %v1734 = vsub.s32 2, %v1733
        %v1735 = vrot.slane %v1722, %v1734
        %v1736 = vlaneseq
        %v1737 = vshrl.u32 %v1736, 7
        %v1738 = vsub.s32 3, %v1737
        %v1739 = vrot.slane %v1722, %v1738
        %v1872 = vunpack.c.l.b16 %v1593
        %v1873 = vunpack.c.h.b16 %v1593
        %v1874 = vunpack.c.l.b16 %v1594
        %v1875 = vunpack.c.h.b16 %v1594
        %v1876 = vunpack.c.l.b16 %v1595
        %v1877 = vunpack.c.h.b16 %v1595
        %v1878 = vunpack.c.l.b16 %v1596
        %v1879 = vunpack.c.h.b16 %v1596
        %v1880 = vunpack.c.l.b16 %v1597
        %v1881 = vunpack.c.h.b16 %v1597
        %v1882 = vunpack.c.l.b16 %v1598
        %v1883 = vunpack.c.h.b16 %v1598
        %v1884 = vunpack.c.l.b16 %v1599
        %v1885 = vunpack.c.h.b16 %v1599
        %v1886 = vunpack.c.l.b16 %v1600
        %v1887 = vunpack.c.h.b16 %v1600
        %v1888 = vunpack.c.l.b16 %v1601
        %v1889 = vunpack.c.h.b16 %v1601
        %v1890 = vunpack.c.l.b16 %v1602
        %v1891 = vunpack.c.h.b16 %v1602
        %v1892 = vunpack.c.l.b16 %v1603
        %v1893 = vunpack.c.h.b16 %v1603
        %v1894 = vunpack.c.l.b16 %v1604
        %v1895 = vunpack.c.h.b16 %v1604
        %v1896 = vunpack.c.l.b16 %v1605
        %v1897 = vunpack.c.h.b16 %v1605
        %v1898 = vunpack.c.l.b16 %v1606
        %v1899 = vunpack.c.h.b16 %v1606
        %v1900 = vunpack.c.l.b16 %v1607
        %v1901 = vunpack.c.h.b16 %v1607
        %v1902 = vunpack.c.l.b16 %v1608
        %v1903 = vunpack.c.h.b16 %v1608
        %v1904 = vunpack.c.l.b16 %v1609
        %v1905 = vunpack.c.h.b16 %v1609
        %v1906 = vunpack.c.l.b16 %v1610
        %v1907 = vunpack.c.h.b16 %v1610
        %v1908 = vunpack.c.l.b16 %v1611
        %v1909 = vunpack.c.h.b16 %v1611
        %v1910 = vunpack.c.l.b16 %v1612
        %v1911 = vunpack.c.h.b16 %v1612
        %v1912 = vunpack.c.l.b16 %v1613
        %v1913 = vunpack.c.h.b16 %v1613
        %v1914 = vunpack.c.l.b16 %v1614
        %v1915 = vunpack.c.h.b16 %v1614
        %v1916 = vunpack.c.l.b16 %v1615
        %v1917 = vunpack.c.h.b16 %v1615
        %v1918 = vunpack.c.l.b16 %v1616
        %v1919 = vunpack.c.h.b16 %v1616
        %v1920 = vunpack.c.l.b16 %v1617
        %v1921 = vunpack.c.h.b16 %v1617
        %v1922 = vunpack.c.l.b16 %v1618
        %v1923 = vunpack.c.h.b16 %v1618
        %v1924 = vunpack.c.l.b16 %v1619
        %v1925 = vunpack.c.h.b16 %v1619
        %v1926 = vunpack.c.l.b16 %v1620
        %v1927 = vunpack.c.h.b16 %v1620
        %v1928 = vunpack.c.l.b16 %v1621
        %v1929 = vunpack.c.h.b16 %v1621
        %v1930 = vunpack.c.l.b16 %v1622
        %v1931 = vunpack.c.h.b16 %v1622
        %v1932 = vunpack.c.l.b16 %v1623
        %v1933 = vunpack.c.h.b16 %v1623
        %v1934 = vunpack.c.l.b16 %v1624
        %v1935 = vunpack.c.h.b16 %v1624
        %v1936 = vunpack.c.l.b16 %v1625
        %v1937 = vunpack.c.h.b16 %v1625
        %v1938 = vunpack.c.l.b16 %v1626
        %v1939 = vunpack.c.h.b16 %v1626
        %v1940 = vunpack.c.l.b16 %v1627
        %v1941 = vunpack.c.h.b16 %v1627
        %v1942 = vunpack.c.l.b16 %v1628
        %v1943 = vunpack.c.h.b16 %v1628
        %v1944 = vunpack.c.l.b16 %v1629
        %v1945 = vunpack.c.h.b16 %v1629
        %v1946 = vunpack.c.l.b16 %v1630
        %v1947 = vunpack.c.h.b16 %v1630
        %v1948 = vunpack.c.l.b16 %v1631
        %v1949 = vunpack.c.h.b16 %v1631
        %v1950 = vunpack.c.l.b16 %v1632
        %v1951 = vunpack.c.h.b16 %v1632
        %v1952 = vunpack.c.l.b16 %v1633
        %v1953 = vunpack.c.h.b16 %v1633
        %v1954 = vunpack.c.l.b16 %v1634
        %v1955 = vunpack.c.h.b16 %v1634
        %v1956 = vunpack.c.l.b16 %v1635
        %v1957 = vunpack.c.h.b16 %v1635
        %v1958 = vunpack.c.l.b16 %v1636
        %v1959 = vunpack.c.h.b16 %v1636
        %v1960 = vunpack.c.l.b16 %v1637
        %v1961 = vunpack.c.h.b16 %v1637
        %v1962 = vunpack.c.l.b16 %v1638
        %v1963 = vunpack.c.h.b16 %v1638
        %v1964 = vunpack.c.l.b16 %v1639
        %v1965 = vunpack.c.h.b16 %v1639
        %v1966 = vunpack.c.l.b16 %v1640
        %v1967 = vunpack.c.h.b16 %v1640
        %v1968 = vunpack.c.l.b16 %v1641
        %v1969 = vunpack.c.h.b16 %v1641
        %v1970 = vunpack.c.l.b16 %v1642
        %v1971 = vunpack.c.h.b16 %v1642
        %v1972 = vunpack.c.l.b16 %v1643
        %v1973 = vunpack.c.h.b16 %v1643
        %v1974 = vunpack.c.l.b16 %v1644
        %v1975 = vunpack.c.h.b16 %v1644
        %v1976 = vunpack.c.l.b16 %v1645
        %v1977 = vunpack.c.h.b16 %v1645
        %v1978 = vunpack.c.l.b16 %v1646
        %v1979 = vunpack.c.h.b16 %v1646
        %v1980 = vunpack.c.l.b16 %v1647
        %v1981 = vunpack.c.h.b16 %v1647
        %v1982 = vunpack.c.l.b16 %v1648
        %v1983 = vunpack.c.h.b16 %v1648
        %v1984 = vunpack.c.l.b16 %v1649
        %v1985 = vunpack.c.h.b16 %v1649
        %v1986 = vunpack.c.l.b16 %v1650
        %v1987 = vunpack.c.h.b16 %v1650
        %v1988 = vunpack.c.l.b16 %v1651
        %v1989 = vunpack.c.h.b16 %v1651
        %v1990 = vunpack.c.l.b16 %v1652
        %v1991 = vunpack.c.h.b16 %v1652
        %v1992 = vunpack.c.l.b16 %v1653
        %v1993 = vunpack.c.h.b16 %v1653
        %v1994 = vunpack.c.l.b16 %v1654
        %v1995 = vunpack.c.h.b16 %v1654
        %v1996 = vunpack.c.l.b16 %v1655
        %v1997 = vunpack.c.h.b16 %v1655
        %v1998 = vunpack.c.l.b16 %v1656
        %v1999 = vunpack.c.h.b16 %v1656
        %v2000 = vunpack.c.l.b16 %v1657
        %v2001 = vunpack.c.h.b16 %v1657
        %v2002 = vunpack.c.l.b16 %v1658
        %v2003 = vunpack.c.h.b16 %v1658
        %v2004 = vunpack.c.l.b16 %v1659
        %v2005 = vunpack.c.h.b16 %v1659
        %v2006 = vunpack.c.l.b16 %v1660
        %v2007 = vunpack.c.h.b16 %v1660
        %v2008 = vunpack.c.l.b16 %v1661
        %v2009 = vunpack.c.h.b16 %v1661
        %v2010 = vunpack.c.l.b16 %v1662
        %v2011 = vunpack.c.h.b16 %v1662
        %v2012 = vunpack.c.l.b16 %v1663
        %v2013 = vunpack.c.h.b16 %v1663
        %v2014 = vunpack.c.l.b16 %v1664
        %v2015 = vunpack.c.h.b16 %v1664
        %v2016 = vunpack.c.l.b16 %v1665
        %v2017 = vunpack.c.h.b16 %v1665
        %v2018 = vunpack.c.l.b16 %v1666
        %v2019 = vunpack.c.h.b16 %v1666
        %v2020 = vunpack.c.l.b16 %v1667
        %v2021 = vunpack.c.h.b16 %v1667
        %v2022 = vunpack.c.l.b16 %v1668
        %v2023 = vunpack.c.h.b16 %v1668
        %v2024 = vunpack.c.l.b16 %v1669
        %v2025 = vunpack.c.h.b16 %v1669
        %v2026 = vunpack.c.l.b16 %v1670
        %v2027 = vunpack.c.h.b16 %v1670
        %v2028 = vunpack.c.l.b16 %v1671
        %v2029 = vunpack.c.h.b16 %v1671
        %v2030 = vunpack.c.l.b16 %v1672
        %v2031 = vunpack.c.h.b16 %v1672
        %v2032 = vunpack.c.l.b16 %v1673
        %v2033 = vunpack.c.h.b16 %v1673
        %v2034 = vunpack.c.l.b16 %v1674
        %v2035 = vunpack.c.h.b16 %v1674
        %v2036 = vunpack.c.l.b16 %v1675
        %v2037 = vunpack.c.h.b16 %v1675
        %v2038 = vunpack.c.l.b16 %v1676
        %v2039 = vunpack.c.h.b16 %v1676
        %v2040 = vunpack.c.l.b16 %v1677
        %v2041 = vunpack.c.h.b16 %v1677
        %v2042 = vunpack.c.l.b16 %v1678
        %v2043 = vunpack.c.h.b16 %v1678
        %v2044 = vunpack.c.l.b16 %v1679
        %v2045 = vunpack.c.h.b16 %v1679
        %v2046 = vunpack.c.l.b16 %v1680
        %v2047 = vunpack.c.h.b16 %v1680
        %v2048 = vunpack.c.l.b16 %v1681
        %v2049 = vunpack.c.h.b16 %v1681
        %v2050 = vunpack.c.l.b16 %v1682
        %v2051 = vunpack.c.h.b16 %v1682
        %v2052 = vunpack.c.l.b16 %v1683
        %v2053 = vunpack.c.h.b16 %v1683
        %v2054 = vunpack.c.l.b16 %v1684
        %v2055 = vunpack.c.h.b16 %v1684
        %v2056 = vunpack.c.l.b16 %v1685
        %v2057 = vunpack.c.h.b16 %v1685
        %v2058 = vunpack.c.l.b16 %v1686
        %v2059 = vunpack.c.h.b16 %v1686
        %v2060 = vunpack.c.l.b16 %v1687
        %v2061 = vunpack.c.h.b16 %v1687
        %v2062 = vunpack.c.l.b16 %v1688
        %v2063 = vunpack.c.h.b16 %v1688
        %v2064 = vunpack.c.l.b16 %v1689
        %v2065 = vunpack.c.h.b16 %v1689
        %v2066 = vunpack.c.l.b16 %v1690
        %v2067 = vunpack.c.h.b16 %v1690
        %v2068 = vunpack.c.l.b16 %v1691
        %v2069 = vunpack.c.h.b16 %v1691
        %v2070 = vunpack.c.l.b16 %v1692
        %v2071 = vunpack.c.h.b16 %v1692
        %v2072 = vunpack.c.l.b16 %v1693
        %v2073 = vunpack.c.h.b16 %v1693
        %v2074 = vunpack.c.l.b16 %v1694
        %v2075 = vunpack.c.h.b16 %v1694
        %v2076 = vunpack.c.l.b16 %v1695
        %v2077 = vunpack.c.h.b16 %v1695
        %v2078 = vunpack.c.l.b16 %v1696
        %v2079 = vunpack.c.h.b16 %v1696
        %v2080 = vunpack.c.l.b16 %v1697
        %v2081 = vunpack.c.h.b16 %v1697
        %v2082 = vunpack.c.l.b16 %v1698
        %v2083 = vunpack.c.h.b16 %v1698
        %v2084 = vunpack.c.l.b16 %v1699
        %v2085 = vunpack.c.h.b16 %v1699
        %v2086 = vunpack.c.l.b16 %v1700
        %v2087 = vunpack.c.h.b16 %v1700
        %v2088 = vunpack.c.l.b16 %v1701
        %v2089 = vunpack.c.h.b16 %v1701
        %v2090 = vunpack.c.l.b16 %v1702
        %v2091 = vunpack.c.h.b16 %v1702
        %v2092 = vunpack.c.l.b16 %v1703
        %v2093 = vunpack.c.h.b16 %v1703
        %v2094 = vunpack.c.l.b16 %v1704
        %v2095 = vunpack.c.h.b16 %v1704
        %v2096 = vunpack.c.l.b16 %v1705
        %v2097 = vunpack.c.h.b16 %v1705
        %v2098 = vunpack.c.l.b16 %v1706
        %v2099 = vunpack.c.h.b16 %v1706
        %v2100 = vunpack.c.l.b16 %v1707
        %v2101 = vunpack.c.h.b16 %v1707
        %v2102 = vunpack.c.l.b16 %v1708
        %v2103 = vunpack.c.h.b16 %v1708
        %v2104 = vunpack.c.l.b16 %v1709
        %v2105 = vunpack.c.h.b16 %v1709
        %v2106 = vunpack.c.l.b16 %v1710
        %v2107 = vunpack.c.h.b16 %v1710
        %v2108 = vunpack.c.l.b16 %v1711
        %v2109 = vunpack.c.h.b16 %v1711
        %v2110 = vunpack.c.l.b16 %v1712
        %v2111 = vunpack.c.h.b16 %v1712
        %v2112 = vunpack.c.l.b16 %v1713
        %v2113 = vunpack.c.h.b16 %v1713
        %v2114 = vunpack.c.l.b16 %v1714
        %v2115 = vunpack.c.h.b16 %v1714
        %v2116 = vunpack.c.l.b16 %v1715
        %v2117 = vunpack.c.h.b16 %v1715
        %v2118 = vunpack.c.l.b16 %v1716
        %v2119 = vunpack.c.h.b16 %v1716
        %v2120 = vunpack.c.l.b16 %v1717
        %v2121 = vunpack.c.h.b16 %v1717
        %v2122 = vunpack.c.l.b16 %v1718
        %v2123 = vunpack.c.h.b16 %v1718
        %v2124 = vunpack.c.l.b16 %v1719
        %v2125 = vunpack.c.h.b16 %v1719
        %v2126 = vunpack.c.l.b16 %v1720
        %v2127 = vunpack.c.h.b16 %v1720
        %v2128 = vpack.c.b16 %v1876, %v1872
        %v2129 = vpack.c.b16 %v1877, %v1873
        %v2130 = vpack.c.b16 %v1878, %v1874
        %v2131 = vpack.c.b16 %v1879, %v1875
        %v2132 = vpack.c.b16 %v1884, %v1880
        %v2133 = vpack.c.b16 %v1885, %v1881
        %v2134 = vpack.c.b16 %v1886, %v1882
        %v2135 = vpack.c.b16 %v1887, %v1883
        %v2136 = vpack.c.b16 %v1892, %v1888
        %v2137 = vpack.c.b16 %v1893, %v1889
        %v2138 = vpack.c.b16 %v1894, %v1890
        %v2139 = vpack.c.b16 %v1895, %v1891
        %v2140 = vpack.c.b16 %v1900, %v1896
        %v2141 = vpack.c.b16 %v1901, %v1897
        %v2142 = vpack.c.b16 %v1902, %v1898
        %v2143 = vpack.c.b16 %v1903, %v1899
        %v2144 = vpack.c.b16 %v1908, %v1904
        %v2145 = vpack.c.b16 %v1909, %v1905
        %v2146 = vpack.c.b16 %v1910, %v1906
        %v2147 = vpack.c.b16 %v1911, %v1907
        %v2148 = vpack.c.b16 %v1916, %v1912
        %v2149 = vpack.c.b16 %v1917, %v1913
        %v2150 = vpack.c.b16 %v1918, %v1914
        %v2151 = vpack.c.b16 %v1919, %v1915
        %v2152 = vpack.c.b16 %v1924, %v1920
        %v2153 = vpack.c.b16 %v1925, %v1921
        %v2154 = vpack.c.b16 %v1926, %v1922
        %v2155 = vpack.c.b16 %v1927, %v1923
        %v2156 = vpack.c.b16 %v1932, %v1928
        %v2157 = vpack.c.b16 %v1933, %v1929
        %v2158 = vpack.c.b16 %v1934, %v1930
        %v2159 = vpack.c.b16 %v1935, %v1931
        %v2160 = vpack.c.b16 %v1940, %v1936
        %v2161 = vpack.c.b16 %v1941, %v1937
        %v2162 = vpack.c.b16 %v1942, %v1938
        %v2163 = vpack.c.b16 %v1943, %v1939
        %v2164 = vpack.c.b16 %v1948, %v1944
        %v2165 = vpack.c.b16 %v1949, %v1945
        %v2166 = vpack.c.b16 %v1950, %v1946
        %v2167 = vpack.c.b16 %v1951, %v1947
        %v2168 = vpack.c.b16 %v1956, %v1952
        %v2169 = vpack.c.b16 %v1957, %v1953
        %v2170 = vpack.c.b16 %v1958, %v1954
        %v2171 = vpack.c.b16 %v1959, %v1955
        %v2172 = vpack.c.b16 %v1964, %v1960
        %v2173 = vpack.c.b16 %v1965, %v1961
        %v2174 = vpack.c.b16 %v1966, %v1962
        %v2175 = vpack.c.b16 %v1967, %v1963
        %v2176 = vpack.c.b16 %v1972, %v1968
        %v2177 = vpack.c.b16 %v1973, %v1969
        %v2178 = vpack.c.b16 %v1974, %v1970
        %v2179 = vpack.c.b16 %v1975, %v1971
        %v2180 = vpack.c.b16 %v1980, %v1976
        %v2181 = vpack.c.b16 %v1981, %v1977
        %v2182 = vpack.c.b16 %v1982, %v1978
        %v2183 = vpack.c.b16 %v1983, %v1979
        %v2184 = vpack.c.b16 %v1988, %v1984
        %v2185 = vpack.c.b16 %v1989, %v1985
        %v2186 = vpack.c.b16 %v1990, %v1986
        %v2187 = vpack.c.b16 %v1991, %v1987
        %v2188 = vpack.c.b16 %v1996, %v1992
        %v2189 = vpack.c.b16 %v1997, %v1993
        %v2190 = vpack.c.b16 %v1998, %v1994
        %v2191 = vpack.c.b16 %v1999, %v1995
        %v2192 = vpack.c.b16 %v2004, %v2000
        %v2193 = vpack.c.b16 %v2005, %v2001
        %v2194 = vpack.c.b16 %v2006, %v2002
        %v2195 = vpack.c.b16 %v2007, %v2003
        %v2196 = vpack.c.b16 %v2012, %v2008
        %v2197 = vpack.c.b16 %v2013, %v2009
        %v2198 = vpack.c.b16 %v2014, %v2010
        %v2199 = vpack.c.b16 %v2015, %v2011
        %v2200 = vpack.c.b16 %v2020, %v2016
        %v2201 = vpack.c.b16 %v2021, %v2017
        %v2202 = vpack.c.b16 %v2022, %v2018
        %v2203 = vpack.c.b16 %v2023, %v2019
        %v2204 = vpack.c.b16 %v2028, %v2024
        %v2205 = vpack.c.b16 %v2029, %v2025
        %v2206 = vpack.c.b16 %v2030, %v2026
        %v2207 = vpack.c.b16 %v2031, %v2027
        %v2208 = vpack.c.b16 %v2036, %v2032
        %v2209 = vpack.c.b16 %v2037, %v2033
        %v2210 = vpack.c.b16 %v2038, %v2034
        %v2211 = vpack.c.b16 %v2039, %v2035
        %v2212 = vpack.c.b16 %v2044, %v2040
        %v2213 = vpack.c.b16 %v2045, %v2041
        %v2214 = vpack.c.b16 %v2046, %v2042
        %v2215 = vpack.c.b16 %v2047, %v2043
        %v2216 = vpack.c.b16 %v2052, %v2048
        %v2217 = vpack.c.b16 %v2053, %v2049
        %v2218 = vpack.c.b16 %v2054, %v2050
        %v2219 = vpack.c.b16 %v2055, %v2051
        %v2220 = vpack.c.b16 %v2060, %v2056
        %v2221 = vpack.c.b16 %v2061, %v2057
        %v2222 = vpack.c.b16 %v2062, %v2058
        %v2223 = vpack.c.b16 %v2063, %v2059
        %v2224 = vpack.c.b16 %v2068, %v2064
        %v2225 = vpack.c.b16 %v2069, %v2065
        %v2226 = vpack.c.b16 %v2070, %v2066
        %v2227 = vpack.c.b16 %v2071, %v2067
        %v2228 = vpack.c.b16 %v2076, %v2072
        %v2229 = vpack.c.b16 %v2077, %v2073
        %v2230 = vpack.c.b16 %v2078, %v2074
        %v2231 = vpack.c.b16 %v2079, %v2075
        %v2232 = vpack.c.b16 %v2084, %v2080
        %v2233 = vpack.c.b16 %v2085, %v2081
        %v2234 = vpack.c.b16 %v2086, %v2082
        %v2235 = vpack.c.b16 %v2087, %v2083
        %v2236 = vpack.c.b16 %v2092, %v2088
        %v2237 = vpack.c.b16 %v2093, %v2089
        %v2238 = vpack.c.b16 %v2094, %v2090
        %v2239 = vpack.c.b16 %v2095, %v2091
        %v2240 = vpack.c.b16 %v2100, %v2096
        %v2241 = vpack.c.b16 %v2101, %v2097
        %v2242 = vpack.c.b16 %v2102, %v2098
        %v2243 = vpack.c.b16 %v2103, %v2099
        %v2244 = vpack.c.b16 %v2108, %v2104
        %v2245 = vpack.c.b16 %v2109, %v2105
        %v2246 = vpack.c.b16 %v2110, %v2106
        %v2247 = vpack.c.b16 %v2111, %v2107
        %v2248 = vpack.c.b16 %v2116, %v2112
        %v2249 = vpack.c.b16 %v2117, %v2113
        %v2250 = vpack.c.b16 %v2118, %v2114
        %v2251 = vpack.c.b16 %v2119, %v2115
        %v2252 = vpack.c.b16 %v2124, %v2120
        %v2253 = vpack.c.b16 %v2125, %v2121
        %v2254 = vpack.c.b16 %v2126, %v2122
        %v2255 = vpack.c.b16 %v2127, %v2123
        %2384 = vmatprep.subr.bf16.mxu0 %v2157
        %2385 = vmatpush1.bf16.msra.mxu0 %v2156
        %2386 = vmatprep.subr.bf16.mxu0 %v2153
        %2387 = vmatpush1.bf16.msra.mxu0 %v2152
        %2388 = vmatprep.subr.bf16.mxu0 %v2149
        %2389 = vmatpush1.bf16.msra.mxu0 %v2148
        %2390 = vmatprep.subr.bf16.mxu0 %v2145
        %2391 = vmatpush1.bf16.msra.mxu0 %v2144
        %2392 = vmatprep.subr.bf16.mxu0 %v2141
        %2393 = vmatpush1.bf16.msra.mxu0 %v2140
        %2394 = vmatprep.subr.bf16.mxu0 %v2137
        %2395 = vmatpush1.bf16.msra.mxu0 %v2136
        %2396 = vmatprep.subr.bf16.mxu0 %v2133
        %2397 = vmatpush1.bf16.msra.mxu0 %v2132
        %2398 = vmatprep.subr.bf16.mxu0 %v2129
        %2399 = vmatpush1.bf16.msra.mxu0 %v2128
        %2400 = vmatprep.subr.bf16.mxu0 %v2189
        %2401 = vmatpush2.bf16.msra.mxu0 %v2188
        %2402 = vmatprep.subr.bf16.mxu0 %v2185
        %2403 = vmatpush2.bf16.msra.mxu0 %v2184
        %2404 = vmatprep.subr.bf16.mxu0 %v2181
        %2405 = vmatpush2.bf16.msra.mxu0 %v2180
        %2406 = vmatprep.subr.bf16.mxu0 %v2177
        %2407 = vmatpush2.bf16.msra.mxu0 %v2176
        %2408 = vmatprep.subr.bf16.mxu0 %v2173
        %2409 = vmatpush2.bf16.msra.mxu0 %v2172
        %2410 = vmatprep.subr.bf16.mxu0 %v2169
        %2411 = vmatpush2.bf16.msra.mxu0 %v2168
        %2412 = vmatprep.subr.bf16.mxu0 %v2165
        %2413 = vmatpush2.bf16.msra.mxu0 %v2164
        %2414 = vmatprep.subr.bf16.mxu0 %v2161
        %2415 = vmatpush2.bf16.msra.mxu0 %v2160
        %2416 = vmatprep.mubr.bf16.mxu0 %v1589
        %2417 = vmatmul.mubr.bf16.gmra.mxu0 %v1588
        %v2418 = vpop.f32.mrf.mxu0
        %v2419 = vadd.f32 %v1727, %v2418
        %v2420 = vpop.f32.mrf.mxu0
        %v2421 = vadd.f32 %v1731, %v2420
        %v2422 = vpop.f32.mrf.mxu0
        %v2423 = vpop.f32.mrf.mxu0
        %2424 = vdwg.mxu0
        %2425 = vmatprep.subr.bf16.mxu0 %v2221
        %2426 = vmatpush1.bf16.msra.mxu0 %v2220
        %2427 = vmatprep.subr.bf16.mxu0 %v2217
        %2428 = vmatpush1.bf16.msra.mxu0 %v2216
        %2429 = vmatprep.subr.bf16.mxu0 %v2213
        %2430 = vmatpush1.bf16.msra.mxu0 %v2212
        %2431 = vmatprep.subr.bf16.mxu0 %v2209
        %2432 = vmatpush1.bf16.msra.mxu0 %v2208
        %2433 = vmatprep.subr.bf16.mxu0 %v2205
        %2434 = vmatpush1.bf16.msra.mxu0 %v2204
        %2435 = vmatprep.subr.bf16.mxu0 %v2201
        %2436 = vmatpush1.bf16.msra.mxu0 %v2200
        %2437 = vmatprep.subr.bf16.mxu0 %v2197
        %2438 = vmatpush1.bf16.msra.mxu0 %v2196
        %2439 = vmatprep.subr.bf16.mxu0 %v2193
        %2440 = vmatpush1.bf16.msra.mxu0 %v2192
        %2441 = vmatprep.subr.bf16.mxu0 %v2253
        %2442 = vmatpush2.bf16.msra.mxu0 %v2252
        %2443 = vmatprep.subr.bf16.mxu0 %v2249
        %2444 = vmatpush2.bf16.msra.mxu0 %v2248
        %2445 = vmatprep.subr.bf16.mxu0 %v2245
        %2446 = vmatpush2.bf16.msra.mxu0 %v2244
        %2447 = vmatprep.subr.bf16.mxu0 %v2241
        %2448 = vmatpush2.bf16.msra.mxu0 %v2240
        %2449 = vmatprep.subr.bf16.mxu0 %v2237
        %2450 = vmatpush2.bf16.msra.mxu0 %v2236
        %2451 = vmatprep.subr.bf16.mxu0 %v2233
        %2452 = vmatpush2.bf16.msra.mxu0 %v2232
        %2453 = vmatprep.subr.bf16.mxu0 %v2229
        %2454 = vmatpush2.bf16.msra.mxu0 %v2228
        %2455 = vmatprep.subr.bf16.mxu0 %v2225
        %2456 = vmatpush2.bf16.msra.mxu0 %v2224
        %2457 = vmatprep.mubr.bf16.mxu0 %v1591
        %2458 = vmatmul.mubr.bf16.gmra.mxu0 %v1590
        %v2459 = vpop.f32.mrf.mxu0
        %v2460 = vadd.f32 %v2419, %v2459
        %v2461 = vpop.f32.mrf.mxu0
        %v2462 = vadd.f32 %v2421, %v2461
        %v2463 = vpop.f32.mrf.mxu0
        %v2464 = vpop.f32.mrf.mxu0
        %2465 = vdwg.mxu0
        %2466 = vmatprep.subr.bf16.mxu0 %v2159
        %2467 = vmatpush1.bf16.msra.mxu0 %v2158
        %2468 = vmatprep.subr.bf16.mxu0 %v2155
        %2469 = vmatpush1.bf16.msra.mxu0 %v2154
        %2470 = vmatprep.subr.bf16.mxu0 %v2151
        %2471 = vmatpush1.bf16.msra.mxu0 %v2150
        %2472 = vmatprep.subr.bf16.mxu0 %v2147
        %2473 = vmatpush1.bf16.msra.mxu0 %v2146
        %2474 = vmatprep.subr.bf16.mxu0 %v2143
        %2475 = vmatpush1.bf16.msra.mxu0 %v2142
        %2476 = vmatprep.subr.bf16.mxu0 %v2139
        %2477 = vmatpush1.bf16.msra.mxu0 %v2138
        %2478 = vmatprep.subr.bf16.mxu0 %v2135
        %2479 = vmatpush1.bf16.msra.mxu0 %v2134
        %2480 = vmatprep.subr.bf16.mxu0 %v2131
        %2481 = vmatpush1.bf16.msra.mxu0 %v2130
        %2482 = vmatprep.subr.bf16.mxu0 %v2191
        %2483 = vmatpush2.bf16.msra.mxu0 %v2190
        %2484 = vmatprep.subr.bf16.mxu0 %v2187
        %2485 = vmatpush2.bf16.msra.mxu0 %v2186
        %2486 = vmatprep.subr.bf16.mxu0 %v2183
        %2487 = vmatpush2.bf16.msra.mxu0 %v2182
        %2488 = vmatprep.subr.bf16.mxu0 %v2179
        %2489 = vmatpush2.bf16.msra.mxu0 %v2178
        %2490 = vmatprep.subr.bf16.mxu0 %v2175
        %2491 = vmatpush2.bf16.msra.mxu0 %v2174
        %2492 = vmatprep.subr.bf16.mxu0 %v2171
        %2493 = vmatpush2.bf16.msra.mxu0 %v2170
        %2494 = vmatprep.subr.bf16.mxu0 %v2167
        %2495 = vmatpush2.bf16.msra.mxu0 %v2166
        %2496 = vmatprep.subr.bf16.mxu0 %v2163
        %2497 = vmatpush2.bf16.msra.mxu0 %v2162
        %2498 = vmatprep.mubr.bf16.mxu0 %v1589
        %2499 = vmatmul.mubr.bf16.gmra.mxu0 %v1588
        %v2500 = vpop.f32.mrf.mxu0
        %v2501 = vadd.f32 %v1735, %v2500
        %v2502 = vpop.f32.mrf.mxu0
        %v2503 = vadd.f32 %v1739, %v2502
        %v2504 = vpop.f32.mrf.mxu0
        %v2505 = vpop.f32.mrf.mxu0
        %2506 = vdwg.mxu0
        %2507 = vmatprep.subr.bf16.mxu0 %v2223
        %2508 = vmatpush1.bf16.msra.mxu0 %v2222
        %2509 = vmatprep.subr.bf16.mxu0 %v2219
        %2510 = vmatpush1.bf16.msra.mxu0 %v2218
        %2511 = vmatprep.subr.bf16.mxu0 %v2215
        %2512 = vmatpush1.bf16.msra.mxu0 %v2214
        %2513 = vmatprep.subr.bf16.mxu0 %v2211
        %2514 = vmatpush1.bf16.msra.mxu0 %v2210
        %2515 = vmatprep.subr.bf16.mxu0 %v2207
        %2516 = vmatpush1.bf16.msra.mxu0 %v2206
        %2517 = vmatprep.subr.bf16.mxu0 %v2203
        %2518 = vmatpush1.bf16.msra.mxu0 %v2202
        %2519 = vmatprep.subr.bf16.mxu0 %v2199
        %2520 = vmatpush1.bf16.msra.mxu0 %v2198
        %2521 = vmatprep.subr.bf16.mxu0 %v2195
        %2522 = vmatpush1.bf16.msra.mxu0 %v2194
        %2523 = vmatprep.subr.bf16.mxu0 %v2255
        %2524 = vmatpush2.bf16.msra.mxu0 %v2254
        %2525 = vmatprep.subr.bf16.mxu0 %v2251
        %2526 = vmatpush2.bf16.msra.mxu0 %v2250
        %2527 = vmatprep.subr.bf16.mxu0 %v2247
        %2528 = vmatpush2.bf16.msra.mxu0 %v2246
        %2529 = vmatprep.subr.bf16.mxu0 %v2243
        %2530 = vmatpush2.bf16.msra.mxu0 %v2242
        %2531 = vmatprep.subr.bf16.mxu0 %v2239
        %2532 = vmatpush2.bf16.msra.mxu0 %v2238
        %2533 = vmatprep.subr.bf16.mxu0 %v2235
        %2534 = vmatpush2.bf16.msra.mxu0 %v2234
        %2535 = vmatprep.subr.bf16.mxu0 %v2231
        %2536 = vmatpush2.bf16.msra.mxu0 %v2230
        %2537 = vmatprep.subr.bf16.mxu0 %v2227
        %2538 = vmatpush2.bf16.msra.mxu0 %v2226
        %2539 = vmatprep.mubr.bf16.mxu0 %v1591
        %2540 = vmatmul.mubr.bf16.gmra.mxu0 %v1590
        %v2541 = vpop.f32.mrf.mxu0
        %v2542 = vadd.f32 %v2501, %v2541
        %v2543 = vpop.f32.mrf.mxu0
        %v2544 = vadd.f32 %v2503, %v2543
        %v2545 = vpop.f32.mrf.mxu0
        %v2546 = vpop.f32.mrf.mxu0
        %2547 = vdwg.mxu0
        %v2548 = vtanh.pop %v2460
        %v2549 = vtanh.pop %v2462
        %v2550 = vtanh.pop %v2542
        %v2551 = vtanh.pop %v2544
        %v2552 = vpack.c.bf16 %v2548, %v2548
        %v2553 = vpack.c.bf16 %v2549, %v2549
        %v2554 = vpack.c.bf16 %v2550, %v2550
        %v2555 = vpack.c.bf16 %v2551, %v2551
        %s2556 = scalar_lea.vmem %s384, 2048 [#allocation8]
        %v2557 = vld [vmem:[%s2556] sm:$0xff]
        %v2558 = vld [vmem:[%s2556 + $0x8] sm:$0xff]
        %v2559 = vld [vmem:[%s2556 + $0x10] sm:$0xff]
        %v2560 = vld [vmem:[%s2556 + $0x18] sm:$0xff]
        %v2561 = vld [vmem:[%s2556 + $0x20] sm:$0xff]
        %v2562 = vld [vmem:[%s2556 + $0x28] sm:$0xff]
        %v2563 = vld [vmem:[%s2556 + $0x30] sm:$0xff]
        %v2564 = vld [vmem:[%s2556 + $0x38] sm:$0xff]
        %v2565 = vld [vmem:[%s2556 + $0x40] sm:$0xff]
        %v2566 = vld [vmem:[%s2556 + $0x48] sm:$0xff]
        %v2567 = vld [vmem:[%s2556 + $0x50] sm:$0xff]
        %v2568 = vld [vmem:[%s2556 + $0x58] sm:$0xff]
        %v2569 = vld [vmem:[%s2556 + $0x60] sm:$0xff]
        %v2570 = vld [vmem:[%s2556 + $0x68] sm:$0xff]
        %v2571 = vld [vmem:[%s2556 + $0x70] sm:$0xff]
        %v2572 = vld [vmem:[%s2556 + $0x78] sm:$0xff]
        %v2573 = vld [vmem:[%s2556 + $0x80] sm:$0xff]
        %v2574 = vld [vmem:[%s2556 + $0x88] sm:$0xff]
        %v2575 = vld [vmem:[%s2556 + $0x90] sm:$0xff]
        %v2576 = vld [vmem:[%s2556 + $0x98] sm:$0xff]
        %v2577 = vld [vmem:[%s2556 + $0xa0] sm:$0xff]
        %v2578 = vld [vmem:[%s2556 + $0xa8] sm:$0xff]
        %v2579 = vld [vmem:[%s2556 + $0xb0] sm:$0xff]
        %v2580 = vld [vmem:[%s2556 + $0xb8] sm:$0xff]
        %v2581 = vld [vmem:[%s2556 + $0xc0] sm:$0xff]
        %v2582 = vld [vmem:[%s2556 + $0xc8] sm:$0xff]
        %v2583 = vld [vmem:[%s2556 + $0xd0] sm:$0xff]
        %v2584 = vld [vmem:[%s2556 + $0xd8] sm:$0xff]
        %v2585 = vld [vmem:[%s2556 + $0xe0] sm:$0xff]
        %v2586 = vld [vmem:[%s2556 + $0xe8] sm:$0xff]
        %v2587 = vld [vmem:[%s2556 + $0xf0] sm:$0xff]
        %v2588 = vld [vmem:[%s2556 + $0xf8] sm:$0xff]
        %v2589 = vld [vmem:[%s2556 + $0x100] sm:$0xff]
        %v2590 = vld [vmem:[%s2556 + $0x108] sm:$0xff]
        %v2591 = vld [vmem:[%s2556 + $0x110] sm:$0xff]
        %v2592 = vld [vmem:[%s2556 + $0x118] sm:$0xff]
        %v2593 = vld [vmem:[%s2556 + $0x120] sm:$0xff]
        %v2594 = vld [vmem:[%s2556 + $0x128] sm:$0xff]
        %v2595 = vld [vmem:[%s2556 + $0x130] sm:$0xff]
        %v2596 = vld [vmem:[%s2556 + $0x138] sm:$0xff]
        %v2597 = vld [vmem:[%s2556 + $0x140] sm:$0xff]
        %v2598 = vld [vmem:[%s2556 + $0x148] sm:$0xff]
        %v2599 = vld [vmem:[%s2556 + $0x150] sm:$0xff]
        %v2600 = vld [vmem:[%s2556 + $0x158] sm:$0xff]
        %v2601 = vld [vmem:[%s2556 + $0x160] sm:$0xff]
        %v2602 = vld [vmem:[%s2556 + $0x168] sm:$0xff]
        %v2603 = vld [vmem:[%s2556 + $0x170] sm:$0xff]
        %v2604 = vld [vmem:[%s2556 + $0x178] sm:$0xff]
        %v2605 = vld [vmem:[%s2556 + $0x180] sm:$0xff]
        %v2606 = vld [vmem:[%s2556 + $0x188] sm:$0xff]
        %v2607 = vld [vmem:[%s2556 + $0x190] sm:$0xff]
        %v2608 = vld [vmem:[%s2556 + $0x198] sm:$0xff]
        %v2609 = vld [vmem:[%s2556 + $0x1a0] sm:$0xff]
        %v2610 = vld [vmem:[%s2556 + $0x1a8] sm:$0xff]
        %v2611 = vld [vmem:[%s2556 + $0x1b0] sm:$0xff]
        %v2612 = vld [vmem:[%s2556 + $0x1b8] sm:$0xff]
        %v2613 = vld [vmem:[%s2556 + $0x1c0] sm:$0xff]
        %v2614 = vld [vmem:[%s2556 + $0x1c8] sm:$0xff]
        %v2615 = vld [vmem:[%s2556 + $0x1d0] sm:$0xff]
        %v2616 = vld [vmem:[%s2556 + $0x1d8] sm:$0xff]
        %v2617 = vld [vmem:[%s2556 + $0x1e0] sm:$0xff]
        %v2618 = vld [vmem:[%s2556 + $0x1e8] sm:$0xff]
        %v2619 = vld [vmem:[%s2556 + $0x1f0] sm:$0xff]
        %v2620 = vld [vmem:[%s2556 + $0x1f8] sm:$0xff]
        %v2621 = vld [vmem:[%s2556 + $0x200] sm:$0xff]
        %v2622 = vld [vmem:[%s2556 + $0x208] sm:$0xff]
        %v2623 = vld [vmem:[%s2556 + $0x210] sm:$0xff]
        %v2624 = vld [vmem:[%s2556 + $0x218] sm:$0xff]
        %v2625 = vld [vmem:[%s2556 + $0x220] sm:$0xff]
        %v2626 = vld [vmem:[%s2556 + $0x228] sm:$0xff]
        %v2627 = vld [vmem:[%s2556 + $0x230] sm:$0xff]
        %v2628 = vld [vmem:[%s2556 + $0x238] sm:$0xff]
        %v2629 = vld [vmem:[%s2556 + $0x240] sm:$0xff]
        %v2630 = vld [vmem:[%s2556 + $0x248] sm:$0xff]
        %v2631 = vld [vmem:[%s2556 + $0x250] sm:$0xff]
        %v2632 = vld [vmem:[%s2556 + $0x258] sm:$0xff]
        %v2633 = vld [vmem:[%s2556 + $0x260] sm:$0xff]
        %v2634 = vld [vmem:[%s2556 + $0x268] sm:$0xff]
        %v2635 = vld [vmem:[%s2556 + $0x270] sm:$0xff]
        %v2636 = vld [vmem:[%s2556 + $0x278] sm:$0xff]
        %v2637 = vld [vmem:[%s2556 + $0x280] sm:$0xff]
        %v2638 = vld [vmem:[%s2556 + $0x288] sm:$0xff]
        %v2639 = vld [vmem:[%s2556 + $0x290] sm:$0xff]
        %v2640 = vld [vmem:[%s2556 + $0x298] sm:$0xff]
        %v2641 = vld [vmem:[%s2556 + $0x2a0] sm:$0xff]
        %v2642 = vld [vmem:[%s2556 + $0x2a8] sm:$0xff]
        %v2643 = vld [vmem:[%s2556 + $0x2b0] sm:$0xff]
        %v2644 = vld [vmem:[%s2556 + $0x2b8] sm:$0xff]
        %v2645 = vld [vmem:[%s2556 + $0x2c0] sm:$0xff]
        %v2646 = vld [vmem:[%s2556 + $0x2c8] sm:$0xff]
        %v2647 = vld [vmem:[%s2556 + $0x2d0] sm:$0xff]
        %v2648 = vld [vmem:[%s2556 + $0x2d8] sm:$0xff]
        %v2649 = vld [vmem:[%s2556 + $0x2e0] sm:$0xff]
        %v2650 = vld [vmem:[%s2556 + $0x2e8] sm:$0xff]
        %v2651 = vld [vmem:[%s2556 + $0x2f0] sm:$0xff]
        %v2652 = vld [vmem:[%s2556 + $0x2f8] sm:$0xff]
        %v2653 = vld [vmem:[%s2556 + $0x300] sm:$0xff]
        %v2654 = vld [vmem:[%s2556 + $0x308] sm:$0xff]
        %v2655 = vld [vmem:[%s2556 + $0x310] sm:$0xff]
        %v2656 = vld [vmem:[%s2556 + $0x318] sm:$0xff]
        %v2657 = vld [vmem:[%s2556 + $0x320] sm:$0xff]
        %v2658 = vld [vmem:[%s2556 + $0x328] sm:$0xff]
        %v2659 = vld [vmem:[%s2556 + $0x330] sm:$0xff]
        %v2660 = vld [vmem:[%s2556 + $0x338] sm:$0xff]
        %v2661 = vld [vmem:[%s2556 + $0x340] sm:$0xff]
        %v2662 = vld [vmem:[%s2556 + $0x348] sm:$0xff]
        %v2663 = vld [vmem:[%s2556 + $0x350] sm:$0xff]
        %v2664 = vld [vmem:[%s2556 + $0x358] sm:$0xff]
        %v2665 = vld [vmem:[%s2556 + $0x360] sm:$0xff]
        %v2666 = vld [vmem:[%s2556 + $0x368] sm:$0xff]
        %v2667 = vld [vmem:[%s2556 + $0x370] sm:$0xff]
        %v2668 = vld [vmem:[%s2556 + $0x378] sm:$0xff]
        %v2669 = vld [vmem:[%s2556 + $0x380] sm:$0xff]
        %v2670 = vld [vmem:[%s2556 + $0x388] sm:$0xff]
        %v2671 = vld [vmem:[%s2556 + $0x390] sm:$0xff]
        %v2672 = vld [vmem:[%s2556 + $0x398] sm:$0xff]
        %v2673 = vld [vmem:[%s2556 + $0x3a0] sm:$0xff]
        %v2674 = vld [vmem:[%s2556 + $0x3a8] sm:$0xff]
        %v2675 = vld [vmem:[%s2556 + $0x3b0] sm:$0xff]
        %v2676 = vld [vmem:[%s2556 + $0x3b8] sm:$0xff]
        %v2677 = vld [vmem:[%s2556 + $0x3c0] sm:$0xff]
        %v2678 = vld [vmem:[%s2556 + $0x3c8] sm:$0xff]
        %v2679 = vld [vmem:[%s2556 + $0x3d0] sm:$0xff]
        %v2680 = vld [vmem:[%s2556 + $0x3d8] sm:$0xff]
        %v2681 = vld [vmem:[%s2556 + $0x3e0] sm:$0xff]
        %v2682 = vld [vmem:[%s2556 + $0x3e8] sm:$0xff]
        %v2683 = vld [vmem:[%s2556 + $0x3f0] sm:$0xff]
        %v2684 = vld [vmem:[%s2556 + $0x3f8] sm:$0xff]
        %s2685 = scalar_lea.vmem %s436, 2
        %v2686 = vld [vmem:[%s2685] ss:$8 sm:$0xf]
        %v2688 = vlaneseq
        %v2689 = vshrl.u32 %v2688, 7
        %v2690 = vsub.s32 0, %v2689
        %v2691 = vrot.slane %v2686, %v2690
        %v2692 = vlaneseq
        %v2693 = vshrl.u32 %v2692, 7
        %v2694 = vsub.s32 1, %v2693
        %v2695 = vrot.slane %v2686, %v2694
        %v2696 = vlaneseq
        %v2697 = vshrl.u32 %v2696, 7
        %v2698 = vsub.s32 2, %v2697
        %v2699 = vrot.slane %v2686, %v2698
        %v2700 = vlaneseq
        %v2701 = vshrl.u32 %v2700, 7
        %v2702 = vsub.s32 3, %v2701
        %v2703 = vrot.slane %v2686, %v2702
        %v2836 = vunpack.c.l.b16 %v2557
        %v2837 = vunpack.c.h.b16 %v2557
        %v2838 = vunpack.c.l.b16 %v2558
        %v2839 = vunpack.c.h.b16 %v2558
        %v2840 = vunpack.c.l.b16 %v2559
        %v2841 = vunpack.c.h.b16 %v2559
        %v2842 = vunpack.c.l.b16 %v2560
        %v2843 = vunpack.c.h.b16 %v2560
        %v2844 = vunpack.c.l.b16 %v2561
        %v2845 = vunpack.c.h.b16 %v2561
        %v2846 = vunpack.c.l.b16 %v2562
        %v2847 = vunpack.c.h.b16 %v2562
        %v2848 = vunpack.c.l.b16 %v2563
        %v2849 = vunpack.c.h.b16 %v2563
        %v2850 = vunpack.c.l.b16 %v2564
        %v2851 = vunpack.c.h.b16 %v2564
        %v2852 = vunpack.c.l.b16 %v2565
        %v2853 = vunpack.c.h.b16 %v2565
        %v2854 = vunpack.c.l.b16 %v2566
        %v2855 = vunpack.c.h.b16 %v2566
        %v2856 = vunpack.c.l.b16 %v2567
        %v2857 = vunpack.c.h.b16 %v2567
        %v2858 = vunpack.c.l.b16 %v2568
        %v2859 = vunpack.c.h.b16 %v2568
        %v2860 = vunpack.c.l.b16 %v2569
        %v2861 = vunpack.c.h.b16 %v2569
        %v2862 = vunpack.c.l.b16 %v2570
        %v2863 = vunpack.c.h.b16 %v2570
        %v2864 = vunpack.c.l.b16 %v2571
        %v2865 = vunpack.c.h.b16 %v2571
        %v2866 = vunpack.c.l.b16 %v2572
        %v2867 = vunpack.c.h.b16 %v2572
        %v2868 = vunpack.c.l.b16 %v2573
        %v2869 = vunpack.c.h.b16 %v2573
        %v2870 = vunpack.c.l.b16 %v2574
        %v2871 = vunpack.c.h.b16 %v2574
        %v2872 = vunpack.c.l.b16 %v2575
        %v2873 = vunpack.c.h.b16 %v2575
        %v2874 = vunpack.c.l.b16 %v2576
        %v2875 = vunpack.c.h.b16 %v2576
        %v2876 = vunpack.c.l.b16 %v2577
        %v2877 = vunpack.c.h.b16 %v2577
        %v2878 = vunpack.c.l.b16 %v2578
        %v2879 = vunpack.c.h.b16 %v2578
        %v2880 = vunpack.c.l.b16 %v2579
        %v2881 = vunpack.c.h.b16 %v2579
        %v2882 = vunpack.c.l.b16 %v2580
        %v2883 = vunpack.c.h.b16 %v2580
        %v2884 = vunpack.c.l.b16 %v2581
        %v2885 = vunpack.c.h.b16 %v2581
        %v2886 = vunpack.c.l.b16 %v2582
        %v2887 = vunpack.c.h.b16 %v2582
        %v2888 = vunpack.c.l.b16 %v2583
        %v2889 = vunpack.c.h.b16 %v2583
        %v2890 = vunpack.c.l.b16 %v2584
        %v2891 = vunpack.c.h.b16 %v2584
        %v2892 = vunpack.c.l.b16 %v2585
        %v2893 = vunpack.c.h.b16 %v2585
        %v2894 = vunpack.c.l.b16 %v2586
        %v2895 = vunpack.c.h.b16 %v2586
        %v2896 = vunpack.c.l.b16 %v2587
        %v2897 = vunpack.c.h.b16 %v2587
        %v2898 = vunpack.c.l.b16 %v2588
        %v2899 = vunpack.c.h.b16 %v2588
        %v2900 = vunpack.c.l.b16 %v2589
        %v2901 = vunpack.c.h.b16 %v2589
        %v2902 = vunpack.c.l.b16 %v2590
        %v2903 = vunpack.c.h.b16 %v2590
        %v2904 = vunpack.c.l.b16 %v2591
        %v2905 = vunpack.c.h.b16 %v2591
        %v2906 = vunpack.c.l.b16 %v2592
        %v2907 = vunpack.c.h.b16 %v2592
        %v2908 = vunpack.c.l.b16 %v2593
        %v2909 = vunpack.c.h.b16 %v2593
        %v2910 = vunpack.c.l.b16 %v2594
        %v2911 = vunpack.c.h.b16 %v2594
        %v2912 = vunpack.c.l.b16 %v2595
        %v2913 = vunpack.c.h.b16 %v2595
        %v2914 = vunpack.c.l.b16 %v2596
        %v2915 = vunpack.c.h.b16 %v2596
        %v2916 = vunpack.c.l.b16 %v2597
        %v2917 = vunpack.c.h.b16 %v2597
        %v2918 = vunpack.c.l.b16 %v2598
        %v2919 = vunpack.c.h.b16 %v2598
        %v2920 = vunpack.c.l.b16 %v2599
        %v2921 = vunpack.c.h.b16 %v2599
        %v2922 = vunpack.c.l.b16 %v2600
        %v2923 = vunpack.c.h.b16 %v2600
        %v2924 = vunpack.c.l.b16 %v2601
        %v2925 = vunpack.c.h.b16 %v2601
        %v2926 = vunpack.c.l.b16 %v2602
        %v2927 = vunpack.c.h.b16 %v2602
        %v2928 = vunpack.c.l.b16 %v2603
        %v2929 = vunpack.c.h.b16 %v2603
        %v2930 = vunpack.c.l.b16 %v2604
        %v2931 = vunpack.c.h.b16 %v2604
        %v2932 = vunpack.c.l.b16 %v2605
        %v2933 = vunpack.c.h.b16 %v2605
        %v2934 = vunpack.c.l.b16 %v2606
        %v2935 = vunpack.c.h.b16 %v2606
        %v2936 = vunpack.c.l.b16 %v2607
        %v2937 = vunpack.c.h.b16 %v2607
        %v2938 = vunpack.c.l.b16 %v2608
        %v2939 = vunpack.c.h.b16 %v2608
        %v2940 = vunpack.c.l.b16 %v2609
        %v2941 = vunpack.c.h.b16 %v2609
        %v2942 = vunpack.c.l.b16 %v2610
        %v2943 = vunpack.c.h.b16 %v2610
        %v2944 = vunpack.c.l.b16 %v2611
        %v2945 = vunpack.c.h.b16 %v2611
        %v2946 = vunpack.c.l.b16 %v2612
        %v2947 = vunpack.c.h.b16 %v2612
        %v2948 = vunpack.c.l.b16 %v2613
        %v2949 = vunpack.c.h.b16 %v2613
        %v2950 = vunpack.c.l.b16 %v2614
        %v2951 = vunpack.c.h.b16 %v2614
        %v2952 = vunpack.c.l.b16 %v2615
        %v2953 = vunpack.c.h.b16 %v2615
        %v2954 = vunpack.c.l.b16 %v2616
        %v2955 = vunpack.c.h.b16 %v2616
        %v2956 = vunpack.c.l.b16 %v2617
        %v2957 = vunpack.c.h.b16 %v2617
        %v2958 = vunpack.c.l.b16 %v2618
        %v2959 = vunpack.c.h.b16 %v2618
        %v2960 = vunpack.c.l.b16 %v2619
        %v2961 = vunpack.c.h.b16 %v2619
        %v2962 = vunpack.c.l.b16 %v2620
        %v2963 = vunpack.c.h.b16 %v2620
        %v2964 = vunpack.c.l.b16 %v2621
        %v2965 = vunpack.c.h.b16 %v2621
        %v2966 = vunpack.c.l.b16 %v2622
        %v2967 = vunpack.c.h.b16 %v2622
        %v2968 = vunpack.c.l.b16 %v2623
        %v2969 = vunpack.c.h.b16 %v2623
        %v2970 = vunpack.c.l.b16 %v2624
        %v2971 = vunpack.c.h.b16 %v2624
        %v2972 = vunpack.c.l.b16 %v2625
        %v2973 = vunpack.c.h.b16 %v2625
        %v2974 = vunpack.c.l.b16 %v2626
        %v2975 = vunpack.c.h.b16 %v2626
        %v2976 = vunpack.c.l.b16 %v2627
        %v2977 = vunpack.c.h.b16 %v2627
        %v2978 = vunpack.c.l.b16 %v2628
        %v2979 = vunpack.c.h.b16 %v2628
        %v2980 = vunpack.c.l.b16 %v2629
        %v2981 = vunpack.c.h.b16 %v2629
        %v2982 = vunpack.c.l.b16 %v2630
        %v2983 = vunpack.c.h.b16 %v2630
        %v2984 = vunpack.c.l.b16 %v2631
        %v2985 = vunpack.c.h.b16 %v2631
        %v2986 = vunpack.c.l.b16 %v2632
        %v2987 = vunpack.c.h.b16 %v2632
        %v2988 = vunpack.c.l.b16 %v2633
        %v2989 = vunpack.c.h.b16 %v2633
        %v2990 = vunpack.c.l.b16 %v2634
        %v2991 = vunpack.c.h.b16 %v2634
        %v2992 = vunpack.c.l.b16 %v2635
        %v2993 = vunpack.c.h.b16 %v2635
        %v2994 = vunpack.c.l.b16 %v2636
        %v2995 = vunpack.c.h.b16 %v2636
        %v2996 = vunpack.c.l.b16 %v2637
        %v2997 = vunpack.c.h.b16 %v2637
        %v2998 = vunpack.c.l.b16 %v2638
        %v2999 = vunpack.c.h.b16 %v2638
        %v3000 = vunpack.c.l.b16 %v2639
        %v3001 = vunpack.c.h.b16 %v2639
        %v3002 = vunpack.c.l.b16 %v2640
        %v3003 = vunpack.c.h.b16 %v2640
        %v3004 = vunpack.c.l.b16 %v2641
        %v3005 = vunpack.c.h.b16 %v2641
        %v3006 = vunpack.c.l.b16 %v2642
        %v3007 = vunpack.c.h.b16 %v2642
        %v3008 = vunpack.c.l.b16 %v2643
        %v3009 = vunpack.c.h.b16 %v2643
        %v3010 = vunpack.c.l.b16 %v2644
        %v3011 = vunpack.c.h.b16 %v2644
        %v3012 = vunpack.c.l.b16 %v2645
        %v3013 = vunpack.c.h.b16 %v2645
        %v3014 = vunpack.c.l.b16 %v2646
        %v3015 = vunpack.c.h.b16 %v2646
        %v3016 = vunpack.c.l.b16 %v2647
        %v3017 = vunpack.c.h.b16 %v2647
        %v3018 = vunpack.c.l.b16 %v2648
        %v3019 = vunpack.c.h.b16 %v2648
        %v3020 = vunpack.c.l.b16 %v2649
        %v3021 = vunpack.c.h.b16 %v2649
        %v3022 = vunpack.c.l.b16 %v2650
        %v3023 = vunpack.c.h.b16 %v2650
        %v3024 = vunpack.c.l.b16 %v2651
        %v3025 = vunpack.c.h.b16 %v2651
        %v3026 = vunpack.c.l.b16 %v2652
        %v3027 = vunpack.c.h.b16 %v2652
        %v3028 = vunpack.c.l.b16 %v2653
        %v3029 = vunpack.c.h.b16 %v2653
        %v3030 = vunpack.c.l.b16 %v2654
        %v3031 = vunpack.c.h.b16 %v2654
        %v3032 = vunpack.c.l.b16 %v2655
        %v3033 = vunpack.c.h.b16 %v2655
        %v3034 = vunpack.c.l.b16 %v2656
        %v3035 = vunpack.c.h.b16 %v2656
        %v3036 = vunpack.c.l.b16 %v2657
        %v3037 = vunpack.c.h.b16 %v2657
        %v3038 = vunpack.c.l.b16 %v2658
        %v3039 = vunpack.c.h.b16 %v2658
        %v3040 = vunpack.c.l.b16 %v2659
        %v3041 = vunpack.c.h.b16 %v2659
        %v3042 = vunpack.c.l.b16 %v2660
        %v3043 = vunpack.c.h.b16 %v2660
        %v3044 = vunpack.c.l.b16 %v2661
        %v3045 = vunpack.c.h.b16 %v2661
        %v3046 = vunpack.c.l.b16 %v2662
        %v3047 = vunpack.c.h.b16 %v2662
        %v3048 = vunpack.c.l.b16 %v2663
        %v3049 = vunpack.c.h.b16 %v2663
        %v3050 = vunpack.c.l.b16 %v2664
        %v3051 = vunpack.c.h.b16 %v2664
        %v3052 = vunpack.c.l.b16 %v2665
        %v3053 = vunpack.c.h.b16 %v2665
        %v3054 = vunpack.c.l.b16 %v2666
        %v3055 = vunpack.c.h.b16 %v2666
        %v3056 = vunpack.c.l.b16 %v2667
        %v3057 = vunpack.c.h.b16 %v2667
        %v3058 = vunpack.c.l.b16 %v2668
        %v3059 = vunpack.c.h.b16 %v2668
        %v3060 = vunpack.c.l.b16 %v2669
        %v3061 = vunpack.c.h.b16 %v2669
        %v3062 = vunpack.c.l.b16 %v2670
        %v3063 = vunpack.c.h.b16 %v2670
        %v3064 = vunpack.c.l.b16 %v2671
        %v3065 = vunpack.c.h.b16 %v2671
        %v3066 = vunpack.c.l.b16 %v2672
        %v3067 = vunpack.c.h.b16 %v2672
        %v3068 = vunpack.c.l.b16 %v2673
        %v3069 = vunpack.c.h.b16 %v2673
        %v3070 = vunpack.c.l.b16 %v2674
        %v3071 = vunpack.c.h.b16 %v2674
        %v3072 = vunpack.c.l.b16 %v2675
        %v3073 = vunpack.c.h.b16 %v2675
        %v3074 = vunpack.c.l.b16 %v2676
        %v3075 = vunpack.c.h.b16 %v2676
        %v3076 = vunpack.c.l.b16 %v2677
        %v3077 = vunpack.c.h.b16 %v2677
        %v3078 = vunpack.c.l.b16 %v2678
        %v3079 = vunpack.c.h.b16 %v2678
        %v3080 = vunpack.c.l.b16 %v2679
        %v3081 = vunpack.c.h.b16 %v2679
        %v3082 = vunpack.c.l.b16 %v2680
        %v3083 = vunpack.c.h.b16 %v2680
        %v3084 = vunpack.c.l.b16 %v2681
        %v3085 = vunpack.c.h.b16 %v2681
        %v3086 = vunpack.c.l.b16 %v2682
        %v3087 = vunpack.c.h.b16 %v2682
        %v3088 = vunpack.c.l.b16 %v2683
        %v3089 = vunpack.c.h.b16 %v2683
        %v3090 = vunpack.c.l.b16 %v2684
        %v3091 = vunpack.c.h.b16 %v2684
        %v3092 = vpack.c.b16 %v2840, %v2836
        %v3093 = vpack.c.b16 %v2841, %v2837
        %v3094 = vpack.c.b16 %v2842, %v2838
        %v3095 = vpack.c.b16 %v2843, %v2839
        %v3096 = vpack.c.b16 %v2848, %v2844
        %v3097 = vpack.c.b16 %v2849, %v2845
        %v3098 = vpack.c.b16 %v2850, %v2846
        %v3099 = vpack.c.b16 %v2851, %v2847
        %v3100 = vpack.c.b16 %v2856, %v2852
        %v3101 = vpack.c.b16 %v2857, %v2853
        %v3102 = vpack.c.b16 %v2858, %v2854
        %v3103 = vpack.c.b16 %v2859, %v2855
        %v3104 = vpack.c.b16 %v2864, %v2860
        %v3105 = vpack.c.b16 %v2865, %v2861
        %v3106 = vpack.c.b16 %v2866, %v2862
        %v3107 = vpack.c.b16 %v2867, %v2863
        %v3108 = vpack.c.b16 %v2872, %v2868
        %v3109 = vpack.c.b16 %v2873, %v2869
        %v3110 = vpack.c.b16 %v2874, %v2870
        %v3111 = vpack.c.b16 %v2875, %v2871
        %v3112 = vpack.c.b16 %v2880, %v2876
        %v3113 = vpack.c.b16 %v2881, %v2877
        %v3114 = vpack.c.b16 %v2882, %v2878
        %v3115 = vpack.c.b16 %v2883, %v2879
        %v3116 = vpack.c.b16 %v2888, %v2884
        %v3117 = vpack.c.b16 %v2889, %v2885
        %v3118 = vpack.c.b16 %v2890, %v2886
        %v3119 = vpack.c.b16 %v2891, %v2887
        %v3120 = vpack.c.b16 %v2896, %v2892
        %v3121 = vpack.c.b16 %v2897, %v2893
        %v3122 = vpack.c.b16 %v2898, %v2894
        %v3123 = vpack.c.b16 %v2899, %v2895
        %v3124 = vpack.c.b16 %v2904, %v2900
        %v3125 = vpack.c.b16 %v2905, %v2901
        %v3126 = vpack.c.b16 %v2906, %v2902
        %v3127 = vpack.c.b16 %v2907, %v2903
        %v3128 = vpack.c.b16 %v2912, %v2908
        %v3129 = vpack.c.b16 %v2913, %v2909
        %v3130 = vpack.c.b16 %v2914, %v2910
        %v3131 = vpack.c.b16 %v2915, %v2911
        %v3132 = vpack.c.b16 %v2920, %v2916
        %v3133 = vpack.c.b16 %v2921, %v2917
        %v3134 = vpack.c.b16 %v2922, %v2918
        %v3135 = vpack.c.b16 %v2923, %v2919
        %v3136 = vpack.c.b16 %v2928, %v2924
        %v3137 = vpack.c.b16 %v2929, %v2925
        %v3138 = vpack.c.b16 %v2930, %v2926
        %v3139 = vpack.c.b16 %v2931, %v2927
        %v3140 = vpack.c.b16 %v2936, %v2932
        %v3141 = vpack.c.b16 %v2937, %v2933
        %v3142 = vpack.c.b16 %v2938, %v2934
        %v3143 = vpack.c.b16 %v2939, %v2935
        %v3144 = vpack.c.b16 %v2944, %v2940
        %v3145 = vpack.c.b16 %v2945, %v2941
        %v3146 = vpack.c.b16 %v2946, %v2942
        %v3147 = vpack.c.b16 %v2947, %v2943
        %v3148 = vpack.c.b16 %v2952, %v2948
        %v3149 = vpack.c.b16 %v2953, %v2949
        %v3150 = vpack.c.b16 %v2954, %v2950
        %v3151 = vpack.c.b16 %v2955, %v2951
        %v3152 = vpack.c.b16 %v2960, %v2956
        %v3153 = vpack.c.b16 %v2961, %v2957
        %v3154 = vpack.c.b16 %v2962, %v2958
        %v3155 = vpack.c.b16 %v2963, %v2959
        %v3156 = vpack.c.b16 %v2968, %v2964
        %v3157 = vpack.c.b16 %v2969, %v2965
        %v3158 = vpack.c.b16 %v2970, %v2966
        %v3159 = vpack.c.b16 %v2971, %v2967
        %v3160 = vpack.c.b16 %v2976, %v2972
        %v3161 = vpack.c.b16 %v2977, %v2973
        %v3162 = vpack.c.b16 %v2978, %v2974
        %v3163 = vpack.c.b16 %v2979, %v2975
        %v3164 = vpack.c.b16 %v2984, %v2980
        %v3165 = vpack.c.b16 %v2985, %v2981
        %v3166 = vpack.c.b16 %v2986, %v2982
        %v3167 = vpack.c.b16 %v2987, %v2983
        %v3168 = vpack.c.b16 %v2992, %v2988
        %v3169 = vpack.c.b16 %v2993, %v2989
        %v3170 = vpack.c.b16 %v2994, %v2990
        %v3171 = vpack.c.b16 %v2995, %v2991
        %v3172 = vpack.c.b16 %v3000, %v2996
        %v3173 = vpack.c.b16 %v3001, %v2997
        %v3174 = vpack.c.b16 %v3002, %v2998
        %v3175 = vpack.c.b16 %v3003, %v2999
        %v3176 = vpack.c.b16 %v3008, %v3004
        %v3177 = vpack.c.b16 %v3009, %v3005
        %v3178 = vpack.c.b16 %v3010, %v3006
        %v3179 = vpack.c.b16 %v3011, %v3007
        %v3180 = vpack.c.b16 %v3016, %v3012
        %v3181 = vpack.c.b16 %v3017, %v3013
        %v3182 = vpack.c.b16 %v3018, %v3014
        %v3183 = vpack.c.b16 %v3019, %v3015
        %v3184 = vpack.c.b16 %v3024, %v3020
        %v3185 = vpack.c.b16 %v3025, %v3021
        %v3186 = vpack.c.b16 %v3026, %v3022
        %v3187 = vpack.c.b16 %v3027, %v3023
        %v3188 = vpack.c.b16 %v3032, %v3028
        %v3189 = vpack.c.b16 %v3033, %v3029
        %v3190 = vpack.c.b16 %v3034, %v3030
        %v3191 = vpack.c.b16 %v3035, %v3031
        %v3192 = vpack.c.b16 %v3040, %v3036
        %v3193 = vpack.c.b16 %v3041, %v3037
        %v3194 = vpack.c.b16 %v3042, %v3038
        %v3195 = vpack.c.b16 %v3043, %v3039
        %v3196 = vpack.c.b16 %v3048, %v3044
        %v3197 = vpack.c.b16 %v3049, %v3045
        %v3198 = vpack.c.b16 %v3050, %v3046
        %v3199 = vpack.c.b16 %v3051, %v3047
        %v3200 = vpack.c.b16 %v3056, %v3052
        %v3201 = vpack.c.b16 %v3057, %v3053
        %v3202 = vpack.c.b16 %v3058, %v3054
        %v3203 = vpack.c.b16 %v3059, %v3055
        %v3204 = vpack.c.b16 %v3064, %v3060
        %v3205 = vpack.c.b16 %v3065, %v3061
        %v3206 = vpack.c.b16 %v3066, %v3062
        %v3207 = vpack.c.b16 %v3067, %v3063
        %v3208 = vpack.c.b16 %v3072, %v3068
        %v3209 = vpack.c.b16 %v3073, %v3069
        %v3210 = vpack.c.b16 %v3074, %v3070
        %v3211 = vpack.c.b16 %v3075, %v3071
        %v3212 = vpack.c.b16 %v3080, %v3076
        %v3213 = vpack.c.b16 %v3081, %v3077
        %v3214 = vpack.c.b16 %v3082, %v3078
        %v3215 = vpack.c.b16 %v3083, %v3079
        %v3216 = vpack.c.b16 %v3088, %v3084
        %v3217 = vpack.c.b16 %v3089, %v3085
        %v3218 = vpack.c.b16 %v3090, %v3086
        %v3219 = vpack.c.b16 %v3091, %v3087
        %3348 = vmatprep.subr.bf16.mxu0 %v3121
        %3349 = vmatpush1.bf16.msra.mxu0 %v3120
        %3350 = vmatprep.subr.bf16.mxu0 %v3117
        %3351 = vmatpush1.bf16.msra.mxu0 %v3116
        %3352 = vmatprep.subr.bf16.mxu0 %v3113
        %3353 = vmatpush1.bf16.msra.mxu0 %v3112
        %3354 = vmatprep.subr.bf16.mxu0 %v3109
        %3355 = vmatpush1.bf16.msra.mxu0 %v3108
        %3356 = vmatprep.subr.bf16.mxu0 %v3105
        %3357 = vmatpush1.bf16.msra.mxu0 %v3104
        %3358 = vmatprep.subr.bf16.mxu0 %v3101
        %3359 = vmatpush1.bf16.msra.mxu0 %v3100
        %3360 = vmatprep.subr.bf16.mxu0 %v3097
        %3361 = vmatpush1.bf16.msra.mxu0 %v3096
        %3362 = vmatprep.subr.bf16.mxu0 %v3093
        %3363 = vmatpush1.bf16.msra.mxu0 %v3092
        %3364 = vmatprep.subr.bf16.mxu0 %v3153
        %3365 = vmatpush2.bf16.msra.mxu0 %v3152
        %3366 = vmatprep.subr.bf16.mxu0 %v3149
        %3367 = vmatpush2.bf16.msra.mxu0 %v3148
        %3368 = vmatprep.subr.bf16.mxu0 %v3145
        %3369 = vmatpush2.bf16.msra.mxu0 %v3144
        %3370 = vmatprep.subr.bf16.mxu0 %v3141
        %3371 = vmatpush2.bf16.msra.mxu0 %v3140
        %3372 = vmatprep.subr.bf16.mxu0 %v3137
        %3373 = vmatpush2.bf16.msra.mxu0 %v3136
        %3374 = vmatprep.subr.bf16.mxu0 %v3133
        %3375 = vmatpush2.bf16.msra.mxu0 %v3132
        %3376 = vmatprep.subr.bf16.mxu0 %v3129
        %3377 = vmatpush2.bf16.msra.mxu0 %v3128
        %3378 = vmatprep.subr.bf16.mxu0 %v3125
        %3379 = vmatpush2.bf16.msra.mxu0 %v3124
        %3380 = vmatprep.mubr.bf16.mxu0 %v2553
        %3381 = vmatmul.mubr.bf16.gmra.mxu0 %v2552
        %v3382 = vpop.f32.mrf.mxu0
        %v3383 = vadd.f32 %v2691, %v3382
        %v3384 = vpop.f32.mrf.mxu0
        %v3385 = vadd.f32 %v2695, %v3384
        %v3386 = vpop.f32.mrf.mxu0
        %v3387 = vpop.f32.mrf.mxu0
        %3388 = vdwg.mxu0
        %3389 = vmatprep.subr.bf16.mxu0 %v3185
        %3390 = vmatpush1.bf16.msra.mxu0 %v3184
        %3391 = vmatprep.subr.bf16.mxu0 %v3181
        %3392 = vmatpush1.bf16.msra.mxu0 %v3180
        %3393 = vmatprep.subr.bf16.mxu0 %v3177
        %3394 = vmatpush1.bf16.msra.mxu0 %v3176
        %3395 = vmatprep.subr.bf16.mxu0 %v3173
        %3396 = vmatpush1.bf16.msra.mxu0 %v3172
        %3397 = vmatprep.subr.bf16.mxu0 %v3169
        %3398 = vmatpush1.bf16.msra.mxu0 %v3168
        %3399 = vmatprep.subr.bf16.mxu0 %v3165
        %3400 = vmatpush1.bf16.msra.mxu0 %v3164
        %3401 = vmatprep.subr.bf16.mxu0 %v3161
        %3402 = vmatpush1.bf16.msra.mxu0 %v3160
        %3403 = vmatprep.subr.bf16.mxu0 %v3157
        %3404 = vmatpush1.bf16.msra.mxu0 %v3156
        %3405 = vmatprep.subr.bf16.mxu0 %v3217
        %3406 = vmatpush2.bf16.msra.mxu0 %v3216
        %3407 = vmatprep.subr.bf16.mxu0 %v3213
        %3408 = vmatpush2.bf16.msra.mxu0 %v3212
        %3409 = vmatprep.subr.bf16.mxu0 %v3209
        %3410 = vmatpush2.bf16.msra.mxu0 %v3208
        %3411 = vmatprep.subr.bf16.mxu0 %v3205
        %3412 = vmatpush2.bf16.msra.mxu0 %v3204
        %3413 = vmatprep.subr.bf16.mxu0 %v3201
        %3414 = vmatpush2.bf16.msra.mxu0 %v3200
        %3415 = vmatprep.subr.bf16.mxu0 %v3197
        %3416 = vmatpush2.bf16.msra.mxu0 %v3196
        %3417 = vmatprep.subr.bf16.mxu0 %v3193
        %3418 = vmatpush2.bf16.msra.mxu0 %v3192
        %3419 = vmatprep.subr.bf16.mxu0 %v3189
        %3420 = vmatpush2.bf16.msra.mxu0 %v3188
        %3421 = vmatprep.mubr.bf16.mxu0 %v2555
        %3422 = vmatmul.mubr.bf16.gmra.mxu0 %v2554
        %v3423 = vpop.f32.mrf.mxu0
        %v3424 = vadd.f32 %v3383, %v3423
        %v3425 = vpop.f32.mrf.mxu0
        %v3426 = vadd.f32 %v3385, %v3425
        %v3427 = vpop.f32.mrf.mxu0
        %v3428 = vpop.f32.mrf.mxu0
        %3429 = vdwg.mxu0
        %3430 = vmatprep.subr.bf16.mxu0 %v3123
        %3431 = vmatpush1.bf16.msra.mxu0 %v3122
        %3432 = vmatprep.subr.bf16.mxu0 %v3119
        %3433 = vmatpush1.bf16.msra.mxu0 %v3118
        %3434 = vmatprep.subr.bf16.mxu0 %v3115
        %3435 = vmatpush1.bf16.msra.mxu0 %v3114
        %3436 = vmatprep.subr.bf16.mxu0 %v3111
        %3437 = vmatpush1.bf16.msra.mxu0 %v3110
        %3438 = vmatprep.subr.bf16.mxu0 %v3107
        %3439 = vmatpush1.bf16.msra.mxu0 %v3106
        %3440 = vmatprep.subr.bf16.mxu0 %v3103
        %3441 = vmatpush1.bf16.msra.mxu0 %v3102
        %3442 = vmatprep.subr.bf16.mxu0 %v3099
        %3443 = vmatpush1.bf16.msra.mxu0 %v3098
        %3444 = vmatprep.subr.bf16.mxu0 %v3095
        %3445 = vmatpush1.bf16.msra.mxu0 %v3094
        %3446 = vmatprep.subr.bf16.mxu0 %v3155
        %3447 = vmatpush2.bf16.msra.mxu0 %v3154
        %3448 = vmatprep.subr.bf16.mxu0 %v3151
        %3449 = vmatpush2.bf16.msra.mxu0 %v3150
        %3450 = vmatprep.subr.bf16.mxu0 %v3147
        %3451 = vmatpush2.bf16.msra.mxu0 %v3146
        %3452 = vmatprep.subr.bf16.mxu0 %v3143
        %3453 = vmatpush2.bf16.msra.mxu0 %v3142
        %3454 = vmatprep.subr.bf16.mxu0 %v3139
        %3455 = vmatpush2.bf16.msra.mxu0 %v3138
        %3456 = vmatprep.subr.bf16.mxu0 %v3135
        %3457 = vmatpush2.bf16.msra.mxu0 %v3134
        %3458 = vmatprep.subr.bf16.mxu0 %v3131
        %3459 = vmatpush2.bf16.msra.mxu0 %v3130
        %3460 = vmatprep.subr.bf16.mxu0 %v3127
        %3461 = vmatpush2.bf16.msra.mxu0 %v3126
        %3462 = vmatprep.mubr.bf16.mxu0 %v2553
        %3463 = vmatmul.mubr.bf16.gmra.mxu0 %v2552
        %v3464 = vpop.f32.mrf.mxu0
        %v3465 = vadd.f32 %v2699, %v3464
        %v3466 = vpop.f32.mrf.mxu0
        %v3467 = vadd.f32 %v2703, %v3466
        %v3468 = vpop.f32.mrf.mxu0
        %v3469 = vpop.f32.mrf.mxu0
        %3470 = vdwg.mxu0
        %3471 = vmatprep.subr.bf16.mxu0 %v3187
        %3472 = vmatpush1.bf16.msra.mxu0 %v3186
        %3473 = vmatprep.subr.bf16.mxu0 %v3183
        %3474 = vmatpush1.bf16.msra.mxu0 %v3182
        %3475 = vmatprep.subr.bf16.mxu0 %v3179
        %3476 = vmatpush1.bf16.msra.mxu0 %v3178
        %3477 = vmatprep.subr.bf16.mxu0 %v3175
        %3478 = vmatpush1.bf16.msra.mxu0 %v3174
        %3479 = vmatprep.subr.bf16.mxu0 %v3171
        %3480 = vmatpush1.bf16.msra.mxu0 %v3170
        %3481 = vmatprep.subr.bf16.mxu0 %v3167
        %3482 = vmatpush1.bf16.msra.mxu0 %v3166
        %3483 = vmatprep.subr.bf16.mxu0 %v3163
        %3484 = vmatpush1.bf16.msra.mxu0 %v3162
        %3485 = vmatprep.subr.bf16.mxu0 %v3159
        %3486 = vmatpush1.bf16.msra.mxu0 %v3158
        %3487 = vmatprep.subr.bf16.mxu0 %v3219
        %3488 = vmatpush2.bf16.msra.mxu0 %v3218
        %3489 = vmatprep.subr.bf16.mxu0 %v3215
        %3490 = vmatpush2.bf16.msra.mxu0 %v3214
        %3491 = vmatprep.subr.bf16.mxu0 %v3211
        %3492 = vmatpush2.bf16.msra.mxu0 %v3210
        %3493 = vmatprep.subr.bf16.mxu0 %v3207
        %3494 = vmatpush2.bf16.msra.mxu0 %v3206
        %3495 = vmatprep.subr.bf16.mxu0 %v3203
        %3496 = vmatpush2.bf16.msra.mxu0 %v3202
        %3497 = vmatprep.subr.bf16.mxu0 %v3199
        %3498 = vmatpush2.bf16.msra.mxu0 %v3198
        %3499 = vmatprep.subr.bf16.mxu0 %v3195
        %3500 = vmatpush2.bf16.msra.mxu0 %v3194
        %3501 = vmatprep.subr.bf16.mxu0 %v3191
        %3502 = vmatpush2.bf16.msra.mxu0 %v3190
        %3503 = vmatprep.mubr.bf16.mxu0 %v2555
        %3504 = vmatmul.mubr.bf16.gmra.mxu0 %v2554
        %v3505 = vpop.f32.mrf.mxu0
        %v3506 = vadd.f32 %v3465, %v3505
        %v3507 = vpop.f32.mrf.mxu0
        %v3508 = vadd.f32 %v3467, %v3507
        %v3509 = vpop.f32.mrf.mxu0
        %v3510 = vpop.f32.mrf.mxu0
        %3511 = vdwg.mxu0
        %v3512 = vtanh.pop %v3424
        %v3513 = vtanh.pop %v3426
        %v3514 = vtanh.pop %v3506
        %v3515 = vtanh.pop %v3508
        %v3516 = vpack.c.bf16 %v3512, %v3512
        %v3517 = vpack.c.bf16 %v3513, %v3513
        %v3518 = vpack.c.bf16 %v3514, %v3514
        %v3519 = vpack.c.bf16 %v3515, %v3515
        %s3520 = scalar_lea.vmem %s384, 3072 [#allocation8]
        %v3521 = vld [vmem:[%s3520] sm:$0xff]
        %v3522 = vld [vmem:[%s3520 + $0x8] sm:$0xff]
        %v3523 = vld [vmem:[%s3520 + $0x10] sm:$0xff]
        %v3524 = vld [vmem:[%s3520 + $0x18] sm:$0xff]
        %v3525 = vld [vmem:[%s3520 + $0x20] sm:$0xff]
        %v3526 = vld [vmem:[%s3520 + $0x28] sm:$0xff]
        %v3527 = vld [vmem:[%s3520 + $0x30] sm:$0xff]
        %v3528 = vld [vmem:[%s3520 + $0x38] sm:$0xff]
        %v3529 = vld [vmem:[%s3520 + $0x40] sm:$0xff]
        %v3530 = vld [vmem:[%s3520 + $0x48] sm:$0xff]
        %v3531 = vld [vmem:[%s3520 + $0x50] sm:$0xff]
        %v3532 = vld [vmem:[%s3520 + $0x58] sm:$0xff]
        %v3533 = vld [vmem:[%s3520 + $0x60] sm:$0xff]
        %v3534 = vld [vmem:[%s3520 + $0x68] sm:$0xff]
        %v3535 = vld [vmem:[%s3520 + $0x70] sm:$0xff]
        %v3536 = vld [vmem:[%s3520 + $0x78] sm:$0xff]
        %v3537 = vld [vmem:[%s3520 + $0x80] sm:$0xff]
        %v3538 = vld [vmem:[%s3520 + $0x88] sm:$0xff]
        %v3539 = vld [vmem:[%s3520 + $0x90] sm:$0xff]
        %v3540 = vld [vmem:[%s3520 + $0x98] sm:$0xff]
        %v3541 = vld [vmem:[%s3520 + $0xa0] sm:$0xff]
        %v3542 = vld [vmem:[%s3520 + $0xa8] sm:$0xff]
        %v3543 = vld [vmem:[%s3520 + $0xb0] sm:$0xff]
        %v3544 = vld [vmem:[%s3520 + $0xb8] sm:$0xff]
        %v3545 = vld [vmem:[%s3520 + $0xc0] sm:$0xff]
        %v3546 = vld [vmem:[%s3520 + $0xc8] sm:$0xff]
        %v3547 = vld [vmem:[%s3520 + $0xd0] sm:$0xff]
        %v3548 = vld [vmem:[%s3520 + $0xd8] sm:$0xff]
        %v3549 = vld [vmem:[%s3520 + $0xe0] sm:$0xff]
        %v3550 = vld [vmem:[%s3520 + $0xe8] sm:$0xff]
        %v3551 = vld [vmem:[%s3520 + $0xf0] sm:$0xff]
        %v3552 = vld [vmem:[%s3520 + $0xf8] sm:$0xff]
        %v3553 = vld [vmem:[%s3520 + $0x100] sm:$0xff]
        %v3554 = vld [vmem:[%s3520 + $0x108] sm:$0xff]
        %v3555 = vld [vmem:[%s3520 + $0x110] sm:$0xff]
        %v3556 = vld [vmem:[%s3520 + $0x118] sm:$0xff]
        %v3557 = vld [vmem:[%s3520 + $0x120] sm:$0xff]
        %v3558 = vld [vmem:[%s3520 + $0x128] sm:$0xff]
        %v3559 = vld [vmem:[%s3520 + $0x130] sm:$0xff]
        %v3560 = vld [vmem:[%s3520 + $0x138] sm:$0xff]
        %v3561 = vld [vmem:[%s3520 + $0x140] sm:$0xff]
        %v3562 = vld [vmem:[%s3520 + $0x148] sm:$0xff]
        %v3563 = vld [vmem:[%s3520 + $0x150] sm:$0xff]
        %v3564 = vld [vmem:[%s3520 + $0x158] sm:$0xff]
        %v3565 = vld [vmem:[%s3520 + $0x160] sm:$0xff]
        %v3566 = vld [vmem:[%s3520 + $0x168] sm:$0xff]
        %v3567 = vld [vmem:[%s3520 + $0x170] sm:$0xff]
        %v3568 = vld [vmem:[%s3520 + $0x178] sm:$0xff]
        %v3569 = vld [vmem:[%s3520 + $0x180] sm:$0xff]
        %v3570 = vld [vmem:[%s3520 + $0x188] sm:$0xff]
        %v3571 = vld [vmem:[%s3520 + $0x190] sm:$0xff]
        %v3572 = vld [vmem:[%s3520 + $0x198] sm:$0xff]
        %v3573 = vld [vmem:[%s3520 + $0x1a0] sm:$0xff]
        %v3574 = vld [vmem:[%s3520 + $0x1a8] sm:$0xff]
        %v3575 = vld [vmem:[%s3520 + $0x1b0] sm:$0xff]
        %v3576 = vld [vmem:[%s3520 + $0x1b8] sm:$0xff]
        %v3577 = vld [vmem:[%s3520 + $0x1c0] sm:$0xff]
        %v3578 = vld [vmem:[%s3520 + $0x1c8] sm:$0xff]
        %v3579 = vld [vmem:[%s3520 + $0x1d0] sm:$0xff]
        %v3580 = vld [vmem:[%s3520 + $0x1d8] sm:$0xff]
        %v3581 = vld [vmem:[%s3520 + $0x1e0] sm:$0xff]
        %v3582 = vld [vmem:[%s3520 + $0x1e8] sm:$0xff]
        %v3583 = vld [vmem:[%s3520 + $0x1f0] sm:$0xff]
        %v3584 = vld [vmem:[%s3520 + $0x1f8] sm:$0xff]
        %v3585 = vld [vmem:[%s3520 + $0x200] sm:$0xff]
        %v3586 = vld [vmem:[%s3520 + $0x208] sm:$0xff]
        %v3587 = vld [vmem:[%s3520 + $0x210] sm:$0xff]
        %v3588 = vld [vmem:[%s3520 + $0x218] sm:$0xff]
        %v3589 = vld [vmem:[%s3520 + $0x220] sm:$0xff]
        %v3590 = vld [vmem:[%s3520 + $0x228] sm:$0xff]
        %v3591 = vld [vmem:[%s3520 + $0x230] sm:$0xff]
        %v3592 = vld [vmem:[%s3520 + $0x238] sm:$0xff]
        %v3593 = vld [vmem:[%s3520 + $0x240] sm:$0xff]
        %v3594 = vld [vmem:[%s3520 + $0x248] sm:$0xff]
        %v3595 = vld [vmem:[%s3520 + $0x250] sm:$0xff]
        %v3596 = vld [vmem:[%s3520 + $0x258] sm:$0xff]
        %v3597 = vld [vmem:[%s3520 + $0x260] sm:$0xff]
        %v3598 = vld [vmem:[%s3520 + $0x268] sm:$0xff]
        %v3599 = vld [vmem:[%s3520 + $0x270] sm:$0xff]
        %v3600 = vld [vmem:[%s3520 + $0x278] sm:$0xff]
        %v3601 = vld [vmem:[%s3520 + $0x280] sm:$0xff]
        %v3602 = vld [vmem:[%s3520 + $0x288] sm:$0xff]
        %v3603 = vld [vmem:[%s3520 + $0x290] sm:$0xff]
        %v3604 = vld [vmem:[%s3520 + $0x298] sm:$0xff]
        %v3605 = vld [vmem:[%s3520 + $0x2a0] sm:$0xff]
        %v3606 = vld [vmem:[%s3520 + $0x2a8] sm:$0xff]
        %v3607 = vld [vmem:[%s3520 + $0x2b0] sm:$0xff]
        %v3608 = vld [vmem:[%s3520 + $0x2b8] sm:$0xff]
        %v3609 = vld [vmem:[%s3520 + $0x2c0] sm:$0xff]
        %v3610 = vld [vmem:[%s3520 + $0x2c8] sm:$0xff]
        %v3611 = vld [vmem:[%s3520 + $0x2d0] sm:$0xff]
        %v3612 = vld [vmem:[%s3520 + $0x2d8] sm:$0xff]
        %v3613 = vld [vmem:[%s3520 + $0x2e0] sm:$0xff]
        %v3614 = vld [vmem:[%s3520 + $0x2e8] sm:$0xff]
        %v3615 = vld [vmem:[%s3520 + $0x2f0] sm:$0xff]
        %v3616 = vld [vmem:[%s3520 + $0x2f8] sm:$0xff]
        %v3617 = vld [vmem:[%s3520 + $0x300] sm:$0xff]
        %v3618 = vld [vmem:[%s3520 + $0x308] sm:$0xff]
        %v3619 = vld [vmem:[%s3520 + $0x310] sm:$0xff]
        %v3620 = vld [vmem:[%s3520 + $0x318] sm:$0xff]
        %v3621 = vld [vmem:[%s3520 + $0x320] sm:$0xff]
        %v3622 = vld [vmem:[%s3520 + $0x328] sm:$0xff]
        %v3623 = vld [vmem:[%s3520 + $0x330] sm:$0xff]
        %v3624 = vld [vmem:[%s3520 + $0x338] sm:$0xff]
        %v3625 = vld [vmem:[%s3520 + $0x340] sm:$0xff]
        %v3626 = vld [vmem:[%s3520 + $0x348] sm:$0xff]
        %v3627 = vld [vmem:[%s3520 + $0x350] sm:$0xff]
        %v3628 = vld [vmem:[%s3520 + $0x358] sm:$0xff]
        %v3629 = vld [vmem:[%s3520 + $0x360] sm:$0xff]
        %v3630 = vld [vmem:[%s3520 + $0x368] sm:$0xff]
        %v3631 = vld [vmem:[%s3520 + $0x370] sm:$0xff]
        %v3632 = vld [vmem:[%s3520 + $0x378] sm:$0xff]
        %v3633 = vld [vmem:[%s3520 + $0x380] sm:$0xff]
        %v3634 = vld [vmem:[%s3520 + $0x388] sm:$0xff]
        %v3635 = vld [vmem:[%s3520 + $0x390] sm:$0xff]
        %v3636 = vld [vmem:[%s3520 + $0x398] sm:$0xff]
        %v3637 = vld [vmem:[%s3520 + $0x3a0] sm:$0xff]
        %v3638 = vld [vmem:[%s3520 + $0x3a8] sm:$0xff]
        %v3639 = vld [vmem:[%s3520 + $0x3b0] sm:$0xff]
        %v3640 = vld [vmem:[%s3520 + $0x3b8] sm:$0xff]
        %v3641 = vld [vmem:[%s3520 + $0x3c0] sm:$0xff]
        %v3642 = vld [vmem:[%s3520 + $0x3c8] sm:$0xff]
        %v3643 = vld [vmem:[%s3520 + $0x3d0] sm:$0xff]
        %v3644 = vld [vmem:[%s3520 + $0x3d8] sm:$0xff]
        %v3645 = vld [vmem:[%s3520 + $0x3e0] sm:$0xff]
        %v3646 = vld [vmem:[%s3520 + $0x3e8] sm:$0xff]
        %v3647 = vld [vmem:[%s3520 + $0x3f0] sm:$0xff]
        %v3648 = vld [vmem:[%s3520 + $0x3f8] sm:$0xff]
        %s3649 = scalar_lea.vmem %s436, 3
        %v3650 = vld [vmem:[%s3649] ss:$8 sm:$0xf]
        %v3652 = vlaneseq
        %v3653 = vshrl.u32 %v3652, 7
        %v3654 = vsub.s32 0, %v3653
        %v3655 = vrot.slane %v3650, %v3654
        %v3656 = vlaneseq
        %v3657 = vshrl.u32 %v3656, 7
        %v3658 = vsub.s32 1, %v3657
        %v3659 = vrot.slane %v3650, %v3658
        %v3660 = vlaneseq
        %v3661 = vshrl.u32 %v3660, 7
        %v3662 = vsub.s32 2, %v3661
        %v3663 = vrot.slane %v3650, %v3662
        %v3664 = vlaneseq
        %v3665 = vshrl.u32 %v3664, 7
        %v3666 = vsub.s32 3, %v3665
        %v3667 = vrot.slane %v3650, %v3666
        %v3800 = vunpack.c.l.b16 %v3521
        %v3801 = vunpack.c.h.b16 %v3521
        %v3802 = vunpack.c.l.b16 %v3522
        %v3803 = vunpack.c.h.b16 %v3522
        %v3804 = vunpack.c.l.b16 %v3523
        %v3805 = vunpack.c.h.b16 %v3523
        %v3806 = vunpack.c.l.b16 %v3524
        %v3807 = vunpack.c.h.b16 %v3524
        %v3808 = vunpack.c.l.b16 %v3525
        %v3809 = vunpack.c.h.b16 %v3525
        %v3810 = vunpack.c.l.b16 %v3526
        %v3811 = vunpack.c.h.b16 %v3526
        %v3812 = vunpack.c.l.b16 %v3527
        %v3813 = vunpack.c.h.b16 %v3527
        %v3814 = vunpack.c.l.b16 %v3528
        %v3815 = vunpack.c.h.b16 %v3528
        %v3816 = vunpack.c.l.b16 %v3529
        %v3817 = vunpack.c.h.b16 %v3529
        %v3818 = vunpack.c.l.b16 %v3530
        %v3819 = vunpack.c.h.b16 %v3530
        %v3820 = vunpack.c.l.b16 %v3531
        %v3821 = vunpack.c.h.b16 %v3531
        %v3822 = vunpack.c.l.b16 %v3532
        %v3823 = vunpack.c.h.b16 %v3532
        %v3824 = vunpack.c.l.b16 %v3533
        %v3825 = vunpack.c.h.b16 %v3533
        %v3826 = vunpack.c.l.b16 %v3534
        %v3827 = vunpack.c.h.b16 %v3534
        %v3828 = vunpack.c.l.b16 %v3535
        %v3829 = vunpack.c.h.b16 %v3535
        %v3830 = vunpack.c.l.b16 %v3536
        %v3831 = vunpack.c.h.b16 %v3536
        %v3832 = vunpack.c.l.b16 %v3537
        %v3833 = vunpack.c.h.b16 %v3537
        %v3834 = vunpack.c.l.b16 %v3538
        %v3835 = vunpack.c.h.b16 %v3538
        %v3836 = vunpack.c.l.b16 %v3539
        %v3837 = vunpack.c.h.b16 %v3539
        %v3838 = vunpack.c.l.b16 %v3540
        %v3839 = vunpack.c.h.b16 %v3540
        %v3840 = vunpack.c.l.b16 %v3541
        %v3841 = vunpack.c.h.b16 %v3541
        %v3842 = vunpack.c.l.b16 %v3542
        %v3843 = vunpack.c.h.b16 %v3542
        %v3844 = vunpack.c.l.b16 %v3543
        %v3845 = vunpack.c.h.b16 %v3543
        %v3846 = vunpack.c.l.b16 %v3544
        %v3847 = vunpack.c.h.b16 %v3544
        %v3848 = vunpack.c.l.b16 %v3545
        %v3849 = vunpack.c.h.b16 %v3545
        %v3850 = vunpack.c.l.b16 %v3546
        %v3851 = vunpack.c.h.b16 %v3546
        %v3852 = vunpack.c.l.b16 %v3547
        %v3853 = vunpack.c.h.b16 %v3547
        %v3854 = vunpack.c.l.b16 %v3548
        %v3855 = vunpack.c.h.b16 %v3548
        %v3856 = vunpack.c.l.b16 %v3549
        %v3857 = vunpack.c.h.b16 %v3549
        %v3858 = vunpack.c.l.b16 %v3550
        %v3859 = vunpack.c.h.b16 %v3550
        %v3860 = vunpack.c.l.b16 %v3551
        %v3861 = vunpack.c.h.b16 %v3551
        %v3862 = vunpack.c.l.b16 %v3552
        %v3863 = vunpack.c.h.b16 %v3552
        %v3864 = vunpack.c.l.b16 %v3553
        %v3865 = vunpack.c.h.b16 %v3553
        %v3866 = vunpack.c.l.b16 %v3554
        %v3867 = vunpack.c.h.b16 %v3554
        %v3868 = vunpack.c.l.b16 %v3555
        %v3869 = vunpack.c.h.b16 %v3555
        %v3870 = vunpack.c.l.b16 %v3556
        %v3871 = vunpack.c.h.b16 %v3556
        %v3872 = vunpack.c.l.b16 %v3557
        %v3873 = vunpack.c.h.b16 %v3557
        %v3874 = vunpack.c.l.b16 %v3558
        %v3875 = vunpack.c.h.b16 %v3558
        %v3876 = vunpack.c.l.b16 %v3559
        %v3877 = vunpack.c.h.b16 %v3559
        %v3878 = vunpack.c.l.b16 %v3560
        %v3879 = vunpack.c.h.b16 %v3560
        %v3880 = vunpack.c.l.b16 %v3561
        %v3881 = vunpack.c.h.b16 %v3561
        %v3882 = vunpack.c.l.b16 %v3562
        %v3883 = vunpack.c.h.b16 %v3562
        %v3884 = vunpack.c.l.b16 %v3563
        %v3885 = vunpack.c.h.b16 %v3563
        %v3886 = vunpack.c.l.b16 %v3564
        %v3887 = vunpack.c.h.b16 %v3564
        %v3888 = vunpack.c.l.b16 %v3565
        %v3889 = vunpack.c.h.b16 %v3565
        %v3890 = vunpack.c.l.b16 %v3566
        %v3891 = vunpack.c.h.b16 %v3566
        %v3892 = vunpack.c.l.b16 %v3567
        %v3893 = vunpack.c.h.b16 %v3567
        %v3894 = vunpack.c.l.b16 %v3568
        %v3895 = vunpack.c.h.b16 %v3568
        %v3896 = vunpack.c.l.b16 %v3569
        %v3897 = vunpack.c.h.b16 %v3569
        %v3898 = vunpack.c.l.b16 %v3570
        %v3899 = vunpack.c.h.b16 %v3570
        %v3900 = vunpack.c.l.b16 %v3571
        %v3901 = vunpack.c.h.b16 %v3571
        %v3902 = vunpack.c.l.b16 %v3572
        %v3903 = vunpack.c.h.b16 %v3572
        %v3904 = vunpack.c.l.b16 %v3573
        %v3905 = vunpack.c.h.b16 %v3573
        %v3906 = vunpack.c.l.b16 %v3574
        %v3907 = vunpack.c.h.b16 %v3574
        %v3908 = vunpack.c.l.b16 %v3575
        %v3909 = vunpack.c.h.b16 %v3575
        %v3910 = vunpack.c.l.b16 %v3576
        %v3911 = vunpack.c.h.b16 %v3576
        %v3912 = vunpack.c.l.b16 %v3577
        %v3913 = vunpack.c.h.b16 %v3577
        %v3914 = vunpack.c.l.b16 %v3578
        %v3915 = vunpack.c.h.b16 %v3578
        %v3916 = vunpack.c.l.b16 %v3579
        %v3917 = vunpack.c.h.b16 %v3579
        %v3918 = vunpack.c.l.b16 %v3580
        %v3919 = vunpack.c.h.b16 %v3580
        %v3920 = vunpack.c.l.b16 %v3581
        %v3921 = vunpack.c.h.b16 %v3581
        %v3922 = vunpack.c.l.b16 %v3582
        %v3923 = vunpack.c.h.b16 %v3582
        %v3924 = vunpack.c.l.b16 %v3583
        %v3925 = vunpack.c.h.b16 %v3583
        %v3926 = vunpack.c.l.b16 %v3584
        %v3927 = vunpack.c.h.b16 %v3584
        %v3928 = vunpack.c.l.b16 %v3585
        %v3929 = vunpack.c.h.b16 %v3585
        %v3930 = vunpack.c.l.b16 %v3586
        %v3931 = vunpack.c.h.b16 %v3586
        %v3932 = vunpack.c.l.b16 %v3587
        %v3933 = vunpack.c.h.b16 %v3587
        %v3934 = vunpack.c.l.b16 %v3588
        %v3935 = vunpack.c.h.b16 %v3588
        %v3936 = vunpack.c.l.b16 %v3589
        %v3937 = vunpack.c.h.b16 %v3589
        %v3938 = vunpack.c.l.b16 %v3590
        %v3939 = vunpack.c.h.b16 %v3590
        %v3940 = vunpack.c.l.b16 %v3591
        %v3941 = vunpack.c.h.b16 %v3591
        %v3942 = vunpack.c.l.b16 %v3592
        %v3943 = vunpack.c.h.b16 %v3592
        %v3944 = vunpack.c.l.b16 %v3593
        %v3945 = vunpack.c.h.b16 %v3593
        %v3946 = vunpack.c.l.b16 %v3594
        %v3947 = vunpack.c.h.b16 %v3594
        %v3948 = vunpack.c.l.b16 %v3595
        %v3949 = vunpack.c.h.b16 %v3595
        %v3950 = vunpack.c.l.b16 %v3596
        %v3951 = vunpack.c.h.b16 %v3596
        %v3952 = vunpack.c.l.b16 %v3597
        %v3953 = vunpack.c.h.b16 %v3597
        %v3954 = vunpack.c.l.b16 %v3598
        %v3955 = vunpack.c.h.b16 %v3598
        %v3956 = vunpack.c.l.b16 %v3599
        %v3957 = vunpack.c.h.b16 %v3599
        %v3958 = vunpack.c.l.b16 %v3600
        %v3959 = vunpack.c.h.b16 %v3600
        %v3960 = vunpack.c.l.b16 %v3601
        %v3961 = vunpack.c.h.b16 %v3601
        %v3962 = vunpack.c.l.b16 %v3602
        %v3963 = vunpack.c.h.b16 %v3602
        %v3964 = vunpack.c.l.b16 %v3603
        %v3965 = vunpack.c.h.b16 %v3603
        %v3966 = vunpack.c.l.b16 %v3604
        %v3967 = vunpack.c.h.b16 %v3604
        %v3968 = vunpack.c.l.b16 %v3605
        %v3969 = vunpack.c.h.b16 %v3605
        %v3970 = vunpack.c.l.b16 %v3606
        %v3971 = vunpack.c.h.b16 %v3606
        %v3972 = vunpack.c.l.b16 %v3607
        %v3973 = vunpack.c.h.b16 %v3607
        %v3974 = vunpack.c.l.b16 %v3608
        %v3975 = vunpack.c.h.b16 %v3608
        %v3976 = vunpack.c.l.b16 %v3609
        %v3977 = vunpack.c.h.b16 %v3609
        %v3978 = vunpack.c.l.b16 %v3610
        %v3979 = vunpack.c.h.b16 %v3610
        %v3980 = vunpack.c.l.b16 %v3611
        %v3981 = vunpack.c.h.b16 %v3611
        %v3982 = vunpack.c.l.b16 %v3612
        %v3983 = vunpack.c.h.b16 %v3612
        %v3984 = vunpack.c.l.b16 %v3613
        %v3985 = vunpack.c.h.b16 %v3613
        %v3986 = vunpack.c.l.b16 %v3614
        %v3987 = vunpack.c.h.b16 %v3614
        %v3988 = vunpack.c.l.b16 %v3615
        %v3989 = vunpack.c.h.b16 %v3615
        %v3990 = vunpack.c.l.b16 %v3616
        %v3991 = vunpack.c.h.b16 %v3616
        %v3992 = vunpack.c.l.b16 %v3617
        %v3993 = vunpack.c.h.b16 %v3617
        %v3994 = vunpack.c.l.b16 %v3618
        %v3995 = vunpack.c.h.b16 %v3618
        %v3996 = vunpack.c.l.b16 %v3619
        %v3997 = vunpack.c.h.b16 %v3619
        %v3998 = vunpack.c.l.b16 %v3620
        %v3999 = vunpack.c.h.b16 %v3620
        %v4000 = vunpack.c.l.b16 %v3621
        %v4001 = vunpack.c.h.b16 %v3621
        %v4002 = vunpack.c.l.b16 %v3622
        %v4003 = vunpack.c.h.b16 %v3622
        %v4004 = vunpack.c.l.b16 %v3623
        %v4005 = vunpack.c.h.b16 %v3623
        %v4006 = vunpack.c.l.b16 %v3624
        %v4007 = vunpack.c.h.b16 %v3624
        %v4008 = vunpack.c.l.b16 %v3625
        %v4009 = vunpack.c.h.b16 %v3625
        %v4010 = vunpack.c.l.b16 %v3626
        %v4011 = vunpack.c.h.b16 %v3626
        %v4012 = vunpack.c.l.b16 %v3627
        %v4013 = vunpack.c.h.b16 %v3627
        %v4014 = vunpack.c.l.b16 %v3628
        %v4015 = vunpack.c.h.b16 %v3628
        %v4016 = vunpack.c.l.b16 %v3629
        %v4017 = vunpack.c.h.b16 %v3629
        %v4018 = vunpack.c.l.b16 %v3630
        %v4019 = vunpack.c.h.b16 %v3630
        %v4020 = vunpack.c.l.b16 %v3631
        %v4021 = vunpack.c.h.b16 %v3631
        %v4022 = vunpack.c.l.b16 %v3632
        %v4023 = vunpack.c.h.b16 %v3632
        %v4024 = vunpack.c.l.b16 %v3633
        %v4025 = vunpack.c.h.b16 %v3633
        %v4026 = vunpack.c.l.b16 %v3634
        %v4027 = vunpack.c.h.b16 %v3634
        %v4028 = vunpack.c.l.b16 %v3635
        %v4029 = vunpack.c.h.b16 %v3635
        %v4030 = vunpack.c.l.b16 %v3636
        %v4031 = vunpack.c.h.b16 %v3636
        %v4032 = vunpack.c.l.b16 %v3637
        %v4033 = vunpack.c.h.b16 %v3637
        %v4034 = vunpack.c.l.b16 %v3638
        %v4035 = vunpack.c.h.b16 %v3638
        %v4036 = vunpack.c.l.b16 %v3639
        %v4037 = vunpack.c.h.b16 %v3639
        %v4038 = vunpack.c.l.b16 %v3640
        %v4039 = vunpack.c.h.b16 %v3640
        %v4040 = vunpack.c.l.b16 %v3641
        %v4041 = vunpack.c.h.b16 %v3641
        %v4042 = vunpack.c.l.b16 %v3642
        %v4043 = vunpack.c.h.b16 %v3642
        %v4044 = vunpack.c.l.b16 %v3643
        %v4045 = vunpack.c.h.b16 %v3643
        %v4046 = vunpack.c.l.b16 %v3644
        %v4047 = vunpack.c.h.b16 %v3644
        %v4048 = vunpack.c.l.b16 %v3645
        %v4049 = vunpack.c.h.b16 %v3645
        %v4050 = vunpack.c.l.b16 %v3646
        %v4051 = vunpack.c.h.b16 %v3646
        %v4052 = vunpack.c.l.b16 %v3647
        %v4053 = vunpack.c.h.b16 %v3647
        %v4054 = vunpack.c.l.b16 %v3648
        %v4055 = vunpack.c.h.b16 %v3648
        %v4056 = vpack.c.b16 %v3804, %v3800
        %v4057 = vpack.c.b16 %v3805, %v3801
        %v4058 = vpack.c.b16 %v3806, %v3802
        %v4059 = vpack.c.b16 %v3807, %v3803
        %v4060 = vpack.c.b16 %v3812, %v3808
        %v4061 = vpack.c.b16 %v3813, %v3809
        %v4062 = vpack.c.b16 %v3814, %v3810
        %v4063 = vpack.c.b16 %v3815, %v3811
        %v4064 = vpack.c.b16 %v3820, %v3816
        %v4065 = vpack.c.b16 %v3821, %v3817
        %v4066 = vpack.c.b16 %v3822, %v3818
        %v4067 = vpack.c.b16 %v3823, %v3819
        %v4068 = vpack.c.b16 %v3828, %v3824
        %v4069 = vpack.c.b16 %v3829, %v3825
        %v4070 = vpack.c.b16 %v3830, %v3826
        %v4071 = vpack.c.b16 %v3831, %v3827
        %v4072 = vpack.c.b16 %v3836, %v3832
        %v4073 = vpack.c.b16 %v3837, %v3833
        %v4074 = vpack.c.b16 %v3838, %v3834
        %v4075 = vpack.c.b16 %v3839, %v3835
        %v4076 = vpack.c.b16 %v3844, %v3840
        %v4077 = vpack.c.b16 %v3845, %v3841
        %v4078 = vpack.c.b16 %v3846, %v3842
        %v4079 = vpack.c.b16 %v3847, %v3843
        %v4080 = vpack.c.b16 %v3852, %v3848
        %v4081 = vpack.c.b16 %v3853, %v3849
        %v4082 = vpack.c.b16 %v3854, %v3850
        %v4083 = vpack.c.b16 %v3855, %v3851
        %v4084 = vpack.c.b16 %v3860, %v3856
        %v4085 = vpack.c.b16 %v3861, %v3857
        %v4086 = vpack.c.b16 %v3862, %v3858
        %v4087 = vpack.c.b16 %v3863, %v3859
        %v4088 = vpack.c.b16 %v3868, %v3864
        %v4089 = vpack.c.b16 %v3869, %v3865
        %v4090 = vpack.c.b16 %v3870, %v3866
        %v4091 = vpack.c.b16 %v3871, %v3867
        %v4092 = vpack.c.b16 %v3876, %v3872
        %v4093 = vpack.c.b16 %v3877, %v3873
        %v4094 = vpack.c.b16 %v3878, %v3874
        %v4095 = vpack.c.b16 %v3879, %v3875
        %v4096 = vpack.c.b16 %v3884, %v3880
        %v4097 = vpack.c.b16 %v3885, %v3881
        %v4098 = vpack.c.b16 %v3886, %v3882
        %v4099 = vpack.c.b16 %v3887, %v3883
        %v4100 = vpack.c.b16 %v3892, %v3888
        %v4101 = vpack.c.b16 %v3893, %v3889
        %v4102 = vpack.c.b16 %v3894, %v3890
        %v4103 = vpack.c.b16 %v3895, %v3891
        %v4104 = vpack.c.b16 %v3900, %v3896
        %v4105 = vpack.c.b16 %v3901, %v3897
        %v4106 = vpack.c.b16 %v3902, %v3898
        %v4107 = vpack.c.b16 %v3903, %v3899
        %v4108 = vpack.c.b16 %v3908, %v3904
        %v4109 = vpack.c.b16 %v3909, %v3905
        %v4110 = vpack.c.b16 %v3910, %v3906
        %v4111 = vpack.c.b16 %v3911, %v3907
        %v4112 = vpack.c.b16 %v3916, %v3912
        %v4113 = vpack.c.b16 %v3917, %v3913
        %v4114 = vpack.c.b16 %v3918, %v3914
        %v4115 = vpack.c.b16 %v3919, %v3915
        %v4116 = vpack.c.b16 %v3924, %v3920
        %v4117 = vpack.c.b16 %v3925, %v3921
        %v4118 = vpack.c.b16 %v3926, %v3922
        %v4119 = vpack.c.b16 %v3927, %v3923
        %v4120 = vpack.c.b16 %v3932, %v3928
        %v4121 = vpack.c.b16 %v3933, %v3929
        %v4122 = vpack.c.b16 %v3934, %v3930
        %v4123 = vpack.c.b16 %v3935, %v3931
        %v4124 = vpack.c.b16 %v3940, %v3936
        %v4125 = vpack.c.b16 %v3941, %v3937
        %v4126 = vpack.c.b16 %v3942, %v3938
        %v4127 = vpack.c.b16 %v3943, %v3939
        %v4128 = vpack.c.b16 %v3948, %v3944
        %v4129 = vpack.c.b16 %v3949, %v3945
        %v4130 = vpack.c.b16 %v3950, %v3946
        %v4131 = vpack.c.b16 %v3951, %v3947
        %v4132 = vpack.c.b16 %v3956, %v3952
        %v4133 = vpack.c.b16 %v3957, %v3953
        %v4134 = vpack.c.b16 %v3958, %v3954
        %v4135 = vpack.c.b16 %v3959, %v3955
        %v4136 = vpack.c.b16 %v3964, %v3960
        %v4137 = vpack.c.b16 %v3965, %v3961
        %v4138 = vpack.c.b16 %v3966, %v3962
        %v4139 = vpack.c.b16 %v3967, %v3963
        %v4140 = vpack.c.b16 %v3972, %v3968
        %v4141 = vpack.c.b16 %v3973, %v3969
        %v4142 = vpack.c.b16 %v3974, %v3970
        %v4143 = vpack.c.b16 %v3975, %v3971
        %v4144 = vpack.c.b16 %v3980, %v3976
        %v4145 = vpack.c.b16 %v3981, %v3977
        %v4146 = vpack.c.b16 %v3982, %v3978
        %v4147 = vpack.c.b16 %v3983, %v3979
        %v4148 = vpack.c.b16 %v3988, %v3984
        %v4149 = vpack.c.b16 %v3989, %v3985
        %v4150 = vpack.c.b16 %v3990, %v3986
        %v4151 = vpack.c.b16 %v3991, %v3987
        %v4152 = vpack.c.b16 %v3996, %v3992
        %v4153 = vpack.c.b16 %v3997, %v3993
        %v4154 = vpack.c.b16 %v3998, %v3994
        %v4155 = vpack.c.b16 %v3999, %v3995
        %v4156 = vpack.c.b16 %v4004, %v4000
        %v4157 = vpack.c.b16 %v4005, %v4001
        %v4158 = vpack.c.b16 %v4006, %v4002
        %v4159 = vpack.c.b16 %v4007, %v4003
        %v4160 = vpack.c.b16 %v4012, %v4008
        %v4161 = vpack.c.b16 %v4013, %v4009
        %v4162 = vpack.c.b16 %v4014, %v4010
        %v4163 = vpack.c.b16 %v4015, %v4011
        %v4164 = vpack.c.b16 %v4020, %v4016
        %v4165 = vpack.c.b16 %v4021, %v4017
        %v4166 = vpack.c.b16 %v4022, %v4018
        %v4167 = vpack.c.b16 %v4023, %v4019
        %v4168 = vpack.c.b16 %v4028, %v4024
        %v4169 = vpack.c.b16 %v4029, %v4025
        %v4170 = vpack.c.b16 %v4030, %v4026
        %v4171 = vpack.c.b16 %v4031, %v4027
        %v4172 = vpack.c.b16 %v4036, %v4032
        %v4173 = vpack.c.b16 %v4037, %v4033
        %v4174 = vpack.c.b16 %v4038, %v4034
        %v4175 = vpack.c.b16 %v4039, %v4035
        %v4176 = vpack.c.b16 %v4044, %v4040
        %v4177 = vpack.c.b16 %v4045, %v4041
        %v4178 = vpack.c.b16 %v4046, %v4042
        %v4179 = vpack.c.b16 %v4047, %v4043
        %v4180 = vpack.c.b16 %v4052, %v4048
        %v4181 = vpack.c.b16 %v4053, %v4049
        %v4182 = vpack.c.b16 %v4054, %v4050
        %v4183 = vpack.c.b16 %v4055, %v4051
        %4312 = vmatprep.subr.bf16.mxu0 %v4085
        %4313 = vmatpush1.bf16.msra.mxu0 %v4084
        %4314 = vmatprep.subr.bf16.mxu0 %v4081
        %4315 = vmatpush1.bf16.msra.mxu0 %v4080
        %4316 = vmatprep.subr.bf16.mxu0 %v4077
        %4317 = vmatpush1.bf16.msra.mxu0 %v4076
        %4318 = vmatprep.subr.bf16.mxu0 %v4073
        %4319 = vmatpush1.bf16.msra.mxu0 %v4072
        %4320 = vmatprep.subr.bf16.mxu0 %v4069
        %4321 = vmatpush1.bf16.msra.mxu0 %v4068
        %4322 = vmatprep.subr.bf16.mxu0 %v4065
        %4323 = vmatpush1.bf16.msra.mxu0 %v4064
        %4324 = vmatprep.subr.bf16.mxu0 %v4061
        %4325 = vmatpush1.bf16.msra.mxu0 %v4060
        %4326 = vmatprep.subr.bf16.mxu0 %v4057
        %4327 = vmatpush1.bf16.msra.mxu0 %v4056
        %4328 = vmatprep.subr.bf16.mxu0 %v4117
        %4329 = vmatpush2.bf16.msra.mxu0 %v4116
        %4330 = vmatprep.subr.bf16.mxu0 %v4113
        %4331 = vmatpush2.bf16.msra.mxu0 %v4112
        %4332 = vmatprep.subr.bf16.mxu0 %v4109
        %4333 = vmatpush2.bf16.msra.mxu0 %v4108
        %4334 = vmatprep.subr.bf16.mxu0 %v4105
        %4335 = vmatpush2.bf16.msra.mxu0 %v4104
        %4336 = vmatprep.subr.bf16.mxu0 %v4101
        %4337 = vmatpush2.bf16.msra.mxu0 %v4100
        %4338 = vmatprep.subr.bf16.mxu0 %v4097
        %4339 = vmatpush2.bf16.msra.mxu0 %v4096
        %4340 = vmatprep.subr.bf16.mxu0 %v4093
        %4341 = vmatpush2.bf16.msra.mxu0 %v4092
        %4342 = vmatprep.subr.bf16.mxu0 %v4089
        %4343 = vmatpush2.bf16.msra.mxu0 %v4088
        %4344 = vmatprep.mubr.bf16.mxu0 %v3517
        %4345 = vmatmul.mubr.bf16.gmra.mxu0 %v3516
        %v4346 = vpop.f32.mrf.mxu0
        %v4347 = vadd.f32 %v3655, %v4346
        %v4348 = vpop.f32.mrf.mxu0
        %v4349 = vadd.f32 %v3659, %v4348
        %v4350 = vpop.f32.mrf.mxu0
        %v4351 = vpop.f32.mrf.mxu0
        %4352 = vdwg.mxu0
        %4353 = vmatprep.subr.bf16.mxu0 %v4149
        %4354 = vmatpush1.bf16.msra.mxu0 %v4148
        %4355 = vmatprep.subr.bf16.mxu0 %v4145
        %4356 = vmatpush1.bf16.msra.mxu0 %v4144
        %4357 = vmatprep.subr.bf16.mxu0 %v4141
        %4358 = vmatpush1.bf16.msra.mxu0 %v4140
        %4359 = vmatprep.subr.bf16.mxu0 %v4137
        %4360 = vmatpush1.bf16.msra.mxu0 %v4136
        %4361 = vmatprep.subr.bf16.mxu0 %v4133
        %4362 = vmatpush1.bf16.msra.mxu0 %v4132
        %4363 = vmatprep.subr.bf16.mxu0 %v4129
        %4364 = vmatpush1.bf16.msra.mxu0 %v4128
        %4365 = vmatprep.subr.bf16.mxu0 %v4125
        %4366 = vmatpush1.bf16.msra.mxu0 %v4124
        %4367 = vmatprep.subr.bf16.mxu0 %v4121
        %4368 = vmatpush1.bf16.msra.mxu0 %v4120
        %4369 = vmatprep.subr.bf16.mxu0 %v4181
        %4370 = vmatpush2.bf16.msra.mxu0 %v4180
        %4371 = vmatprep.subr.bf16.mxu0 %v4177
        %4372 = vmatpush2.bf16.msra.mxu0 %v4176
        %4373 = vmatprep.subr.bf16.mxu0 %v4173
        %4374 = vmatpush2.bf16.msra.mxu0 %v4172
        %4375 = vmatprep.subr.bf16.mxu0 %v4169
        %4376 = vmatpush2.bf16.msra.mxu0 %v4168
        %4377 = vmatprep.subr.bf16.mxu0 %v4165
        %4378 = vmatpush2.bf16.msra.mxu0 %v4164
        %4379 = vmatprep.subr.bf16.mxu0 %v4161
        %4380 = vmatpush2.bf16.msra.mxu0 %v4160
        %4381 = vmatprep.subr.bf16.mxu0 %v4157
        %4382 = vmatpush2.bf16.msra.mxu0 %v4156
        %4383 = vmatprep.subr.bf16.mxu0 %v4153
        %4384 = vmatpush2.bf16.msra.mxu0 %v4152
        %4385 = vmatprep.mubr.bf16.mxu0 %v3519
        %4386 = vmatmul.mubr.bf16.gmra.mxu0 %v3518
        %v4387 = vpop.f32.mrf.mxu0
        %v4388 = vadd.f32 %v4347, %v4387
        %v4389 = vpop.f32.mrf.mxu0
        %v4390 = vadd.f32 %v4349, %v4389
        %v4391 = vpop.f32.mrf.mxu0
        %v4392 = vpop.f32.mrf.mxu0
        %4393 = vdwg.mxu0
        %4394 = vmatprep.subr.bf16.mxu0 %v4087
        %4395 = vmatpush1.bf16.msra.mxu0 %v4086
        %4396 = vmatprep.subr.bf16.mxu0 %v4083
        %4397 = vmatpush1.bf16.msra.mxu0 %v4082
        %4398 = vmatprep.subr.bf16.mxu0 %v4079
        %4399 = vmatpush1.bf16.msra.mxu0 %v4078
        %4400 = vmatprep.subr.bf16.mxu0 %v4075
        %4401 = vmatpush1.bf16.msra.mxu0 %v4074
        %4402 = vmatprep.subr.bf16.mxu0 %v4071
        %4403 = vmatpush1.bf16.msra.mxu0 %v4070
        %4404 = vmatprep.subr.bf16.mxu0 %v4067
        %4405 = vmatpush1.bf16.msra.mxu0 %v4066
        %4406 = vmatprep.subr.bf16.mxu0 %v4063
        %4407 = vmatpush1.bf16.msra.mxu0 %v4062
        %4408 = vmatprep.subr.bf16.mxu0 %v4059
        %4409 = vmatpush1.bf16.msra.mxu0 %v4058
        %4410 = vmatprep.subr.bf16.mxu0 %v4119
        %4411 = vmatpush2.bf16.msra.mxu0 %v4118
        %4412 = vmatprep.subr.bf16.mxu0 %v4115
        %4413 = vmatpush2.bf16.msra.mxu0 %v4114
        %4414 = vmatprep.subr.bf16.mxu0 %v4111
        %4415 = vmatpush2.bf16.msra.mxu0 %v4110
        %4416 = vmatprep.subr.bf16.mxu0 %v4107
        %4417 = vmatpush2.bf16.msra.mxu0 %v4106
        %4418 = vmatprep.subr.bf16.mxu0 %v4103
        %4419 = vmatpush2.bf16.msra.mxu0 %v4102
        %4420 = vmatprep.subr.bf16.mxu0 %v4099
        %4421 = vmatpush2.bf16.msra.mxu0 %v4098
        %4422 = vmatprep.subr.bf16.mxu0 %v4095
        %4423 = vmatpush2.bf16.msra.mxu0 %v4094
        %4424 = vmatprep.subr.bf16.mxu0 %v4091
        %4425 = vmatpush2.bf16.msra.mxu0 %v4090
        %4426 = vmatprep.mubr.bf16.mxu0 %v3517
        %4427 = vmatmul.mubr.bf16.gmra.mxu0 %v3516
        %v4428 = vpop.f32.mrf.mxu0
        %v4429 = vadd.f32 %v3663, %v4428
        %v4430 = vpop.f32.mrf.mxu0
        %v4431 = vadd.f32 %v3667, %v4430
        %v4432 = vpop.f32.mrf.mxu0
        %v4433 = vpop.f32.mrf.mxu0
        %4434 = vdwg.mxu0
        %4435 = vmatprep.subr.bf16.mxu0 %v4151
        %4436 = vmatpush1.bf16.msra.mxu0 %v4150
        %4437 = vmatprep.subr.bf16.mxu0 %v4147
        %4438 = vmatpush1.bf16.msra.mxu0 %v4146
        %4439 = vmatprep.subr.bf16.mxu0 %v4143
        %4440 = vmatpush1.bf16.msra.mxu0 %v4142
        %4441 = vmatprep.subr.bf16.mxu0 %v4139
        %4442 = vmatpush1.bf16.msra.mxu0 %v4138
        %4443 = vmatprep.subr.bf16.mxu0 %v4135
        %4444 = vmatpush1.bf16.msra.mxu0 %v4134
        %4445 = vmatprep.subr.bf16.mxu0 %v4131
        %4446 = vmatpush1.bf16.msra.mxu0 %v4130
        %4447 = vmatprep.subr.bf16.mxu0 %v4127
        %4448 = vmatpush1.bf16.msra.mxu0 %v4126
        %4449 = vmatprep.subr.bf16.mxu0 %v4123
        %4450 = vmatpush1.bf16.msra.mxu0 %v4122
        %4451 = vmatprep.subr.bf16.mxu0 %v4183
        %4452 = vmatpush2.bf16.msra.mxu0 %v4182
        %4453 = vmatprep.subr.bf16.mxu0 %v4179
        %4454 = vmatpush2.bf16.msra.mxu0 %v4178
        %4455 = vmatprep.subr.bf16.mxu0 %v4175
        %4456 = vmatpush2.bf16.msra.mxu0 %v4174
        %4457 = vmatprep.subr.bf16.mxu0 %v4171
        %4458 = vmatpush2.bf16.msra.mxu0 %v4170
        %4459 = vmatprep.subr.bf16.mxu0 %v4167
        %4460 = vmatpush2.bf16.msra.mxu0 %v4166
        %4461 = vmatprep.subr.bf16.mxu0 %v4163
        %4462 = vmatpush2.bf16.msra.mxu0 %v4162
        %4463 = vmatprep.subr.bf16.mxu0 %v4159
        %4464 = vmatpush2.bf16.msra.mxu0 %v4158
        %4465 = vmatprep.subr.bf16.mxu0 %v4155
        %4466 = vmatpush2.bf16.msra.mxu0 %v4154
        %4467 = vmatprep.mubr.bf16.mxu0 %v3519
        %4468 = vmatmul.mubr.bf16.gmra.mxu0 %v3518
        %v4469 = vpop.f32.mrf.mxu0
        %v4470 = vadd.f32 %v4429, %v4469
        %v4471 = vpop.f32.mrf.mxu0
        %v4472 = vadd.f32 %v4431, %v4471
        %v4473 = vpop.f32.mrf.mxu0
        %v4474 = vpop.f32.mrf.mxu0
        %4475 = vdwg.mxu0
        %v4476 = vtanh.pop %v4388
        %v4477 = vtanh.pop %v4390
        %v4478 = vtanh.pop %v4470
        %v4479 = vtanh.pop %v4472
        %v4480 = vpack.c.bf16 %v4476, %v4476
        %v4481 = vpack.c.bf16 %v4477, %v4477
        %v4482 = vpack.c.bf16 %v4478, %v4478
        %v4483 = vpack.c.bf16 %v4479, %v4479
        %s4484 = scalar_lea.vmem %s384, 4096 [#allocation8]
        %v4485 = vld [vmem:[%s4484] sm:$0xff]
        %v4486 = vld [vmem:[%s4484 + $0x8] sm:$0xff]
        %v4487 = vld [vmem:[%s4484 + $0x10] sm:$0xff]
        %v4488 = vld [vmem:[%s4484 + $0x18] sm:$0xff]
        %v4489 = vld [vmem:[%s4484 + $0x20] sm:$0xff]
        %v4490 = vld [vmem:[%s4484 + $0x28] sm:$0xff]
        %v4491 = vld [vmem:[%s4484 + $0x30] sm:$0xff]
        %v4492 = vld [vmem:[%s4484 + $0x38] sm:$0xff]
        %v4493 = vld [vmem:[%s4484 + $0x40] sm:$0xff]
        %v4494 = vld [vmem:[%s4484 + $0x48] sm:$0xff]
        %v4495 = vld [vmem:[%s4484 + $0x50] sm:$0xff]
        %v4496 = vld [vmem:[%s4484 + $0x58] sm:$0xff]
        %v4497 = vld [vmem:[%s4484 + $0x60] sm:$0xff]
        %v4498 = vld [vmem:[%s4484 + $0x68] sm:$0xff]
        %v4499 = vld [vmem:[%s4484 + $0x70] sm:$0xff]
        %v4500 = vld [vmem:[%s4484 + $0x78] sm:$0xff]
        %v4501 = vld [vmem:[%s4484 + $0x80] sm:$0xff]
        %v4502 = vld [vmem:[%s4484 + $0x88] sm:$0xff]
        %v4503 = vld [vmem:[%s4484 + $0x90] sm:$0xff]
        %v4504 = vld [vmem:[%s4484 + $0x98] sm:$0xff]
        %v4505 = vld [vmem:[%s4484 + $0xa0] sm:$0xff]
        %v4506 = vld [vmem:[%s4484 + $0xa8] sm:$0xff]
        %v4507 = vld [vmem:[%s4484 + $0xb0] sm:$0xff]
        %v4508 = vld [vmem:[%s4484 + $0xb8] sm:$0xff]
        %v4509 = vld [vmem:[%s4484 + $0xc0] sm:$0xff]
        %v4510 = vld [vmem:[%s4484 + $0xc8] sm:$0xff]
        %v4511 = vld [vmem:[%s4484 + $0xd0] sm:$0xff]
        %v4512 = vld [vmem:[%s4484 + $0xd8] sm:$0xff]
        %v4513 = vld [vmem:[%s4484 + $0xe0] sm:$0xff]
        %v4514 = vld [vmem:[%s4484 + $0xe8] sm:$0xff]
        %v4515 = vld [vmem:[%s4484 + $0xf0] sm:$0xff]
        %v4516 = vld [vmem:[%s4484 + $0xf8] sm:$0xff]
        %v4517 = vld [vmem:[%s4484 + $0x100] sm:$0xff]
        %v4518 = vld [vmem:[%s4484 + $0x108] sm:$0xff]
        %v4519 = vld [vmem:[%s4484 + $0x110] sm:$0xff]
        %v4520 = vld [vmem:[%s4484 + $0x118] sm:$0xff]
        %v4521 = vld [vmem:[%s4484 + $0x120] sm:$0xff]
        %v4522 = vld [vmem:[%s4484 + $0x128] sm:$0xff]
        %v4523 = vld [vmem:[%s4484 + $0x130] sm:$0xff]
        %v4524 = vld [vmem:[%s4484 + $0x138] sm:$0xff]
        %v4525 = vld [vmem:[%s4484 + $0x140] sm:$0xff]
        %v4526 = vld [vmem:[%s4484 + $0x148] sm:$0xff]
        %v4527 = vld [vmem:[%s4484 + $0x150] sm:$0xff]
        %v4528 = vld [vmem:[%s4484 + $0x158] sm:$0xff]
        %v4529 = vld [vmem:[%s4484 + $0x160] sm:$0xff]
        %v4530 = vld [vmem:[%s4484 + $0x168] sm:$0xff]
        %v4531 = vld [vmem:[%s4484 + $0x170] sm:$0xff]
        %v4532 = vld [vmem:[%s4484 + $0x178] sm:$0xff]
        %v4533 = vld [vmem:[%s4484 + $0x180] sm:$0xff]
        %v4534 = vld [vmem:[%s4484 + $0x188] sm:$0xff]
        %v4535 = vld [vmem:[%s4484 + $0x190] sm:$0xff]
        %v4536 = vld [vmem:[%s4484 + $0x198] sm:$0xff]
        %v4537 = vld [vmem:[%s4484 + $0x1a0] sm:$0xff]
        %v4538 = vld [vmem:[%s4484 + $0x1a8] sm:$0xff]
        %v4539 = vld [vmem:[%s4484 + $0x1b0] sm:$0xff]
        %v4540 = vld [vmem:[%s4484 + $0x1b8] sm:$0xff]
        %v4541 = vld [vmem:[%s4484 + $0x1c0] sm:$0xff]
        %v4542 = vld [vmem:[%s4484 + $0x1c8] sm:$0xff]
        %v4543 = vld [vmem:[%s4484 + $0x1d0] sm:$0xff]
        %v4544 = vld [vmem:[%s4484 + $0x1d8] sm:$0xff]
        %v4545 = vld [vmem:[%s4484 + $0x1e0] sm:$0xff]
        %v4546 = vld [vmem:[%s4484 + $0x1e8] sm:$0xff]
        %v4547 = vld [vmem:[%s4484 + $0x1f0] sm:$0xff]
        %v4548 = vld [vmem:[%s4484 + $0x1f8] sm:$0xff]
        %v4549 = vld [vmem:[%s4484 + $0x200] sm:$0xff]
        %v4550 = vld [vmem:[%s4484 + $0x208] sm:$0xff]
        %v4551 = vld [vmem:[%s4484 + $0x210] sm:$0xff]
        %v4552 = vld [vmem:[%s4484 + $0x218] sm:$0xff]
        %v4553 = vld [vmem:[%s4484 + $0x220] sm:$0xff]
        %v4554 = vld [vmem:[%s4484 + $0x228] sm:$0xff]
        %v4555 = vld [vmem:[%s4484 + $0x230] sm:$0xff]
        %v4556 = vld [vmem:[%s4484 + $0x238] sm:$0xff]
        %v4557 = vld [vmem:[%s4484 + $0x240] sm:$0xff]
        %v4558 = vld [vmem:[%s4484 + $0x248] sm:$0xff]
        %v4559 = vld [vmem:[%s4484 + $0x250] sm:$0xff]
        %v4560 = vld [vmem:[%s4484 + $0x258] sm:$0xff]
        %v4561 = vld [vmem:[%s4484 + $0x260] sm:$0xff]
        %v4562 = vld [vmem:[%s4484 + $0x268] sm:$0xff]
        %v4563 = vld [vmem:[%s4484 + $0x270] sm:$0xff]
        %v4564 = vld [vmem:[%s4484 + $0x278] sm:$0xff]
        %v4565 = vld [vmem:[%s4484 + $0x280] sm:$0xff]
        %v4566 = vld [vmem:[%s4484 + $0x288] sm:$0xff]
        %v4567 = vld [vmem:[%s4484 + $0x290] sm:$0xff]
        %v4568 = vld [vmem:[%s4484 + $0x298] sm:$0xff]
        %v4569 = vld [vmem:[%s4484 + $0x2a0] sm:$0xff]
        %v4570 = vld [vmem:[%s4484 + $0x2a8] sm:$0xff]
        %v4571 = vld [vmem:[%s4484 + $0x2b0] sm:$0xff]
        %v4572 = vld [vmem:[%s4484 + $0x2b8] sm:$0xff]
        %v4573 = vld [vmem:[%s4484 + $0x2c0] sm:$0xff]
        %v4574 = vld [vmem:[%s4484 + $0x2c8] sm:$0xff]
        %v4575 = vld [vmem:[%s4484 + $0x2d0] sm:$0xff]
        %v4576 = vld [vmem:[%s4484 + $0x2d8] sm:$0xff]
        %v4577 = vld [vmem:[%s4484 + $0x2e0] sm:$0xff]
        %v4578 = vld [vmem:[%s4484 + $0x2e8] sm:$0xff]
        %v4579 = vld [vmem:[%s4484 + $0x2f0] sm:$0xff]
        %v4580 = vld [vmem:[%s4484 + $0x2f8] sm:$0xff]
        %v4581 = vld [vmem:[%s4484 + $0x300] sm:$0xff]
        %v4582 = vld [vmem:[%s4484 + $0x308] sm:$0xff]
        %v4583 = vld [vmem:[%s4484 + $0x310] sm:$0xff]
        %v4584 = vld [vmem:[%s4484 + $0x318] sm:$0xff]
        %v4585 = vld [vmem:[%s4484 + $0x320] sm:$0xff]
        %v4586 = vld [vmem:[%s4484 + $0x328] sm:$0xff]
        %v4587 = vld [vmem:[%s4484 + $0x330] sm:$0xff]
        %v4588 = vld [vmem:[%s4484 + $0x338] sm:$0xff]
        %v4589 = vld [vmem:[%s4484 + $0x340] sm:$0xff]
        %v4590 = vld [vmem:[%s4484 + $0x348] sm:$0xff]
        %v4591 = vld [vmem:[%s4484 + $0x350] sm:$0xff]
        %v4592 = vld [vmem:[%s4484 + $0x358] sm:$0xff]
        %v4593 = vld [vmem:[%s4484 + $0x360] sm:$0xff]
        %v4594 = vld [vmem:[%s4484 + $0x368] sm:$0xff]
        %v4595 = vld [vmem:[%s4484 + $0x370] sm:$0xff]
        %v4596 = vld [vmem:[%s4484 + $0x378] sm:$0xff]
        %v4597 = vld [vmem:[%s4484 + $0x380] sm:$0xff]
        %v4598 = vld [vmem:[%s4484 + $0x388] sm:$0xff]
        %v4599 = vld [vmem:[%s4484 + $0x390] sm:$0xff]
        %v4600 = vld [vmem:[%s4484 + $0x398] sm:$0xff]
        %v4601 = vld [vmem:[%s4484 + $0x3a0] sm:$0xff]
        %v4602 = vld [vmem:[%s4484 + $0x3a8] sm:$0xff]
        %v4603 = vld [vmem:[%s4484 + $0x3b0] sm:$0xff]
        %v4604 = vld [vmem:[%s4484 + $0x3b8] sm:$0xff]
        %v4605 = vld [vmem:[%s4484 + $0x3c0] sm:$0xff]
        %v4606 = vld [vmem:[%s4484 + $0x3c8] sm:$0xff]
        %v4607 = vld [vmem:[%s4484 + $0x3d0] sm:$0xff]
        %v4608 = vld [vmem:[%s4484 + $0x3d8] sm:$0xff]
        %v4609 = vld [vmem:[%s4484 + $0x3e0] sm:$0xff]
        %v4610 = vld [vmem:[%s4484 + $0x3e8] sm:$0xff]
        %v4611 = vld [vmem:[%s4484 + $0x3f0] sm:$0xff]
        %v4612 = vld [vmem:[%s4484 + $0x3f8] sm:$0xff]
        %s4613 = scalar_lea.vmem %s436, 4
        %v4614 = vld [vmem:[%s4613] ss:$8 sm:$0xf]
        %v4616 = vlaneseq
        %v4617 = vshrl.u32 %v4616, 7
        %v4618 = vsub.s32 0, %v4617
        %v4619 = vrot.slane %v4614, %v4618
        %v4620 = vlaneseq
        %v4621 = vshrl.u32 %v4620, 7
        %v4622 = vsub.s32 1, %v4621
        %v4623 = vrot.slane %v4614, %v4622
        %v4624 = vlaneseq
        %v4625 = vshrl.u32 %v4624, 7
        %v4626 = vsub.s32 2, %v4625
        %v4627 = vrot.slane %v4614, %v4626
        %v4628 = vlaneseq
        %v4629 = vshrl.u32 %v4628, 7
        %v4630 = vsub.s32 3, %v4629
        %v4631 = vrot.slane %v4614, %v4630
        %v4764 = vunpack.c.l.b16 %v4485
        %v4765 = vunpack.c.h.b16 %v4485
        %v4766 = vunpack.c.l.b16 %v4486
        %v4767 = vunpack.c.h.b16 %v4486
        %v4768 = vunpack.c.l.b16 %v4487
        %v4769 = vunpack.c.h.b16 %v4487
        %v4770 = vunpack.c.l.b16 %v4488
        %v4771 = vunpack.c.h.b16 %v4488
        %v4772 = vunpack.c.l.b16 %v4489
        %v4773 = vunpack.c.h.b16 %v4489
        %v4774 = vunpack.c.l.b16 %v4490
        %v4775 = vunpack.c.h.b16 %v4490
        %v4776 = vunpack.c.l.b16 %v4491
        %v4777 = vunpack.c.h.b16 %v4491
        %v4778 = vunpack.c.l.b16 %v4492
        %v4779 = vunpack.c.h.b16 %v4492
        %v4780 = vunpack.c.l.b16 %v4493
        %v4781 = vunpack.c.h.b16 %v4493
        %v4782 = vunpack.c.l.b16 %v4494
        %v4783 = vunpack.c.h.b16 %v4494
        %v4784 = vunpack.c.l.b16 %v4495
        %v4785 = vunpack.c.h.b16 %v4495
        %v4786 = vunpack.c.l.b16 %v4496
        %v4787 = vunpack.c.h.b16 %v4496
        %v4788 = vunpack.c.l.b16 %v4497
        %v4789 = vunpack.c.h.b16 %v4497
        %v4790 = vunpack.c.l.b16 %v4498
        %v4791 = vunpack.c.h.b16 %v4498
        %v4792 = vunpack.c.l.b16 %v4499
        %v4793 = vunpack.c.h.b16 %v4499
        %v4794 = vunpack.c.l.b16 %v4500
        %v4795 = vunpack.c.h.b16 %v4500
        %v4796 = vunpack.c.l.b16 %v4501
        %v4797 = vunpack.c.h.b16 %v4501
        %v4798 = vunpack.c.l.b16 %v4502
        %v4799 = vunpack.c.h.b16 %v4502
        %v4800 = vunpack.c.l.b16 %v4503
        %v4801 = vunpack.c.h.b16 %v4503
        %v4802 = vunpack.c.l.b16 %v4504
        %v4803 = vunpack.c.h.b16 %v4504
        %v4804 = vunpack.c.l.b16 %v4505
        %v4805 = vunpack.c.h.b16 %v4505
        %v4806 = vunpack.c.l.b16 %v4506
        %v4807 = vunpack.c.h.b16 %v4506
        %v4808 = vunpack.c.l.b16 %v4507
        %v4809 = vunpack.c.h.b16 %v4507
        %v4810 = vunpack.c.l.b16 %v4508
        %v4811 = vunpack.c.h.b16 %v4508
        %v4812 = vunpack.c.l.b16 %v4509
        %v4813 = vunpack.c.h.b16 %v4509
        %v4814 = vunpack.c.l.b16 %v4510
        %v4815 = vunpack.c.h.b16 %v4510
        %v4816 = vunpack.c.l.b16 %v4511
        %v4817 = vunpack.c.h.b16 %v4511
        %v4818 = vunpack.c.l.b16 %v4512
        %v4819 = vunpack.c.h.b16 %v4512
        %v4820 = vunpack.c.l.b16 %v4513
        %v4821 = vunpack.c.h.b16 %v4513
        %v4822 = vunpack.c.l.b16 %v4514
        %v4823 = vunpack.c.h.b16 %v4514
        %v4824 = vunpack.c.l.b16 %v4515
        %v4825 = vunpack.c.h.b16 %v4515
        %v4826 = vunpack.c.l.b16 %v4516
        %v4827 = vunpack.c.h.b16 %v4516
        %v4828 = vunpack.c.l.b16 %v4517
        %v4829 = vunpack.c.h.b16 %v4517
        %v4830 = vunpack.c.l.b16 %v4518
        %v4831 = vunpack.c.h.b16 %v4518
        %v4832 = vunpack.c.l.b16 %v4519
        %v4833 = vunpack.c.h.b16 %v4519
        %v4834 = vunpack.c.l.b16 %v4520
        %v4835 = vunpack.c.h.b16 %v4520
        %v4836 = vunpack.c.l.b16 %v4521
        %v4837 = vunpack.c.h.b16 %v4521
        %v4838 = vunpack.c.l.b16 %v4522
        %v4839 = vunpack.c.h.b16 %v4522
        %v4840 = vunpack.c.l.b16 %v4523
        %v4841 = vunpack.c.h.b16 %v4523
        %v4842 = vunpack.c.l.b16 %v4524
        %v4843 = vunpack.c.h.b16 %v4524
        %v4844 = vunpack.c.l.b16 %v4525
        %v4845 = vunpack.c.h.b16 %v4525
        %v4846 = vunpack.c.l.b16 %v4526
        %v4847 = vunpack.c.h.b16 %v4526
        %v4848 = vunpack.c.l.b16 %v4527
        %v4849 = vunpack.c.h.b16 %v4527
        %v4850 = vunpack.c.l.b16 %v4528
        %v4851 = vunpack.c.h.b16 %v4528
        %v4852 = vunpack.c.l.b16 %v4529
        %v4853 = vunpack.c.h.b16 %v4529
        %v4854 = vunpack.c.l.b16 %v4530
        %v4855 = vunpack.c.h.b16 %v4530
        %v4856 = vunpack.c.l.b16 %v4531
        %v4857 = vunpack.c.h.b16 %v4531
        %v4858 = vunpack.c.l.b16 %v4532
        %v4859 = vunpack.c.h.b16 %v4532
        %v4860 = vunpack.c.l.b16 %v4533
        %v4861 = vunpack.c.h.b16 %v4533
        %v4862 = vunpack.c.l.b16 %v4534
        %v4863 = vunpack.c.h.b16 %v4534
        %v4864 = vunpack.c.l.b16 %v4535
        %v4865 = vunpack.c.h.b16 %v4535
        %v4866 = vunpack.c.l.b16 %v4536
        %v4867 = vunpack.c.h.b16 %v4536
        %v4868 = vunpack.c.l.b16 %v4537
        %v4869 = vunpack.c.h.b16 %v4537
        %v4870 = vunpack.c.l.b16 %v4538
        %v4871 = vunpack.c.h.b16 %v4538
        %v4872 = vunpack.c.l.b16 %v4539
        %v4873 = vunpack.c.h.b16 %v4539
        %v4874 = vunpack.c.l.b16 %v4540
        %v4875 = vunpack.c.h.b16 %v4540
        %v4876 = vunpack.c.l.b16 %v4541
        %v4877 = vunpack.c.h.b16 %v4541
        %v4878 = vunpack.c.l.b16 %v4542
        %v4879 = vunpack.c.h.b16 %v4542
        %v4880 = vunpack.c.l.b16 %v4543
        %v4881 = vunpack.c.h.b16 %v4543
        %v4882 = vunpack.c.l.b16 %v4544
        %v4883 = vunpack.c.h.b16 %v4544
        %v4884 = vunpack.c.l.b16 %v4545
        %v4885 = vunpack.c.h.b16 %v4545
        %v4886 = vunpack.c.l.b16 %v4546
        %v4887 = vunpack.c.h.b16 %v4546
        %v4888 = vunpack.c.l.b16 %v4547
        %v4889 = vunpack.c.h.b16 %v4547
        %v4890 = vunpack.c.l.b16 %v4548
        %v4891 = vunpack.c.h.b16 %v4548
        %v4892 = vunpack.c.l.b16 %v4549
        %v4893 = vunpack.c.h.b16 %v4549
        %v4894 = vunpack.c.l.b16 %v4550
        %v4895 = vunpack.c.h.b16 %v4550
        %v4896 = vunpack.c.l.b16 %v4551
        %v4897 = vunpack.c.h.b16 %v4551
        %v4898 = vunpack.c.l.b16 %v4552
        %v4899 = vunpack.c.h.b16 %v4552
        %v4900 = vunpack.c.l.b16 %v4553
        %v4901 = vunpack.c.h.b16 %v4553
        %v4902 = vunpack.c.l.b16 %v4554
        %v4903 = vunpack.c.h.b16 %v4554
        %v4904 = vunpack.c.l.b16 %v4555
        %v4905 = vunpack.c.h.b16 %v4555
        %v4906 = vunpack.c.l.b16 %v4556
        %v4907 = vunpack.c.h.b16 %v4556
        %v4908 = vunpack.c.l.b16 %v4557
        %v4909 = vunpack.c.h.b16 %v4557
        %v4910 = vunpack.c.l.b16 %v4558
        %v4911 = vunpack.c.h.b16 %v4558
        %v4912 = vunpack.c.l.b16 %v4559
        %v4913 = vunpack.c.h.b16 %v4559
        %v4914 = vunpack.c.l.b16 %v4560
        %v4915 = vunpack.c.h.b16 %v4560
        %v4916 = vunpack.c.l.b16 %v4561
        %v4917 = vunpack.c.h.b16 %v4561
        %v4918 = vunpack.c.l.b16 %v4562
        %v4919 = vunpack.c.h.b16 %v4562
        %v4920 = vunpack.c.l.b16 %v4563
        %v4921 = vunpack.c.h.b16 %v4563
        %v4922 = vunpack.c.l.b16 %v4564
        %v4923 = vunpack.c.h.b16 %v4564
        %v4924 = vunpack.c.l.b16 %v4565
        %v4925 = vunpack.c.h.b16 %v4565
        %v4926 = vunpack.c.l.b16 %v4566
        %v4927 = vunpack.c.h.b16 %v4566
        %v4928 = vunpack.c.l.b16 %v4567
        %v4929 = vunpack.c.h.b16 %v4567
        %v4930 = vunpack.c.l.b16 %v4568
        %v4931 = vunpack.c.h.b16 %v4568
        %v4932 = vunpack.c.l.b16 %v4569
        %v4933 = vunpack.c.h.b16 %v4569
        %v4934 = vunpack.c.l.b16 %v4570
        %v4935 = vunpack.c.h.b16 %v4570
        %v4936 = vunpack.c.l.b16 %v4571
        %v4937 = vunpack.c.h.b16 %v4571
        %v4938 = vunpack.c.l.b16 %v4572
        %v4939 = vunpack.c.h.b16 %v4572
        %v4940 = vunpack.c.l.b16 %v4573
        %v4941 = vunpack.c.h.b16 %v4573
        %v4942 = vunpack.c.l.b16 %v4574
        %v4943 = vunpack.c.h.b16 %v4574
        %v4944 = vunpack.c.l.b16 %v4575
        %v4945 = vunpack.c.h.b16 %v4575
        %v4946 = vunpack.c.l.b16 %v4576
        %v4947 = vunpack.c.h.b16 %v4576
        %v4948 = vunpack.c.l.b16 %v4577
        %v4949 = vunpack.c.h.b16 %v4577
        %v4950 = vunpack.c.l.b16 %v4578
        %v4951 = vunpack.c.h.b16 %v4578
        %v4952 = vunpack.c.l.b16 %v4579
        %v4953 = vunpack.c.h.b16 %v4579
        %v4954 = vunpack.c.l.b16 %v4580
        %v4955 = vunpack.c.h.b16 %v4580
        %v4956 = vunpack.c.l.b16 %v4581
        %v4957 = vunpack.c.h.b16 %v4581
        %v4958 = vunpack.c.l.b16 %v4582
        %v4959 = vunpack.c.h.b16 %v4582
        %v4960 = vunpack.c.l.b16 %v4583
        %v4961 = vunpack.c.h.b16 %v4583
        %v4962 = vunpack.c.l.b16 %v4584
        %v4963 = vunpack.c.h.b16 %v4584
        %v4964 = vunpack.c.l.b16 %v4585
        %v4965 = vunpack.c.h.b16 %v4585
        %v4966 = vunpack.c.l.b16 %v4586
        %v4967 = vunpack.c.h.b16 %v4586
        %v4968 = vunpack.c.l.b16 %v4587
        %v4969 = vunpack.c.h.b16 %v4587
        %v4970 = vunpack.c.l.b16 %v4588
        %v4971 = vunpack.c.h.b16 %v4588
        %v4972 = vunpack.c.l.b16 %v4589
        %v4973 = vunpack.c.h.b16 %v4589
        %v4974 = vunpack.c.l.b16 %v4590
        %v4975 = vunpack.c.h.b16 %v4590
        %v4976 = vunpack.c.l.b16 %v4591
        %v4977 = vunpack.c.h.b16 %v4591
        %v4978 = vunpack.c.l.b16 %v4592
        %v4979 = vunpack.c.h.b16 %v4592
        %v4980 = vunpack.c.l.b16 %v4593
        %v4981 = vunpack.c.h.b16 %v4593
        %v4982 = vunpack.c.l.b16 %v4594
        %v4983 = vunpack.c.h.b16 %v4594
        %v4984 = vunpack.c.l.b16 %v4595
        %v4985 = vunpack.c.h.b16 %v4595
        %v4986 = vunpack.c.l.b16 %v4596
        %v4987 = vunpack.c.h.b16 %v4596
        %v4988 = vunpack.c.l.b16 %v4597
        %v4989 = vunpack.c.h.b16 %v4597
        %v4990 = vunpack.c.l.b16 %v4598
        %v4991 = vunpack.c.h.b16 %v4598
        %v4992 = vunpack.c.l.b16 %v4599
        %v4993 = vunpack.c.h.b16 %v4599
        %v4994 = vunpack.c.l.b16 %v4600
        %v4995 = vunpack.c.h.b16 %v4600
        %v4996 = vunpack.c.l.b16 %v4601
        %v4997 = vunpack.c.h.b16 %v4601
        %v4998 = vunpack.c.l.b16 %v4602
        %v4999 = vunpack.c.h.b16 %v4602
        %v5000 = vunpack.c.l.b16 %v4603
        %v5001 = vunpack.c.h.b16 %v4603
        %v5002 = vunpack.c.l.b16 %v4604
        %v5003 = vunpack.c.h.b16 %v4604
        %v5004 = vunpack.c.l.b16 %v4605
        %v5005 = vunpack.c.h.b16 %v4605
        %v5006 = vunpack.c.l.b16 %v4606
        %v5007 = vunpack.c.h.b16 %v4606
        %v5008 = vunpack.c.l.b16 %v4607
        %v5009 = vunpack.c.h.b16 %v4607
        %v5010 = vunpack.c.l.b16 %v4608
        %v5011 = vunpack.c.h.b16 %v4608
        %v5012 = vunpack.c.l.b16 %v4609
        %v5013 = vunpack.c.h.b16 %v4609
        %v5014 = vunpack.c.l.b16 %v4610
        %v5015 = vunpack.c.h.b16 %v4610
        %v5016 = vunpack.c.l.b16 %v4611
        %v5017 = vunpack.c.h.b16 %v4611
        %v5018 = vunpack.c.l.b16 %v4612
        %v5019 = vunpack.c.h.b16 %v4612
        %v5020 = vpack.c.b16 %v4768, %v4764
        %v5021 = vpack.c.b16 %v4769, %v4765
        %v5022 = vpack.c.b16 %v4770, %v4766
        %v5023 = vpack.c.b16 %v4771, %v4767
        %v5024 = vpack.c.b16 %v4776, %v4772
        %v5025 = vpack.c.b16 %v4777, %v4773
        %v5026 = vpack.c.b16 %v4778, %v4774
        %v5027 = vpack.c.b16 %v4779, %v4775
        %v5028 = vpack.c.b16 %v4784, %v4780
        %v5029 = vpack.c.b16 %v4785, %v4781
        %v5030 = vpack.c.b16 %v4786, %v4782
        %v5031 = vpack.c.b16 %v4787, %v4783
        %v5032 = vpack.c.b16 %v4792, %v4788
        %v5033 = vpack.c.b16 %v4793, %v4789
        %v5034 = vpack.c.b16 %v4794, %v4790
        %v5035 = vpack.c.b16 %v4795, %v4791
        %v5036 = vpack.c.b16 %v4800, %v4796
        %v5037 = vpack.c.b16 %v4801, %v4797
        %v5038 = vpack.c.b16 %v4802, %v4798
        %v5039 = vpack.c.b16 %v4803, %v4799
        %v5040 = vpack.c.b16 %v4808, %v4804
        %v5041 = vpack.c.b16 %v4809, %v4805
        %v5042 = vpack.c.b16 %v4810, %v4806
        %v5043 = vpack.c.b16 %v4811, %v4807
        %v5044 = vpack.c.b16 %v4816, %v4812
        %v5045 = vpack.c.b16 %v4817, %v4813
        %v5046 = vpack.c.b16 %v4818, %v4814
        %v5047 = vpack.c.b16 %v4819, %v4815
        %v5048 = vpack.c.b16 %v4824, %v4820
        %v5049 = vpack.c.b16 %v4825, %v4821
        %v5050 = vpack.c.b16 %v4826, %v4822
        %v5051 = vpack.c.b16 %v4827, %v4823
        %v5052 = vpack.c.b16 %v4832, %v4828
        %v5053 = vpack.c.b16 %v4833, %v4829
        %v5054 = vpack.c.b16 %v4834, %v4830
        %v5055 = vpack.c.b16 %v4835, %v4831
        %v5056 = vpack.c.b16 %v4840, %v4836
        %v5057 = vpack.c.b16 %v4841, %v4837
        %v5058 = vpack.c.b16 %v4842, %v4838
        %v5059 = vpack.c.b16 %v4843, %v4839
        %v5060 = vpack.c.b16 %v4848, %v4844
        %v5061 = vpack.c.b16 %v4849, %v4845
        %v5062 = vpack.c.b16 %v4850, %v4846
        %v5063 = vpack.c.b16 %v4851, %v4847
        %v5064 = vpack.c.b16 %v4856, %v4852
        %v5065 = vpack.c.b16 %v4857, %v4853
        %v5066 = vpack.c.b16 %v4858, %v4854
        %v5067 = vpack.c.b16 %v4859, %v4855
        %v5068 = vpack.c.b16 %v4864, %v4860
        %v5069 = vpack.c.b16 %v4865, %v4861
        %v5070 = vpack.c.b16 %v4866, %v4862
        %v5071 = vpack.c.b16 %v4867, %v4863
        %v5072 = vpack.c.b16 %v4872, %v4868
        %v5073 = vpack.c.b16 %v4873, %v4869
        %v5074 = vpack.c.b16 %v4874, %v4870
        %v5075 = vpack.c.b16 %v4875, %v4871
        %v5076 = vpack.c.b16 %v4880, %v4876
        %v5077 = vpack.c.b16 %v4881, %v4877
        %v5078 = vpack.c.b16 %v4882, %v4878
        %v5079 = vpack.c.b16 %v4883, %v4879
        %v5080 = vpack.c.b16 %v4888, %v4884
        %v5081 = vpack.c.b16 %v4889, %v4885
        %v5082 = vpack.c.b16 %v4890, %v4886
        %v5083 = vpack.c.b16 %v4891, %v4887
        %v5084 = vpack.c.b16 %v4896, %v4892
        %v5085 = vpack.c.b16 %v4897, %v4893
        %v5086 = vpack.c.b16 %v4898, %v4894
        %v5087 = vpack.c.b16 %v4899, %v4895
        %v5088 = vpack.c.b16 %v4904, %v4900
        %v5089 = vpack.c.b16 %v4905, %v4901
        %v5090 = vpack.c.b16 %v4906, %v4902
        %v5091 = vpack.c.b16 %v4907, %v4903
        %v5092 = vpack.c.b16 %v4912, %v4908
        %v5093 = vpack.c.b16 %v4913, %v4909
        %v5094 = vpack.c.b16 %v4914, %v4910
        %v5095 = vpack.c.b16 %v4915, %v4911
        %v5096 = vpack.c.b16 %v4920, %v4916
        %v5097 = vpack.c.b16 %v4921, %v4917
        %v5098 = vpack.c.b16 %v4922, %v4918
        %v5099 = vpack.c.b16 %v4923, %v4919
        %v5100 = vpack.c.b16 %v4928, %v4924
        %v5101 = vpack.c.b16 %v4929, %v4925
        %v5102 = vpack.c.b16 %v4930, %v4926
        %v5103 = vpack.c.b16 %v4931, %v4927
        %v5104 = vpack.c.b16 %v4936, %v4932
        %v5105 = vpack.c.b16 %v4937, %v4933
        %v5106 = vpack.c.b16 %v4938, %v4934
        %v5107 = vpack.c.b16 %v4939, %v4935
        %v5108 = vpack.c.b16 %v4944, %v4940
        %v5109 = vpack.c.b16 %v4945, %v4941
        %v5110 = vpack.c.b16 %v4946, %v4942
        %v5111 = vpack.c.b16 %v4947, %v4943
        %v5112 = vpack.c.b16 %v4952, %v4948
        %v5113 = vpack.c.b16 %v4953, %v4949
        %v5114 = vpack.c.b16 %v4954, %v4950
        %v5115 = vpack.c.b16 %v4955, %v4951
        %v5116 = vpack.c.b16 %v4960, %v4956
        %v5117 = vpack.c.b16 %v4961, %v4957
        %v5118 = vpack.c.b16 %v4962, %v4958
        %v5119 = vpack.c.b16 %v4963, %v4959
        %v5120 = vpack.c.b16 %v4968, %v4964
        %v5121 = vpack.c.b16 %v4969, %v4965
        %v5122 = vpack.c.b16 %v4970, %v4966
        %v5123 = vpack.c.b16 %v4971, %v4967
        %v5124 = vpack.c.b16 %v4976, %v4972
        %v5125 = vpack.c.b16 %v4977, %v4973
        %v5126 = vpack.c.b16 %v4978, %v4974
        %v5127 = vpack.c.b16 %v4979, %v4975
        %v5128 = vpack.c.b16 %v4984, %v4980
        %v5129 = vpack.c.b16 %v4985, %v4981
        %v5130 = vpack.c.b16 %v4986, %v4982
        %v5131 = vpack.c.b16 %v4987, %v4983
        %v5132 = vpack.c.b16 %v4992, %v4988
        %v5133 = vpack.c.b16 %v4993, %v4989
        %v5134 = vpack.c.b16 %v4994, %v4990
        %v5135 = vpack.c.b16 %v4995, %v4991
        %v5136 = vpack.c.b16 %v5000, %v4996
        %v5137 = vpack.c.b16 %v5001, %v4997
        %v5138 = vpack.c.b16 %v5002, %v4998
        %v5139 = vpack.c.b16 %v5003, %v4999
        %v5140 = vpack.c.b16 %v5008, %v5004
        %v5141 = vpack.c.b16 %v5009, %v5005
        %v5142 = vpack.c.b16 %v5010, %v5006
        %v5143 = vpack.c.b16 %v5011, %v5007
        %v5144 = vpack.c.b16 %v5016, %v5012
        %v5145 = vpack.c.b16 %v5017, %v5013
        %v5146 = vpack.c.b16 %v5018, %v5014
        %v5147 = vpack.c.b16 %v5019, %v5015
        %5276 = vmatprep.subr.bf16.mxu0 %v5049
        %5277 = vmatpush1.bf16.msra.mxu0 %v5048
        %5278 = vmatprep.subr.bf16.mxu0 %v5045
        %5279 = vmatpush1.bf16.msra.mxu0 %v5044
        %5280 = vmatprep.subr.bf16.mxu0 %v5041
        %5281 = vmatpush1.bf16.msra.mxu0 %v5040
        %5282 = vmatprep.subr.bf16.mxu0 %v5037
        %5283 = vmatpush1.bf16.msra.mxu0 %v5036
        %5284 = vmatprep.subr.bf16.mxu0 %v5033
        %5285 = vmatpush1.bf16.msra.mxu0 %v5032
        %5286 = vmatprep.subr.bf16.mxu0 %v5029
        %5287 = vmatpush1.bf16.msra.mxu0 %v5028
        %5288 = vmatprep.subr.bf16.mxu0 %v5025
        %5289 = vmatpush1.bf16.msra.mxu0 %v5024
        %5290 = vmatprep.subr.bf16.mxu0 %v5021
        %5291 = vmatpush1.bf16.msra.mxu0 %v5020
        %5292 = vmatprep.subr.bf16.mxu0 %v5081
        %5293 = vmatpush2.bf16.msra.mxu0 %v5080
        %5294 = vmatprep.subr.bf16.mxu0 %v5077
        %5295 = vmatpush2.bf16.msra.mxu0 %v5076
        %5296 = vmatprep.subr.bf16.mxu0 %v5073
        %5297 = vmatpush2.bf16.msra.mxu0 %v5072
        %5298 = vmatprep.subr.bf16.mxu0 %v5069
        %5299 = vmatpush2.bf16.msra.mxu0 %v5068
        %5300 = vmatprep.subr.bf16.mxu0 %v5065
        %5301 = vmatpush2.bf16.msra.mxu0 %v5064
        %5302 = vmatprep.subr.bf16.mxu0 %v5061
        %5303 = vmatpush2.bf16.msra.mxu0 %v5060
        %5304 = vmatprep.subr.bf16.mxu0 %v5057
        %5305 = vmatpush2.bf16.msra.mxu0 %v5056
        %5306 = vmatprep.subr.bf16.mxu0 %v5053
        %5307 = vmatpush2.bf16.msra.mxu0 %v5052
        %5308 = vmatprep.mubr.bf16.mxu0 %v4481
        %5309 = vmatmul.mubr.bf16.gmra.mxu0 %v4480
        %v5310 = vpop.f32.mrf.mxu0
        %v5311 = vadd.f32 %v4619, %v5310
        %v5312 = vpop.f32.mrf.mxu0
        %v5313 = vadd.f32 %v4623, %v5312
        %v5314 = vpop.f32.mrf.mxu0
        %v5315 = vpop.f32.mrf.mxu0
        %5316 = vdwg.mxu0
        %5317 = vmatprep.subr.bf16.mxu0 %v5113
        %5318 = vmatpush1.bf16.msra.mxu0 %v5112
        %5319 = vmatprep.subr.bf16.mxu0 %v5109
        %5320 = vmatpush1.bf16.msra.mxu0 %v5108
        %5321 = vmatprep.subr.bf16.mxu0 %v5105
        %5322 = vmatpush1.bf16.msra.mxu0 %v5104
        %5323 = vmatprep.subr.bf16.mxu0 %v5101
        %5324 = vmatpush1.bf16.msra.mxu0 %v5100
        %5325 = vmatprep.subr.bf16.mxu0 %v5097
        %5326 = vmatpush1.bf16.msra.mxu0 %v5096
        %5327 = vmatprep.subr.bf16.mxu0 %v5093
        %5328 = vmatpush1.bf16.msra.mxu0 %v5092
        %5329 = vmatprep.subr.bf16.mxu0 %v5089
        %5330 = vmatpush1.bf16.msra.mxu0 %v5088
        %5331 = vmatprep.subr.bf16.mxu0 %v5085
        %5332 = vmatpush1.bf16.msra.mxu0 %v5084
        %5333 = vmatprep.subr.bf16.mxu0 %v5145
        %5334 = vmatpush2.bf16.msra.mxu0 %v5144
        %5335 = vmatprep.subr.bf16.mxu0 %v5141
        %5336 = vmatpush2.bf16.msra.mxu0 %v5140
        %5337 = vmatprep.subr.bf16.mxu0 %v5137
        %5338 = vmatpush2.bf16.msra.mxu0 %v5136
        %5339 = vmatprep.subr.bf16.mxu0 %v5133
        %5340 = vmatpush2.bf16.msra.mxu0 %v5132
        %5341 = vmatprep.subr.bf16.mxu0 %v5129
        %5342 = vmatpush2.bf16.msra.mxu0 %v5128
        %5343 = vmatprep.subr.bf16.mxu0 %v5125
        %5344 = vmatpush2.bf16.msra.mxu0 %v5124
        %5345 = vmatprep.subr.bf16.mxu0 %v5121
        %5346 = vmatpush2.bf16.msra.mxu0 %v5120
        %5347 = vmatprep.subr.bf16.mxu0 %v5117
        %5348 = vmatpush2.bf16.msra.mxu0 %v5116
        %5349 = vmatprep.mubr.bf16.mxu0 %v4483
        %5350 = vmatmul.mubr.bf16.gmra.mxu0 %v4482
        %v5351 = vpop.f32.mrf.mxu0
        %v5352 = vadd.f32 %v5311, %v5351
        %v5353 = vpop.f32.mrf.mxu0
        %v5354 = vadd.f32 %v5313, %v5353
        %v5355 = vpop.f32.mrf.mxu0
        %v5356 = vpop.f32.mrf.mxu0
        %5357 = vdwg.mxu0
        %5358 = vmatprep.subr.bf16.mxu0 %v5051
        %5359 = vmatpush1.bf16.msra.mxu0 %v5050
        %5360 = vmatprep.subr.bf16.mxu0 %v5047
        %5361 = vmatpush1.bf16.msra.mxu0 %v5046
        %5362 = vmatprep.subr.bf16.mxu0 %v5043
        %5363 = vmatpush1.bf16.msra.mxu0 %v5042
        %5364 = vmatprep.subr.bf16.mxu0 %v5039
        %5365 = vmatpush1.bf16.msra.mxu0 %v5038
        %5366 = vmatprep.subr.bf16.mxu0 %v5035
        %5367 = vmatpush1.bf16.msra.mxu0 %v5034
        %5368 = vmatprep.subr.bf16.mxu0 %v5031
        %5369 = vmatpush1.bf16.msra.mxu0 %v5030
        %5370 = vmatprep.subr.bf16.mxu0 %v5027
        %5371 = vmatpush1.bf16.msra.mxu0 %v5026
        %5372 = vmatprep.subr.bf16.mxu0 %v5023
        %5373 = vmatpush1.bf16.msra.mxu0 %v5022
        %5374 = vmatprep.subr.bf16.mxu0 %v5083
        %5375 = vmatpush2.bf16.msra.mxu0 %v5082
        %5376 = vmatprep.subr.bf16.mxu0 %v5079
        %5377 = vmatpush2.bf16.msra.mxu0 %v5078
        %5378 = vmatprep.subr.bf16.mxu0 %v5075
        %5379 = vmatpush2.bf16.msra.mxu0 %v5074
        %5380 = vmatprep.subr.bf16.mxu0 %v5071
        %5381 = vmatpush2.bf16.msra.mxu0 %v5070
        %5382 = vmatprep.subr.bf16.mxu0 %v5067
        %5383 = vmatpush2.bf16.msra.mxu0 %v5066
        %5384 = vmatprep.subr.bf16.mxu0 %v5063
        %5385 = vmatpush2.bf16.msra.mxu0 %v5062
        %5386 = vmatprep.subr.bf16.mxu0 %v5059
        %5387 = vmatpush2.bf16.msra.mxu0 %v5058
        %5388 = vmatprep.subr.bf16.mxu0 %v5055
        %5389 = vmatpush2.bf16.msra.mxu0 %v5054
        %5390 = vmatprep.mubr.bf16.mxu0 %v4481
        %5391 = vmatmul.mubr.bf16.gmra.mxu0 %v4480
        %v5392 = vpop.f32.mrf.mxu0
        %v5393 = vadd.f32 %v4627, %v5392
        %v5394 = vpop.f32.mrf.mxu0
        %v5395 = vadd.f32 %v4631, %v5394
        %v5396 = vpop.f32.mrf.mxu0
        %v5397 = vpop.f32.mrf.mxu0
        %5398 = vdwg.mxu0
        %5399 = vmatprep.subr.bf16.mxu0 %v5115
        %5400 = vmatpush1.bf16.msra.mxu0 %v5114
        %5401 = vmatprep.subr.bf16.mxu0 %v5111
        %5402 = vmatpush1.bf16.msra.mxu0 %v5110
        %5403 = vmatprep.subr.bf16.mxu0 %v5107
        %5404 = vmatpush1.bf16.msra.mxu0 %v5106
        %5405 = vmatprep.subr.bf16.mxu0 %v5103
        %5406 = vmatpush1.bf16.msra.mxu0 %v5102
        %5407 = vmatprep.subr.bf16.mxu0 %v5099
        %5408 = vmatpush1.bf16.msra.mxu0 %v5098
        %5409 = vmatprep.subr.bf16.mxu0 %v5095
        %5410 = vmatpush1.bf16.msra.mxu0 %v5094
        %5411 = vmatprep.subr.bf16.mxu0 %v5091
        %5412 = vmatpush1.bf16.msra.mxu0 %v5090
        %5413 = vmatprep.subr.bf16.mxu0 %v5087
        %5414 = vmatpush1.bf16.msra.mxu0 %v5086
        %5415 = vmatprep.subr.bf16.mxu0 %v5147
        %5416 = vmatpush2.bf16.msra.mxu0 %v5146
        %5417 = vmatprep.subr.bf16.mxu0 %v5143
        %5418 = vmatpush2.bf16.msra.mxu0 %v5142
        %5419 = vmatprep.subr.bf16.mxu0 %v5139
        %5420 = vmatpush2.bf16.msra.mxu0 %v5138
        %5421 = vmatprep.subr.bf16.mxu0 %v5135
        %5422 = vmatpush2.bf16.msra.mxu0 %v5134
        %5423 = vmatprep.subr.bf16.mxu0 %v5131
        %5424 = vmatpush2.bf16.msra.mxu0 %v5130
        %5425 = vmatprep.subr.bf16.mxu0 %v5127
        %5426 = vmatpush2.bf16.msra.mxu0 %v5126
        %5427 = vmatprep.subr.bf16.mxu0 %v5123
        %5428 = vmatpush2.bf16.msra.mxu0 %v5122
        %5429 = vmatprep.subr.bf16.mxu0 %v5119
        %5430 = vmatpush2.bf16.msra.mxu0 %v5118
        %5431 = vmatprep.mubr.bf16.mxu0 %v4483
        %5432 = vmatmul.mubr.bf16.gmra.mxu0 %v4482
        %v5433 = vpop.f32.mrf.mxu0
        %v5434 = vadd.f32 %v5393, %v5433
        %v5435 = vpop.f32.mrf.mxu0
        %v5436 = vadd.f32 %v5395, %v5435
        %v5437 = vpop.f32.mrf.mxu0
        %v5438 = vpop.f32.mrf.mxu0
        %5439 = vdwg.mxu0
        %v5440 = vtanh.pop %v5352
        %v5441 = vtanh.pop %v5354
        %v5442 = vtanh.pop %v5434
        %v5443 = vtanh.pop %v5436
        %v5444 = vpack.c.bf16 %v5440, %v5440
        %v5445 = vpack.c.bf16 %v5441, %v5441
        %v5446 = vpack.c.bf16 %v5442, %v5442
        %v5447 = vpack.c.bf16 %v5443, %v5443
        %s5448 = scalar_lea.vmem %s384, 5120 [#allocation8]
        %v5449 = vld [vmem:[%s5448] sm:$0xff]
        %v5450 = vld [vmem:[%s5448 + $0x8] sm:$0xff]
        %v5451 = vld [vmem:[%s5448 + $0x10] sm:$0xff]
        %v5452 = vld [vmem:[%s5448 + $0x18] sm:$0xff]
        %v5453 = vld [vmem:[%s5448 + $0x20] sm:$0xff]
        %v5454 = vld [vmem:[%s5448 + $0x28] sm:$0xff]
        %v5455 = vld [vmem:[%s5448 + $0x30] sm:$0xff]
        %v5456 = vld [vmem:[%s5448 + $0x38] sm:$0xff]
        %v5457 = vld [vmem:[%s5448 + $0x40] sm:$0xff]
        %v5458 = vld [vmem:[%s5448 + $0x48] sm:$0xff]
        %v5459 = vld [vmem:[%s5448 + $0x50] sm:$0xff]
        %v5460 = vld [vmem:[%s5448 + $0x58] sm:$0xff]
        %v5461 = vld [vmem:[%s5448 + $0x60] sm:$0xff]
        %v5462 = vld [vmem:[%s5448 + $0x68] sm:$0xff]
        %v5463 = vld [vmem:[%s5448 + $0x70] sm:$0xff]
        %v5464 = vld [vmem:[%s5448 + $0x78] sm:$0xff]
        %v5465 = vld [vmem:[%s5448 + $0x80] sm:$0xff]
        %v5466 = vld [vmem:[%s5448 + $0x88] sm:$0xff]
        %v5467 = vld [vmem:[%s5448 + $0x90] sm:$0xff]
        %v5468 = vld [vmem:[%s5448 + $0x98] sm:$0xff]
        %v5469 = vld [vmem:[%s5448 + $0xa0] sm:$0xff]
        %v5470 = vld [vmem:[%s5448 + $0xa8] sm:$0xff]
        %v5471 = vld [vmem:[%s5448 + $0xb0] sm:$0xff]
        %v5472 = vld [vmem:[%s5448 + $0xb8] sm:$0xff]
        %v5473 = vld [vmem:[%s5448 + $0xc0] sm:$0xff]
        %v5474 = vld [vmem:[%s5448 + $0xc8] sm:$0xff]
        %v5475 = vld [vmem:[%s5448 + $0xd0] sm:$0xff]
        %v5476 = vld [vmem:[%s5448 + $0xd8] sm:$0xff]
        %v5477 = vld [vmem:[%s5448 + $0xe0] sm:$0xff]
        %v5478 = vld [vmem:[%s5448 + $0xe8] sm:$0xff]
        %v5479 = vld [vmem:[%s5448 + $0xf0] sm:$0xff]
        %v5480 = vld [vmem:[%s5448 + $0xf8] sm:$0xff]
        %v5481 = vld [vmem:[%s5448 + $0x100] sm:$0xff]
        %v5482 = vld [vmem:[%s5448 + $0x108] sm:$0xff]
        %v5483 = vld [vmem:[%s5448 + $0x110] sm:$0xff]
        %v5484 = vld [vmem:[%s5448 + $0x118] sm:$0xff]
        %v5485 = vld [vmem:[%s5448 + $0x120] sm:$0xff]
        %v5486 = vld [vmem:[%s5448 + $0x128] sm:$0xff]
        %v5487 = vld [vmem:[%s5448 + $0x130] sm:$0xff]
        %v5488 = vld [vmem:[%s5448 + $0x138] sm:$0xff]
        %v5489 = vld [vmem:[%s5448 + $0x140] sm:$0xff]
        %v5490 = vld [vmem:[%s5448 + $0x148] sm:$0xff]
        %v5491 = vld [vmem:[%s5448 + $0x150] sm:$0xff]
        %v5492 = vld [vmem:[%s5448 + $0x158] sm:$0xff]
        %v5493 = vld [vmem:[%s5448 + $0x160] sm:$0xff]
        %v5494 = vld [vmem:[%s5448 + $0x168] sm:$0xff]
        %v5495 = vld [vmem:[%s5448 + $0x170] sm:$0xff]
        %v5496 = vld [vmem:[%s5448 + $0x178] sm:$0xff]
        %v5497 = vld [vmem:[%s5448 + $0x180] sm:$0xff]
        %v5498 = vld [vmem:[%s5448 + $0x188] sm:$0xff]
        %v5499 = vld [vmem:[%s5448 + $0x190] sm:$0xff]
        %v5500 = vld [vmem:[%s5448 + $0x198] sm:$0xff]
        %v5501 = vld [vmem:[%s5448 + $0x1a0] sm:$0xff]
        %v5502 = vld [vmem:[%s5448 + $0x1a8] sm:$0xff]
        %v5503 = vld [vmem:[%s5448 + $0x1b0] sm:$0xff]
        %v5504 = vld [vmem:[%s5448 + $0x1b8] sm:$0xff]
        %v5505 = vld [vmem:[%s5448 + $0x1c0] sm:$0xff]
        %v5506 = vld [vmem:[%s5448 + $0x1c8] sm:$0xff]
        %v5507 = vld [vmem:[%s5448 + $0x1d0] sm:$0xff]
        %v5508 = vld [vmem:[%s5448 + $0x1d8] sm:$0xff]
        %v5509 = vld [vmem:[%s5448 + $0x1e0] sm:$0xff]
        %v5510 = vld [vmem:[%s5448 + $0x1e8] sm:$0xff]
        %v5511 = vld [vmem:[%s5448 + $0x1f0] sm:$0xff]
        %v5512 = vld [vmem:[%s5448 + $0x1f8] sm:$0xff]
        %v5513 = vld [vmem:[%s5448 + $0x200] sm:$0xff]
        %v5514 = vld [vmem:[%s5448 + $0x208] sm:$0xff]
        %v5515 = vld [vmem:[%s5448 + $0x210] sm:$0xff]
        %v5516 = vld [vmem:[%s5448 + $0x218] sm:$0xff]
        %v5517 = vld [vmem:[%s5448 + $0x220] sm:$0xff]
        %v5518 = vld [vmem:[%s5448 + $0x228] sm:$0xff]
        %v5519 = vld [vmem:[%s5448 + $0x230] sm:$0xff]
        %v5520 = vld [vmem:[%s5448 + $0x238] sm:$0xff]
        %v5521 = vld [vmem:[%s5448 + $0x240] sm:$0xff]
        %v5522 = vld [vmem:[%s5448 + $0x248] sm:$0xff]
        %v5523 = vld [vmem:[%s5448 + $0x250] sm:$0xff]
        %v5524 = vld [vmem:[%s5448 + $0x258] sm:$0xff]
        %v5525 = vld [vmem:[%s5448 + $0x260] sm:$0xff]
        %v5526 = vld [vmem:[%s5448 + $0x268] sm:$0xff]
        %v5527 = vld [vmem:[%s5448 + $0x270] sm:$0xff]
        %v5528 = vld [vmem:[%s5448 + $0x278] sm:$0xff]
        %v5529 = vld [vmem:[%s5448 + $0x280] sm:$0xff]
        %v5530 = vld [vmem:[%s5448 + $0x288] sm:$0xff]
        %v5531 = vld [vmem:[%s5448 + $0x290] sm:$0xff]
        %v5532 = vld [vmem:[%s5448 + $0x298] sm:$0xff]
        %v5533 = vld [vmem:[%s5448 + $0x2a0] sm:$0xff]
        %v5534 = vld [vmem:[%s5448 + $0x2a8] sm:$0xff]
        %v5535 = vld [vmem:[%s5448 + $0x2b0] sm:$0xff]
        %v5536 = vld [vmem:[%s5448 + $0x2b8] sm:$0xff]
        %v5537 = vld [vmem:[%s5448 + $0x2c0] sm:$0xff]
        %v5538 = vld [vmem:[%s5448 + $0x2c8] sm:$0xff]
        %v5539 = vld [vmem:[%s5448 + $0x2d0] sm:$0xff]
        %v5540 = vld [vmem:[%s5448 + $0x2d8] sm:$0xff]
        %v5541 = vld [vmem:[%s5448 + $0x2e0] sm:$0xff]
        %v5542 = vld [vmem:[%s5448 + $0x2e8] sm:$0xff]
        %v5543 = vld [vmem:[%s5448 + $0x2f0] sm:$0xff]
        %v5544 = vld [vmem:[%s5448 + $0x2f8] sm:$0xff]
        %v5545 = vld [vmem:[%s5448 + $0x300] sm:$0xff]
        %v5546 = vld [vmem:[%s5448 + $0x308] sm:$0xff]
        %v5547 = vld [vmem:[%s5448 + $0x310] sm:$0xff]
        %v5548 = vld [vmem:[%s5448 + $0x318] sm:$0xff]
        %v5549 = vld [vmem:[%s5448 + $0x320] sm:$0xff]
        %v5550 = vld [vmem:[%s5448 + $0x328] sm:$0xff]
        %v5551 = vld [vmem:[%s5448 + $0x330] sm:$0xff]
        %v5552 = vld [vmem:[%s5448 + $0x338] sm:$0xff]
        %v5553 = vld [vmem:[%s5448 + $0x340] sm:$0xff]
        %v5554 = vld [vmem:[%s5448 + $0x348] sm:$0xff]
        %v5555 = vld [vmem:[%s5448 + $0x350] sm:$0xff]
        %v5556 = vld [vmem:[%s5448 + $0x358] sm:$0xff]
        %v5557 = vld [vmem:[%s5448 + $0x360] sm:$0xff]
        %v5558 = vld [vmem:[%s5448 + $0x368] sm:$0xff]
        %v5559 = vld [vmem:[%s5448 + $0x370] sm:$0xff]
        %v5560 = vld [vmem:[%s5448 + $0x378] sm:$0xff]
        %v5561 = vld [vmem:[%s5448 + $0x380] sm:$0xff]
        %v5562 = vld [vmem:[%s5448 + $0x388] sm:$0xff]
        %v5563 = vld [vmem:[%s5448 + $0x390] sm:$0xff]
        %v5564 = vld [vmem:[%s5448 + $0x398] sm:$0xff]
        %v5565 = vld [vmem:[%s5448 + $0x3a0] sm:$0xff]
        %v5566 = vld [vmem:[%s5448 + $0x3a8] sm:$0xff]
        %v5567 = vld [vmem:[%s5448 + $0x3b0] sm:$0xff]
        %v5568 = vld [vmem:[%s5448 + $0x3b8] sm:$0xff]
        %v5569 = vld [vmem:[%s5448 + $0x3c0] sm:$0xff]
        %v5570 = vld [vmem:[%s5448 + $0x3c8] sm:$0xff]
        %v5571 = vld [vmem:[%s5448 + $0x3d0] sm:$0xff]
        %v5572 = vld [vmem:[%s5448 + $0x3d8] sm:$0xff]
        %v5573 = vld [vmem:[%s5448 + $0x3e0] sm:$0xff]
        %v5574 = vld [vmem:[%s5448 + $0x3e8] sm:$0xff]
        %v5575 = vld [vmem:[%s5448 + $0x3f0] sm:$0xff]
        %v5576 = vld [vmem:[%s5448 + $0x3f8] sm:$0xff]
        %s5577 = scalar_lea.vmem %s436, 5
        %v5578 = vld [vmem:[%s5577] ss:$8 sm:$0xf]
        %v5580 = vlaneseq
        %v5581 = vshrl.u32 %v5580, 7
        %v5582 = vsub.s32 0, %v5581
        %v5583 = vrot.slane %v5578, %v5582
        %v5584 = vlaneseq
        %v5585 = vshrl.u32 %v5584, 7
        %v5586 = vsub.s32 1, %v5585
        %v5587 = vrot.slane %v5578, %v5586
        %v5588 = vlaneseq
        %v5589 = vshrl.u32 %v5588, 7
        %v5590 = vsub.s32 2, %v5589
        %v5591 = vrot.slane %v5578, %v5590
        %v5592 = vlaneseq
        %v5593 = vshrl.u32 %v5592, 7
        %v5594 = vsub.s32 3, %v5593
        %v5595 = vrot.slane %v5578, %v5594
        %v5728 = vunpack.c.l.b16 %v5449
        %v5729 = vunpack.c.h.b16 %v5449
        %v5730 = vunpack.c.l.b16 %v5450
        %v5731 = vunpack.c.h.b16 %v5450
        %v5732 = vunpack.c.l.b16 %v5451
        %v5733 = vunpack.c.h.b16 %v5451
        %v5734 = vunpack.c.l.b16 %v5452
        %v5735 = vunpack.c.h.b16 %v5452
        %v5736 = vunpack.c.l.b16 %v5453
        %v5737 = vunpack.c.h.b16 %v5453
        %v5738 = vunpack.c.l.b16 %v5454
        %v5739 = vunpack.c.h.b16 %v5454
        %v5740 = vunpack.c.l.b16 %v5455
        %v5741 = vunpack.c.h.b16 %v5455
        %v5742 = vunpack.c.l.b16 %v5456
        %v5743 = vunpack.c.h.b16 %v5456
        %v5744 = vunpack.c.l.b16 %v5457
        %v5745 = vunpack.c.h.b16 %v5457
        %v5746 = vunpack.c.l.b16 %v5458
        %v5747 = vunpack.c.h.b16 %v5458
        %v5748 = vunpack.c.l.b16 %v5459
        %v5749 = vunpack.c.h.b16 %v5459
        %v5750 = vunpack.c.l.b16 %v5460
        %v5751 = vunpack.c.h.b16 %v5460
        %v5752 = vunpack.c.l.b16 %v5461
        %v5753 = vunpack.c.h.b16 %v5461
        %v5754 = vunpack.c.l.b16 %v5462
        %v5755 = vunpack.c.h.b16 %v5462
        %v5756 = vunpack.c.l.b16 %v5463
        %v5757 = vunpack.c.h.b16 %v5463
        %v5758 = vunpack.c.l.b16 %v5464
        %v5759 = vunpack.c.h.b16 %v5464
        %v5760 = vunpack.c.l.b16 %v5465
        %v5761 = vunpack.c.h.b16 %v5465
        %v5762 = vunpack.c.l.b16 %v5466
        %v5763 = vunpack.c.h.b16 %v5466
        %v5764 = vunpack.c.l.b16 %v5467
        %v5765 = vunpack.c.h.b16 %v5467
        %v5766 = vunpack.c.l.b16 %v5468
        %v5767 = vunpack.c.h.b16 %v5468
        %v5768 = vunpack.c.l.b16 %v5469
        %v5769 = vunpack.c.h.b16 %v5469
        %v5770 = vunpack.c.l.b16 %v5470
        %v5771 = vunpack.c.h.b16 %v5470
        %v5772 = vunpack.c.l.b16 %v5471
        %v5773 = vunpack.c.h.b16 %v5471
        %v5774 = vunpack.c.l.b16 %v5472
        %v5775 = vunpack.c.h.b16 %v5472
        %v5776 = vunpack.c.l.b16 %v5473
        %v5777 = vunpack.c.h.b16 %v5473
        %v5778 = vunpack.c.l.b16 %v5474
        %v5779 = vunpack.c.h.b16 %v5474
        %v5780 = vunpack.c.l.b16 %v5475
        %v5781 = vunpack.c.h.b16 %v5475
        %v5782 = vunpack.c.l.b16 %v5476
        %v5783 = vunpack.c.h.b16 %v5476
        %v5784 = vunpack.c.l.b16 %v5477
        %v5785 = vunpack.c.h.b16 %v5477
        %v5786 = vunpack.c.l.b16 %v5478
        %v5787 = vunpack.c.h.b16 %v5478
        %v5788 = vunpack.c.l.b16 %v5479
        %v5789 = vunpack.c.h.b16 %v5479
        %v5790 = vunpack.c.l.b16 %v5480
        %v5791 = vunpack.c.h.b16 %v5480
        %v5792 = vunpack.c.l.b16 %v5481
        %v5793 = vunpack.c.h.b16 %v5481
        %v5794 = vunpack.c.l.b16 %v5482
        %v5795 = vunpack.c.h.b16 %v5482
        %v5796 = vunpack.c.l.b16 %v5483
        %v5797 = vunpack.c.h.b16 %v5483
        %v5798 = vunpack.c.l.b16 %v5484
        %v5799 = vunpack.c.h.b16 %v5484
        %v5800 = vunpack.c.l.b16 %v5485
        %v5801 = vunpack.c.h.b16 %v5485
        %v5802 = vunpack.c.l.b16 %v5486
        %v5803 = vunpack.c.h.b16 %v5486
        %v5804 = vunpack.c.l.b16 %v5487
        %v5805 = vunpack.c.h.b16 %v5487
        %v5806 = vunpack.c.l.b16 %v5488
        %v5807 = vunpack.c.h.b16 %v5488
        %v5808 = vunpack.c.l.b16 %v5489
        %v5809 = vunpack.c.h.b16 %v5489
        %v5810 = vunpack.c.l.b16 %v5490
        %v5811 = vunpack.c.h.b16 %v5490
        %v5812 = vunpack.c.l.b16 %v5491
        %v5813 = vunpack.c.h.b16 %v5491
        %v5814 = vunpack.c.l.b16 %v5492
        %v5815 = vunpack.c.h.b16 %v5492
        %v5816 = vunpack.c.l.b16 %v5493
        %v5817 = vunpack.c.h.b16 %v5493
        %v5818 = vunpack.c.l.b16 %v5494
        %v5819 = vunpack.c.h.b16 %v5494
        %v5820 = vunpack.c.l.b16 %v5495
        %v5821 = vunpack.c.h.b16 %v5495
        %v5822 = vunpack.c.l.b16 %v5496
        %v5823 = vunpack.c.h.b16 %v5496
        %v5824 = vunpack.c.l.b16 %v5497
        %v5825 = vunpack.c.h.b16 %v5497
        %v5826 = vunpack.c.l.b16 %v5498
        %v5827 = vunpack.c.h.b16 %v5498
        %v5828 = vunpack.c.l.b16 %v5499
        %v5829 = vunpack.c.h.b16 %v5499
        %v5830 = vunpack.c.l.b16 %v5500
        %v5831 = vunpack.c.h.b16 %v5500
        %v5832 = vunpack.c.l.b16 %v5501
        %v5833 = vunpack.c.h.b16 %v5501
        %v5834 = vunpack.c.l.b16 %v5502
        %v5835 = vunpack.c.h.b16 %v5502
        %v5836 = vunpack.c.l.b16 %v5503
        %v5837 = vunpack.c.h.b16 %v5503
        %v5838 = vunpack.c.l.b16 %v5504
        %v5839 = vunpack.c.h.b16 %v5504
        %v5840 = vunpack.c.l.b16 %v5505
        %v5841 = vunpack.c.h.b16 %v5505
        %v5842 = vunpack.c.l.b16 %v5506
        %v5843 = vunpack.c.h.b16 %v5506
        %v5844 = vunpack.c.l.b16 %v5507
        %v5845 = vunpack.c.h.b16 %v5507
        %v5846 = vunpack.c.l.b16 %v5508
        %v5847 = vunpack.c.h.b16 %v5508
        %v5848 = vunpack.c.l.b16 %v5509
        %v5849 = vunpack.c.h.b16 %v5509
        %v5850 = vunpack.c.l.b16 %v5510
        %v5851 = vunpack.c.h.b16 %v5510
        %v5852 = vunpack.c.l.b16 %v5511
        %v5853 = vunpack.c.h.b16 %v5511
        %v5854 = vunpack.c.l.b16 %v5512
        %v5855 = vunpack.c.h.b16 %v5512
        %v5856 = vunpack.c.l.b16 %v5513
        %v5857 = vunpack.c.h.b16 %v5513
        %v5858 = vunpack.c.l.b16 %v5514
        %v5859 = vunpack.c.h.b16 %v5514
        %v5860 = vunpack.c.l.b16 %v5515
        %v5861 = vunpack.c.h.b16 %v5515
        %v5862 = vunpack.c.l.b16 %v5516
        %v5863 = vunpack.c.h.b16 %v5516
        %v5864 = vunpack.c.l.b16 %v5517
        %v5865 = vunpack.c.h.b16 %v5517
        %v5866 = vunpack.c.l.b16 %v5518
        %v5867 = vunpack.c.h.b16 %v5518
        %v5868 = vunpack.c.l.b16 %v5519
        %v5869 = vunpack.c.h.b16 %v5519
        %v5870 = vunpack.c.l.b16 %v5520
        %v5871 = vunpack.c.h.b16 %v5520
        %v5872 = vunpack.c.l.b16 %v5521
        %v5873 = vunpack.c.h.b16 %v5521
        %v5874 = vunpack.c.l.b16 %v5522
        %v5875 = vunpack.c.h.b16 %v5522
        %v5876 = vunpack.c.l.b16 %v5523
        %v5877 = vunpack.c.h.b16 %v5523
        %v5878 = vunpack.c.l.b16 %v5524
        %v5879 = vunpack.c.h.b16 %v5524
        %v5880 = vunpack.c.l.b16 %v5525
        %v5881 = vunpack.c.h.b16 %v5525
        %v5882 = vunpack.c.l.b16 %v5526
        %v5883 = vunpack.c.h.b16 %v5526
        %v5884 = vunpack.c.l.b16 %v5527
        %v5885 = vunpack.c.h.b16 %v5527
        %v5886 = vunpack.c.l.b16 %v5528
        %v5887 = vunpack.c.h.b16 %v5528
        %v5888 = vunpack.c.l.b16 %v5529
        %v5889 = vunpack.c.h.b16 %v5529
        %v5890 = vunpack.c.l.b16 %v5530
        %v5891 = vunpack.c.h.b16 %v5530
        %v5892 = vunpack.c.l.b16 %v5531
        %v5893 = vunpack.c.h.b16 %v5531
        %v5894 = vunpack.c.l.b16 %v5532
        %v5895 = vunpack.c.h.b16 %v5532
        %v5896 = vunpack.c.l.b16 %v5533
        %v5897 = vunpack.c.h.b16 %v5533
        %v5898 = vunpack.c.l.b16 %v5534
        %v5899 = vunpack.c.h.b16 %v5534
        %v5900 = vunpack.c.l.b16 %v5535
        %v5901 = vunpack.c.h.b16 %v5535
        %v5902 = vunpack.c.l.b16 %v5536
        %v5903 = vunpack.c.h.b16 %v5536
        %v5904 = vunpack.c.l.b16 %v5537
        %v5905 = vunpack.c.h.b16 %v5537
        %v5906 = vunpack.c.l.b16 %v5538
        %v5907 = vunpack.c.h.b16 %v5538
        %v5908 = vunpack.c.l.b16 %v5539
        %v5909 = vunpack.c.h.b16 %v5539
        %v5910 = vunpack.c.l.b16 %v5540
        %v5911 = vunpack.c.h.b16 %v5540
        %v5912 = vunpack.c.l.b16 %v5541
        %v5913 = vunpack.c.h.b16 %v5541
        %v5914 = vunpack.c.l.b16 %v5542
        %v5915 = vunpack.c.h.b16 %v5542
        %v5916 = vunpack.c.l.b16 %v5543
        %v5917 = vunpack.c.h.b16 %v5543
        %v5918 = vunpack.c.l.b16 %v5544
        %v5919 = vunpack.c.h.b16 %v5544
        %v5920 = vunpack.c.l.b16 %v5545
        %v5921 = vunpack.c.h.b16 %v5545
        %v5922 = vunpack.c.l.b16 %v5546
        %v5923 = vunpack.c.h.b16 %v5546
        %v5924 = vunpack.c.l.b16 %v5547
        %v5925 = vunpack.c.h.b16 %v5547
        %v5926 = vunpack.c.l.b16 %v5548
        %v5927 = vunpack.c.h.b16 %v5548
        %v5928 = vunpack.c.l.b16 %v5549
        %v5929 = vunpack.c.h.b16 %v5549
        %v5930 = vunpack.c.l.b16 %v5550
        %v5931 = vunpack.c.h.b16 %v5550
        %v5932 = vunpack.c.l.b16 %v5551
        %v5933 = vunpack.c.h.b16 %v5551
        %v5934 = vunpack.c.l.b16 %v5552
        %v5935 = vunpack.c.h.b16 %v5552
        %v5936 = vunpack.c.l.b16 %v5553
        %v5937 = vunpack.c.h.b16 %v5553
        %v5938 = vunpack.c.l.b16 %v5554
        %v5939 = vunpack.c.h.b16 %v5554
        %v5940 = vunpack.c.l.b16 %v5555
        %v5941 = vunpack.c.h.b16 %v5555
        %v5942 = vunpack.c.l.b16 %v5556
        %v5943 = vunpack.c.h.b16 %v5556
        %v5944 = vunpack.c.l.b16 %v5557
        %v5945 = vunpack.c.h.b16 %v5557
        %v5946 = vunpack.c.l.b16 %v5558
        %v5947 = vunpack.c.h.b16 %v5558
        %v5948 = vunpack.c.l.b16 %v5559
        %v5949 = vunpack.c.h.b16 %v5559
        %v5950 = vunpack.c.l.b16 %v5560
        %v5951 = vunpack.c.h.b16 %v5560
        %v5952 = vunpack.c.l.b16 %v5561
        %v5953 = vunpack.c.h.b16 %v5561
        %v5954 = vunpack.c.l.b16 %v5562
        %v5955 = vunpack.c.h.b16 %v5562
        %v5956 = vunpack.c.l.b16 %v5563
        %v5957 = vunpack.c.h.b16 %v5563
        %v5958 = vunpack.c.l.b16 %v5564
        %v5959 = vunpack.c.h.b16 %v5564
        %v5960 = vunpack.c.l.b16 %v5565
        %v5961 = vunpack.c.h.b16 %v5565
        %v5962 = vunpack.c.l.b16 %v5566
        %v5963 = vunpack.c.h.b16 %v5566
        %v5964 = vunpack.c.l.b16 %v5567
        %v5965 = vunpack.c.h.b16 %v5567
        %v5966 = vunpack.c.l.b16 %v5568
        %v5967 = vunpack.c.h.b16 %v5568
        %v5968 = vunpack.c.l.b16 %v5569
        %v5969 = vunpack.c.h.b16 %v5569
        %v5970 = vunpack.c.l.b16 %v5570
        %v5971 = vunpack.c.h.b16 %v5570
        %v5972 = vunpack.c.l.b16 %v5571
        %v5973 = vunpack.c.h.b16 %v5571
        %v5974 = vunpack.c.l.b16 %v5572
        %v5975 = vunpack.c.h.b16 %v5572
        %v5976 = vunpack.c.l.b16 %v5573
        %v5977 = vunpack.c.h.b16 %v5573
        %v5978 = vunpack.c.l.b16 %v5574
        %v5979 = vunpack.c.h.b16 %v5574
        %v5980 = vunpack.c.l.b16 %v5575
        %v5981 = vunpack.c.h.b16 %v5575
        %v5982 = vunpack.c.l.b16 %v5576
        %v5983 = vunpack.c.h.b16 %v5576
        %v5984 = vpack.c.b16 %v5732, %v5728
        %v5985 = vpack.c.b16 %v5733, %v5729
        %v5986 = vpack.c.b16 %v5734, %v5730
        %v5987 = vpack.c.b16 %v5735, %v5731
        %v5988 = vpack.c.b16 %v5740, %v5736
        %v5989 = vpack.c.b16 %v5741, %v5737
        %v5990 = vpack.c.b16 %v5742, %v5738
        %v5991 = vpack.c.b16 %v5743, %v5739
        %v5992 = vpack.c.b16 %v5748, %v5744
        %v5993 = vpack.c.b16 %v5749, %v5745
        %v5994 = vpack.c.b16 %v5750, %v5746
        %v5995 = vpack.c.b16 %v5751, %v5747
        %v5996 = vpack.c.b16 %v5756, %v5752
        %v5997 = vpack.c.b16 %v5757, %v5753
        %v5998 = vpack.c.b16 %v5758, %v5754
        %v5999 = vpack.c.b16 %v5759, %v5755
        %v6000 = vpack.c.b16 %v5764, %v5760
        %v6001 = vpack.c.b16 %v5765, %v5761
        %v6002 = vpack.c.b16 %v5766, %v5762
        %v6003 = vpack.c.b16 %v5767, %v5763
        %v6004 = vpack.c.b16 %v5772, %v5768
        %v6005 = vpack.c.b16 %v5773, %v5769
        %v6006 = vpack.c.b16 %v5774, %v5770
        %v6007 = vpack.c.b16 %v5775, %v5771
        %v6008 = vpack.c.b16 %v5780, %v5776
        %v6009 = vpack.c.b16 %v5781, %v5777
        %v6010 = vpack.c.b16 %v5782, %v5778
        %v6011 = vpack.c.b16 %v5783, %v5779
        %v6012 = vpack.c.b16 %v5788, %v5784
        %v6013 = vpack.c.b16 %v5789, %v5785
        %v6014 = vpack.c.b16 %v5790, %v5786
        %v6015 = vpack.c.b16 %v5791, %v5787
        %v6016 = vpack.c.b16 %v5796, %v5792
        %v6017 = vpack.c.b16 %v5797, %v5793
        %v6018 = vpack.c.b16 %v5798, %v5794
        %v6019 = vpack.c.b16 %v5799, %v5795
        %v6020 = vpack.c.b16 %v5804, %v5800
        %v6021 = vpack.c.b16 %v5805, %v5801
        %v6022 = vpack.c.b16 %v5806, %v5802
        %v6023 = vpack.c.b16 %v5807, %v5803
        %v6024 = vpack.c.b16 %v5812, %v5808
        %v6025 = vpack.c.b16 %v5813, %v5809
        %v6026 = vpack.c.b16 %v5814, %v5810
        %v6027 = vpack.c.b16 %v5815, %v5811
        %v6028 = vpack.c.b16 %v5820, %v5816
        %v6029 = vpack.c.b16 %v5821, %v5817
        %v6030 = vpack.c.b16 %v5822, %v5818
        %v6031 = vpack.c.b16 %v5823, %v5819
        %v6032 = vpack.c.b16 %v5828, %v5824
        %v6033 = vpack.c.b16 %v5829, %v5825
        %v6034 = vpack.c.b16 %v5830, %v5826
        %v6035 = vpack.c.b16 %v5831, %v5827
        %v6036 = vpack.c.b16 %v5836, %v5832
        %v6037 = vpack.c.b16 %v5837, %v5833
        %v6038 = vpack.c.b16 %v5838, %v5834
        %v6039 = vpack.c.b16 %v5839, %v5835
        %v6040 = vpack.c.b16 %v5844, %v5840
        %v6041 = vpack.c.b16 %v5845, %v5841
        %v6042 = vpack.c.b16 %v5846, %v5842
        %v6043 = vpack.c.b16 %v5847, %v5843
        %v6044 = vpack.c.b16 %v5852, %v5848
        %v6045 = vpack.c.b16 %v5853, %v5849
        %v6046 = vpack.c.b16 %v5854, %v5850
        %v6047 = vpack.c.b16 %v5855, %v5851
        %v6048 = vpack.c.b16 %v5860, %v5856
        %v6049 = vpack.c.b16 %v5861, %v5857
        %v6050 = vpack.c.b16 %v5862, %v5858
        %v6051 = vpack.c.b16 %v5863, %v5859
        %v6052 = vpack.c.b16 %v5868, %v5864
        %v6053 = vpack.c.b16 %v5869, %v5865
        %v6054 = vpack.c.b16 %v5870, %v5866
        %v6055 = vpack.c.b16 %v5871, %v5867
        %v6056 = vpack.c.b16 %v5876, %v5872
        %v6057 = vpack.c.b16 %v5877, %v5873
        %v6058 = vpack.c.b16 %v5878, %v5874
        %v6059 = vpack.c.b16 %v5879, %v5875
        %v6060 = vpack.c.b16 %v5884, %v5880
        %v6061 = vpack.c.b16 %v5885, %v5881
        %v6062 = vpack.c.b16 %v5886, %v5882
        %v6063 = vpack.c.b16 %v5887, %v5883
        %v6064 = vpack.c.b16 %v5892, %v5888
        %v6065 = vpack.c.b16 %v5893, %v5889
        %v6066 = vpack.c.b16 %v5894, %v5890
        %v6067 = vpack.c.b16 %v5895, %v5891
        %v6068 = vpack.c.b16 %v5900, %v5896
        %v6069 = vpack.c.b16 %v5901, %v5897
        %v6070 = vpack.c.b16 %v5902, %v5898
        %v6071 = vpack.c.b16 %v5903, %v5899
        %v6072 = vpack.c.b16 %v5908, %v5904
        %v6073 = vpack.c.b16 %v5909, %v5905
        %v6074 = vpack.c.b16 %v5910, %v5906
        %v6075 = vpack.c.b16 %v5911, %v5907
        %v6076 = vpack.c.b16 %v5916, %v5912
        %v6077 = vpack.c.b16 %v5917, %v5913
        %v6078 = vpack.c.b16 %v5918, %v5914
        %v6079 = vpack.c.b16 %v5919, %v5915
        %v6080 = vpack.c.b16 %v5924, %v5920
        %v6081 = vpack.c.b16 %v5925, %v5921
        %v6082 = vpack.c.b16 %v5926, %v5922
        %v6083 = vpack.c.b16 %v5927, %v5923
        %v6084 = vpack.c.b16 %v5932, %v5928
        %v6085 = vpack.c.b16 %v5933, %v5929
        %v6086 = vpack.c.b16 %v5934, %v5930
        %v6087 = vpack.c.b16 %v5935, %v5931
        %v6088 = vpack.c.b16 %v5940, %v5936
        %v6089 = vpack.c.b16 %v5941, %v5937
        %v6090 = vpack.c.b16 %v5942, %v5938
        %v6091 = vpack.c.b16 %v5943, %v5939
        %v6092 = vpack.c.b16 %v5948, %v5944
        %v6093 = vpack.c.b16 %v5949, %v5945
        %v6094 = vpack.c.b16 %v5950, %v5946
        %v6095 = vpack.c.b16 %v5951, %v5947
        %v6096 = vpack.c.b16 %v5956, %v5952
        %v6097 = vpack.c.b16 %v5957, %v5953
        %v6098 = vpack.c.b16 %v5958, %v5954
        %v6099 = vpack.c.b16 %v5959, %v5955
        %v6100 = vpack.c.b16 %v5964, %v5960
        %v6101 = vpack.c.b16 %v5965, %v5961
        %v6102 = vpack.c.b16 %v5966, %v5962
        %v6103 = vpack.c.b16 %v5967, %v5963
        %v6104 = vpack.c.b16 %v5972, %v5968
        %v6105 = vpack.c.b16 %v5973, %v5969
        %v6106 = vpack.c.b16 %v5974, %v5970
        %v6107 = vpack.c.b16 %v5975, %v5971
        %v6108 = vpack.c.b16 %v5980, %v5976
        %v6109 = vpack.c.b16 %v5981, %v5977
        %v6110 = vpack.c.b16 %v5982, %v5978
        %v6111 = vpack.c.b16 %v5983, %v5979
        %6240 = vmatprep.subr.bf16.mxu0 %v6013
        %6241 = vmatpush1.bf16.msra.mxu0 %v6012
        %6242 = vmatprep.subr.bf16.mxu0 %v6009
        %6243 = vmatpush1.bf16.msra.mxu0 %v6008
        %6244 = vmatprep.subr.bf16.mxu0 %v6005
        %6245 = vmatpush1.bf16.msra.mxu0 %v6004
        %6246 = vmatprep.subr.bf16.mxu0 %v6001
        %6247 = vmatpush1.bf16.msra.mxu0 %v6000
        %6248 = vmatprep.subr.bf16.mxu0 %v5997
        %6249 = vmatpush1.bf16.msra.mxu0 %v5996
        %6250 = vmatprep.subr.bf16.mxu0 %v5993
        %6251 = vmatpush1.bf16.msra.mxu0 %v5992
        %6252 = vmatprep.subr.bf16.mxu0 %v5989
        %6253 = vmatpush1.bf16.msra.mxu0 %v5988
        %6254 = vmatprep.subr.bf16.mxu0 %v5985
        %6255 = vmatpush1.bf16.msra.mxu0 %v5984
        %6256 = vmatprep.subr.bf16.mxu0 %v6045
        %6257 = vmatpush2.bf16.msra.mxu0 %v6044
        %6258 = vmatprep.subr.bf16.mxu0 %v6041
        %6259 = vmatpush2.bf16.msra.mxu0 %v6040
        %6260 = vmatprep.subr.bf16.mxu0 %v6037
        %6261 = vmatpush2.bf16.msra.mxu0 %v6036
        %6262 = vmatprep.subr.bf16.mxu0 %v6033
        %6263 = vmatpush2.bf16.msra.mxu0 %v6032
        %6264 = vmatprep.subr.bf16.mxu0 %v6029
        %6265 = vmatpush2.bf16.msra.mxu0 %v6028
        %6266 = vmatprep.subr.bf16.mxu0 %v6025
        %6267 = vmatpush2.bf16.msra.mxu0 %v6024
        %6268 = vmatprep.subr.bf16.mxu0 %v6021
        %6269 = vmatpush2.bf16.msra.mxu0 %v6020
        %6270 = vmatprep.subr.bf16.mxu0 %v6017
        %6271 = vmatpush2.bf16.msra.mxu0 %v6016
        %6272 = vmatprep.mubr.bf16.mxu0 %v5445
        %6273 = vmatmul.mubr.bf16.gmra.mxu0 %v5444
        %v6274 = vpop.f32.mrf.mxu0
        %v6275 = vadd.f32 %v5583, %v6274
        %v6276 = vpop.f32.mrf.mxu0
        %v6277 = vadd.f32 %v5587, %v6276
        %v6278 = vpop.f32.mrf.mxu0
        %v6279 = vpop.f32.mrf.mxu0
        %6280 = vdwg.mxu0
        %6281 = vmatprep.subr.bf16.mxu0 %v6077
        %6282 = vmatpush1.bf16.msra.mxu0 %v6076
        %6283 = vmatprep.subr.bf16.mxu0 %v6073
        %6284 = vmatpush1.bf16.msra.mxu0 %v6072
        %6285 = vmatprep.subr.bf16.mxu0 %v6069
        %6286 = vmatpush1.bf16.msra.mxu0 %v6068
        %6287 = vmatprep.subr.bf16.mxu0 %v6065
        %6288 = vmatpush1.bf16.msra.mxu0 %v6064
        %6289 = vmatprep.subr.bf16.mxu0 %v6061
        %6290 = vmatpush1.bf16.msra.mxu0 %v6060
        %6291 = vmatprep.subr.bf16.mxu0 %v6057
        %6292 = vmatpush1.bf16.msra.mxu0 %v6056
        %6293 = vmatprep.subr.bf16.mxu0 %v6053
        %6294 = vmatpush1.bf16.msra.mxu0 %v6052
        %6295 = vmatprep.subr.bf16.mxu0 %v6049
        %6296 = vmatpush1.bf16.msra.mxu0 %v6048
        %6297 = vmatprep.subr.bf16.mxu0 %v6109
        %6298 = vmatpush2.bf16.msra.mxu0 %v6108
        %6299 = vmatprep.subr.bf16.mxu0 %v6105
        %6300 = vmatpush2.bf16.msra.mxu0 %v6104
        %6301 = vmatprep.subr.bf16.mxu0 %v6101
        %6302 = vmatpush2.bf16.msra.mxu0 %v6100
        %6303 = vmatprep.subr.bf16.mxu0 %v6097
        %6304 = vmatpush2.bf16.msra.mxu0 %v6096
        %6305 = vmatprep.subr.bf16.mxu0 %v6093
        %6306 = vmatpush2.bf16.msra.mxu0 %v6092
        %6307 = vmatprep.subr.bf16.mxu0 %v6089
        %6308 = vmatpush2.bf16.msra.mxu0 %v6088
        %6309 = vmatprep.subr.bf16.mxu0 %v6085
        %6310 = vmatpush2.bf16.msra.mxu0 %v6084
        %6311 = vmatprep.subr.bf16.mxu0 %v6081
        %6312 = vmatpush2.bf16.msra.mxu0 %v6080
        %6313 = vmatprep.mubr.bf16.mxu0 %v5447
        %6314 = vmatmul.mubr.bf16.gmra.mxu0 %v5446
        %v6315 = vpop.f32.mrf.mxu0
        %v6316 = vadd.f32 %v6275, %v6315
        %v6317 = vpop.f32.mrf.mxu0
        %v6318 = vadd.f32 %v6277, %v6317
        %v6319 = vpop.f32.mrf.mxu0
        %v6320 = vpop.f32.mrf.mxu0
        %6321 = vdwg.mxu0
        %6322 = vmatprep.subr.bf16.mxu0 %v6015
        %6323 = vmatpush1.bf16.msra.mxu0 %v6014
        %6324 = vmatprep.subr.bf16.mxu0 %v6011
        %6325 = vmatpush1.bf16.msra.mxu0 %v6010
        %6326 = vmatprep.subr.bf16.mxu0 %v6007
        %6327 = vmatpush1.bf16.msra.mxu0 %v6006
        %6328 = vmatprep.subr.bf16.mxu0 %v6003
        %6329 = vmatpush1.bf16.msra.mxu0 %v6002
        %6330 = vmatprep.subr.bf16.mxu0 %v5999
        %6331 = vmatpush1.bf16.msra.mxu0 %v5998
        %6332 = vmatprep.subr.bf16.mxu0 %v5995
        %6333 = vmatpush1.bf16.msra.mxu0 %v5994
        %6334 = vmatprep.subr.bf16.mxu0 %v5991
        %6335 = vmatpush1.bf16.msra.mxu0 %v5990
        %6336 = vmatprep.subr.bf16.mxu0 %v5987
        %6337 = vmatpush1.bf16.msra.mxu0 %v5986
        %6338 = vmatprep.subr.bf16.mxu0 %v6047
        %6339 = vmatpush2.bf16.msra.mxu0 %v6046
        %6340 = vmatprep.subr.bf16.mxu0 %v6043
        %6341 = vmatpush2.bf16.msra.mxu0 %v6042
        %6342 = vmatprep.subr.bf16.mxu0 %v6039
        %6343 = vmatpush2.bf16.msra.mxu0 %v6038
        %6344 = vmatprep.subr.bf16.mxu0 %v6035
        %6345 = vmatpush2.bf16.msra.mxu0 %v6034
        %6346 = vmatprep.subr.bf16.mxu0 %v6031
        %6347 = vmatpush2.bf16.msra.mxu0 %v6030
        %6348 = vmatprep.subr.bf16.mxu0 %v6027
        %6349 = vmatpush2.bf16.msra.mxu0 %v6026
        %6350 = vmatprep.subr.bf16.mxu0 %v6023
        %6351 = vmatpush2.bf16.msra.mxu0 %v6022
        %6352 = vmatprep.subr.bf16.mxu0 %v6019
        %6353 = vmatpush2.bf16.msra.mxu0 %v6018
        %6354 = vmatprep.mubr.bf16.mxu0 %v5445
        %6355 = vmatmul.mubr.bf16.gmra.mxu0 %v5444
        %v6356 = vpop.f32.mrf.mxu0
        %v6357 = vadd.f32 %v5591, %v6356
        %v6358 = vpop.f32.mrf.mxu0
        %v6359 = vadd.f32 %v5595, %v6358
        %v6360 = vpop.f32.mrf.mxu0
        %v6361 = vpop.f32.mrf.mxu0
        %6362 = vdwg.mxu0
        %6363 = vmatprep.subr.bf16.mxu0 %v6079
        %6364 = vmatpush1.bf16.msra.mxu0 %v6078
        %6365 = vmatprep.subr.bf16.mxu0 %v6075
        %6366 = vmatpush1.bf16.msra.mxu0 %v6074
        %6367 = vmatprep.subr.bf16.mxu0 %v6071
        %6368 = vmatpush1.bf16.msra.mxu0 %v6070
        %6369 = vmatprep.subr.bf16.mxu0 %v6067
        %6370 = vmatpush1.bf16.msra.mxu0 %v6066
        %6371 = vmatprep.subr.bf16.mxu0 %v6063
        %6372 = vmatpush1.bf16.msra.mxu0 %v6062
        %6373 = vmatprep.subr.bf16.mxu0 %v6059
        %6374 = vmatpush1.bf16.msra.mxu0 %v6058
        %6375 = vmatprep.subr.bf16.mxu0 %v6055
        %6376 = vmatpush1.bf16.msra.mxu0 %v6054
        %6377 = vmatprep.subr.bf16.mxu0 %v6051
        %6378 = vmatpush1.bf16.msra.mxu0 %v6050
        %6379 = vmatprep.subr.bf16.mxu0 %v6111
        %6380 = vmatpush2.bf16.msra.mxu0 %v6110
        %6381 = vmatprep.subr.bf16.mxu0 %v6107
        %6382 = vmatpush2.bf16.msra.mxu0 %v6106
        %6383 = vmatprep.subr.bf16.mxu0 %v6103
        %6384 = vmatpush2.bf16.msra.mxu0 %v6102
        %6385 = vmatprep.subr.bf16.mxu0 %v6099
        %6386 = vmatpush2.bf16.msra.mxu0 %v6098
        %6387 = vmatprep.subr.bf16.mxu0 %v6095
        %6388 = vmatpush2.bf16.msra.mxu0 %v6094
        %6389 = vmatprep.subr.bf16.mxu0 %v6091
        %6390 = vmatpush2.bf16.msra.mxu0 %v6090
        %6391 = vmatprep.subr.bf16.mxu0 %v6087
        %6392 = vmatpush2.bf16.msra.mxu0 %v6086
        %6393 = vmatprep.subr.bf16.mxu0 %v6083
        %6394 = vmatpush2.bf16.msra.mxu0 %v6082
        %6395 = vmatprep.mubr.bf16.mxu0 %v5447
        %6396 = vmatmul.mubr.bf16.gmra.mxu0 %v5446
        %v6397 = vpop.f32.mrf.mxu0
        %v6398 = vadd.f32 %v6357, %v6397
        %v6399 = vpop.f32.mrf.mxu0
        %v6400 = vadd.f32 %v6359, %v6399
        %v6401 = vpop.f32.mrf.mxu0
        %v6402 = vpop.f32.mrf.mxu0
        %6403 = vdwg.mxu0
        %v6404 = vtanh.pop %v6316
        %v6405 = vtanh.pop %v6318
        %v6406 = vtanh.pop %v6398
        %v6407 = vtanh.pop %v6400
        %v6408 = vpack.c.bf16 %v6404, %v6404
        %v6409 = vpack.c.bf16 %v6405, %v6405
        %v6410 = vpack.c.bf16 %v6406, %v6406
        %v6411 = vpack.c.bf16 %v6407, %v6407
        %s6412 = scalar_lea.vmem %s384, 6144 [#allocation8]
        %v6413 = vld [vmem:[%s6412] sm:$0xff]
        %v6414 = vld [vmem:[%s6412 + $0x8] sm:$0xff]
        %v6415 = vld [vmem:[%s6412 + $0x10] sm:$0xff]
        %v6416 = vld [vmem:[%s6412 + $0x18] sm:$0xff]
        %v6417 = vld [vmem:[%s6412 + $0x20] sm:$0xff]
        %v6418 = vld [vmem:[%s6412 + $0x28] sm:$0xff]
        %v6419 = vld [vmem:[%s6412 + $0x30] sm:$0xff]
        %v6420 = vld [vmem:[%s6412 + $0x38] sm:$0xff]
        %v6421 = vld [vmem:[%s6412 + $0x40] sm:$0xff]
        %v6422 = vld [vmem:[%s6412 + $0x48] sm:$0xff]
        %v6423 = vld [vmem:[%s6412 + $0x50] sm:$0xff]
        %v6424 = vld [vmem:[%s6412 + $0x58] sm:$0xff]
        %v6425 = vld [vmem:[%s6412 + $0x60] sm:$0xff]
        %v6426 = vld [vmem:[%s6412 + $0x68] sm:$0xff]
        %v6427 = vld [vmem:[%s6412 + $0x70] sm:$0xff]
        %v6428 = vld [vmem:[%s6412 + $0x78] sm:$0xff]
        %v6429 = vld [vmem:[%s6412 + $0x80] sm:$0xff]
        %v6430 = vld [vmem:[%s6412 + $0x88] sm:$0xff]
        %v6431 = vld [vmem:[%s6412 + $0x90] sm:$0xff]
        %v6432 = vld [vmem:[%s6412 + $0x98] sm:$0xff]
        %v6433 = vld [vmem:[%s6412 + $0xa0] sm:$0xff]
        %v6434 = vld [vmem:[%s6412 + $0xa8] sm:$0xff]
        %v6435 = vld [vmem:[%s6412 + $0xb0] sm:$0xff]
        %v6436 = vld [vmem:[%s6412 + $0xb8] sm:$0xff]
        %v6437 = vld [vmem:[%s6412 + $0xc0] sm:$0xff]
        %v6438 = vld [vmem:[%s6412 + $0xc8] sm:$0xff]
        %v6439 = vld [vmem:[%s6412 + $0xd0] sm:$0xff]
        %v6440 = vld [vmem:[%s6412 + $0xd8] sm:$0xff]
        %v6441 = vld [vmem:[%s6412 + $0xe0] sm:$0xff]
        %v6442 = vld [vmem:[%s6412 + $0xe8] sm:$0xff]
        %v6443 = vld [vmem:[%s6412 + $0xf0] sm:$0xff]
        %v6444 = vld [vmem:[%s6412 + $0xf8] sm:$0xff]
        %v6445 = vld [vmem:[%s6412 + $0x100] sm:$0xff]
        %v6446 = vld [vmem:[%s6412 + $0x108] sm:$0xff]
        %v6447 = vld [vmem:[%s6412 + $0x110] sm:$0xff]
        %v6448 = vld [vmem:[%s6412 + $0x118] sm:$0xff]
        %v6449 = vld [vmem:[%s6412 + $0x120] sm:$0xff]
        %v6450 = vld [vmem:[%s6412 + $0x128] sm:$0xff]
        %v6451 = vld [vmem:[%s6412 + $0x130] sm:$0xff]
        %v6452 = vld [vmem:[%s6412 + $0x138] sm:$0xff]
        %v6453 = vld [vmem:[%s6412 + $0x140] sm:$0xff]
        %v6454 = vld [vmem:[%s6412 + $0x148] sm:$0xff]
        %v6455 = vld [vmem:[%s6412 + $0x150] sm:$0xff]
        %v6456 = vld [vmem:[%s6412 + $0x158] sm:$0xff]
        %v6457 = vld [vmem:[%s6412 + $0x160] sm:$0xff]
        %v6458 = vld [vmem:[%s6412 + $0x168] sm:$0xff]
        %v6459 = vld [vmem:[%s6412 + $0x170] sm:$0xff]
        %v6460 = vld [vmem:[%s6412 + $0x178] sm:$0xff]
        %v6461 = vld [vmem:[%s6412 + $0x180] sm:$0xff]
        %v6462 = vld [vmem:[%s6412 + $0x188] sm:$0xff]
        %v6463 = vld [vmem:[%s6412 + $0x190] sm:$0xff]
        %v6464 = vld [vmem:[%s6412 + $0x198] sm:$0xff]
        %v6465 = vld [vmem:[%s6412 + $0x1a0] sm:$0xff]
        %v6466 = vld [vmem:[%s6412 + $0x1a8] sm:$0xff]
        %v6467 = vld [vmem:[%s6412 + $0x1b0] sm:$0xff]
        %v6468 = vld [vmem:[%s6412 + $0x1b8] sm:$0xff]
        %v6469 = vld [vmem:[%s6412 + $0x1c0] sm:$0xff]
        %v6470 = vld [vmem:[%s6412 + $0x1c8] sm:$0xff]
        %v6471 = vld [vmem:[%s6412 + $0x1d0] sm:$0xff]
        %v6472 = vld [vmem:[%s6412 + $0x1d8] sm:$0xff]
        %v6473 = vld [vmem:[%s6412 + $0x1e0] sm:$0xff]
        %v6474 = vld [vmem:[%s6412 + $0x1e8] sm:$0xff]
        %v6475 = vld [vmem:[%s6412 + $0x1f0] sm:$0xff]
        %v6476 = vld [vmem:[%s6412 + $0x1f8] sm:$0xff]
        %v6477 = vld [vmem:[%s6412 + $0x200] sm:$0xff]
        %v6478 = vld [vmem:[%s6412 + $0x208] sm:$0xff]
        %v6479 = vld [vmem:[%s6412 + $0x210] sm:$0xff]
        %v6480 = vld [vmem:[%s6412 + $0x218] sm:$0xff]
        %v6481 = vld [vmem:[%s6412 + $0x220] sm:$0xff]
        %v6482 = vld [vmem:[%s6412 + $0x228] sm:$0xff]
        %v6483 = vld [vmem:[%s6412 + $0x230] sm:$0xff]
        %v6484 = vld [vmem:[%s6412 + $0x238] sm:$0xff]
        %v6485 = vld [vmem:[%s6412 + $0x240] sm:$0xff]
        %v6486 = vld [vmem:[%s6412 + $0x248] sm:$0xff]
        %v6487 = vld [vmem:[%s6412 + $0x250] sm:$0xff]
        %v6488 = vld [vmem:[%s6412 + $0x258] sm:$0xff]
        %v6489 = vld [vmem:[%s6412 + $0x260] sm:$0xff]
        %v6490 = vld [vmem:[%s6412 + $0x268] sm:$0xff]
        %v6491 = vld [vmem:[%s6412 + $0x270] sm:$0xff]
        %v6492 = vld [vmem:[%s6412 + $0x278] sm:$0xff]
        %v6493 = vld [vmem:[%s6412 + $0x280] sm:$0xff]
        %v6494 = vld [vmem:[%s6412 + $0x288] sm:$0xff]
        %v6495 = vld [vmem:[%s6412 + $0x290] sm:$0xff]
        %v6496 = vld [vmem:[%s6412 + $0x298] sm:$0xff]
        %v6497 = vld [vmem:[%s6412 + $0x2a0] sm:$0xff]
        %v6498 = vld [vmem:[%s6412 + $0x2a8] sm:$0xff]
        %v6499 = vld [vmem:[%s6412 + $0x2b0] sm:$0xff]
        %v6500 = vld [vmem:[%s6412 + $0x2b8] sm:$0xff]
        %v6501 = vld [vmem:[%s6412 + $0x2c0] sm:$0xff]
        %v6502 = vld [vmem:[%s6412 + $0x2c8] sm:$0xff]
        %v6503 = vld [vmem:[%s6412 + $0x2d0] sm:$0xff]
        %v6504 = vld [vmem:[%s6412 + $0x2d8] sm:$0xff]
        %v6505 = vld [vmem:[%s6412 + $0x2e0] sm:$0xff]
        %v6506 = vld [vmem:[%s6412 + $0x2e8] sm:$0xff]
        %v6507 = vld [vmem:[%s6412 + $0x2f0] sm:$0xff]
        %v6508 = vld [vmem:[%s6412 + $0x2f8] sm:$0xff]
        %v6509 = vld [vmem:[%s6412 + $0x300] sm:$0xff]
        %v6510 = vld [vmem:[%s6412 + $0x308] sm:$0xff]
        %v6511 = vld [vmem:[%s6412 + $0x310] sm:$0xff]
        %v6512 = vld [vmem:[%s6412 + $0x318] sm:$0xff]
        %v6513 = vld [vmem:[%s6412 + $0x320] sm:$0xff]
        %v6514 = vld [vmem:[%s6412 + $0x328] sm:$0xff]
        %v6515 = vld [vmem:[%s6412 + $0x330] sm:$0xff]
        %v6516 = vld [vmem:[%s6412 + $0x338] sm:$0xff]
        %v6517 = vld [vmem:[%s6412 + $0x340] sm:$0xff]
        %v6518 = vld [vmem:[%s6412 + $0x348] sm:$0xff]
        %v6519 = vld [vmem:[%s6412 + $0x350] sm:$0xff]
        %v6520 = vld [vmem:[%s6412 + $0x358] sm:$0xff]
        %v6521 = vld [vmem:[%s6412 + $0x360] sm:$0xff]
        %v6522 = vld [vmem:[%s6412 + $0x368] sm:$0xff]
        %v6523 = vld [vmem:[%s6412 + $0x370] sm:$0xff]
        %v6524 = vld [vmem:[%s6412 + $0x378] sm:$0xff]
        %v6525 = vld [vmem:[%s6412 + $0x380] sm:$0xff]
        %v6526 = vld [vmem:[%s6412 + $0x388] sm:$0xff]
        %v6527 = vld [vmem:[%s6412 + $0x390] sm:$0xff]
        %v6528 = vld [vmem:[%s6412 + $0x398] sm:$0xff]
        %v6529 = vld [vmem:[%s6412 + $0x3a0] sm:$0xff]
        %v6530 = vld [vmem:[%s6412 + $0x3a8] sm:$0xff]
        %v6531 = vld [vmem:[%s6412 + $0x3b0] sm:$0xff]
        %v6532 = vld [vmem:[%s6412 + $0x3b8] sm:$0xff]
        %v6533 = vld [vmem:[%s6412 + $0x3c0] sm:$0xff]
        %v6534 = vld [vmem:[%s6412 + $0x3c8] sm:$0xff]
        %v6535 = vld [vmem:[%s6412 + $0x3d0] sm:$0xff]
        %v6536 = vld [vmem:[%s6412 + $0x3d8] sm:$0xff]
        %v6537 = vld [vmem:[%s6412 + $0x3e0] sm:$0xff]
        %v6538 = vld [vmem:[%s6412 + $0x3e8] sm:$0xff]
        %v6539 = vld [vmem:[%s6412 + $0x3f0] sm:$0xff]
        %v6540 = vld [vmem:[%s6412 + $0x3f8] sm:$0xff]
        %s6541 = scalar_lea.vmem %s436, 6
        %v6542 = vld [vmem:[%s6541] ss:$8 sm:$0xf]
        %v6544 = vlaneseq
        %v6545 = vshrl.u32 %v6544, 7
        %v6546 = vsub.s32 0, %v6545
        %v6547 = vrot.slane %v6542, %v6546
        %v6548 = vlaneseq
        %v6549 = vshrl.u32 %v6548, 7
        %v6550 = vsub.s32 1, %v6549
        %v6551 = vrot.slane %v6542, %v6550
        %v6552 = vlaneseq
        %v6553 = vshrl.u32 %v6552, 7
        %v6554 = vsub.s32 2, %v6553
        %v6555 = vrot.slane %v6542, %v6554
        %v6556 = vlaneseq
        %v6557 = vshrl.u32 %v6556, 7
        %v6558 = vsub.s32 3, %v6557
        %v6559 = vrot.slane %v6542, %v6558
        %v6692 = vunpack.c.l.b16 %v6413
        %v6693 = vunpack.c.h.b16 %v6413
        %v6694 = vunpack.c.l.b16 %v6414
        %v6695 = vunpack.c.h.b16 %v6414
        %v6696 = vunpack.c.l.b16 %v6415
        %v6697 = vunpack.c.h.b16 %v6415
        %v6698 = vunpack.c.l.b16 %v6416
        %v6699 = vunpack.c.h.b16 %v6416
        %v6700 = vunpack.c.l.b16 %v6417
        %v6701 = vunpack.c.h.b16 %v6417
        %v6702 = vunpack.c.l.b16 %v6418
        %v6703 = vunpack.c.h.b16 %v6418
        %v6704 = vunpack.c.l.b16 %v6419
        %v6705 = vunpack.c.h.b16 %v6419
        %v6706 = vunpack.c.l.b16 %v6420
        %v6707 = vunpack.c.h.b16 %v6420
        %v6708 = vunpack.c.l.b16 %v6421
        %v6709 = vunpack.c.h.b16 %v6421
        %v6710 = vunpack.c.l.b16 %v6422
        %v6711 = vunpack.c.h.b16 %v6422
        %v6712 = vunpack.c.l.b16 %v6423
        %v6713 = vunpack.c.h.b16 %v6423
        %v6714 = vunpack.c.l.b16 %v6424
        %v6715 = vunpack.c.h.b16 %v6424
        %v6716 = vunpack.c.l.b16 %v6425
        %v6717 = vunpack.c.h.b16 %v6425
        %v6718 = vunpack.c.l.b16 %v6426
        %v6719 = vunpack.c.h.b16 %v6426
        %v6720 = vunpack.c.l.b16 %v6427
        %v6721 = vunpack.c.h.b16 %v6427
        %v6722 = vunpack.c.l.b16 %v6428
        %v6723 = vunpack.c.h.b16 %v6428
        %v6724 = vunpack.c.l.b16 %v6429
        %v6725 = vunpack.c.h.b16 %v6429
        %v6726 = vunpack.c.l.b16 %v6430
        %v6727 = vunpack.c.h.b16 %v6430
        %v6728 = vunpack.c.l.b16 %v6431
        %v6729 = vunpack.c.h.b16 %v6431
        %v6730 = vunpack.c.l.b16 %v6432
        %v6731 = vunpack.c.h.b16 %v6432
        %v6732 = vunpack.c.l.b16 %v6433
        %v6733 = vunpack.c.h.b16 %v6433
        %v6734 = vunpack.c.l.b16 %v6434
        %v6735 = vunpack.c.h.b16 %v6434
        %v6736 = vunpack.c.l.b16 %v6435
        %v6737 = vunpack.c.h.b16 %v6435
        %v6738 = vunpack.c.l.b16 %v6436
        %v6739 = vunpack.c.h.b16 %v6436
        %v6740 = vunpack.c.l.b16 %v6437
        %v6741 = vunpack.c.h.b16 %v6437
        %v6742 = vunpack.c.l.b16 %v6438
        %v6743 = vunpack.c.h.b16 %v6438
        %v6744 = vunpack.c.l.b16 %v6439
        %v6745 = vunpack.c.h.b16 %v6439
        %v6746 = vunpack.c.l.b16 %v6440
        %v6747 = vunpack.c.h.b16 %v6440
        %v6748 = vunpack.c.l.b16 %v6441
        %v6749 = vunpack.c.h.b16 %v6441
        %v6750 = vunpack.c.l.b16 %v6442
        %v6751 = vunpack.c.h.b16 %v6442
        %v6752 = vunpack.c.l.b16 %v6443
        %v6753 = vunpack.c.h.b16 %v6443
        %v6754 = vunpack.c.l.b16 %v6444
        %v6755 = vunpack.c.h.b16 %v6444
        %v6756 = vunpack.c.l.b16 %v6445
        %v6757 = vunpack.c.h.b16 %v6445
        %v6758 = vunpack.c.l.b16 %v6446
        %v6759 = vunpack.c.h.b16 %v6446
        %v6760 = vunpack.c.l.b16 %v6447
        %v6761 = vunpack.c.h.b16 %v6447
        %v6762 = vunpack.c.l.b16 %v6448
        %v6763 = vunpack.c.h.b16 %v6448
        %v6764 = vunpack.c.l.b16 %v6449
        %v6765 = vunpack.c.h.b16 %v6449
        %v6766 = vunpack.c.l.b16 %v6450
        %v6767 = vunpack.c.h.b16 %v6450
        %v6768 = vunpack.c.l.b16 %v6451
        %v6769 = vunpack.c.h.b16 %v6451
        %v6770 = vunpack.c.l.b16 %v6452
        %v6771 = vunpack.c.h.b16 %v6452
        %v6772 = vunpack.c.l.b16 %v6453
        %v6773 = vunpack.c.h.b16 %v6453
        %v6774 = vunpack.c.l.b16 %v6454
        %v6775 = vunpack.c.h.b16 %v6454
        %v6776 = vunpack.c.l.b16 %v6455
        %v6777 = vunpack.c.h.b16 %v6455
        %v6778 = vunpack.c.l.b16 %v6456
        %v6779 = vunpack.c.h.b16 %v6456
        %v6780 = vunpack.c.l.b16 %v6457
        %v6781 = vunpack.c.h.b16 %v6457
        %v6782 = vunpack.c.l.b16 %v6458
        %v6783 = vunpack.c.h.b16 %v6458
        %v6784 = vunpack.c.l.b16 %v6459
        %v6785 = vunpack.c.h.b16 %v6459
        %v6786 = vunpack.c.l.b16 %v6460
        %v6787 = vunpack.c.h.b16 %v6460
        %v6788 = vunpack.c.l.b16 %v6461
        %v6789 = vunpack.c.h.b16 %v6461
        %v6790 = vunpack.c.l.b16 %v6462
        %v6791 = vunpack.c.h.b16 %v6462
        %v6792 = vunpack.c.l.b16 %v6463
        %v6793 = vunpack.c.h.b16 %v6463
        %v6794 = vunpack.c.l.b16 %v6464
        %v6795 = vunpack.c.h.b16 %v6464
        %v6796 = vunpack.c.l.b16 %v6465
        %v6797 = vunpack.c.h.b16 %v6465
        %v6798 = vunpack.c.l.b16 %v6466
        %v6799 = vunpack.c.h.b16 %v6466
        %v6800 = vunpack.c.l.b16 %v6467
        %v6801 = vunpack.c.h.b16 %v6467
        %v6802 = vunpack.c.l.b16 %v6468
        %v6803 = vunpack.c.h.b16 %v6468
        %v6804 = vunpack.c.l.b16 %v6469
        %v6805 = vunpack.c.h.b16 %v6469
        %v6806 = vunpack.c.l.b16 %v6470
        %v6807 = vunpack.c.h.b16 %v6470
        %v6808 = vunpack.c.l.b16 %v6471
        %v6809 = vunpack.c.h.b16 %v6471
        %v6810 = vunpack.c.l.b16 %v6472
        %v6811 = vunpack.c.h.b16 %v6472
        %v6812 = vunpack.c.l.b16 %v6473
        %v6813 = vunpack.c.h.b16 %v6473
        %v6814 = vunpack.c.l.b16 %v6474
        %v6815 = vunpack.c.h.b16 %v6474
        %v6816 = vunpack.c.l.b16 %v6475
        %v6817 = vunpack.c.h.b16 %v6475
        %v6818 = vunpack.c.l.b16 %v6476
        %v6819 = vunpack.c.h.b16 %v6476
        %v6820 = vunpack.c.l.b16 %v6477
        %v6821 = vunpack.c.h.b16 %v6477
        %v6822 = vunpack.c.l.b16 %v6478
        %v6823 = vunpack.c.h.b16 %v6478
        %v6824 = vunpack.c.l.b16 %v6479
        %v6825 = vunpack.c.h.b16 %v6479
        %v6826 = vunpack.c.l.b16 %v6480
        %v6827 = vunpack.c.h.b16 %v6480
        %v6828 = vunpack.c.l.b16 %v6481
        %v6829 = vunpack.c.h.b16 %v6481
        %v6830 = vunpack.c.l.b16 %v6482
        %v6831 = vunpack.c.h.b16 %v6482
        %v6832 = vunpack.c.l.b16 %v6483
        %v6833 = vunpack.c.h.b16 %v6483
        %v6834 = vunpack.c.l.b16 %v6484
        %v6835 = vunpack.c.h.b16 %v6484
        %v6836 = vunpack.c.l.b16 %v6485
        %v6837 = vunpack.c.h.b16 %v6485
        %v6838 = vunpack.c.l.b16 %v6486
        %v6839 = vunpack.c.h.b16 %v6486
        %v6840 = vunpack.c.l.b16 %v6487
        %v6841 = vunpack.c.h.b16 %v6487
        %v6842 = vunpack.c.l.b16 %v6488
        %v6843 = vunpack.c.h.b16 %v6488
        %v6844 = vunpack.c.l.b16 %v6489
        %v6845 = vunpack.c.h.b16 %v6489
        %v6846 = vunpack.c.l.b16 %v6490
        %v6847 = vunpack.c.h.b16 %v6490
        %v6848 = vunpack.c.l.b16 %v6491
        %v6849 = vunpack.c.h.b16 %v6491
        %v6850 = vunpack.c.l.b16 %v6492
        %v6851 = vunpack.c.h.b16 %v6492
        %v6852 = vunpack.c.l.b16 %v6493
        %v6853 = vunpack.c.h.b16 %v6493
        %v6854 = vunpack.c.l.b16 %v6494
        %v6855 = vunpack.c.h.b16 %v6494
        %v6856 = vunpack.c.l.b16 %v6495
        %v6857 = vunpack.c.h.b16 %v6495
        %v6858 = vunpack.c.l.b16 %v6496
        %v6859 = vunpack.c.h.b16 %v6496
        %v6860 = vunpack.c.l.b16 %v6497
        %v6861 = vunpack.c.h.b16 %v6497
        %v6862 = vunpack.c.l.b16 %v6498
        %v6863 = vunpack.c.h.b16 %v6498
        %v6864 = vunpack.c.l.b16 %v6499
        %v6865 = vunpack.c.h.b16 %v6499
        %v6866 = vunpack.c.l.b16 %v6500
        %v6867 = vunpack.c.h.b16 %v6500
        %v6868 = vunpack.c.l.b16 %v6501
        %v6869 = vunpack.c.h.b16 %v6501
        %v6870 = vunpack.c.l.b16 %v6502
        %v6871 = vunpack.c.h.b16 %v6502
        %v6872 = vunpack.c.l.b16 %v6503
        %v6873 = vunpack.c.h.b16 %v6503
        %v6874 = vunpack.c.l.b16 %v6504
        %v6875 = vunpack.c.h.b16 %v6504
        %v6876 = vunpack.c.l.b16 %v6505
        %v6877 = vunpack.c.h.b16 %v6505
        %v6878 = vunpack.c.l.b16 %v6506
        %v6879 = vunpack.c.h.b16 %v6506
        %v6880 = vunpack.c.l.b16 %v6507
        %v6881 = vunpack.c.h.b16 %v6507
        %v6882 = vunpack.c.l.b16 %v6508
        %v6883 = vunpack.c.h.b16 %v6508
        %v6884 = vunpack.c.l.b16 %v6509
        %v6885 = vunpack.c.h.b16 %v6509
        %v6886 = vunpack.c.l.b16 %v6510
        %v6887 = vunpack.c.h.b16 %v6510
        %v6888 = vunpack.c.l.b16 %v6511
        %v6889 = vunpack.c.h.b16 %v6511
        %v6890 = vunpack.c.l.b16 %v6512
        %v6891 = vunpack.c.h.b16 %v6512
        %v6892 = vunpack.c.l.b16 %v6513
        %v6893 = vunpack.c.h.b16 %v6513
        %v6894 = vunpack.c.l.b16 %v6514
        %v6895 = vunpack.c.h.b16 %v6514
        %v6896 = vunpack.c.l.b16 %v6515
        %v6897 = vunpack.c.h.b16 %v6515
        %v6898 = vunpack.c.l.b16 %v6516
        %v6899 = vunpack.c.h.b16 %v6516
        %v6900 = vunpack.c.l.b16 %v6517
        %v6901 = vunpack.c.h.b16 %v6517
        %v6902 = vunpack.c.l.b16 %v6518
        %v6903 = vunpack.c.h.b16 %v6518
        %v6904 = vunpack.c.l.b16 %v6519
        %v6905 = vunpack.c.h.b16 %v6519
        %v6906 = vunpack.c.l.b16 %v6520
        %v6907 = vunpack.c.h.b16 %v6520
        %v6908 = vunpack.c.l.b16 %v6521
        %v6909 = vunpack.c.h.b16 %v6521
        %v6910 = vunpack.c.l.b16 %v6522
        %v6911 = vunpack.c.h.b16 %v6522
        %v6912 = vunpack.c.l.b16 %v6523
        %v6913 = vunpack.c.h.b16 %v6523
        %v6914 = vunpack.c.l.b16 %v6524
        %v6915 = vunpack.c.h.b16 %v6524
        %v6916 = vunpack.c.l.b16 %v6525
        %v6917 = vunpack.c.h.b16 %v6525
        %v6918 = vunpack.c.l.b16 %v6526
        %v6919 = vunpack.c.h.b16 %v6526
        %v6920 = vunpack.c.l.b16 %v6527
        %v6921 = vunpack.c.h.b16 %v6527
        %v6922 = vunpack.c.l.b16 %v6528
        %v6923 = vunpack.c.h.b16 %v6528
        %v6924 = vunpack.c.l.b16 %v6529
        %v6925 = vunpack.c.h.b16 %v6529
        %v6926 = vunpack.c.l.b16 %v6530
        %v6927 = vunpack.c.h.b16 %v6530
        %v6928 = vunpack.c.l.b16 %v6531
        %v6929 = vunpack.c.h.b16 %v6531
        %v6930 = vunpack.c.l.b16 %v6532
        %v6931 = vunpack.c.h.b16 %v6532
        %v6932 = vunpack.c.l.b16 %v6533
        %v6933 = vunpack.c.h.b16 %v6533
        %v6934 = vunpack.c.l.b16 %v6534
        %v6935 = vunpack.c.h.b16 %v6534
        %v6936 = vunpack.c.l.b16 %v6535
        %v6937 = vunpack.c.h.b16 %v6535
        %v6938 = vunpack.c.l.b16 %v6536
        %v6939 = vunpack.c.h.b16 %v6536
        %v6940 = vunpack.c.l.b16 %v6537
        %v6941 = vunpack.c.h.b16 %v6537
        %v6942 = vunpack.c.l.b16 %v6538
        %v6943 = vunpack.c.h.b16 %v6538
        %v6944 = vunpack.c.l.b16 %v6539
        %v6945 = vunpack.c.h.b16 %v6539
        %v6946 = vunpack.c.l.b16 %v6540
        %v6947 = vunpack.c.h.b16 %v6540
        %v6948 = vpack.c.b16 %v6696, %v6692
        %v6949 = vpack.c.b16 %v6697, %v6693
        %v6950 = vpack.c.b16 %v6698, %v6694
        %v6951 = vpack.c.b16 %v6699, %v6695
        %v6952 = vpack.c.b16 %v6704, %v6700
        %v6953 = vpack.c.b16 %v6705, %v6701
        %v6954 = vpack.c.b16 %v6706, %v6702
        %v6955 = vpack.c.b16 %v6707, %v6703
        %v6956 = vpack.c.b16 %v6712, %v6708
        %v6957 = vpack.c.b16 %v6713, %v6709
        %v6958 = vpack.c.b16 %v6714, %v6710
        %v6959 = vpack.c.b16 %v6715, %v6711
        %v6960 = vpack.c.b16 %v6720, %v6716
        %v6961 = vpack.c.b16 %v6721, %v6717
        %v6962 = vpack.c.b16 %v6722, %v6718
        %v6963 = vpack.c.b16 %v6723, %v6719
        %v6964 = vpack.c.b16 %v6728, %v6724
        %v6965 = vpack.c.b16 %v6729, %v6725
        %v6966 = vpack.c.b16 %v6730, %v6726
        %v6967 = vpack.c.b16 %v6731, %v6727
        %v6968 = vpack.c.b16 %v6736, %v6732
        %v6969 = vpack.c.b16 %v6737, %v6733
        %v6970 = vpack.c.b16 %v6738, %v6734
        %v6971 = vpack.c.b16 %v6739, %v6735
        %v6972 = vpack.c.b16 %v6744, %v6740
        %v6973 = vpack.c.b16 %v6745, %v6741
        %v6974 = vpack.c.b16 %v6746, %v6742
        %v6975 = vpack.c.b16 %v6747, %v6743
        %v6976 = vpack.c.b16 %v6752, %v6748
        %v6977 = vpack.c.b16 %v6753, %v6749
        %v6978 = vpack.c.b16 %v6754, %v6750
        %v6979 = vpack.c.b16 %v6755, %v6751
        %v6980 = vpack.c.b16 %v6760, %v6756
        %v6981 = vpack.c.b16 %v6761, %v6757
        %v6982 = vpack.c.b16 %v6762, %v6758
        %v6983 = vpack.c.b16 %v6763, %v6759
        %v6984 = vpack.c.b16 %v6768, %v6764
        %v6985 = vpack.c.b16 %v6769, %v6765
        %v6986 = vpack.c.b16 %v6770, %v6766
        %v6987 = vpack.c.b16 %v6771, %v6767
        %v6988 = vpack.c.b16 %v6776, %v6772
        %v6989 = vpack.c.b16 %v6777, %v6773
        %v6990 = vpack.c.b16 %v6778, %v6774
        %v6991 = vpack.c.b16 %v6779, %v6775
        %v6992 = vpack.c.b16 %v6784, %v6780
        %v6993 = vpack.c.b16 %v6785, %v6781
        %v6994 = vpack.c.b16 %v6786, %v6782
        %v6995 = vpack.c.b16 %v6787, %v6783
        %v6996 = vpack.c.b16 %v6792, %v6788
        %v6997 = vpack.c.b16 %v6793, %v6789
        %v6998 = vpack.c.b16 %v6794, %v6790
        %v6999 = vpack.c.b16 %v6795, %v6791
        %v7000 = vpack.c.b16 %v6800, %v6796
        %v7001 = vpack.c.b16 %v6801, %v6797
        %v7002 = vpack.c.b16 %v6802, %v6798
        %v7003 = vpack.c.b16 %v6803, %v6799
        %v7004 = vpack.c.b16 %v6808, %v6804
        %v7005 = vpack.c.b16 %v6809, %v6805
        %v7006 = vpack.c.b16 %v6810, %v6806
        %v7007 = vpack.c.b16 %v6811, %v6807
        %v7008 = vpack.c.b16 %v6816, %v6812
        %v7009 = vpack.c.b16 %v6817, %v6813
        %v7010 = vpack.c.b16 %v6818, %v6814
        %v7011 = vpack.c.b16 %v6819, %v6815
        %v7012 = vpack.c.b16 %v6824, %v6820
        %v7013 = vpack.c.b16 %v6825, %v6821
        %v7014 = vpack.c.b16 %v6826, %v6822
        %v7015 = vpack.c.b16 %v6827, %v6823
        %v7016 = vpack.c.b16 %v6832, %v6828
        %v7017 = vpack.c.b16 %v6833, %v6829
        %v7018 = vpack.c.b16 %v6834, %v6830
        %v7019 = vpack.c.b16 %v6835, %v6831
        %v7020 = vpack.c.b16 %v6840, %v6836
        %v7021 = vpack.c.b16 %v6841, %v6837
        %v7022 = vpack.c.b16 %v6842, %v6838
        %v7023 = vpack.c.b16 %v6843, %v6839
        %v7024 = vpack.c.b16 %v6848, %v6844
        %v7025 = vpack.c.b16 %v6849, %v6845
        %v7026 = vpack.c.b16 %v6850, %v6846
        %v7027 = vpack.c.b16 %v6851, %v6847
        %v7028 = vpack.c.b16 %v6856, %v6852
        %v7029 = vpack.c.b16 %v6857, %v6853
        %v7030 = vpack.c.b16 %v6858, %v6854
        %v7031 = vpack.c.b16 %v6859, %v6855
        %v7032 = vpack.c.b16 %v6864, %v6860
        %v7033 = vpack.c.b16 %v6865, %v6861
        %v7034 = vpack.c.b16 %v6866, %v6862
        %v7035 = vpack.c.b16 %v6867, %v6863
        %v7036 = vpack.c.b16 %v6872, %v6868
        %v7037 = vpack.c.b16 %v6873, %v6869
        %v7038 = vpack.c.b16 %v6874, %v6870
        %v7039 = vpack.c.b16 %v6875, %v6871
        %v7040 = vpack.c.b16 %v6880, %v6876
        %v7041 = vpack.c.b16 %v6881, %v6877
        %v7042 = vpack.c.b16 %v6882, %v6878
        %v7043 = vpack.c.b16 %v6883, %v6879
        %v7044 = vpack.c.b16 %v6888, %v6884
        %v7045 = vpack.c.b16 %v6889, %v6885
        %v7046 = vpack.c.b16 %v6890, %v6886
        %v7047 = vpack.c.b16 %v6891, %v6887
        %v7048 = vpack.c.b16 %v6896, %v6892
        %v7049 = vpack.c.b16 %v6897, %v6893
        %v7050 = vpack.c.b16 %v6898, %v6894
        %v7051 = vpack.c.b16 %v6899, %v6895
        %v7052 = vpack.c.b16 %v6904, %v6900
        %v7053 = vpack.c.b16 %v6905, %v6901
        %v7054 = vpack.c.b16 %v6906, %v6902
        %v7055 = vpack.c.b16 %v6907, %v6903
        %v7056 = vpack.c.b16 %v6912, %v6908
        %v7057 = vpack.c.b16 %v6913, %v6909
        %v7058 = vpack.c.b16 %v6914, %v6910
        %v7059 = vpack.c.b16 %v6915, %v6911
        %v7060 = vpack.c.b16 %v6920, %v6916
        %v7061 = vpack.c.b16 %v6921, %v6917
        %v7062 = vpack.c.b16 %v6922, %v6918
        %v7063 = vpack.c.b16 %v6923, %v6919
        %v7064 = vpack.c.b16 %v6928, %v6924
        %v7065 = vpack.c.b16 %v6929, %v6925
        %v7066 = vpack.c.b16 %v6930, %v6926
        %v7067 = vpack.c.b16 %v6931, %v6927
        %v7068 = vpack.c.b16 %v6936, %v6932
        %v7069 = vpack.c.b16 %v6937, %v6933
        %v7070 = vpack.c.b16 %v6938, %v6934
        %v7071 = vpack.c.b16 %v6939, %v6935
        %v7072 = vpack.c.b16 %v6944, %v6940
        %v7073 = vpack.c.b16 %v6945, %v6941
        %v7074 = vpack.c.b16 %v6946, %v6942
        %v7075 = vpack.c.b16 %v6947, %v6943
        %7204 = vmatprep.subr.bf16.mxu0 %v6977
        %7205 = vmatpush1.bf16.msra.mxu0 %v6976
        %7206 = vmatprep.subr.bf16.mxu0 %v6973
        %7207 = vmatpush1.bf16.msra.mxu0 %v6972
        %7208 = vmatprep.subr.bf16.mxu0 %v6969
        %7209 = vmatpush1.bf16.msra.mxu0 %v6968
        %7210 = vmatprep.subr.bf16.mxu0 %v6965
        %7211 = vmatpush1.bf16.msra.mxu0 %v6964
        %7212 = vmatprep.subr.bf16.mxu0 %v6961
        %7213 = vmatpush1.bf16.msra.mxu0 %v6960
        %7214 = vmatprep.subr.bf16.mxu0 %v6957
        %7215 = vmatpush1.bf16.msra.mxu0 %v6956
        %7216 = vmatprep.subr.bf16.mxu0 %v6953
        %7217 = vmatpush1.bf16.msra.mxu0 %v6952
        %7218 = vmatprep.subr.bf16.mxu0 %v6949
        %7219 = vmatpush1.bf16.msra.mxu0 %v6948
        %7220 = vmatprep.subr.bf16.mxu0 %v7009
        %7221 = vmatpush2.bf16.msra.mxu0 %v7008
        %7222 = vmatprep.subr.bf16.mxu0 %v7005
        %7223 = vmatpush2.bf16.msra.mxu0 %v7004
        %7224 = vmatprep.subr.bf16.mxu0 %v7001
        %7225 = vmatpush2.bf16.msra.mxu0 %v7000
        %7226 = vmatprep.subr.bf16.mxu0 %v6997
        %7227 = vmatpush2.bf16.msra.mxu0 %v6996
        %7228 = vmatprep.subr.bf16.mxu0 %v6993
        %7229 = vmatpush2.bf16.msra.mxu0 %v6992
        %7230 = vmatprep.subr.bf16.mxu0 %v6989
        %7231 = vmatpush2.bf16.msra.mxu0 %v6988
        %7232 = vmatprep.subr.bf16.mxu0 %v6985
        %7233 = vmatpush2.bf16.msra.mxu0 %v6984
        %7234 = vmatprep.subr.bf16.mxu0 %v6981
        %7235 = vmatpush2.bf16.msra.mxu0 %v6980
        %7236 = vmatprep.mubr.bf16.mxu0 %v6409
        %7237 = vmatmul.mubr.bf16.gmra.mxu0 %v6408
        %v7238 = vpop.f32.mrf.mxu0
        %v7239 = vadd.f32 %v6547, %v7238
        %v7240 = vpop.f32.mrf.mxu0
        %v7241 = vadd.f32 %v6551, %v7240
        %v7242 = vpop.f32.mrf.mxu0
        %v7243 = vpop.f32.mrf.mxu0
        %7244 = vdwg.mxu0
        %7245 = vmatprep.subr.bf16.mxu0 %v7041
        %7246 = vmatpush1.bf16.msra.mxu0 %v7040
        %7247 = vmatprep.subr.bf16.mxu0 %v7037
        %7248 = vmatpush1.bf16.msra.mxu0 %v7036
        %7249 = vmatprep.subr.bf16.mxu0 %v7033
        %7250 = vmatpush1.bf16.msra.mxu0 %v7032
        %7251 = vmatprep.subr.bf16.mxu0 %v7029
        %7252 = vmatpush1.bf16.msra.mxu0 %v7028
        %7253 = vmatprep.subr.bf16.mxu0 %v7025
        %7254 = vmatpush1.bf16.msra.mxu0 %v7024
        %7255 = vmatprep.subr.bf16.mxu0 %v7021
        %7256 = vmatpush1.bf16.msra.mxu0 %v7020
        %7257 = vmatprep.subr.bf16.mxu0 %v7017
        %7258 = vmatpush1.bf16.msra.mxu0 %v7016
        %7259 = vmatprep.subr.bf16.mxu0 %v7013
        %7260 = vmatpush1.bf16.msra.mxu0 %v7012
        %7261 = vmatprep.subr.bf16.mxu0 %v7073
        %7262 = vmatpush2.bf16.msra.mxu0 %v7072
        %7263 = vmatprep.subr.bf16.mxu0 %v7069
        %7264 = vmatpush2.bf16.msra.mxu0 %v7068
        %7265 = vmatprep.subr.bf16.mxu0 %v7065
        %7266 = vmatpush2.bf16.msra.mxu0 %v7064
        %7267 = vmatprep.subr.bf16.mxu0 %v7061
        %7268 = vmatpush2.bf16.msra.mxu0 %v7060
        %7269 = vmatprep.subr.bf16.mxu0 %v7057
        %7270 = vmatpush2.bf16.msra.mxu0 %v7056
        %7271 = vmatprep.subr.bf16.mxu0 %v7053
        %7272 = vmatpush2.bf16.msra.mxu0 %v7052
        %7273 = vmatprep.subr.bf16.mxu0 %v7049
        %7274 = vmatpush2.bf16.msra.mxu0 %v7048
        %7275 = vmatprep.subr.bf16.mxu0 %v7045
        %7276 = vmatpush2.bf16.msra.mxu0 %v7044
        %7277 = vmatprep.mubr.bf16.mxu0 %v6411
        %7278 = vmatmul.mubr.bf16.gmra.mxu0 %v6410
        %v7279 = vpop.f32.mrf.mxu0
        %v7280 = vadd.f32 %v7239, %v7279
        %v7281 = vpop.f32.mrf.mxu0
        %v7282 = vadd.f32 %v7241, %v7281
        %v7283 = vpop.f32.mrf.mxu0
        %v7284 = vpop.f32.mrf.mxu0
        %7285 = vdwg.mxu0
        %7286 = vmatprep.subr.bf16.mxu0 %v6979
        %7287 = vmatpush1.bf16.msra.mxu0 %v6978
        %7288 = vmatprep.subr.bf16.mxu0 %v6975
        %7289 = vmatpush1.bf16.msra.mxu0 %v6974
        %7290 = vmatprep.subr.bf16.mxu0 %v6971
        %7291 = vmatpush1.bf16.msra.mxu0 %v6970
        %7292 = vmatprep.subr.bf16.mxu0 %v6967
        %7293 = vmatpush1.bf16.msra.mxu0 %v6966
        %7294 = vmatprep.subr.bf16.mxu0 %v6963
        %7295 = vmatpush1.bf16.msra.mxu0 %v6962
        %7296 = vmatprep.subr.bf16.mxu0 %v6959
        %7297 = vmatpush1.bf16.msra.mxu0 %v6958
        %7298 = vmatprep.subr.bf16.mxu0 %v6955
        %7299 = vmatpush1.bf16.msra.mxu0 %v6954
        %7300 = vmatprep.subr.bf16.mxu0 %v6951
        %7301 = vmatpush1.bf16.msra.mxu0 %v6950
        %7302 = vmatprep.subr.bf16.mxu0 %v7011
        %7303 = vmatpush2.bf16.msra.mxu0 %v7010
        %7304 = vmatprep.subr.bf16.mxu0 %v7007
        %7305 = vmatpush2.bf16.msra.mxu0 %v7006
        %7306 = vmatprep.subr.bf16.mxu0 %v7003
        %7307 = vmatpush2.bf16.msra.mxu0 %v7002
        %7308 = vmatprep.subr.bf16.mxu0 %v6999
        %7309 = vmatpush2.bf16.msra.mxu0 %v6998
        %7310 = vmatprep.subr.bf16.mxu0 %v6995
        %7311 = vmatpush2.bf16.msra.mxu0 %v6994
        %7312 = vmatprep.subr.bf16.mxu0 %v6991
        %7313 = vmatpush2.bf16.msra.mxu0 %v6990
        %7314 = vmatprep.subr.bf16.mxu0 %v6987
        %7315 = vmatpush2.bf16.msra.mxu0 %v6986
        %7316 = vmatprep.subr.bf16.mxu0 %v6983
        %7317 = vmatpush2.bf16.msra.mxu0 %v6982
        %7318 = vmatprep.mubr.bf16.mxu0 %v6409
        %7319 = vmatmul.mubr.bf16.gmra.mxu0 %v6408
        %v7320 = vpop.f32.mrf.mxu0
        %v7321 = vadd.f32 %v6555, %v7320
        %v7322 = vpop.f32.mrf.mxu0
        %v7323 = vadd.f32 %v6559, %v7322
        %v7324 = vpop.f32.mrf.mxu0
        %v7325 = vpop.f32.mrf.mxu0
        %7326 = vdwg.mxu0
        %7327 = vmatprep.subr.bf16.mxu0 %v7043
        %7328 = vmatpush1.bf16.msra.mxu0 %v7042
        %7329 = vmatprep.subr.bf16.mxu0 %v7039
        %7330 = vmatpush1.bf16.msra.mxu0 %v7038
        %7331 = vmatprep.subr.bf16.mxu0 %v7035
        %7332 = vmatpush1.bf16.msra.mxu0 %v7034
        %7333 = vmatprep.subr.bf16.mxu0 %v7031
        %7334 = vmatpush1.bf16.msra.mxu0 %v7030
        %7335 = vmatprep.subr.bf16.mxu0 %v7027
        %7336 = vmatpush1.bf16.msra.mxu0 %v7026
        %7337 = vmatprep.subr.bf16.mxu0 %v7023
        %7338 = vmatpush1.bf16.msra.mxu0 %v7022
        %7339 = vmatprep.subr.bf16.mxu0 %v7019
        %7340 = vmatpush1.bf16.msra.mxu0 %v7018
        %7341 = vmatprep.subr.bf16.mxu0 %v7015
        %7342 = vmatpush1.bf16.msra.mxu0 %v7014
        %7343 = vmatprep.subr.bf16.mxu0 %v7075
        %7344 = vmatpush2.bf16.msra.mxu0 %v7074
        %7345 = vmatprep.subr.bf16.mxu0 %v7071
        %7346 = vmatpush2.bf16.msra.mxu0 %v7070
        %7347 = vmatprep.subr.bf16.mxu0 %v7067
        %7348 = vmatpush2.bf16.msra.mxu0 %v7066
        %7349 = vmatprep.subr.bf16.mxu0 %v7063
        %7350 = vmatpush2.bf16.msra.mxu0 %v7062
        %7351 = vmatprep.subr.bf16.mxu0 %v7059
        %7352 = vmatpush2.bf16.msra.mxu0 %v7058
        %7353 = vmatprep.subr.bf16.mxu0 %v7055
        %7354 = vmatpush2.bf16.msra.mxu0 %v7054
        %7355 = vmatprep.subr.bf16.mxu0 %v7051
        %7356 = vmatpush2.bf16.msra.mxu0 %v7050
        %7357 = vmatprep.subr.bf16.mxu0 %v7047
        %7358 = vmatpush2.bf16.msra.mxu0 %v7046
        %7359 = vmatprep.mubr.bf16.mxu0 %v6411
        %7360 = vmatmul.mubr.bf16.gmra.mxu0 %v6410
        %v7361 = vpop.f32.mrf.mxu0
        %v7362 = vadd.f32 %v7321, %v7361
        %v7363 = vpop.f32.mrf.mxu0
        %v7364 = vadd.f32 %v7323, %v7363
        %v7365 = vpop.f32.mrf.mxu0
        %v7366 = vpop.f32.mrf.mxu0
        %7367 = vdwg.mxu0
        %v7368 = vtanh.pop %v7280
        %v7369 = vtanh.pop %v7282
        %v7370 = vtanh.pop %v7362
        %v7371 = vtanh.pop %v7364
        %v7372 = vpack.c.bf16 %v7368, %v7368
        %v7373 = vpack.c.bf16 %v7369, %v7369
        %v7374 = vpack.c.bf16 %v7370, %v7370
        %v7375 = vpack.c.bf16 %v7371, %v7371
        %s7376 = scalar_lea.vmem %s384, 7168 [#allocation8]
        %v7377 = vld [vmem:[%s7376] sm:$0xff]
        %v7378 = vld [vmem:[%s7376 + $0x8] sm:$0xff]
        %v7379 = vld [vmem:[%s7376 + $0x10] sm:$0xff]
        %v7380 = vld [vmem:[%s7376 + $0x18] sm:$0xff]
        %v7381 = vld [vmem:[%s7376 + $0x20] sm:$0xff]
        %v7382 = vld [vmem:[%s7376 + $0x28] sm:$0xff]
        %v7383 = vld [vmem:[%s7376 + $0x30] sm:$0xff]
        %v7384 = vld [vmem:[%s7376 + $0x38] sm:$0xff]
        %v7385 = vld [vmem:[%s7376 + $0x40] sm:$0xff]
        %v7386 = vld [vmem:[%s7376 + $0x48] sm:$0xff]
        %v7387 = vld [vmem:[%s7376 + $0x50] sm:$0xff]
        %v7388 = vld [vmem:[%s7376 + $0x58] sm:$0xff]
        %v7389 = vld [vmem:[%s7376 + $0x60] sm:$0xff]
        %v7390 = vld [vmem:[%s7376 + $0x68] sm:$0xff]
        %v7391 = vld [vmem:[%s7376 + $0x70] sm:$0xff]
        %v7392 = vld [vmem:[%s7376 + $0x78] sm:$0xff]
        %v7393 = vld [vmem:[%s7376 + $0x80] sm:$0xff]
        %v7394 = vld [vmem:[%s7376 + $0x88] sm:$0xff]
        %v7395 = vld [vmem:[%s7376 + $0x90] sm:$0xff]
        %v7396 = vld [vmem:[%s7376 + $0x98] sm:$0xff]
        %v7397 = vld [vmem:[%s7376 + $0xa0] sm:$0xff]
        %v7398 = vld [vmem:[%s7376 + $0xa8] sm:$0xff]
        %v7399 = vld [vmem:[%s7376 + $0xb0] sm:$0xff]
        %v7400 = vld [vmem:[%s7376 + $0xb8] sm:$0xff]
        %v7401 = vld [vmem:[%s7376 + $0xc0] sm:$0xff]
        %v7402 = vld [vmem:[%s7376 + $0xc8] sm:$0xff]
        %v7403 = vld [vmem:[%s7376 + $0xd0] sm:$0xff]
        %v7404 = vld [vmem:[%s7376 + $0xd8] sm:$0xff]
        %v7405 = vld [vmem:[%s7376 + $0xe0] sm:$0xff]
        %v7406 = vld [vmem:[%s7376 + $0xe8] sm:$0xff]
        %v7407 = vld [vmem:[%s7376 + $0xf0] sm:$0xff]
        %v7408 = vld [vmem:[%s7376 + $0xf8] sm:$0xff]
        %v7409 = vld [vmem:[%s7376 + $0x100] sm:$0xff]
        %v7410 = vld [vmem:[%s7376 + $0x108] sm:$0xff]
        %v7411 = vld [vmem:[%s7376 + $0x110] sm:$0xff]
        %v7412 = vld [vmem:[%s7376 + $0x118] sm:$0xff]
        %v7413 = vld [vmem:[%s7376 + $0x120] sm:$0xff]
        %v7414 = vld [vmem:[%s7376 + $0x128] sm:$0xff]
        %v7415 = vld [vmem:[%s7376 + $0x130] sm:$0xff]
        %v7416 = vld [vmem:[%s7376 + $0x138] sm:$0xff]
        %v7417 = vld [vmem:[%s7376 + $0x140] sm:$0xff]
        %v7418 = vld [vmem:[%s7376 + $0x148] sm:$0xff]
        %v7419 = vld [vmem:[%s7376 + $0x150] sm:$0xff]
        %v7420 = vld [vmem:[%s7376 + $0x158] sm:$0xff]
        %v7421 = vld [vmem:[%s7376 + $0x160] sm:$0xff]
        %v7422 = vld [vmem:[%s7376 + $0x168] sm:$0xff]
        %v7423 = vld [vmem:[%s7376 + $0x170] sm:$0xff]
        %v7424 = vld [vmem:[%s7376 + $0x178] sm:$0xff]
        %v7425 = vld [vmem:[%s7376 + $0x180] sm:$0xff]
        %v7426 = vld [vmem:[%s7376 + $0x188] sm:$0xff]
        %v7427 = vld [vmem:[%s7376 + $0x190] sm:$0xff]
        %v7428 = vld [vmem:[%s7376 + $0x198] sm:$0xff]
        %v7429 = vld [vmem:[%s7376 + $0x1a0] sm:$0xff]
        %v7430 = vld [vmem:[%s7376 + $0x1a8] sm:$0xff]
        %v7431 = vld [vmem:[%s7376 + $0x1b0] sm:$0xff]
        %v7432 = vld [vmem:[%s7376 + $0x1b8] sm:$0xff]
        %v7433 = vld [vmem:[%s7376 + $0x1c0] sm:$0xff]
        %v7434 = vld [vmem:[%s7376 + $0x1c8] sm:$0xff]
        %v7435 = vld [vmem:[%s7376 + $0x1d0] sm:$0xff]
        %v7436 = vld [vmem:[%s7376 + $0x1d8] sm:$0xff]
        %v7437 = vld [vmem:[%s7376 + $0x1e0] sm:$0xff]
        %v7438 = vld [vmem:[%s7376 + $0x1e8] sm:$0xff]
        %v7439 = vld [vmem:[%s7376 + $0x1f0] sm:$0xff]
        %v7440 = vld [vmem:[%s7376 + $0x1f8] sm:$0xff]
        %v7441 = vld [vmem:[%s7376 + $0x200] sm:$0xff]
        %v7442 = vld [vmem:[%s7376 + $0x208] sm:$0xff]
        %v7443 = vld [vmem:[%s7376 + $0x210] sm:$0xff]
        %v7444 = vld [vmem:[%s7376 + $0x218] sm:$0xff]
        %v7445 = vld [vmem:[%s7376 + $0x220] sm:$0xff]
        %v7446 = vld [vmem:[%s7376 + $0x228] sm:$0xff]
        %v7447 = vld [vmem:[%s7376 + $0x230] sm:$0xff]
        %v7448 = vld [vmem:[%s7376 + $0x238] sm:$0xff]
        %v7449 = vld [vmem:[%s7376 + $0x240] sm:$0xff]
        %v7450 = vld [vmem:[%s7376 + $0x248] sm:$0xff]
        %v7451 = vld [vmem:[%s7376 + $0x250] sm:$0xff]
        %v7452 = vld [vmem:[%s7376 + $0x258] sm:$0xff]
        %v7453 = vld [vmem:[%s7376 + $0x260] sm:$0xff]
        %v7454 = vld [vmem:[%s7376 + $0x268] sm:$0xff]
        %v7455 = vld [vmem:[%s7376 + $0x270] sm:$0xff]
        %v7456 = vld [vmem:[%s7376 + $0x278] sm:$0xff]
        %v7457 = vld [vmem:[%s7376 + $0x280] sm:$0xff]
        %v7458 = vld [vmem:[%s7376 + $0x288] sm:$0xff]
        %v7459 = vld [vmem:[%s7376 + $0x290] sm:$0xff]
        %v7460 = vld [vmem:[%s7376 + $0x298] sm:$0xff]
        %v7461 = vld [vmem:[%s7376 + $0x2a0] sm:$0xff]
        %v7462 = vld [vmem:[%s7376 + $0x2a8] sm:$0xff]
        %v7463 = vld [vmem:[%s7376 + $0x2b0] sm:$0xff]
        %v7464 = vld [vmem:[%s7376 + $0x2b8] sm:$0xff]
        %v7465 = vld [vmem:[%s7376 + $0x2c0] sm:$0xff]
        %v7466 = vld [vmem:[%s7376 + $0x2c8] sm:$0xff]
        %v7467 = vld [vmem:[%s7376 + $0x2d0] sm:$0xff]
        %v7468 = vld [vmem:[%s7376 + $0x2d8] sm:$0xff]
        %v7469 = vld [vmem:[%s7376 + $0x2e0] sm:$0xff]
        %v7470 = vld [vmem:[%s7376 + $0x2e8] sm:$0xff]
        %v7471 = vld [vmem:[%s7376 + $0x2f0] sm:$0xff]
        %v7472 = vld [vmem:[%s7376 + $0x2f8] sm:$0xff]
        %v7473 = vld [vmem:[%s7376 + $0x300] sm:$0xff]
        %v7474 = vld [vmem:[%s7376 + $0x308] sm:$0xff]
        %v7475 = vld [vmem:[%s7376 + $0x310] sm:$0xff]
        %v7476 = vld [vmem:[%s7376 + $0x318] sm:$0xff]
        %v7477 = vld [vmem:[%s7376 + $0x320] sm:$0xff]
        %v7478 = vld [vmem:[%s7376 + $0x328] sm:$0xff]
        %v7479 = vld [vmem:[%s7376 + $0x330] sm:$0xff]
        %v7480 = vld [vmem:[%s7376 + $0x338] sm:$0xff]
        %v7481 = vld [vmem:[%s7376 + $0x340] sm:$0xff]
        %v7482 = vld [vmem:[%s7376 + $0x348] sm:$0xff]
        %v7483 = vld [vmem:[%s7376 + $0x350] sm:$0xff]
        %v7484 = vld [vmem:[%s7376 + $0x358] sm:$0xff]
        %v7485 = vld [vmem:[%s7376 + $0x360] sm:$0xff]
        %v7486 = vld [vmem:[%s7376 + $0x368] sm:$0xff]
        %v7487 = vld [vmem:[%s7376 + $0x370] sm:$0xff]
        %v7488 = vld [vmem:[%s7376 + $0x378] sm:$0xff]
        %v7489 = vld [vmem:[%s7376 + $0x380] sm:$0xff]
        %v7490 = vld [vmem:[%s7376 + $0x388] sm:$0xff]
        %v7491 = vld [vmem:[%s7376 + $0x390] sm:$0xff]
        %v7492 = vld [vmem:[%s7376 + $0x398] sm:$0xff]
        %v7493 = vld [vmem:[%s7376 + $0x3a0] sm:$0xff]
        %v7494 = vld [vmem:[%s7376 + $0x3a8] sm:$0xff]
        %v7495 = vld [vmem:[%s7376 + $0x3b0] sm:$0xff]
        %v7496 = vld [vmem:[%s7376 + $0x3b8] sm:$0xff]
        %v7497 = vld [vmem:[%s7376 + $0x3c0] sm:$0xff]
        %v7498 = vld [vmem:[%s7376 + $0x3c8] sm:$0xff]
        %v7499 = vld [vmem:[%s7376 + $0x3d0] sm:$0xff]
        %v7500 = vld [vmem:[%s7376 + $0x3d8] sm:$0xff]
        %v7501 = vld [vmem:[%s7376 + $0x3e0] sm:$0xff]
        %v7502 = vld [vmem:[%s7376 + $0x3e8] sm:$0xff]
        %v7503 = vld [vmem:[%s7376 + $0x3f0] sm:$0xff]
        %v7504 = vld [vmem:[%s7376 + $0x3f8] sm:$0xff]
        %s7505 = scalar_lea.vmem %s436, 7
        %v7506 = vld [vmem:[%s7505] ss:$8 sm:$0xf]
        %v7508 = vlaneseq
        %v7509 = vshrl.u32 %v7508, 7
        %v7510 = vsub.s32 0, %v7509
        %v7511 = vrot.slane %v7506, %v7510
        %v7512 = vlaneseq
        %v7513 = vshrl.u32 %v7512, 7
        %v7514 = vsub.s32 1, %v7513
        %v7515 = vrot.slane %v7506, %v7514
        %v7516 = vlaneseq
        %v7517 = vshrl.u32 %v7516, 7
        %v7518 = vsub.s32 2, %v7517
        %v7519 = vrot.slane %v7506, %v7518
        %v7520 = vlaneseq
        %v7521 = vshrl.u32 %v7520, 7
        %v7522 = vsub.s32 3, %v7521
        %v7523 = vrot.slane %v7506, %v7522
        %v7656 = vunpack.c.l.b16 %v7377
        %v7657 = vunpack.c.h.b16 %v7377
        %v7658 = vunpack.c.l.b16 %v7378
        %v7659 = vunpack.c.h.b16 %v7378
        %v7660 = vunpack.c.l.b16 %v7379
        %v7661 = vunpack.c.h.b16 %v7379
        %v7662 = vunpack.c.l.b16 %v7380
        %v7663 = vunpack.c.h.b16 %v7380
        %v7664 = vunpack.c.l.b16 %v7381
        %v7665 = vunpack.c.h.b16 %v7381
        %v7666 = vunpack.c.l.b16 %v7382
        %v7667 = vunpack.c.h.b16 %v7382
        %v7668 = vunpack.c.l.b16 %v7383
        %v7669 = vunpack.c.h.b16 %v7383
        %v7670 = vunpack.c.l.b16 %v7384
        %v7671 = vunpack.c.h.b16 %v7384
        %v7672 = vunpack.c.l.b16 %v7385
        %v7673 = vunpack.c.h.b16 %v7385
        %v7674 = vunpack.c.l.b16 %v7386
        %v7675 = vunpack.c.h.b16 %v7386
        %v7676 = vunpack.c.l.b16 %v7387
        %v7677 = vunpack.c.h.b16 %v7387
        %v7678 = vunpack.c.l.b16 %v7388
        %v7679 = vunpack.c.h.b16 %v7388
        %v7680 = vunpack.c.l.b16 %v7389
        %v7681 = vunpack.c.h.b16 %v7389
        %v7682 = vunpack.c.l.b16 %v7390
        %v7683 = vunpack.c.h.b16 %v7390
        %v7684 = vunpack.c.l.b16 %v7391
        %v7685 = vunpack.c.h.b16 %v7391
        %v7686 = vunpack.c.l.b16 %v7392
        %v7687 = vunpack.c.h.b16 %v7392
        %v7688 = vunpack.c.l.b16 %v7393
        %v7689 = vunpack.c.h.b16 %v7393
        %v7690 = vunpack.c.l.b16 %v7394
        %v7691 = vunpack.c.h.b16 %v7394
        %v7692 = vunpack.c.l.b16 %v7395
        %v7693 = vunpack.c.h.b16 %v7395
        %v7694 = vunpack.c.l.b16 %v7396
        %v7695 = vunpack.c.h.b16 %v7396
        %v7696 = vunpack.c.l.b16 %v7397
        %v7697 = vunpack.c.h.b16 %v7397
        %v7698 = vunpack.c.l.b16 %v7398
        %v7699 = vunpack.c.h.b16 %v7398
        %v7700 = vunpack.c.l.b16 %v7399
        %v7701 = vunpack.c.h.b16 %v7399
        %v7702 = vunpack.c.l.b16 %v7400
        %v7703 = vunpack.c.h.b16 %v7400
        %v7704 = vunpack.c.l.b16 %v7401
        %v7705 = vunpack.c.h.b16 %v7401
        %v7706 = vunpack.c.l.b16 %v7402
        %v7707 = vunpack.c.h.b16 %v7402
        %v7708 = vunpack.c.l.b16 %v7403
        %v7709 = vunpack.c.h.b16 %v7403
        %v7710 = vunpack.c.l.b16 %v7404
        %v7711 = vunpack.c.h.b16 %v7404
        %v7712 = vunpack.c.l.b16 %v7405
        %v7713 = vunpack.c.h.b16 %v7405
        %v7714 = vunpack.c.l.b16 %v7406
        %v7715 = vunpack.c.h.b16 %v7406
        %v7716 = vunpack.c.l.b16 %v7407
        %v7717 = vunpack.c.h.b16 %v7407
        %v7718 = vunpack.c.l.b16 %v7408
        %v7719 = vunpack.c.h.b16 %v7408
        %v7720 = vunpack.c.l.b16 %v7409
        %v7721 = vunpack.c.h.b16 %v7409
        %v7722 = vunpack.c.l.b16 %v7410
        %v7723 = vunpack.c.h.b16 %v7410
        %v7724 = vunpack.c.l.b16 %v7411
        %v7725 = vunpack.c.h.b16 %v7411
        %v7726 = vunpack.c.l.b16 %v7412
        %v7727 = vunpack.c.h.b16 %v7412
        %v7728 = vunpack.c.l.b16 %v7413
        %v7729 = vunpack.c.h.b16 %v7413
        %v7730 = vunpack.c.l.b16 %v7414
        %v7731 = vunpack.c.h.b16 %v7414
        %v7732 = vunpack.c.l.b16 %v7415
        %v7733 = vunpack.c.h.b16 %v7415
        %v7734 = vunpack.c.l.b16 %v7416
        %v7735 = vunpack.c.h.b16 %v7416
        %v7736 = vunpack.c.l.b16 %v7417
        %v7737 = vunpack.c.h.b16 %v7417
        %v7738 = vunpack.c.l.b16 %v7418
        %v7739 = vunpack.c.h.b16 %v7418
        %v7740 = vunpack.c.l.b16 %v7419
        %v7741 = vunpack.c.h.b16 %v7419
        %v7742 = vunpack.c.l.b16 %v7420
        %v7743 = vunpack.c.h.b16 %v7420
        %v7744 = vunpack.c.l.b16 %v7421
        %v7745 = vunpack.c.h.b16 %v7421
        %v7746 = vunpack.c.l.b16 %v7422
        %v7747 = vunpack.c.h.b16 %v7422
        %v7748 = vunpack.c.l.b16 %v7423
        %v7749 = vunpack.c.h.b16 %v7423
        %v7750 = vunpack.c.l.b16 %v7424
        %v7751 = vunpack.c.h.b16 %v7424
        %v7752 = vunpack.c.l.b16 %v7425
        %v7753 = vunpack.c.h.b16 %v7425
        %v7754 = vunpack.c.l.b16 %v7426
        %v7755 = vunpack.c.h.b16 %v7426
        %v7756 = vunpack.c.l.b16 %v7427
        %v7757 = vunpack.c.h.b16 %v7427
        %v7758 = vunpack.c.l.b16 %v7428
        %v7759 = vunpack.c.h.b16 %v7428
        %v7760 = vunpack.c.l.b16 %v7429
        %v7761 = vunpack.c.h.b16 %v7429
        %v7762 = vunpack.c.l.b16 %v7430
        %v7763 = vunpack.c.h.b16 %v7430
        %v7764 = vunpack.c.l.b16 %v7431
        %v7765 = vunpack.c.h.b16 %v7431
        %v7766 = vunpack.c.l.b16 %v7432
        %v7767 = vunpack.c.h.b16 %v7432
        %v7768 = vunpack.c.l.b16 %v7433
        %v7769 = vunpack.c.h.b16 %v7433
        %v7770 = vunpack.c.l.b16 %v7434
        %v7771 = vunpack.c.h.b16 %v7434
        %v7772 = vunpack.c.l.b16 %v7435
        %v7773 = vunpack.c.h.b16 %v7435
        %v7774 = vunpack.c.l.b16 %v7436
        %v7775 = vunpack.c.h.b16 %v7436
        %v7776 = vunpack.c.l.b16 %v7437
        %v7777 = vunpack.c.h.b16 %v7437
        %v7778 = vunpack.c.l.b16 %v7438
        %v7779 = vunpack.c.h.b16 %v7438
        %v7780 = vunpack.c.l.b16 %v7439
        %v7781 = vunpack.c.h.b16 %v7439
        %v7782 = vunpack.c.l.b16 %v7440
        %v7783 = vunpack.c.h.b16 %v7440
        %v7784 = vunpack.c.l.b16 %v7441
        %v7785 = vunpack.c.h.b16 %v7441
        %v7786 = vunpack.c.l.b16 %v7442
        %v7787 = vunpack.c.h.b16 %v7442
        %v7788 = vunpack.c.l.b16 %v7443
        %v7789 = vunpack.c.h.b16 %v7443
        %v7790 = vunpack.c.l.b16 %v7444
        %v7791 = vunpack.c.h.b16 %v7444
        %v7792 = vunpack.c.l.b16 %v7445
        %v7793 = vunpack.c.h.b16 %v7445
        %v7794 = vunpack.c.l.b16 %v7446
        %v7795 = vunpack.c.h.b16 %v7446
        %v7796 = vunpack.c.l.b16 %v7447
        %v7797 = vunpack.c.h.b16 %v7447
        %v7798 = vunpack.c.l.b16 %v7448
        %v7799 = vunpack.c.h.b16 %v7448
        %v7800 = vunpack.c.l.b16 %v7449
        %v7801 = vunpack.c.h.b16 %v7449
        %v7802 = vunpack.c.l.b16 %v7450
        %v7803 = vunpack.c.h.b16 %v7450
        %v7804 = vunpack.c.l.b16 %v7451
        %v7805 = vunpack.c.h.b16 %v7451
        %v7806 = vunpack.c.l.b16 %v7452
        %v7807 = vunpack.c.h.b16 %v7452
        %v7808 = vunpack.c.l.b16 %v7453
        %v7809 = vunpack.c.h.b16 %v7453
        %v7810 = vunpack.c.l.b16 %v7454
        %v7811 = vunpack.c.h.b16 %v7454
        %v7812 = vunpack.c.l.b16 %v7455
        %v7813 = vunpack.c.h.b16 %v7455
        %v7814 = vunpack.c.l.b16 %v7456
        %v7815 = vunpack.c.h.b16 %v7456
        %v7816 = vunpack.c.l.b16 %v7457
        %v7817 = vunpack.c.h.b16 %v7457
        %v7818 = vunpack.c.l.b16 %v7458
        %v7819 = vunpack.c.h.b16 %v7458
        %v7820 = vunpack.c.l.b16 %v7459
        %v7821 = vunpack.c.h.b16 %v7459
        %v7822 = vunpack.c.l.b16 %v7460
        %v7823 = vunpack.c.h.b16 %v7460
        %v7824 = vunpack.c.l.b16 %v7461
        %v7825 = vunpack.c.h.b16 %v7461
        %v7826 = vunpack.c.l.b16 %v7462
        %v7827 = vunpack.c.h.b16 %v7462
        %v7828 = vunpack.c.l.b16 %v7463
        %v7829 = vunpack.c.h.b16 %v7463
        %v7830 = vunpack.c.l.b16 %v7464
        %v7831 = vunpack.c.h.b16 %v7464
        %v7832 = vunpack.c.l.b16 %v7465
        %v7833 = vunpack.c.h.b16 %v7465
        %v7834 = vunpack.c.l.b16 %v7466
        %v7835 = vunpack.c.h.b16 %v7466
        %v7836 = vunpack.c.l.b16 %v7467
        %v7837 = vunpack.c.h.b16 %v7467
        %v7838 = vunpack.c.l.b16 %v7468
        %v7839 = vunpack.c.h.b16 %v7468
        %v7840 = vunpack.c.l.b16 %v7469
        %v7841 = vunpack.c.h.b16 %v7469
        %v7842 = vunpack.c.l.b16 %v7470
        %v7843 = vunpack.c.h.b16 %v7470
        %v7844 = vunpack.c.l.b16 %v7471
        %v7845 = vunpack.c.h.b16 %v7471
        %v7846 = vunpack.c.l.b16 %v7472
        %v7847 = vunpack.c.h.b16 %v7472
        %v7848 = vunpack.c.l.b16 %v7473
        %v7849 = vunpack.c.h.b16 %v7473
        %v7850 = vunpack.c.l.b16 %v7474
        %v7851 = vunpack.c.h.b16 %v7474
        %v7852 = vunpack.c.l.b16 %v7475
        %v7853 = vunpack.c.h.b16 %v7475
        %v7854 = vunpack.c.l.b16 %v7476
        %v7855 = vunpack.c.h.b16 %v7476
        %v7856 = vunpack.c.l.b16 %v7477
        %v7857 = vunpack.c.h.b16 %v7477
        %v7858 = vunpack.c.l.b16 %v7478
        %v7859 = vunpack.c.h.b16 %v7478
        %v7860 = vunpack.c.l.b16 %v7479
        %v7861 = vunpack.c.h.b16 %v7479
        %v7862 = vunpack.c.l.b16 %v7480
        %v7863 = vunpack.c.h.b16 %v7480
        %v7864 = vunpack.c.l.b16 %v7481
        %v7865 = vunpack.c.h.b16 %v7481
        %v7866 = vunpack.c.l.b16 %v7482
        %v7867 = vunpack.c.h.b16 %v7482
        %v7868 = vunpack.c.l.b16 %v7483
        %v7869 = vunpack.c.h.b16 %v7483
        %v7870 = vunpack.c.l.b16 %v7484
        %v7871 = vunpack.c.h.b16 %v7484
        %v7872 = vunpack.c.l.b16 %v7485
        %v7873 = vunpack.c.h.b16 %v7485
        %v7874 = vunpack.c.l.b16 %v7486
        %v7875 = vunpack.c.h.b16 %v7486
        %v7876 = vunpack.c.l.b16 %v7487
        %v7877 = vunpack.c.h.b16 %v7487
        %v7878 = vunpack.c.l.b16 %v7488
        %v7879 = vunpack.c.h.b16 %v7488
        %v7880 = vunpack.c.l.b16 %v7489
        %v7881 = vunpack.c.h.b16 %v7489
        %v7882 = vunpack.c.l.b16 %v7490
        %v7883 = vunpack.c.h.b16 %v7490
        %v7884 = vunpack.c.l.b16 %v7491
        %v7885 = vunpack.c.h.b16 %v7491
        %v7886 = vunpack.c.l.b16 %v7492
        %v7887 = vunpack.c.h.b16 %v7492
        %v7888 = vunpack.c.l.b16 %v7493
        %v7889 = vunpack.c.h.b16 %v7493
        %v7890 = vunpack.c.l.b16 %v7494
        %v7891 = vunpack.c.h.b16 %v7494
        %v7892 = vunpack.c.l.b16 %v7495
        %v7893 = vunpack.c.h.b16 %v7495
        %v7894 = vunpack.c.l.b16 %v7496
        %v7895 = vunpack.c.h.b16 %v7496
        %v7896 = vunpack.c.l.b16 %v7497
        %v7897 = vunpack.c.h.b16 %v7497
        %v7898 = vunpack.c.l.b16 %v7498
        %v7899 = vunpack.c.h.b16 %v7498
        %v7900 = vunpack.c.l.b16 %v7499
        %v7901 = vunpack.c.h.b16 %v7499
        %v7902 = vunpack.c.l.b16 %v7500
        %v7903 = vunpack.c.h.b16 %v7500
        %v7904 = vunpack.c.l.b16 %v7501
        %v7905 = vunpack.c.h.b16 %v7501
        %v7906 = vunpack.c.l.b16 %v7502
        %v7907 = vunpack.c.h.b16 %v7502
        %v7908 = vunpack.c.l.b16 %v7503
        %v7909 = vunpack.c.h.b16 %v7503
        %v7910 = vunpack.c.l.b16 %v7504
        %v7911 = vunpack.c.h.b16 %v7504
        %v7912 = vpack.c.b16 %v7660, %v7656
        %v7913 = vpack.c.b16 %v7661, %v7657
        %v7914 = vpack.c.b16 %v7662, %v7658
        %v7915 = vpack.c.b16 %v7663, %v7659
        %v7916 = vpack.c.b16 %v7668, %v7664
        %v7917 = vpack.c.b16 %v7669, %v7665
        %v7918 = vpack.c.b16 %v7670, %v7666
        %v7919 = vpack.c.b16 %v7671, %v7667
        %v7920 = vpack.c.b16 %v7676, %v7672
        %v7921 = vpack.c.b16 %v7677, %v7673
        %v7922 = vpack.c.b16 %v7678, %v7674
        %v7923 = vpack.c.b16 %v7679, %v7675
        %v7924 = vpack.c.b16 %v7684, %v7680
        %v7925 = vpack.c.b16 %v7685, %v7681
        %v7926 = vpack.c.b16 %v7686, %v7682
        %v7927 = vpack.c.b16 %v7687, %v7683
        %v7928 = vpack.c.b16 %v7692, %v7688
        %v7929 = vpack.c.b16 %v7693, %v7689
        %v7930 = vpack.c.b16 %v7694, %v7690
        %v7931 = vpack.c.b16 %v7695, %v7691
        %v7932 = vpack.c.b16 %v7700, %v7696
        %v7933 = vpack.c.b16 %v7701, %v7697
        %v7934 = vpack.c.b16 %v7702, %v7698
        %v7935 = vpack.c.b16 %v7703, %v7699
        %v7936 = vpack.c.b16 %v7708, %v7704
        %v7937 = vpack.c.b16 %v7709, %v7705
        %v7938 = vpack.c.b16 %v7710, %v7706
        %v7939 = vpack.c.b16 %v7711, %v7707
        %v7940 = vpack.c.b16 %v7716, %v7712
        %v7941 = vpack.c.b16 %v7717, %v7713
        %v7942 = vpack.c.b16 %v7718, %v7714
        %v7943 = vpack.c.b16 %v7719, %v7715
        %v7944 = vpack.c.b16 %v7724, %v7720
        %v7945 = vpack.c.b16 %v7725, %v7721
        %v7946 = vpack.c.b16 %v7726, %v7722
        %v7947 = vpack.c.b16 %v7727, %v7723
        %v7948 = vpack.c.b16 %v7732, %v7728
        %v7949 = vpack.c.b16 %v7733, %v7729
        %v7950 = vpack.c.b16 %v7734, %v7730
        %v7951 = vpack.c.b16 %v7735, %v7731
        %v7952 = vpack.c.b16 %v7740, %v7736
        %v7953 = vpack.c.b16 %v7741, %v7737
        %v7954 = vpack.c.b16 %v7742, %v7738
        %v7955 = vpack.c.b16 %v7743, %v7739
        %v7956 = vpack.c.b16 %v7748, %v7744
        %v7957 = vpack.c.b16 %v7749, %v7745
        %v7958 = vpack.c.b16 %v7750, %v7746
        %v7959 = vpack.c.b16 %v7751, %v7747
        %v7960 = vpack.c.b16 %v7756, %v7752
        %v7961 = vpack.c.b16 %v7757, %v7753
        %v7962 = vpack.c.b16 %v7758, %v7754
        %v7963 = vpack.c.b16 %v7759, %v7755
        %v7964 = vpack.c.b16 %v7764, %v7760
        %v7965 = vpack.c.b16 %v7765, %v7761
        %v7966 = vpack.c.b16 %v7766, %v7762
        %v7967 = vpack.c.b16 %v7767, %v7763
        %v7968 = vpack.c.b16 %v7772, %v7768
        %v7969 = vpack.c.b16 %v7773, %v7769
        %v7970 = vpack.c.b16 %v7774, %v7770
        %v7971 = vpack.c.b16 %v7775, %v7771
        %v7972 = vpack.c.b16 %v7780, %v7776
        %v7973 = vpack.c.b16 %v7781, %v7777
        %v7974 = vpack.c.b16 %v7782, %v7778
        %v7975 = vpack.c.b16 %v7783, %v7779
        %v7976 = vpack.c.b16 %v7788, %v7784
        %v7977 = vpack.c.b16 %v7789, %v7785
        %v7978 = vpack.c.b16 %v7790, %v7786
        %v7979 = vpack.c.b16 %v7791, %v7787
        %v7980 = vpack.c.b16 %v7796, %v7792
        %v7981 = vpack.c.b16 %v7797, %v7793
        %v7982 = vpack.c.b16 %v7798, %v7794
        %v7983 = vpack.c.b16 %v7799, %v7795
        %v7984 = vpack.c.b16 %v7804, %v7800
        %v7985 = vpack.c.b16 %v7805, %v7801
        %v7986 = vpack.c.b16 %v7806, %v7802
        %v7987 = vpack.c.b16 %v7807, %v7803
        %v7988 = vpack.c.b16 %v7812, %v7808
        %v7989 = vpack.c.b16 %v7813, %v7809
        %v7990 = vpack.c.b16 %v7814, %v7810
        %v7991 = vpack.c.b16 %v7815, %v7811
        %v7992 = vpack.c.b16 %v7820, %v7816
        %v7993 = vpack.c.b16 %v7821, %v7817
        %v7994 = vpack.c.b16 %v7822, %v7818
        %v7995 = vpack.c.b16 %v7823, %v7819
        %v7996 = vpack.c.b16 %v7828, %v7824
        %v7997 = vpack.c.b16 %v7829, %v7825
        %v7998 = vpack.c.b16 %v7830, %v7826
        %v7999 = vpack.c.b16 %v7831, %v7827
        %v8000 = vpack.c.b16 %v7836, %v7832
        %v8001 = vpack.c.b16 %v7837, %v7833
        %v8002 = vpack.c.b16 %v7838, %v7834
        %v8003 = vpack.c.b16 %v7839, %v7835
        %v8004 = vpack.c.b16 %v7844, %v7840
        %v8005 = vpack.c.b16 %v7845, %v7841
        %v8006 = vpack.c.b16 %v7846, %v7842
        %v8007 = vpack.c.b16 %v7847, %v7843
        %v8008 = vpack.c.b16 %v7852, %v7848
        %v8009 = vpack.c.b16 %v7853, %v7849
        %v8010 = vpack.c.b16 %v7854, %v7850
        %v8011 = vpack.c.b16 %v7855, %v7851
        %v8012 = vpack.c.b16 %v7860, %v7856
        %v8013 = vpack.c.b16 %v7861, %v7857
        %v8014 = vpack.c.b16 %v7862, %v7858
        %v8015 = vpack.c.b16 %v7863, %v7859
        %v8016 = vpack.c.b16 %v7868, %v7864
        %v8017 = vpack.c.b16 %v7869, %v7865
        %v8018 = vpack.c.b16 %v7870, %v7866
        %v8019 = vpack.c.b16 %v7871, %v7867
        %v8020 = vpack.c.b16 %v7876, %v7872
        %v8021 = vpack.c.b16 %v7877, %v7873
        %v8022 = vpack.c.b16 %v7878, %v7874
        %v8023 = vpack.c.b16 %v7879, %v7875
        %v8024 = vpack.c.b16 %v7884, %v7880
        %v8025 = vpack.c.b16 %v7885, %v7881
        %v8026 = vpack.c.b16 %v7886, %v7882
        %v8027 = vpack.c.b16 %v7887, %v7883
        %v8028 = vpack.c.b16 %v7892, %v7888
        %v8029 = vpack.c.b16 %v7893, %v7889
        %v8030 = vpack.c.b16 %v7894, %v7890
        %v8031 = vpack.c.b16 %v7895, %v7891
        %v8032 = vpack.c.b16 %v7900, %v7896
        %v8033 = vpack.c.b16 %v7901, %v7897
        %v8034 = vpack.c.b16 %v7902, %v7898
        %v8035 = vpack.c.b16 %v7903, %v7899
        %v8036 = vpack.c.b16 %v7908, %v7904
        %v8037 = vpack.c.b16 %v7909, %v7905
        %v8038 = vpack.c.b16 %v7910, %v7906
        %v8039 = vpack.c.b16 %v7911, %v7907
        %8168 = vmatprep.subr.bf16.mxu0 %v7941
        %8169 = vmatpush1.bf16.msra.mxu0 %v7940
        %8170 = vmatprep.subr.bf16.mxu0 %v7937
        %8171 = vmatpush1.bf16.msra.mxu0 %v7936
        %8172 = vmatprep.subr.bf16.mxu0 %v7933
        %8173 = vmatpush1.bf16.msra.mxu0 %v7932
        %8174 = vmatprep.subr.bf16.mxu0 %v7929
        %8175 = vmatpush1.bf16.msra.mxu0 %v7928
        %8176 = vmatprep.subr.bf16.mxu0 %v7925
        %8177 = vmatpush1.bf16.msra.mxu0 %v7924
        %8178 = vmatprep.subr.bf16.mxu0 %v7921
        %8179 = vmatpush1.bf16.msra.mxu0 %v7920
        %8180 = vmatprep.subr.bf16.mxu0 %v7917
        %8181 = vmatpush1.bf16.msra.mxu0 %v7916
        %8182 = vmatprep.subr.bf16.mxu0 %v7913
        %8183 = vmatpush1.bf16.msra.mxu0 %v7912
        %8184 = vmatprep.subr.bf16.mxu0 %v7973
        %8185 = vmatpush2.bf16.msra.mxu0 %v7972
        %8186 = vmatprep.subr.bf16.mxu0 %v7969
        %8187 = vmatpush2.bf16.msra.mxu0 %v7968
        %8188 = vmatprep.subr.bf16.mxu0 %v7965
        %8189 = vmatpush2.bf16.msra.mxu0 %v7964
        %8190 = vmatprep.subr.bf16.mxu0 %v7961
        %8191 = vmatpush2.bf16.msra.mxu0 %v7960
        %8192 = vmatprep.subr.bf16.mxu0 %v7957
        %8193 = vmatpush2.bf16.msra.mxu0 %v7956
        %8194 = vmatprep.subr.bf16.mxu0 %v7953
        %8195 = vmatpush2.bf16.msra.mxu0 %v7952
        %8196 = vmatprep.subr.bf16.mxu0 %v7949
        %8197 = vmatpush2.bf16.msra.mxu0 %v7948
        %8198 = vmatprep.subr.bf16.mxu0 %v7945
        %8199 = vmatpush2.bf16.msra.mxu0 %v7944
        %8200 = vmatprep.mubr.bf16.mxu0 %v7373
        %8201 = vmatmul.mubr.bf16.gmra.mxu0 %v7372
        %v8202 = vpop.f32.mrf.mxu0
        %v8203 = vadd.f32 %v7511, %v8202
        %v8204 = vpop.f32.mrf.mxu0
        %v8205 = vadd.f32 %v7515, %v8204
        %v8206 = vpop.f32.mrf.mxu0
        %v8207 = vpop.f32.mrf.mxu0
        %8208 = vdwg.mxu0
        %8209 = vmatprep.subr.bf16.mxu0 %v8005
        %8210 = vmatpush1.bf16.msra.mxu0 %v8004
        %8211 = vmatprep.subr.bf16.mxu0 %v8001
        %8212 = vmatpush1.bf16.msra.mxu0 %v8000
        %8213 = vmatprep.subr.bf16.mxu0 %v7997
        %8214 = vmatpush1.bf16.msra.mxu0 %v7996
        %8215 = vmatprep.subr.bf16.mxu0 %v7993
        %8216 = vmatpush1.bf16.msra.mxu0 %v7992
        %8217 = vmatprep.subr.bf16.mxu0 %v7989
        %8218 = vmatpush1.bf16.msra.mxu0 %v7988
        %8219 = vmatprep.subr.bf16.mxu0 %v7985
        %8220 = vmatpush1.bf16.msra.mxu0 %v7984
        %8221 = vmatprep.subr.bf16.mxu0 %v7981
        %8222 = vmatpush1.bf16.msra.mxu0 %v7980
        %8223 = vmatprep.subr.bf16.mxu0 %v7977
        %8224 = vmatpush1.bf16.msra.mxu0 %v7976
        %8225 = vmatprep.subr.bf16.mxu0 %v8037
        %8226 = vmatpush2.bf16.msra.mxu0 %v8036
        %8227 = vmatprep.subr.bf16.mxu0 %v8033
        %8228 = vmatpush2.bf16.msra.mxu0 %v8032
        %8229 = vmatprep.subr.bf16.mxu0 %v8029
        %8230 = vmatpush2.bf16.msra.mxu0 %v8028
        %8231 = vmatprep.subr.bf16.mxu0 %v8025
        %8232 = vmatpush2.bf16.msra.mxu0 %v8024
        %8233 = vmatprep.subr.bf16.mxu0 %v8021
        %8234 = vmatpush2.bf16.msra.mxu0 %v8020
        %8235 = vmatprep.subr.bf16.mxu0 %v8017
        %8236 = vmatpush2.bf16.msra.mxu0 %v8016
        %8237 = vmatprep.subr.bf16.mxu0 %v8013
        %8238 = vmatpush2.bf16.msra.mxu0 %v8012
        %8239 = vmatprep.subr.bf16.mxu0 %v8009
        %8240 = vmatpush2.bf16.msra.mxu0 %v8008
        %8241 = vmatprep.mubr.bf16.mxu0 %v7375
        %8242 = vmatmul.mubr.bf16.gmra.mxu0 %v7374
        %v8243 = vpop.f32.mrf.mxu0
        %v8244 = vadd.f32 %v8203, %v8243
        %v8245 = vpop.f32.mrf.mxu0
        %v8246 = vadd.f32 %v8205, %v8245
        %v8247 = vpop.f32.mrf.mxu0
        %v8248 = vpop.f32.mrf.mxu0
        %8249 = vdwg.mxu0
        %8250 = vmatprep.subr.bf16.mxu0 %v7943
        %8251 = vmatpush1.bf16.msra.mxu0 %v7942
        %8252 = vmatprep.subr.bf16.mxu0 %v7939
        %8253 = vmatpush1.bf16.msra.mxu0 %v7938
        %8254 = vmatprep.subr.bf16.mxu0 %v7935
        %8255 = vmatpush1.bf16.msra.mxu0 %v7934
        %8256 = vmatprep.subr.bf16.mxu0 %v7931
        %8257 = vmatpush1.bf16.msra.mxu0 %v7930
        %8258 = vmatprep.subr.bf16.mxu0 %v7927
        %8259 = vmatpush1.bf16.msra.mxu0 %v7926
        %8260 = vmatprep.subr.bf16.mxu0 %v7923
        %8261 = vmatpush1.bf16.msra.mxu0 %v7922
        %8262 = vmatprep.subr.bf16.mxu0 %v7919
        %8263 = vmatpush1.bf16.msra.mxu0 %v7918
        %8264 = vmatprep.subr.bf16.mxu0 %v7915
        %8265 = vmatpush1.bf16.msra.mxu0 %v7914
        %8266 = vmatprep.subr.bf16.mxu0 %v7975
        %8267 = vmatpush2.bf16.msra.mxu0 %v7974
        %8268 = vmatprep.subr.bf16.mxu0 %v7971
        %8269 = vmatpush2.bf16.msra.mxu0 %v7970
        %8270 = vmatprep.subr.bf16.mxu0 %v7967
        %8271 = vmatpush2.bf16.msra.mxu0 %v7966
        %8272 = vmatprep.subr.bf16.mxu0 %v7963
        %8273 = vmatpush2.bf16.msra.mxu0 %v7962
        %8274 = vmatprep.subr.bf16.mxu0 %v7959
        %8275 = vmatpush2.bf16.msra.mxu0 %v7958
        %8276 = vmatprep.subr.bf16.mxu0 %v7955
        %8277 = vmatpush2.bf16.msra.mxu0 %v7954
        %8278 = vmatprep.subr.bf16.mxu0 %v7951
        %8279 = vmatpush2.bf16.msra.mxu0 %v7950
        %8280 = vmatprep.subr.bf16.mxu0 %v7947
        %8281 = vmatpush2.bf16.msra.mxu0 %v7946
        %8282 = vmatprep.mubr.bf16.mxu0 %v7373
        %8283 = vmatmul.mubr.bf16.gmra.mxu0 %v7372
        %v8284 = vpop.f32.mrf.mxu0
        %v8285 = vadd.f32 %v7519, %v8284
        %v8286 = vpop.f32.mrf.mxu0
        %v8287 = vadd.f32 %v7523, %v8286
        %v8288 = vpop.f32.mrf.mxu0
        %v8289 = vpop.f32.mrf.mxu0
        %8290 = vdwg.mxu0
        %8291 = vmatprep.subr.bf16.mxu0 %v8007
        %8292 = vmatpush1.bf16.msra.mxu0 %v8006
        %8293 = vmatprep.subr.bf16.mxu0 %v8003
        %8294 = vmatpush1.bf16.msra.mxu0 %v8002
        %8295 = vmatprep.subr.bf16.mxu0 %v7999
        %8296 = vmatpush1.bf16.msra.mxu0 %v7998
        %8297 = vmatprep.subr.bf16.mxu0 %v7995
        %8298 = vmatpush1.bf16.msra.mxu0 %v7994
        %8299 = vmatprep.subr.bf16.mxu0 %v7991
        %8300 = vmatpush1.bf16.msra.mxu0 %v7990
        %8301 = vmatprep.subr.bf16.mxu0 %v7987
        %8302 = vmatpush1.bf16.msra.mxu0 %v7986
        %8303 = vmatprep.subr.bf16.mxu0 %v7983
        %8304 = vmatpush1.bf16.msra.mxu0 %v7982
        %8305 = vmatprep.subr.bf16.mxu0 %v7979
        %8306 = vmatpush1.bf16.msra.mxu0 %v7978
        %8307 = vmatprep.subr.bf16.mxu0 %v8039
        %8308 = vmatpush2.bf16.msra.mxu0 %v8038
        %8309 = vmatprep.subr.bf16.mxu0 %v8035
        %8310 = vmatpush2.bf16.msra.mxu0 %v8034
        %8311 = vmatprep.subr.bf16.mxu0 %v8031
        %8312 = vmatpush2.bf16.msra.mxu0 %v8030
        %8313 = vmatprep.subr.bf16.mxu0 %v8027
        %8314 = vmatpush2.bf16.msra.mxu0 %v8026
        %8315 = vmatprep.subr.bf16.mxu0 %v8023
        %8316 = vmatpush2.bf16.msra.mxu0 %v8022
        %8317 = vmatprep.subr.bf16.mxu0 %v8019
        %8318 = vmatpush2.bf16.msra.mxu0 %v8018
        %8319 = vmatprep.subr.bf16.mxu0 %v8015
        %8320 = vmatpush2.bf16.msra.mxu0 %v8014
        %8321 = vmatprep.subr.bf16.mxu0 %v8011
        %8322 = vmatpush2.bf16.msra.mxu0 %v8010
        %8323 = vmatprep.mubr.bf16.mxu0 %v7375
        %8324 = vmatmul.mubr.bf16.gmra.mxu0 %v7374
        %v8325 = vpop.f32.mrf.mxu0
        %v8326 = vadd.f32 %v8285, %v8325
        %v8327 = vpop.f32.mrf.mxu0
        %v8328 = vadd.f32 %v8287, %v8327
        %v8329 = vpop.f32.mrf.mxu0
        %v8330 = vpop.f32.mrf.mxu0
        %8331 = vdwg.mxu0
        %v8332 = vtanh.pop %v8244
        %v8333 = vtanh.pop %v8246
        %v8334 = vtanh.pop %v8326
        %v8335 = vtanh.pop %v8328
        %v8336 = vpack.c.bf16 %v8332, %v8332
        %v8337 = vpack.c.bf16 %v8333, %v8333
        %v8338 = vpack.c.bf16 %v8334, %v8334
        %v8339 = vpack.c.bf16 %v8335, %v8335
        %s8340 = scalar_lea.vmem %s384, 8192 [#allocation8]
        %v8341 = vld [vmem:[%s8340] sm:$0xff]
        %v8342 = vld [vmem:[%s8340 + $0x8] sm:$0xff]
        %v8343 = vld [vmem:[%s8340 + $0x10] sm:$0xff]
        %v8344 = vld [vmem:[%s8340 + $0x18] sm:$0xff]
        %v8345 = vld [vmem:[%s8340 + $0x20] sm:$0xff]
        %v8346 = vld [vmem:[%s8340 + $0x28] sm:$0xff]
        %v8347 = vld [vmem:[%s8340 + $0x30] sm:$0xff]
        %v8348 = vld [vmem:[%s8340 + $0x38] sm:$0xff]
        %v8349 = vld [vmem:[%s8340 + $0x40] sm:$0xff]
        %v8350 = vld [vmem:[%s8340 + $0x48] sm:$0xff]
        %v8351 = vld [vmem:[%s8340 + $0x50] sm:$0xff]
        %v8352 = vld [vmem:[%s8340 + $0x58] sm:$0xff]
        %v8353 = vld [vmem:[%s8340 + $0x60] sm:$0xff]
        %v8354 = vld [vmem:[%s8340 + $0x68] sm:$0xff]
        %v8355 = vld [vmem:[%s8340 + $0x70] sm:$0xff]
        %v8356 = vld [vmem:[%s8340 + $0x78] sm:$0xff]
        %v8357 = vld [vmem:[%s8340 + $0x80] sm:$0xff]
        %v8358 = vld [vmem:[%s8340 + $0x88] sm:$0xff]
        %v8359 = vld [vmem:[%s8340 + $0x90] sm:$0xff]
        %v8360 = vld [vmem:[%s8340 + $0x98] sm:$0xff]
        %v8361 = vld [vmem:[%s8340 + $0xa0] sm:$0xff]
        %v8362 = vld [vmem:[%s8340 + $0xa8] sm:$0xff]
        %v8363 = vld [vmem:[%s8340 + $0xb0] sm:$0xff]
        %v8364 = vld [vmem:[%s8340 + $0xb8] sm:$0xff]
        %v8365 = vld [vmem:[%s8340 + $0xc0] sm:$0xff]
        %v8366 = vld [vmem:[%s8340 + $0xc8] sm:$0xff]
        %v8367 = vld [vmem:[%s8340 + $0xd0] sm:$0xff]
        %v8368 = vld [vmem:[%s8340 + $0xd8] sm:$0xff]
        %v8369 = vld [vmem:[%s8340 + $0xe0] sm:$0xff]
        %v8370 = vld [vmem:[%s8340 + $0xe8] sm:$0xff]
        %v8371 = vld [vmem:[%s8340 + $0xf0] sm:$0xff]
        %v8372 = vld [vmem:[%s8340 + $0xf8] sm:$0xff]
        %v8373 = vld [vmem:[%s8340 + $0x100] sm:$0xff]
        %v8374 = vld [vmem:[%s8340 + $0x108] sm:$0xff]
        %v8375 = vld [vmem:[%s8340 + $0x110] sm:$0xff]
        %v8376 = vld [vmem:[%s8340 + $0x118] sm:$0xff]
        %v8377 = vld [vmem:[%s8340 + $0x120] sm:$0xff]
        %v8378 = vld [vmem:[%s8340 + $0x128] sm:$0xff]
        %v8379 = vld [vmem:[%s8340 + $0x130] sm:$0xff]
        %v8380 = vld [vmem:[%s8340 + $0x138] sm:$0xff]
        %v8381 = vld [vmem:[%s8340 + $0x140] sm:$0xff]
        %v8382 = vld [vmem:[%s8340 + $0x148] sm:$0xff]
        %v8383 = vld [vmem:[%s8340 + $0x150] sm:$0xff]
        %v8384 = vld [vmem:[%s8340 + $0x158] sm:$0xff]
        %v8385 = vld [vmem:[%s8340 + $0x160] sm:$0xff]
        %v8386 = vld [vmem:[%s8340 + $0x168] sm:$0xff]
        %v8387 = vld [vmem:[%s8340 + $0x170] sm:$0xff]
        %v8388 = vld [vmem:[%s8340 + $0x178] sm:$0xff]
        %v8389 = vld [vmem:[%s8340 + $0x180] sm:$0xff]
        %v8390 = vld [vmem:[%s8340 + $0x188] sm:$0xff]
        %v8391 = vld [vmem:[%s8340 + $0x190] sm:$0xff]
        %v8392 = vld [vmem:[%s8340 + $0x198] sm:$0xff]
        %v8393 = vld [vmem:[%s8340 + $0x1a0] sm:$0xff]
        %v8394 = vld [vmem:[%s8340 + $0x1a8] sm:$0xff]
        %v8395 = vld [vmem:[%s8340 + $0x1b0] sm:$0xff]
        %v8396 = vld [vmem:[%s8340 + $0x1b8] sm:$0xff]
        %v8397 = vld [vmem:[%s8340 + $0x1c0] sm:$0xff]
        %v8398 = vld [vmem:[%s8340 + $0x1c8] sm:$0xff]
        %v8399 = vld [vmem:[%s8340 + $0x1d0] sm:$0xff]
        %v8400 = vld [vmem:[%s8340 + $0x1d8] sm:$0xff]
        %v8401 = vld [vmem:[%s8340 + $0x1e0] sm:$0xff]
        %v8402 = vld [vmem:[%s8340 + $0x1e8] sm:$0xff]
        %v8403 = vld [vmem:[%s8340 + $0x1f0] sm:$0xff]
        %v8404 = vld [vmem:[%s8340 + $0x1f8] sm:$0xff]
        %v8405 = vld [vmem:[%s8340 + $0x200] sm:$0xff]
        %v8406 = vld [vmem:[%s8340 + $0x208] sm:$0xff]
        %v8407 = vld [vmem:[%s8340 + $0x210] sm:$0xff]
        %v8408 = vld [vmem:[%s8340 + $0x218] sm:$0xff]
        %v8409 = vld [vmem:[%s8340 + $0x220] sm:$0xff]
        %v8410 = vld [vmem:[%s8340 + $0x228] sm:$0xff]
        %v8411 = vld [vmem:[%s8340 + $0x230] sm:$0xff]
        %v8412 = vld [vmem:[%s8340 + $0x238] sm:$0xff]
        %v8413 = vld [vmem:[%s8340 + $0x240] sm:$0xff]
        %v8414 = vld [vmem:[%s8340 + $0x248] sm:$0xff]
        %v8415 = vld [vmem:[%s8340 + $0x250] sm:$0xff]
        %v8416 = vld [vmem:[%s8340 + $0x258] sm:$0xff]
        %v8417 = vld [vmem:[%s8340 + $0x260] sm:$0xff]
        %v8418 = vld [vmem:[%s8340 + $0x268] sm:$0xff]
        %v8419 = vld [vmem:[%s8340 + $0x270] sm:$0xff]
        %v8420 = vld [vmem:[%s8340 + $0x278] sm:$0xff]
        %v8421 = vld [vmem:[%s8340 + $0x280] sm:$0xff]
        %v8422 = vld [vmem:[%s8340 + $0x288] sm:$0xff]
        %v8423 = vld [vmem:[%s8340 + $0x290] sm:$0xff]
        %v8424 = vld [vmem:[%s8340 + $0x298] sm:$0xff]
        %v8425 = vld [vmem:[%s8340 + $0x2a0] sm:$0xff]
        %v8426 = vld [vmem:[%s8340 + $0x2a8] sm:$0xff]
        %v8427 = vld [vmem:[%s8340 + $0x2b0] sm:$0xff]
        %v8428 = vld [vmem:[%s8340 + $0x2b8] sm:$0xff]
        %v8429 = vld [vmem:[%s8340 + $0x2c0] sm:$0xff]
        %v8430 = vld [vmem:[%s8340 + $0x2c8] sm:$0xff]
        %v8431 = vld [vmem:[%s8340 + $0x2d0] sm:$0xff]
        %v8432 = vld [vmem:[%s8340 + $0x2d8] sm:$0xff]
        %v8433 = vld [vmem:[%s8340 + $0x2e0] sm:$0xff]
        %v8434 = vld [vmem:[%s8340 + $0x2e8] sm:$0xff]
        %v8435 = vld [vmem:[%s8340 + $0x2f0] sm:$0xff]
        %v8436 = vld [vmem:[%s8340 + $0x2f8] sm:$0xff]
        %v8437 = vld [vmem:[%s8340 + $0x300] sm:$0xff]
        %v8438 = vld [vmem:[%s8340 + $0x308] sm:$0xff]
        %v8439 = vld [vmem:[%s8340 + $0x310] sm:$0xff]
        %v8440 = vld [vmem:[%s8340 + $0x318] sm:$0xff]
        %v8441 = vld [vmem:[%s8340 + $0x320] sm:$0xff]
        %v8442 = vld [vmem:[%s8340 + $0x328] sm:$0xff]
        %v8443 = vld [vmem:[%s8340 + $0x330] sm:$0xff]
        %v8444 = vld [vmem:[%s8340 + $0x338] sm:$0xff]
        %v8445 = vld [vmem:[%s8340 + $0x340] sm:$0xff]
        %v8446 = vld [vmem:[%s8340 + $0x348] sm:$0xff]
        %v8447 = vld [vmem:[%s8340 + $0x350] sm:$0xff]
        %v8448 = vld [vmem:[%s8340 + $0x358] sm:$0xff]
        %v8449 = vld [vmem:[%s8340 + $0x360] sm:$0xff]
        %v8450 = vld [vmem:[%s8340 + $0x368] sm:$0xff]
        %v8451 = vld [vmem:[%s8340 + $0x370] sm:$0xff]
        %v8452 = vld [vmem:[%s8340 + $0x378] sm:$0xff]
        %v8453 = vld [vmem:[%s8340 + $0x380] sm:$0xff]
        %v8454 = vld [vmem:[%s8340 + $0x388] sm:$0xff]
        %v8455 = vld [vmem:[%s8340 + $0x390] sm:$0xff]
        %v8456 = vld [vmem:[%s8340 + $0x398] sm:$0xff]
        %v8457 = vld [vmem:[%s8340 + $0x3a0] sm:$0xff]
        %v8458 = vld [vmem:[%s8340 + $0x3a8] sm:$0xff]
        %v8459 = vld [vmem:[%s8340 + $0x3b0] sm:$0xff]
        %v8460 = vld [vmem:[%s8340 + $0x3b8] sm:$0xff]
        %v8461 = vld [vmem:[%s8340 + $0x3c0] sm:$0xff]
        %v8462 = vld [vmem:[%s8340 + $0x3c8] sm:$0xff]
        %v8463 = vld [vmem:[%s8340 + $0x3d0] sm:$0xff]
        %v8464 = vld [vmem:[%s8340 + $0x3d8] sm:$0xff]
        %v8465 = vld [vmem:[%s8340 + $0x3e0] sm:$0xff]
        %v8466 = vld [vmem:[%s8340 + $0x3e8] sm:$0xff]
        %v8467 = vld [vmem:[%s8340 + $0x3f0] sm:$0xff]
        %v8468 = vld [vmem:[%s8340 + $0x3f8] sm:$0xff]
        %s8469 = scalar_lea.vmem %s436, 32
        %v8470 = vld [vmem:[%s8469] ss:$8 sm:$0xf]
        %v8472 = vlaneseq
        %v8473 = vshrl.u32 %v8472, 7
        %v8474 = vsub.s32 0, %v8473
        %v8475 = vrot.slane %v8470, %v8474
        %v8476 = vlaneseq
        %v8477 = vshrl.u32 %v8476, 7
        %v8478 = vsub.s32 1, %v8477
        %v8479 = vrot.slane %v8470, %v8478
        %v8480 = vlaneseq
        %v8481 = vshrl.u32 %v8480, 7
        %v8482 = vsub.s32 2, %v8481
        %v8483 = vrot.slane %v8470, %v8482
        %v8484 = vlaneseq
        %v8485 = vshrl.u32 %v8484, 7
        %v8486 = vsub.s32 3, %v8485
        %v8487 = vrot.slane %v8470, %v8486
        %v8620 = vunpack.c.l.b16 %v8341
        %v8621 = vunpack.c.h.b16 %v8341
        %v8622 = vunpack.c.l.b16 %v8342
        %v8623 = vunpack.c.h.b16 %v8342
        %v8624 = vunpack.c.l.b16 %v8343
        %v8625 = vunpack.c.h.b16 %v8343
        %v8626 = vunpack.c.l.b16 %v8344
        %v8627 = vunpack.c.h.b16 %v8344
        %v8628 = vunpack.c.l.b16 %v8345
        %v8629 = vunpack.c.h.b16 %v8345
        %v8630 = vunpack.c.l.b16 %v8346
        %v8631 = vunpack.c.h.b16 %v8346
        %v8632 = vunpack.c.l.b16 %v8347
        %v8633 = vunpack.c.h.b16 %v8347
        %v8634 = vunpack.c.l.b16 %v8348
        %v8635 = vunpack.c.h.b16 %v8348
        %v8636 = vunpack.c.l.b16 %v8349
        %v8637 = vunpack.c.h.b16 %v8349
        %v8638 = vunpack.c.l.b16 %v8350
        %v8639 = vunpack.c.h.b16 %v8350
        %v8640 = vunpack.c.l.b16 %v8351
        %v8641 = vunpack.c.h.b16 %v8351
        %v8642 = vunpack.c.l.b16 %v8352
        %v8643 = vunpack.c.h.b16 %v8352
        %v8644 = vunpack.c.l.b16 %v8353
        %v8645 = vunpack.c.h.b16 %v8353
        %v8646 = vunpack.c.l.b16 %v8354
        %v8647 = vunpack.c.h.b16 %v8354
        %v8648 = vunpack.c.l.b16 %v8355
        %v8649 = vunpack.c.h.b16 %v8355
        %v8650 = vunpack.c.l.b16 %v8356
        %v8651 = vunpack.c.h.b16 %v8356
        %v8652 = vunpack.c.l.b16 %v8357
        %v8653 = vunpack.c.h.b16 %v8357
        %v8654 = vunpack.c.l.b16 %v8358
        %v8655 = vunpack.c.h.b16 %v8358
        %v8656 = vunpack.c.l.b16 %v8359
        %v8657 = vunpack.c.h.b16 %v8359
        %v8658 = vunpack.c.l.b16 %v8360
        %v8659 = vunpack.c.h.b16 %v8360
        %v8660 = vunpack.c.l.b16 %v8361
        %v8661 = vunpack.c.h.b16 %v8361
        %v8662 = vunpack.c.l.b16 %v8362
        %v8663 = vunpack.c.h.b16 %v8362
        %v8664 = vunpack.c.l.b16 %v8363
        %v8665 = vunpack.c.h.b16 %v8363
        %v8666 = vunpack.c.l.b16 %v8364
        %v8667 = vunpack.c.h.b16 %v8364
        %v8668 = vunpack.c.l.b16 %v8365
        %v8669 = vunpack.c.h.b16 %v8365
        %v8670 = vunpack.c.l.b16 %v8366
        %v8671 = vunpack.c.h.b16 %v8366
        %v8672 = vunpack.c.l.b16 %v8367
        %v8673 = vunpack.c.h.b16 %v8367
        %v8674 = vunpack.c.l.b16 %v8368
        %v8675 = vunpack.c.h.b16 %v8368
        %v8676 = vunpack.c.l.b16 %v8369
        %v8677 = vunpack.c.h.b16 %v8369
        %v8678 = vunpack.c.l.b16 %v8370
        %v8679 = vunpack.c.h.b16 %v8370
        %v8680 = vunpack.c.l.b16 %v8371
        %v8681 = vunpack.c.h.b16 %v8371
        %v8682 = vunpack.c.l.b16 %v8372
        %v8683 = vunpack.c.h.b16 %v8372
        %v8684 = vunpack.c.l.b16 %v8373
        %v8685 = vunpack.c.h.b16 %v8373
        %v8686 = vunpack.c.l.b16 %v8374
        %v8687 = vunpack.c.h.b16 %v8374
        %v8688 = vunpack.c.l.b16 %v8375
        %v8689 = vunpack.c.h.b16 %v8375
        %v8690 = vunpack.c.l.b16 %v8376
        %v8691 = vunpack.c.h.b16 %v8376
        %v8692 = vunpack.c.l.b16 %v8377
        %v8693 = vunpack.c.h.b16 %v8377
        %v8694 = vunpack.c.l.b16 %v8378
        %v8695 = vunpack.c.h.b16 %v8378
        %v8696 = vunpack.c.l.b16 %v8379
        %v8697 = vunpack.c.h.b16 %v8379
        %v8698 = vunpack.c.l.b16 %v8380
        %v8699 = vunpack.c.h.b16 %v8380
        %v8700 = vunpack.c.l.b16 %v8381
        %v8701 = vunpack.c.h.b16 %v8381
        %v8702 = vunpack.c.l.b16 %v8382
        %v8703 = vunpack.c.h.b16 %v8382
        %v8704 = vunpack.c.l.b16 %v8383
        %v8705 = vunpack.c.h.b16 %v8383
        %v8706 = vunpack.c.l.b16 %v8384
        %v8707 = vunpack.c.h.b16 %v8384
        %v8708 = vunpack.c.l.b16 %v8385
        %v8709 = vunpack.c.h.b16 %v8385
        %v8710 = vunpack.c.l.b16 %v8386
        %v8711 = vunpack.c.h.b16 %v8386
        %v8712 = vunpack.c.l.b16 %v8387
        %v8713 = vunpack.c.h.b16 %v8387
        %v8714 = vunpack.c.l.b16 %v8388
        %v8715 = vunpack.c.h.b16 %v8388
        %v8716 = vunpack.c.l.b16 %v8389
        %v8717 = vunpack.c.h.b16 %v8389
        %v8718 = vunpack.c.l.b16 %v8390
        %v8719 = vunpack.c.h.b16 %v8390
        %v8720 = vunpack.c.l.b16 %v8391
        %v8721 = vunpack.c.h.b16 %v8391
        %v8722 = vunpack.c.l.b16 %v8392
        %v8723 = vunpack.c.h.b16 %v8392
        %v8724 = vunpack.c.l.b16 %v8393
        %v8725 = vunpack.c.h.b16 %v8393
        %v8726 = vunpack.c.l.b16 %v8394
        %v8727 = vunpack.c.h.b16 %v8394
        %v8728 = vunpack.c.l.b16 %v8395
        %v8729 = vunpack.c.h.b16 %v8395
        %v8730 = vunpack.c.l.b16 %v8396
        %v8731 = vunpack.c.h.b16 %v8396
        %v8732 = vunpack.c.l.b16 %v8397
        %v8733 = vunpack.c.h.b16 %v8397
        %v8734 = vunpack.c.l.b16 %v8398
        %v8735 = vunpack.c.h.b16 %v8398
        %v8736 = vunpack.c.l.b16 %v8399
        %v8737 = vunpack.c.h.b16 %v8399
        %v8738 = vunpack.c.l.b16 %v8400
        %v8739 = vunpack.c.h.b16 %v8400
        %v8740 = vunpack.c.l.b16 %v8401
        %v8741 = vunpack.c.h.b16 %v8401
        %v8742 = vunpack.c.l.b16 %v8402
        %v8743 = vunpack.c.h.b16 %v8402
        %v8744 = vunpack.c.l.b16 %v8403
        %v8745 = vunpack.c.h.b16 %v8403
        %v8746 = vunpack.c.l.b16 %v8404
        %v8747 = vunpack.c.h.b16 %v8404
        %v8748 = vunpack.c.l.b16 %v8405
        %v8749 = vunpack.c.h.b16 %v8405
        %v8750 = vunpack.c.l.b16 %v8406
        %v8751 = vunpack.c.h.b16 %v8406
        %v8752 = vunpack.c.l.b16 %v8407
        %v8753 = vunpack.c.h.b16 %v8407
        %v8754 = vunpack.c.l.b16 %v8408
        %v8755 = vunpack.c.h.b16 %v8408
        %v8756 = vunpack.c.l.b16 %v8409
        %v8757 = vunpack.c.h.b16 %v8409
        %v8758 = vunpack.c.l.b16 %v8410
        %v8759 = vunpack.c.h.b16 %v8410
        %v8760 = vunpack.c.l.b16 %v8411
        %v8761 = vunpack.c.h.b16 %v8411
        %v8762 = vunpack.c.l.b16 %v8412
        %v8763 = vunpack.c.h.b16 %v8412
        %v8764 = vunpack.c.l.b16 %v8413
        %v8765 = vunpack.c.h.b16 %v8413
        %v8766 = vunpack.c.l.b16 %v8414
        %v8767 = vunpack.c.h.b16 %v8414
        %v8768 = vunpack.c.l.b16 %v8415
        %v8769 = vunpack.c.h.b16 %v8415
        %v8770 = vunpack.c.l.b16 %v8416
        %v8771 = vunpack.c.h.b16 %v8416
        %v8772 = vunpack.c.l.b16 %v8417
        %v8773 = vunpack.c.h.b16 %v8417
        %v8774 = vunpack.c.l.b16 %v8418
        %v8775 = vunpack.c.h.b16 %v8418
        %v8776 = vunpack.c.l.b16 %v8419
        %v8777 = vunpack.c.h.b16 %v8419
        %v8778 = vunpack.c.l.b16 %v8420
        %v8779 = vunpack.c.h.b16 %v8420
        %v8780 = vunpack.c.l.b16 %v8421
        %v8781 = vunpack.c.h.b16 %v8421
        %v8782 = vunpack.c.l.b16 %v8422
        %v8783 = vunpack.c.h.b16 %v8422
        %v8784 = vunpack.c.l.b16 %v8423
        %v8785 = vunpack.c.h.b16 %v8423
        %v8786 = vunpack.c.l.b16 %v8424
        %v8787 = vunpack.c.h.b16 %v8424
        %v8788 = vunpack.c.l.b16 %v8425
        %v8789 = vunpack.c.h.b16 %v8425
        %v8790 = vunpack.c.l.b16 %v8426
        %v8791 = vunpack.c.h.b16 %v8426
        %v8792 = vunpack.c.l.b16 %v8427
        %v8793 = vunpack.c.h.b16 %v8427
        %v8794 = vunpack.c.l.b16 %v8428
        %v8795 = vunpack.c.h.b16 %v8428
        %v8796 = vunpack.c.l.b16 %v8429
        %v8797 = vunpack.c.h.b16 %v8429
        %v8798 = vunpack.c.l.b16 %v8430
        %v8799 = vunpack.c.h.b16 %v8430
        %v8800 = vunpack.c.l.b16 %v8431
        %v8801 = vunpack.c.h.b16 %v8431
        %v8802 = vunpack.c.l.b16 %v8432
        %v8803 = vunpack.c.h.b16 %v8432
        %v8804 = vunpack.c.l.b16 %v8433
        %v8805 = vunpack.c.h.b16 %v8433
        %v8806 = vunpack.c.l.b16 %v8434
        %v8807 = vunpack.c.h.b16 %v8434
        %v8808 = vunpack.c.l.b16 %v8435
        %v8809 = vunpack.c.h.b16 %v8435
        %v8810 = vunpack.c.l.b16 %v8436
        %v8811 = vunpack.c.h.b16 %v8436
        %v8812 = vunpack.c.l.b16 %v8437
        %v8813 = vunpack.c.h.b16 %v8437
        %v8814 = vunpack.c.l.b16 %v8438
        %v8815 = vunpack.c.h.b16 %v8438
        %v8816 = vunpack.c.l.b16 %v8439
        %v8817 = vunpack.c.h.b16 %v8439
        %v8818 = vunpack.c.l.b16 %v8440
        %v8819 = vunpack.c.h.b16 %v8440
        %v8820 = vunpack.c.l.b16 %v8441
        %v8821 = vunpack.c.h.b16 %v8441
        %v8822 = vunpack.c.l.b16 %v8442
        %v8823 = vunpack.c.h.b16 %v8442
        %v8824 = vunpack.c.l.b16 %v8443
        %v8825 = vunpack.c.h.b16 %v8443
        %v8826 = vunpack.c.l.b16 %v8444
        %v8827 = vunpack.c.h.b16 %v8444
        %v8828 = vunpack.c.l.b16 %v8445
        %v8829 = vunpack.c.h.b16 %v8445
        %v8830 = vunpack.c.l.b16 %v8446
        %v8831 = vunpack.c.h.b16 %v8446
        %v8832 = vunpack.c.l.b16 %v8447
        %v8833 = vunpack.c.h.b16 %v8447
        %v8834 = vunpack.c.l.b16 %v8448
        %v8835 = vunpack.c.h.b16 %v8448
        %v8836 = vunpack.c.l.b16 %v8449
        %v8837 = vunpack.c.h.b16 %v8449
        %v8838 = vunpack.c.l.b16 %v8450
        %v8839 = vunpack.c.h.b16 %v8450
        %v8840 = vunpack.c.l.b16 %v8451
        %v8841 = vunpack.c.h.b16 %v8451
        %v8842 = vunpack.c.l.b16 %v8452
        %v8843 = vunpack.c.h.b16 %v8452
        %v8844 = vunpack.c.l.b16 %v8453
        %v8845 = vunpack.c.h.b16 %v8453
        %v8846 = vunpack.c.l.b16 %v8454
        %v8847 = vunpack.c.h.b16 %v8454
        %v8848 = vunpack.c.l.b16 %v8455
        %v8849 = vunpack.c.h.b16 %v8455
        %v8850 = vunpack.c.l.b16 %v8456
        %v8851 = vunpack.c.h.b16 %v8456
        %v8852 = vunpack.c.l.b16 %v8457
        %v8853 = vunpack.c.h.b16 %v8457
        %v8854 = vunpack.c.l.b16 %v8458
        %v8855 = vunpack.c.h.b16 %v8458
        %v8856 = vunpack.c.l.b16 %v8459
        %v8857 = vunpack.c.h.b16 %v8459
        %v8858 = vunpack.c.l.b16 %v8460
        %v8859 = vunpack.c.h.b16 %v8460
        %v8860 = vunpack.c.l.b16 %v8461
        %v8861 = vunpack.c.h.b16 %v8461
        %v8862 = vunpack.c.l.b16 %v8462
        %v8863 = vunpack.c.h.b16 %v8462
        %v8864 = vunpack.c.l.b16 %v8463
        %v8865 = vunpack.c.h.b16 %v8463
        %v8866 = vunpack.c.l.b16 %v8464
        %v8867 = vunpack.c.h.b16 %v8464
        %v8868 = vunpack.c.l.b16 %v8465
        %v8869 = vunpack.c.h.b16 %v8465
        %v8870 = vunpack.c.l.b16 %v8466
        %v8871 = vunpack.c.h.b16 %v8466
        %v8872 = vunpack.c.l.b16 %v8467
        %v8873 = vunpack.c.h.b16 %v8467
        %v8874 = vunpack.c.l.b16 %v8468
        %v8875 = vunpack.c.h.b16 %v8468
        %v8876 = vpack.c.b16 %v8624, %v8620
        %v8877 = vpack.c.b16 %v8625, %v8621
        %v8878 = vpack.c.b16 %v8626, %v8622
        %v8879 = vpack.c.b16 %v8627, %v8623
        %v8880 = vpack.c.b16 %v8632, %v8628
        %v8881 = vpack.c.b16 %v8633, %v8629
        %v8882 = vpack.c.b16 %v8634, %v8630
        %v8883 = vpack.c.b16 %v8635, %v8631
        %v8884 = vpack.c.b16 %v8640, %v8636
        %v8885 = vpack.c.b16 %v8641, %v8637
        %v8886 = vpack.c.b16 %v8642, %v8638
        %v8887 = vpack.c.b16 %v8643, %v8639
        %v8888 = vpack.c.b16 %v8648, %v8644
        %v8889 = vpack.c.b16 %v8649, %v8645
        %v8890 = vpack.c.b16 %v8650, %v8646
        %v8891 = vpack.c.b16 %v8651, %v8647
        %v8892 = vpack.c.b16 %v8656, %v8652
        %v8893 = vpack.c.b16 %v8657, %v8653
        %v8894 = vpack.c.b16 %v8658, %v8654
        %v8895 = vpack.c.b16 %v8659, %v8655
        %v8896 = vpack.c.b16 %v8664, %v8660
        %v8897 = vpack.c.b16 %v8665, %v8661
        %v8898 = vpack.c.b16 %v8666, %v8662
        %v8899 = vpack.c.b16 %v8667, %v8663
        %v8900 = vpack.c.b16 %v8672, %v8668
        %v8901 = vpack.c.b16 %v8673, %v8669
        %v8902 = vpack.c.b16 %v8674, %v8670
        %v8903 = vpack.c.b16 %v8675, %v8671
        %v8904 = vpack.c.b16 %v8680, %v8676
        %v8905 = vpack.c.b16 %v8681, %v8677
        %v8906 = vpack.c.b16 %v8682, %v8678
        %v8907 = vpack.c.b16 %v8683, %v8679
        %v8908 = vpack.c.b16 %v8688, %v8684
        %v8909 = vpack.c.b16 %v8689, %v8685
        %v8910 = vpack.c.b16 %v8690, %v8686
        %v8911 = vpack.c.b16 %v8691, %v8687
        %v8912 = vpack.c.b16 %v8696, %v8692
        %v8913 = vpack.c.b16 %v8697, %v8693
        %v8914 = vpack.c.b16 %v8698, %v8694
        %v8915 = vpack.c.b16 %v8699, %v8695
        %v8916 = vpack.c.b16 %v8704, %v8700
        %v8917 = vpack.c.b16 %v8705, %v8701
        %v8918 = vpack.c.b16 %v8706, %v8702
        %v8919 = vpack.c.b16 %v8707, %v8703
        %v8920 = vpack.c.b16 %v8712, %v8708
        %v8921 = vpack.c.b16 %v8713, %v8709
        %v8922 = vpack.c.b16 %v8714, %v8710
        %v8923 = vpack.c.b16 %v8715, %v8711
        %v8924 = vpack.c.b16 %v8720, %v8716
        %v8925 = vpack.c.b16 %v8721, %v8717
        %v8926 = vpack.c.b16 %v8722, %v8718
        %v8927 = vpack.c.b16 %v8723, %v8719
        %v8928 = vpack.c.b16 %v8728, %v8724
        %v8929 = vpack.c.b16 %v8729, %v8725
        %v8930 = vpack.c.b16 %v8730, %v8726
        %v8931 = vpack.c.b16 %v8731, %v8727
        %v8932 = vpack.c.b16 %v8736, %v8732
        %v8933 = vpack.c.b16 %v8737, %v8733
        %v8934 = vpack.c.b16 %v8738, %v8734
        %v8935 = vpack.c.b16 %v8739, %v8735
        %v8936 = vpack.c.b16 %v8744, %v8740
        %v8937 = vpack.c.b16 %v8745, %v8741
        %v8938 = vpack.c.b16 %v8746, %v8742
        %v8939 = vpack.c.b16 %v8747, %v8743
        %v8940 = vpack.c.b16 %v8752, %v8748
        %v8941 = vpack.c.b16 %v8753, %v8749
        %v8942 = vpack.c.b16 %v8754, %v8750
        %v8943 = vpack.c.b16 %v8755, %v8751
        %v8944 = vpack.c.b16 %v8760, %v8756
        %v8945 = vpack.c.b16 %v8761, %v8757
        %v8946 = vpack.c.b16 %v8762, %v8758
        %v8947 = vpack.c.b16 %v8763, %v8759
        %v8948 = vpack.c.b16 %v8768, %v8764
        %v8949 = vpack.c.b16 %v8769, %v8765
        %v8950 = vpack.c.b16 %v8770, %v8766
        %v8951 = vpack.c.b16 %v8771, %v8767
        %v8952 = vpack.c.b16 %v8776, %v8772
        %v8953 = vpack.c.b16 %v8777, %v8773
        %v8954 = vpack.c.b16 %v8778, %v8774
        %v8955 = vpack.c.b16 %v8779, %v8775
        %v8956 = vpack.c.b16 %v8784, %v8780
        %v8957 = vpack.c.b16 %v8785, %v8781
        %v8958 = vpack.c.b16 %v8786, %v8782
        %v8959 = vpack.c.b16 %v8787, %v8783
        %v8960 = vpack.c.b16 %v8792, %v8788
        %v8961 = vpack.c.b16 %v8793, %v8789
        %v8962 = vpack.c.b16 %v8794, %v8790
        %v8963 = vpack.c.b16 %v8795, %v8791
        %v8964 = vpack.c.b16 %v8800, %v8796
        %v8965 = vpack.c.b16 %v8801, %v8797
        %v8966 = vpack.c.b16 %v8802, %v8798
        %v8967 = vpack.c.b16 %v8803, %v8799
        %v8968 = vpack.c.b16 %v8808, %v8804
        %v8969 = vpack.c.b16 %v8809, %v8805
        %v8970 = vpack.c.b16 %v8810, %v8806
        %v8971 = vpack.c.b16 %v8811, %v8807
        %v8972 = vpack.c.b16 %v8816, %v8812
        %v8973 = vpack.c.b16 %v8817, %v8813
        %v8974 = vpack.c.b16 %v8818, %v8814
        %v8975 = vpack.c.b16 %v8819, %v8815
        %v8976 = vpack.c.b16 %v8824, %v8820
        %v8977 = vpack.c.b16 %v8825, %v8821
        %v8978 = vpack.c.b16 %v8826, %v8822
        %v8979 = vpack.c.b16 %v8827, %v8823
        %v8980 = vpack.c.b16 %v8832, %v8828
        %v8981 = vpack.c.b16 %v8833, %v8829
        %v8982 = vpack.c.b16 %v8834, %v8830
        %v8983 = vpack.c.b16 %v8835, %v8831
        %v8984 = vpack.c.b16 %v8840, %v8836
        %v8985 = vpack.c.b16 %v8841, %v8837
        %v8986 = vpack.c.b16 %v8842, %v8838
        %v8987 = vpack.c.b16 %v8843, %v8839
        %v8988 = vpack.c.b16 %v8848, %v8844
        %v8989 = vpack.c.b16 %v8849, %v8845
        %v8990 = vpack.c.b16 %v8850, %v8846
        %v8991 = vpack.c.b16 %v8851, %v8847
        %v8992 = vpack.c.b16 %v8856, %v8852
        %v8993 = vpack.c.b16 %v8857, %v8853
        %v8994 = vpack.c.b16 %v8858, %v8854
        %v8995 = vpack.c.b16 %v8859, %v8855
        %v8996 = vpack.c.b16 %v8864, %v8860
        %v8997 = vpack.c.b16 %v8865, %v8861
        %v8998 = vpack.c.b16 %v8866, %v8862
        %v8999 = vpack.c.b16 %v8867, %v8863
        %v9000 = vpack.c.b16 %v8872, %v8868
        %v9001 = vpack.c.b16 %v8873, %v8869
        %v9002 = vpack.c.b16 %v8874, %v8870
        %v9003 = vpack.c.b16 %v8875, %v8871
        %9132 = vmatprep.subr.bf16.mxu0 %v8905
        %9133 = vmatpush1.bf16.msra.mxu0 %v8904
        %9134 = vmatprep.subr.bf16.mxu0 %v8901
        %9135 = vmatpush1.bf16.msra.mxu0 %v8900
        %9136 = vmatprep.subr.bf16.mxu0 %v8897
        %9137 = vmatpush1.bf16.msra.mxu0 %v8896
        %9138 = vmatprep.subr.bf16.mxu0 %v8893
        %9139 = vmatpush1.bf16.msra.mxu0 %v8892
        %9140 = vmatprep.subr.bf16.mxu0 %v8889
        %9141 = vmatpush1.bf16.msra.mxu0 %v8888
        %9142 = vmatprep.subr.bf16.mxu0 %v8885
        %9143 = vmatpush1.bf16.msra.mxu0 %v8884
        %9144 = vmatprep.subr.bf16.mxu0 %v8881
        %9145 = vmatpush1.bf16.msra.mxu0 %v8880
        %9146 = vmatprep.subr.bf16.mxu0 %v8877
        %9147 = vmatpush1.bf16.msra.mxu0 %v8876
        %9148 = vmatprep.subr.bf16.mxu0 %v8937
        %9149 = vmatpush2.bf16.msra.mxu0 %v8936
        %9150 = vmatprep.subr.bf16.mxu0 %v8933
        %9151 = vmatpush2.bf16.msra.mxu0 %v8932
        %9152 = vmatprep.subr.bf16.mxu0 %v8929
        %9153 = vmatpush2.bf16.msra.mxu0 %v8928
        %9154 = vmatprep.subr.bf16.mxu0 %v8925
        %9155 = vmatpush2.bf16.msra.mxu0 %v8924
        %9156 = vmatprep.subr.bf16.mxu0 %v8921
        %9157 = vmatpush2.bf16.msra.mxu0 %v8920
        %9158 = vmatprep.subr.bf16.mxu0 %v8917
        %9159 = vmatpush2.bf16.msra.mxu0 %v8916
        %9160 = vmatprep.subr.bf16.mxu0 %v8913
        %9161 = vmatpush2.bf16.msra.mxu0 %v8912
        %9162 = vmatprep.subr.bf16.mxu0 %v8909
        %9163 = vmatpush2.bf16.msra.mxu0 %v8908
        %9164 = vmatprep.mubr.bf16.mxu0 %v8337
        %9165 = vmatmul.mubr.bf16.gmra.mxu0 %v8336
        %v9166 = vpop.f32.mrf.mxu0
        %v9167 = vadd.f32 %v8475, %v9166
        %v9168 = vpop.f32.mrf.mxu0
        %v9169 = vadd.f32 %v8479, %v9168
        %v9170 = vpop.f32.mrf.mxu0
        %v9171 = vpop.f32.mrf.mxu0
        %9172 = vdwg.mxu0
        %9173 = vmatprep.subr.bf16.mxu0 %v8969
        %9174 = vmatpush1.bf16.msra.mxu0 %v8968
        %9175 = vmatprep.subr.bf16.mxu0 %v8965
        %9176 = vmatpush1.bf16.msra.mxu0 %v8964
        %9177 = vmatprep.subr.bf16.mxu0 %v8961
        %9178 = vmatpush1.bf16.msra.mxu0 %v8960
        %9179 = vmatprep.subr.bf16.mxu0 %v8957
        %9180 = vmatpush1.bf16.msra.mxu0 %v8956
        %9181 = vmatprep.subr.bf16.mxu0 %v8953
        %9182 = vmatpush1.bf16.msra.mxu0 %v8952
        %9183 = vmatprep.subr.bf16.mxu0 %v8949
        %9184 = vmatpush1.bf16.msra.mxu0 %v8948
        %9185 = vmatprep.subr.bf16.mxu0 %v8945
        %9186 = vmatpush1.bf16.msra.mxu0 %v8944
        %9187 = vmatprep.subr.bf16.mxu0 %v8941
        %9188 = vmatpush1.bf16.msra.mxu0 %v8940
        %9189 = vmatprep.subr.bf16.mxu0 %v9001
        %9190 = vmatpush2.bf16.msra.mxu0 %v9000
        %9191 = vmatprep.subr.bf16.mxu0 %v8997
        %9192 = vmatpush2.bf16.msra.mxu0 %v8996
        %9193 = vmatprep.subr.bf16.mxu0 %v8993
        %9194 = vmatpush2.bf16.msra.mxu0 %v8992
        %9195 = vmatprep.subr.bf16.mxu0 %v8989
        %9196 = vmatpush2.bf16.msra.mxu0 %v8988
        %9197 = vmatprep.subr.bf16.mxu0 %v8985
        %9198 = vmatpush2.bf16.msra.mxu0 %v8984
        %9199 = vmatprep.subr.bf16.mxu0 %v8981
        %9200 = vmatpush2.bf16.msra.mxu0 %v8980
        %9201 = vmatprep.subr.bf16.mxu0 %v8977
        %9202 = vmatpush2.bf16.msra.mxu0 %v8976
        %9203 = vmatprep.subr.bf16.mxu0 %v8973
        %9204 = vmatpush2.bf16.msra.mxu0 %v8972
        %9205 = vmatprep.mubr.bf16.mxu0 %v8339
        %9206 = vmatmul.mubr.bf16.gmra.mxu0 %v8338
        %v9207 = vpop.f32.mrf.mxu0
        %v9208 = vadd.f32 %v9167, %v9207
        %v9209 = vpop.f32.mrf.mxu0
        %v9210 = vadd.f32 %v9169, %v9209
        %v9211 = vpop.f32.mrf.mxu0
        %v9212 = vpop.f32.mrf.mxu0
        %9213 = vdwg.mxu0
        %9214 = vmatprep.subr.bf16.mxu0 %v8907
        %9215 = vmatpush1.bf16.msra.mxu0 %v8906
        %9216 = vmatprep.subr.bf16.mxu0 %v8903
        %9217 = vmatpush1.bf16.msra.mxu0 %v8902
        %9218 = vmatprep.subr.bf16.mxu0 %v8899
        %9219 = vmatpush1.bf16.msra.mxu0 %v8898
        %9220 = vmatprep.subr.bf16.mxu0 %v8895
        %9221 = vmatpush1.bf16.msra.mxu0 %v8894
        %9222 = vmatprep.subr.bf16.mxu0 %v8891
        %9223 = vmatpush1.bf16.msra.mxu0 %v8890
        %9224 = vmatprep.subr.bf16.mxu0 %v8887
        %9225 = vmatpush1.bf16.msra.mxu0 %v8886
        %9226 = vmatprep.subr.bf16.mxu0 %v8883
        %9227 = vmatpush1.bf16.msra.mxu0 %v8882
        %9228 = vmatprep.subr.bf16.mxu0 %v8879
        %9229 = vmatpush1.bf16.msra.mxu0 %v8878
        %9230 = vmatprep.subr.bf16.mxu0 %v8939
        %9231 = vmatpush2.bf16.msra.mxu0 %v8938
        %9232 = vmatprep.subr.bf16.mxu0 %v8935
        %9233 = vmatpush2.bf16.msra.mxu0 %v8934
        %9234 = vmatprep.subr.bf16.mxu0 %v8931
        %9235 = vmatpush2.bf16.msra.mxu0 %v8930
        %9236 = vmatprep.subr.bf16.mxu0 %v8927
        %9237 = vmatpush2.bf16.msra.mxu0 %v8926
        %9238 = vmatprep.subr.bf16.mxu0 %v8923
        %9239 = vmatpush2.bf16.msra.mxu0 %v8922
        %9240 = vmatprep.subr.bf16.mxu0 %v8919
        %9241 = vmatpush2.bf16.msra.mxu0 %v8918
        %9242 = vmatprep.subr.bf16.mxu0 %v8915
        %9243 = vmatpush2.bf16.msra.mxu0 %v8914
        %9244 = vmatprep.subr.bf16.mxu0 %v8911
        %9245 = vmatpush2.bf16.msra.mxu0 %v8910
        %9246 = vmatprep.mubr.bf16.mxu0 %v8337
        %9247 = vmatmul.mubr.bf16.gmra.mxu0 %v8336
        %v9248 = vpop.f32.mrf.mxu0
        %v9249 = vadd.f32 %v8483, %v9248
        %v9250 = vpop.f32.mrf.mxu0
        %v9251 = vadd.f32 %v8487, %v9250
        %v9252 = vpop.f32.mrf.mxu0
        %v9253 = vpop.f32.mrf.mxu0
        %9254 = vdwg.mxu0
        %9255 = vmatprep.subr.bf16.mxu0 %v8971
        %9256 = vmatpush1.bf16.msra.mxu0 %v8970
        %9257 = vmatprep.subr.bf16.mxu0 %v8967
        %9258 = vmatpush1.bf16.msra.mxu0 %v8966
        %9259 = vmatprep.subr.bf16.mxu0 %v8963
        %9260 = vmatpush1.bf16.msra.mxu0 %v8962
        %9261 = vmatprep.subr.bf16.mxu0 %v8959
        %9262 = vmatpush1.bf16.msra.mxu0 %v8958
        %9263 = vmatprep.subr.bf16.mxu0 %v8955
        %9264 = vmatpush1.bf16.msra.mxu0 %v8954
        %9265 = vmatprep.subr.bf16.mxu0 %v8951
        %9266 = vmatpush1.bf16.msra.mxu0 %v8950
        %9267 = vmatprep.subr.bf16.mxu0 %v8947
        %9268 = vmatpush1.bf16.msra.mxu0 %v8946
        %9269 = vmatprep.subr.bf16.mxu0 %v8943
        %9270 = vmatpush1.bf16.msra.mxu0 %v8942
        %9271 = vmatprep.subr.bf16.mxu0 %v9003
        %9272 = vmatpush2.bf16.msra.mxu0 %v9002
        %9273 = vmatprep.subr.bf16.mxu0 %v8999
        %9274 = vmatpush2.bf16.msra.mxu0 %v8998
        %9275 = vmatprep.subr.bf16.mxu0 %v8995
        %9276 = vmatpush2.bf16.msra.mxu0 %v8994
        %9277 = vmatprep.subr.bf16.mxu0 %v8991
        %9278 = vmatpush2.bf16.msra.mxu0 %v8990
        %9279 = vmatprep.subr.bf16.mxu0 %v8987
        %9280 = vmatpush2.bf16.msra.mxu0 %v8986
        %9281 = vmatprep.subr.bf16.mxu0 %v8983
        %9282 = vmatpush2.bf16.msra.mxu0 %v8982
        %9283 = vmatprep.subr.bf16.mxu0 %v8979
        %9284 = vmatpush2.bf16.msra.mxu0 %v8978
        %9285 = vmatprep.subr.bf16.mxu0 %v8975
        %9286 = vmatpush2.bf16.msra.mxu0 %v8974
        %9287 = vmatprep.mubr.bf16.mxu0 %v8339
        %9288 = vmatmul.mubr.bf16.gmra.mxu0 %v8338
        %v9289 = vpop.f32.mrf.mxu0
        %v9290 = vadd.f32 %v9249, %v9289
        %v9291 = vpop.f32.mrf.mxu0
        %v9292 = vadd.f32 %v9251, %v9291
        %v9293 = vpop.f32.mrf.mxu0
        %v9294 = vpop.f32.mrf.mxu0
        %9295 = vdwg.mxu0
        %v9296 = vtanh.pop %v9208
        %v9297 = vtanh.pop %v9210
        %v9298 = vtanh.pop %v9290
        %v9299 = vtanh.pop %v9292
        %v9300 = vpack.c.bf16 %v9296, %v9296
        %v9301 = vpack.c.bf16 %v9297, %v9297
        %v9302 = vpack.c.bf16 %v9298, %v9298
        %v9303 = vpack.c.bf16 %v9299, %v9299
        %s9304 = scalar_lea.vmem %s384, 9216 [#allocation8]
        %v9305 = vld [vmem:[%s9304] sm:$0xff]
        %v9306 = vld [vmem:[%s9304 + $0x8] sm:$0xff]
        %v9307 = vld [vmem:[%s9304 + $0x10] sm:$0xff]
        %v9308 = vld [vmem:[%s9304 + $0x18] sm:$0xff]
        %v9309 = vld [vmem:[%s9304 + $0x20] sm:$0xff]
        %v9310 = vld [vmem:[%s9304 + $0x28] sm:$0xff]
        %v9311 = vld [vmem:[%s9304 + $0x30] sm:$0xff]
        %v9312 = vld [vmem:[%s9304 + $0x38] sm:$0xff]
        %v9313 = vld [vmem:[%s9304 + $0x40] sm:$0xff]
        %v9314 = vld [vmem:[%s9304 + $0x48] sm:$0xff]
        %v9315 = vld [vmem:[%s9304 + $0x50] sm:$0xff]
        %v9316 = vld [vmem:[%s9304 + $0x58] sm:$0xff]
        %v9317 = vld [vmem:[%s9304 + $0x60] sm:$0xff]
        %v9318 = vld [vmem:[%s9304 + $0x68] sm:$0xff]
        %v9319 = vld [vmem:[%s9304 + $0x70] sm:$0xff]
        %v9320 = vld [vmem:[%s9304 + $0x78] sm:$0xff]
        %v9321 = vld [vmem:[%s9304 + $0x80] sm:$0xff]
        %v9322 = vld [vmem:[%s9304 + $0x88] sm:$0xff]
        %v9323 = vld [vmem:[%s9304 + $0x90] sm:$0xff]
        %v9324 = vld [vmem:[%s9304 + $0x98] sm:$0xff]
        %v9325 = vld [vmem:[%s9304 + $0xa0] sm:$0xff]
        %v9326 = vld [vmem:[%s9304 + $0xa8] sm:$0xff]
        %v9327 = vld [vmem:[%s9304 + $0xb0] sm:$0xff]
        %v9328 = vld [vmem:[%s9304 + $0xb8] sm:$0xff]
        %v9329 = vld [vmem:[%s9304 + $0xc0] sm:$0xff]
        %v9330 = vld [vmem:[%s9304 + $0xc8] sm:$0xff]
        %v9331 = vld [vmem:[%s9304 + $0xd0] sm:$0xff]
        %v9332 = vld [vmem:[%s9304 + $0xd8] sm:$0xff]
        %v9333 = vld [vmem:[%s9304 + $0xe0] sm:$0xff]
        %v9334 = vld [vmem:[%s9304 + $0xe8] sm:$0xff]
        %v9335 = vld [vmem:[%s9304 + $0xf0] sm:$0xff]
        %v9336 = vld [vmem:[%s9304 + $0xf8] sm:$0xff]
        %v9337 = vld [vmem:[%s9304 + $0x100] sm:$0xff]
        %v9338 = vld [vmem:[%s9304 + $0x108] sm:$0xff]
        %v9339 = vld [vmem:[%s9304 + $0x110] sm:$0xff]
        %v9340 = vld [vmem:[%s9304 + $0x118] sm:$0xff]
        %v9341 = vld [vmem:[%s9304 + $0x120] sm:$0xff]
        %v9342 = vld [vmem:[%s9304 + $0x128] sm:$0xff]
        %v9343 = vld [vmem:[%s9304 + $0x130] sm:$0xff]
        %v9344 = vld [vmem:[%s9304 + $0x138] sm:$0xff]
        %v9345 = vld [vmem:[%s9304 + $0x140] sm:$0xff]
        %v9346 = vld [vmem:[%s9304 + $0x148] sm:$0xff]
        %v9347 = vld [vmem:[%s9304 + $0x150] sm:$0xff]
        %v9348 = vld [vmem:[%s9304 + $0x158] sm:$0xff]
        %v9349 = vld [vmem:[%s9304 + $0x160] sm:$0xff]
        %v9350 = vld [vmem:[%s9304 + $0x168] sm:$0xff]
        %v9351 = vld [vmem:[%s9304 + $0x170] sm:$0xff]
        %v9352 = vld [vmem:[%s9304 + $0x178] sm:$0xff]
        %v9353 = vld [vmem:[%s9304 + $0x180] sm:$0xff]
        %v9354 = vld [vmem:[%s9304 + $0x188] sm:$0xff]
        %v9355 = vld [vmem:[%s9304 + $0x190] sm:$0xff]
        %v9356 = vld [vmem:[%s9304 + $0x198] sm:$0xff]
        %v9357 = vld [vmem:[%s9304 + $0x1a0] sm:$0xff]
        %v9358 = vld [vmem:[%s9304 + $0x1a8] sm:$0xff]
        %v9359 = vld [vmem:[%s9304 + $0x1b0] sm:$0xff]
        %v9360 = vld [vmem:[%s9304 + $0x1b8] sm:$0xff]
        %v9361 = vld [vmem:[%s9304 + $0x1c0] sm:$0xff]
        %v9362 = vld [vmem:[%s9304 + $0x1c8] sm:$0xff]
        %v9363 = vld [vmem:[%s9304 + $0x1d0] sm:$0xff]
        %v9364 = vld [vmem:[%s9304 + $0x1d8] sm:$0xff]
        %v9365 = vld [vmem:[%s9304 + $0x1e0] sm:$0xff]
        %v9366 = vld [vmem:[%s9304 + $0x1e8] sm:$0xff]
        %v9367 = vld [vmem:[%s9304 + $0x1f0] sm:$0xff]
        %v9368 = vld [vmem:[%s9304 + $0x1f8] sm:$0xff]
        %v9369 = vld [vmem:[%s9304 + $0x200] sm:$0xff]
        %v9370 = vld [vmem:[%s9304 + $0x208] sm:$0xff]
        %v9371 = vld [vmem:[%s9304 + $0x210] sm:$0xff]
        %v9372 = vld [vmem:[%s9304 + $0x218] sm:$0xff]
        %v9373 = vld [vmem:[%s9304 + $0x220] sm:$0xff]
        %v9374 = vld [vmem:[%s9304 + $0x228] sm:$0xff]
        %v9375 = vld [vmem:[%s9304 + $0x230] sm:$0xff]
        %v9376 = vld [vmem:[%s9304 + $0x238] sm:$0xff]
        %v9377 = vld [vmem:[%s9304 + $0x240] sm:$0xff]
        %v9378 = vld [vmem:[%s9304 + $0x248] sm:$0xff]
        %v9379 = vld [vmem:[%s9304 + $0x250] sm:$0xff]
        %v9380 = vld [vmem:[%s9304 + $0x258] sm:$0xff]
        %v9381 = vld [vmem:[%s9304 + $0x260] sm:$0xff]
        %v9382 = vld [vmem:[%s9304 + $0x268] sm:$0xff]
        %v9383 = vld [vmem:[%s9304 + $0x270] sm:$0xff]
        %v9384 = vld [vmem:[%s9304 + $0x278] sm:$0xff]
        %v9385 = vld [vmem:[%s9304 + $0x280] sm:$0xff]
        %v9386 = vld [vmem:[%s9304 + $0x288] sm:$0xff]
        %v9387 = vld [vmem:[%s9304 + $0x290] sm:$0xff]
        %v9388 = vld [vmem:[%s9304 + $0x298] sm:$0xff]
        %v9389 = vld [vmem:[%s9304 + $0x2a0] sm:$0xff]
        %v9390 = vld [vmem:[%s9304 + $0x2a8] sm:$0xff]
        %v9391 = vld [vmem:[%s9304 + $0x2b0] sm:$0xff]
        %v9392 = vld [vmem:[%s9304 + $0x2b8] sm:$0xff]
        %v9393 = vld [vmem:[%s9304 + $0x2c0] sm:$0xff]
        %v9394 = vld [vmem:[%s9304 + $0x2c8] sm:$0xff]
        %v9395 = vld [vmem:[%s9304 + $0x2d0] sm:$0xff]
        %v9396 = vld [vmem:[%s9304 + $0x2d8] sm:$0xff]
        %v9397 = vld [vmem:[%s9304 + $0x2e0] sm:$0xff]
        %v9398 = vld [vmem:[%s9304 + $0x2e8] sm:$0xff]
        %v9399 = vld [vmem:[%s9304 + $0x2f0] sm:$0xff]
        %v9400 = vld [vmem:[%s9304 + $0x2f8] sm:$0xff]
        %v9401 = vld [vmem:[%s9304 + $0x300] sm:$0xff]
        %v9402 = vld [vmem:[%s9304 + $0x308] sm:$0xff]
        %v9403 = vld [vmem:[%s9304 + $0x310] sm:$0xff]
        %v9404 = vld [vmem:[%s9304 + $0x318] sm:$0xff]
        %v9405 = vld [vmem:[%s9304 + $0x320] sm:$0xff]
        %v9406 = vld [vmem:[%s9304 + $0x328] sm:$0xff]
        %v9407 = vld [vmem:[%s9304 + $0x330] sm:$0xff]
        %v9408 = vld [vmem:[%s9304 + $0x338] sm:$0xff]
        %v9409 = vld [vmem:[%s9304 + $0x340] sm:$0xff]
        %v9410 = vld [vmem:[%s9304 + $0x348] sm:$0xff]
        %v9411 = vld [vmem:[%s9304 + $0x350] sm:$0xff]
        %v9412 = vld [vmem:[%s9304 + $0x358] sm:$0xff]
        %v9413 = vld [vmem:[%s9304 + $0x360] sm:$0xff]
        %v9414 = vld [vmem:[%s9304 + $0x368] sm:$0xff]
        %v9415 = vld [vmem:[%s9304 + $0x370] sm:$0xff]
        %v9416 = vld [vmem:[%s9304 + $0x378] sm:$0xff]
        %v9417 = vld [vmem:[%s9304 + $0x380] sm:$0xff]
        %v9418 = vld [vmem:[%s9304 + $0x388] sm:$0xff]
        %v9419 = vld [vmem:[%s9304 + $0x390] sm:$0xff]
        %v9420 = vld [vmem:[%s9304 + $0x398] sm:$0xff]
        %v9421 = vld [vmem:[%s9304 + $0x3a0] sm:$0xff]
        %v9422 = vld [vmem:[%s9304 + $0x3a8] sm:$0xff]
        %v9423 = vld [vmem:[%s9304 + $0x3b0] sm:$0xff]
        %v9424 = vld [vmem:[%s9304 + $0x3b8] sm:$0xff]
        %v9425 = vld [vmem:[%s9304 + $0x3c0] sm:$0xff]
        %v9426 = vld [vmem:[%s9304 + $0x3c8] sm:$0xff]
        %v9427 = vld [vmem:[%s9304 + $0x3d0] sm:$0xff]
        %v9428 = vld [vmem:[%s9304 + $0x3d8] sm:$0xff]
        %v9429 = vld [vmem:[%s9304 + $0x3e0] sm:$0xff]
        %v9430 = vld [vmem:[%s9304 + $0x3e8] sm:$0xff]
        %v9431 = vld [vmem:[%s9304 + $0x3f0] sm:$0xff]
        %v9432 = vld [vmem:[%s9304 + $0x3f8] sm:$0xff]
        %s9433 = scalar_lea.vmem %s436, 33
        %v9434 = vld [vmem:[%s9433] ss:$8 sm:$0xf]
        %v9436 = vlaneseq
        %v9437 = vshrl.u32 %v9436, 7
        %v9438 = vsub.s32 0, %v9437
        %v9439 = vrot.slane %v9434, %v9438
        %v9440 = vlaneseq
        %v9441 = vshrl.u32 %v9440, 7
        %v9442 = vsub.s32 1, %v9441
        %v9443 = vrot.slane %v9434, %v9442
        %v9444 = vlaneseq
        %v9445 = vshrl.u32 %v9444, 7
        %v9446 = vsub.s32 2, %v9445
        %v9447 = vrot.slane %v9434, %v9446
        %v9448 = vlaneseq
        %v9449 = vshrl.u32 %v9448, 7
        %v9450 = vsub.s32 3, %v9449
        %v9451 = vrot.slane %v9434, %v9450
        %v9584 = vunpack.c.l.b16 %v9305
        %v9585 = vunpack.c.h.b16 %v9305
        %v9586 = vunpack.c.l.b16 %v9306
        %v9587 = vunpack.c.h.b16 %v9306
        %v9588 = vunpack.c.l.b16 %v9307
        %v9589 = vunpack.c.h.b16 %v9307
        %v9590 = vunpack.c.l.b16 %v9308
        %v9591 = vunpack.c.h.b16 %v9308
        %v9592 = vunpack.c.l.b16 %v9309
        %v9593 = vunpack.c.h.b16 %v9309
        %v9594 = vunpack.c.l.b16 %v9310
        %v9595 = vunpack.c.h.b16 %v9310
        %v9596 = vunpack.c.l.b16 %v9311
        %v9597 = vunpack.c.h.b16 %v9311
        %v9598 = vunpack.c.l.b16 %v9312
        %v9599 = vunpack.c.h.b16 %v9312
        %v9600 = vunpack.c.l.b16 %v9313
        %v9601 = vunpack.c.h.b16 %v9313
        %v9602 = vunpack.c.l.b16 %v9314
        %v9603 = vunpack.c.h.b16 %v9314
        %v9604 = vunpack.c.l.b16 %v9315
        %v9605 = vunpack.c.h.b16 %v9315
        %v9606 = vunpack.c.l.b16 %v9316
        %v9607 = vunpack.c.h.b16 %v9316
        %v9608 = vunpack.c.l.b16 %v9317
        %v9609 = vunpack.c.h.b16 %v9317
        %v9610 = vunpack.c.l.b16 %v9318
        %v9611 = vunpack.c.h.b16 %v9318
        %v9612 = vunpack.c.l.b16 %v9319
        %v9613 = vunpack.c.h.b16 %v9319
        %v9614 = vunpack.c.l.b16 %v9320
        %v9615 = vunpack.c.h.b16 %v9320
        %v9616 = vunpack.c.l.b16 %v9321
        %v9617 = vunpack.c.h.b16 %v9321
        %v9618 = vunpack.c.l.b16 %v9322
        %v9619 = vunpack.c.h.b16 %v9322
        %v9620 = vunpack.c.l.b16 %v9323
        %v9621 = vunpack.c.h.b16 %v9323
        %v9622 = vunpack.c.l.b16 %v9324
        %v9623 = vunpack.c.h.b16 %v9324
        %v9624 = vunpack.c.l.b16 %v9325
        %v9625 = vunpack.c.h.b16 %v9325
        %v9626 = vunpack.c.l.b16 %v9326
        %v9627 = vunpack.c.h.b16 %v9326
        %v9628 = vunpack.c.l.b16 %v9327
        %v9629 = vunpack.c.h.b16 %v9327
        %v9630 = vunpack.c.l.b16 %v9328
        %v9631 = vunpack.c.h.b16 %v9328
        %v9632 = vunpack.c.l.b16 %v9329
        %v9633 = vunpack.c.h.b16 %v9329
        %v9634 = vunpack.c.l.b16 %v9330
        %v9635 = vunpack.c.h.b16 %v9330
        %v9636 = vunpack.c.l.b16 %v9331
        %v9637 = vunpack.c.h.b16 %v9331
        %v9638 = vunpack.c.l.b16 %v9332
        %v9639 = vunpack.c.h.b16 %v9332
        %v9640 = vunpack.c.l.b16 %v9333
        %v9641 = vunpack.c.h.b16 %v9333
        %v9642 = vunpack.c.l.b16 %v9334
        %v9643 = vunpack.c.h.b16 %v9334
        %v9644 = vunpack.c.l.b16 %v9335
        %v9645 = vunpack.c.h.b16 %v9335
        %v9646 = vunpack.c.l.b16 %v9336
        %v9647 = vunpack.c.h.b16 %v9336
        %v9648 = vunpack.c.l.b16 %v9337
        %v9649 = vunpack.c.h.b16 %v9337
        %v9650 = vunpack.c.l.b16 %v9338
        %v9651 = vunpack.c.h.b16 %v9338
        %v9652 = vunpack.c.l.b16 %v9339
        %v9653 = vunpack.c.h.b16 %v9339
        %v9654 = vunpack.c.l.b16 %v9340
        %v9655 = vunpack.c.h.b16 %v9340
        %v9656 = vunpack.c.l.b16 %v9341
        %v9657 = vunpack.c.h.b16 %v9341
        %v9658 = vunpack.c.l.b16 %v9342
        %v9659 = vunpack.c.h.b16 %v9342
        %v9660 = vunpack.c.l.b16 %v9343
        %v9661 = vunpack.c.h.b16 %v9343
        %v9662 = vunpack.c.l.b16 %v9344
        %v9663 = vunpack.c.h.b16 %v9344
        %v9664 = vunpack.c.l.b16 %v9345
        %v9665 = vunpack.c.h.b16 %v9345
        %v9666 = vunpack.c.l.b16 %v9346
        %v9667 = vunpack.c.h.b16 %v9346
        %v9668 = vunpack.c.l.b16 %v9347
        %v9669 = vunpack.c.h.b16 %v9347
        %v9670 = vunpack.c.l.b16 %v9348
        %v9671 = vunpack.c.h.b16 %v9348
        %v9672 = vunpack.c.l.b16 %v9349
        %v9673 = vunpack.c.h.b16 %v9349
        %v9674 = vunpack.c.l.b16 %v9350
        %v9675 = vunpack.c.h.b16 %v9350
        %v9676 = vunpack.c.l.b16 %v9351
        %v9677 = vunpack.c.h.b16 %v9351
        %v9678 = vunpack.c.l.b16 %v9352
        %v9679 = vunpack.c.h.b16 %v9352
        %v9680 = vunpack.c.l.b16 %v9353
        %v9681 = vunpack.c.h.b16 %v9353
        %v9682 = vunpack.c.l.b16 %v9354
        %v9683 = vunpack.c.h.b16 %v9354
        %v9684 = vunpack.c.l.b16 %v9355
        %v9685 = vunpack.c.h.b16 %v9355
        %v9686 = vunpack.c.l.b16 %v9356
        %v9687 = vunpack.c.h.b16 %v9356
        %v9688 = vunpack.c.l.b16 %v9357
        %v9689 = vunpack.c.h.b16 %v9357
        %v9690 = vunpack.c.l.b16 %v9358
        %v9691 = vunpack.c.h.b16 %v9358
        %v9692 = vunpack.c.l.b16 %v9359
        %v9693 = vunpack.c.h.b16 %v9359
        %v9694 = vunpack.c.l.b16 %v9360
        %v9695 = vunpack.c.h.b16 %v9360
        %v9696 = vunpack.c.l.b16 %v9361
        %v9697 = vunpack.c.h.b16 %v9361
        %v9698 = vunpack.c.l.b16 %v9362
        %v9699 = vunpack.c.h.b16 %v9362
        %v9700 = vunpack.c.l.b16 %v9363
        %v9701 = vunpack.c.h.b16 %v9363
        %v9702 = vunpack.c.l.b16 %v9364
        %v9703 = vunpack.c.h.b16 %v9364
        %v9704 = vunpack.c.l.b16 %v9365
        %v9705 = vunpack.c.h.b16 %v9365
        %v9706 = vunpack.c.l.b16 %v9366
        %v9707 = vunpack.c.h.b16 %v9366
        %v9708 = vunpack.c.l.b16 %v9367
        %v9709 = vunpack.c.h.b16 %v9367
        %v9710 = vunpack.c.l.b16 %v9368
        %v9711 = vunpack.c.h.b16 %v9368
        %v9712 = vunpack.c.l.b16 %v9369
        %v9713 = vunpack.c.h.b16 %v9369
        %v9714 = vunpack.c.l.b16 %v9370
        %v9715 = vunpack.c.h.b16 %v9370
        %v9716 = vunpack.c.l.b16 %v9371
        %v9717 = vunpack.c.h.b16 %v9371
        %v9718 = vunpack.c.l.b16 %v9372
        %v9719 = vunpack.c.h.b16 %v9372
        %v9720 = vunpack.c.l.b16 %v9373
        %v9721 = vunpack.c.h.b16 %v9373
        %v9722 = vunpack.c.l.b16 %v9374
        %v9723 = vunpack.c.h.b16 %v9374
        %v9724 = vunpack.c.l.b16 %v9375
        %v9725 = vunpack.c.h.b16 %v9375
        %v9726 = vunpack.c.l.b16 %v9376
        %v9727 = vunpack.c.h.b16 %v9376
        %v9728 = vunpack.c.l.b16 %v9377
        %v9729 = vunpack.c.h.b16 %v9377
        %v9730 = vunpack.c.l.b16 %v9378
        %v9731 = vunpack.c.h.b16 %v9378
        %v9732 = vunpack.c.l.b16 %v9379
        %v9733 = vunpack.c.h.b16 %v9379
        %v9734 = vunpack.c.l.b16 %v9380
        %v9735 = vunpack.c.h.b16 %v9380
        %v9736 = vunpack.c.l.b16 %v9381
        %v9737 = vunpack.c.h.b16 %v9381
        %v9738 = vunpack.c.l.b16 %v9382
        %v9739 = vunpack.c.h.b16 %v9382
        %v9740 = vunpack.c.l.b16 %v9383
        %v9741 = vunpack.c.h.b16 %v9383
        %v9742 = vunpack.c.l.b16 %v9384
        %v9743 = vunpack.c.h.b16 %v9384
        %v9744 = vunpack.c.l.b16 %v9385
        %v9745 = vunpack.c.h.b16 %v9385
        %v9746 = vunpack.c.l.b16 %v9386
        %v9747 = vunpack.c.h.b16 %v9386
        %v9748 = vunpack.c.l.b16 %v9387
        %v9749 = vunpack.c.h.b16 %v9387
        %v9750 = vunpack.c.l.b16 %v9388
        %v9751 = vunpack.c.h.b16 %v9388
        %v9752 = vunpack.c.l.b16 %v9389
        %v9753 = vunpack.c.h.b16 %v9389
        %v9754 = vunpack.c.l.b16 %v9390
        %v9755 = vunpack.c.h.b16 %v9390
        %v9756 = vunpack.c.l.b16 %v9391
        %v9757 = vunpack.c.h.b16 %v9391
        %v9758 = vunpack.c.l.b16 %v9392
        %v9759 = vunpack.c.h.b16 %v9392
        %v9760 = vunpack.c.l.b16 %v9393
        %v9761 = vunpack.c.h.b16 %v9393
        %v9762 = vunpack.c.l.b16 %v9394
        %v9763 = vunpack.c.h.b16 %v9394
        %v9764 = vunpack.c.l.b16 %v9395
        %v9765 = vunpack.c.h.b16 %v9395
        %v9766 = vunpack.c.l.b16 %v9396
        %v9767 = vunpack.c.h.b16 %v9396
        %v9768 = vunpack.c.l.b16 %v9397
        %v9769 = vunpack.c.h.b16 %v9397
        %v9770 = vunpack.c.l.b16 %v9398
        %v9771 = vunpack.c.h.b16 %v9398
        %v9772 = vunpack.c.l.b16 %v9399
        %v9773 = vunpack.c.h.b16 %v9399
        %v9774 = vunpack.c.l.b16 %v9400
        %v9775 = vunpack.c.h.b16 %v9400
        %v9776 = vunpack.c.l.b16 %v9401
        %v9777 = vunpack.c.h.b16 %v9401
        %v9778 = vunpack.c.l.b16 %v9402
        %v9779 = vunpack.c.h.b16 %v9402
        %v9780 = vunpack.c.l.b16 %v9403
        %v9781 = vunpack.c.h.b16 %v9403
        %v9782 = vunpack.c.l.b16 %v9404
        %v9783 = vunpack.c.h.b16 %v9404
        %v9784 = vunpack.c.l.b16 %v9405
        %v9785 = vunpack.c.h.b16 %v9405
        %v9786 = vunpack.c.l.b16 %v9406
        %v9787 = vunpack.c.h.b16 %v9406
        %v9788 = vunpack.c.l.b16 %v9407
        %v9789 = vunpack.c.h.b16 %v9407
        %v9790 = vunpack.c.l.b16 %v9408
        %v9791 = vunpack.c.h.b16 %v9408
        %v9792 = vunpack.c.l.b16 %v9409
        %v9793 = vunpack.c.h.b16 %v9409
        %v9794 = vunpack.c.l.b16 %v9410
        %v9795 = vunpack.c.h.b16 %v9410
        %v9796 = vunpack.c.l.b16 %v9411
        %v9797 = vunpack.c.h.b16 %v9411
        %v9798 = vunpack.c.l.b16 %v9412
        %v9799 = vunpack.c.h.b16 %v9412
        %v9800 = vunpack.c.l.b16 %v9413
        %v9801 = vunpack.c.h.b16 %v9413
        %v9802 = vunpack.c.l.b16 %v9414
        %v9803 = vunpack.c.h.b16 %v9414
        %v9804 = vunpack.c.l.b16 %v9415
        %v9805 = vunpack.c.h.b16 %v9415
        %v9806 = vunpack.c.l.b16 %v9416
        %v9807 = vunpack.c.h.b16 %v9416
        %v9808 = vunpack.c.l.b16 %v9417
        %v9809 = vunpack.c.h.b16 %v9417
        %v9810 = vunpack.c.l.b16 %v9418
        %v9811 = vunpack.c.h.b16 %v9418
        %v9812 = vunpack.c.l.b16 %v9419
        %v9813 = vunpack.c.h.b16 %v9419
        %v9814 = vunpack.c.l.b16 %v9420
        %v9815 = vunpack.c.h.b16 %v9420
        %v9816 = vunpack.c.l.b16 %v9421
        %v9817 = vunpack.c.h.b16 %v9421
        %v9818 = vunpack.c.l.b16 %v9422
        %v9819 = vunpack.c.h.b16 %v9422
        %v9820 = vunpack.c.l.b16 %v9423
        %v9821 = vunpack.c.h.b16 %v9423
        %v9822 = vunpack.c.l.b16 %v9424
        %v9823 = vunpack.c.h.b16 %v9424
        %v9824 = vunpack.c.l.b16 %v9425
        %v9825 = vunpack.c.h.b16 %v9425
        %v9826 = vunpack.c.l.b16 %v9426
        %v9827 = vunpack.c.h.b16 %v9426
        %v9828 = vunpack.c.l.b16 %v9427
        %v9829 = vunpack.c.h.b16 %v9427
        %v9830 = vunpack.c.l.b16 %v9428
        %v9831 = vunpack.c.h.b16 %v9428
        %v9832 = vunpack.c.l.b16 %v9429
        %v9833 = vunpack.c.h.b16 %v9429
        %v9834 = vunpack.c.l.b16 %v9430
        %v9835 = vunpack.c.h.b16 %v9430
        %v9836 = vunpack.c.l.b16 %v9431
        %v9837 = vunpack.c.h.b16 %v9431
        %v9838 = vunpack.c.l.b16 %v9432
        %v9839 = vunpack.c.h.b16 %v9432
        %v9840 = vpack.c.b16 %v9588, %v9584
        %v9841 = vpack.c.b16 %v9589, %v9585
        %v9842 = vpack.c.b16 %v9590, %v9586
        %v9843 = vpack.c.b16 %v9591, %v9587
        %v9844 = vpack.c.b16 %v9596, %v9592
        %v9845 = vpack.c.b16 %v9597, %v9593
        %v9846 = vpack.c.b16 %v9598, %v9594
        %v9847 = vpack.c.b16 %v9599, %v9595
        %v9848 = vpack.c.b16 %v9604, %v9600
        %v9849 = vpack.c.b16 %v9605, %v9601
        %v9850 = vpack.c.b16 %v9606, %v9602
        %v9851 = vpack.c.b16 %v9607, %v9603
        %v9852 = vpack.c.b16 %v9612, %v9608
        %v9853 = vpack.c.b16 %v9613, %v9609
        %v9854 = vpack.c.b16 %v9614, %v9610
        %v9855 = vpack.c.b16 %v9615, %v9611
        %v9856 = vpack.c.b16 %v9620, %v9616
        %v9857 = vpack.c.b16 %v9621, %v9617
        %v9858 = vpack.c.b16 %v9622, %v9618
        %v9859 = vpack.c.b16 %v9623, %v9619
        %v9860 = vpack.c.b16 %v9628, %v9624
        %v9861 = vpack.c.b16 %v9629, %v9625
        %v9862 = vpack.c.b16 %v9630, %v9626
        %v9863 = vpack.c.b16 %v9631, %v9627
        %v9864 = vpack.c.b16 %v9636, %v9632
        %v9865 = vpack.c.b16 %v9637, %v9633
        %v9866 = vpack.c.b16 %v9638, %v9634
        %v9867 = vpack.c.b16 %v9639, %v9635
        %v9868 = vpack.c.b16 %v9644, %v9640
        %v9869 = vpack.c.b16 %v9645, %v9641
        %v9870 = vpack.c.b16 %v9646, %v9642
        %v9871 = vpack.c.b16 %v9647, %v9643
        %v9872 = vpack.c.b16 %v9652, %v9648
        %v9873 = vpack.c.b16 %v9653, %v9649
        %v9874 = vpack.c.b16 %v9654, %v9650
        %v9875 = vpack.c.b16 %v9655, %v9651
        %v9876 = vpack.c.b16 %v9660, %v9656
        %v9877 = vpack.c.b16 %v9661, %v9657
        %v9878 = vpack.c.b16 %v9662, %v9658
        %v9879 = vpack.c.b16 %v9663, %v9659
        %v9880 = vpack.c.b16 %v9668, %v9664
        %v9881 = vpack.c.b16 %v9669, %v9665
        %v9882 = vpack.c.b16 %v9670, %v9666
        %v9883 = vpack.c.b16 %v9671, %v9667
        %v9884 = vpack.c.b16 %v9676, %v9672
        %v9885 = vpack.c.b16 %v9677, %v9673
        %v9886 = vpack.c.b16 %v9678, %v9674
        %v9887 = vpack.c.b16 %v9679, %v9675
        %v9888 = vpack.c.b16 %v9684, %v9680
        %v9889 = vpack.c.b16 %v9685, %v9681
        %v9890 = vpack.c.b16 %v9686, %v9682
        %v9891 = vpack.c.b16 %v9687, %v9683
        %v9892 = vpack.c.b16 %v9692, %v9688
        %v9893 = vpack.c.b16 %v9693, %v9689
        %v9894 = vpack.c.b16 %v9694, %v9690
        %v9895 = vpack.c.b16 %v9695, %v9691
        %v9896 = vpack.c.b16 %v9700, %v9696
        %v9897 = vpack.c.b16 %v9701, %v9697
        %v9898 = vpack.c.b16 %v9702, %v9698
        %v9899 = vpack.c.b16 %v9703, %v9699
        %v9900 = vpack.c.b16 %v9708, %v9704
        %v9901 = vpack.c.b16 %v9709, %v9705
        %v9902 = vpack.c.b16 %v9710, %v9706
        %v9903 = vpack.c.b16 %v9711, %v9707
        %v9904 = vpack.c.b16 %v9716, %v9712
        %v9905 = vpack.c.b16 %v9717, %v9713
        %v9906 = vpack.c.b16 %v9718, %v9714
        %v9907 = vpack.c.b16 %v9719, %v9715
        %v9908 = vpack.c.b16 %v9724, %v9720
        %v9909 = vpack.c.b16 %v9725, %v9721
        %v9910 = vpack.c.b16 %v9726, %v9722
        %v9911 = vpack.c.b16 %v9727, %v9723
        %v9912 = vpack.c.b16 %v9732, %v9728
        %v9913 = vpack.c.b16 %v9733, %v9729
        %v9914 = vpack.c.b16 %v9734, %v9730
        %v9915 = vpack.c.b16 %v9735, %v9731
        %v9916 = vpack.c.b16 %v9740, %v9736
        %v9917 = vpack.c.b16 %v9741, %v9737
        %v9918 = vpack.c.b16 %v9742, %v9738
        %v9919 = vpack.c.b16 %v9743, %v9739
        %v9920 = vpack.c.b16 %v9748, %v9744
        %v9921 = vpack.c.b16 %v9749, %v9745
        %v9922 = vpack.c.b16 %v9750, %v9746
        %v9923 = vpack.c.b16 %v9751, %v9747
        %v9924 = vpack.c.b16 %v9756, %v9752
        %v9925 = vpack.c.b16 %v9757, %v9753
        %v9926 = vpack.c.b16 %v9758, %v9754
        %v9927 = vpack.c.b16 %v9759, %v9755
        %v9928 = vpack.c.b16 %v9764, %v9760
        %v9929 = vpack.c.b16 %v9765, %v9761
        %v9930 = vpack.c.b16 %v9766, %v9762
        %v9931 = vpack.c.b16 %v9767, %v9763
        %v9932 = vpack.c.b16 %v9772, %v9768
        %v9933 = vpack.c.b16 %v9773, %v9769
        %v9934 = vpack.c.b16 %v9774, %v9770
        %v9935 = vpack.c.b16 %v9775, %v9771
        %v9936 = vpack.c.b16 %v9780, %v9776
        %v9937 = vpack.c.b16 %v9781, %v9777
        %v9938 = vpack.c.b16 %v9782, %v9778
        %v9939 = vpack.c.b16 %v9783, %v9779
        %v9940 = vpack.c.b16 %v9788, %v9784
        %v9941 = vpack.c.b16 %v9789, %v9785
        %v9942 = vpack.c.b16 %v9790, %v9786
        %v9943 = vpack.c.b16 %v9791, %v9787
        %v9944 = vpack.c.b16 %v9796, %v9792
        %v9945 = vpack.c.b16 %v9797, %v9793
        %v9946 = vpack.c.b16 %v9798, %v9794
        %v9947 = vpack.c.b16 %v9799, %v9795
        %v9948 = vpack.c.b16 %v9804, %v9800
        %v9949 = vpack.c.b16 %v9805, %v9801
        %v9950 = vpack.c.b16 %v9806, %v9802
        %v9951 = vpack.c.b16 %v9807, %v9803
        %v9952 = vpack.c.b16 %v9812, %v9808
        %v9953 = vpack.c.b16 %v9813, %v9809
        %v9954 = vpack.c.b16 %v9814, %v9810
        %v9955 = vpack.c.b16 %v9815, %v9811
        %v9956 = vpack.c.b16 %v9820, %v9816
        %v9957 = vpack.c.b16 %v9821, %v9817
        %v9958 = vpack.c.b16 %v9822, %v9818
        %v9959 = vpack.c.b16 %v9823, %v9819
        %v9960 = vpack.c.b16 %v9828, %v9824
        %v9961 = vpack.c.b16 %v9829, %v9825
        %v9962 = vpack.c.b16 %v9830, %v9826
        %v9963 = vpack.c.b16 %v9831, %v9827
        %v9964 = vpack.c.b16 %v9836, %v9832
        %v9965 = vpack.c.b16 %v9837, %v9833
        %v9966 = vpack.c.b16 %v9838, %v9834
        %v9967 = vpack.c.b16 %v9839, %v9835
        %10096 = vmatprep.subr.bf16.mxu0 %v9869
        %10097 = vmatpush1.bf16.msra.mxu0 %v9868
        %10098 = vmatprep.subr.bf16.mxu0 %v9865
        %10099 = vmatpush1.bf16.msra.mxu0 %v9864
        %10100 = vmatprep.subr.bf16.mxu0 %v9861
        %10101 = vmatpush1.bf16.msra.mxu0 %v9860
        %10102 = vmatprep.subr.bf16.mxu0 %v9857
        %10103 = vmatpush1.bf16.msra.mxu0 %v9856
        %10104 = vmatprep.subr.bf16.mxu0 %v9853
        %10105 = vmatpush1.bf16.msra.mxu0 %v9852
        %10106 = vmatprep.subr.bf16.mxu0 %v9849
        %10107 = vmatpush1.bf16.msra.mxu0 %v9848
        %10108 = vmatprep.subr.bf16.mxu0 %v9845
        %10109 = vmatpush1.bf16.msra.mxu0 %v9844
        %10110 = vmatprep.subr.bf16.mxu0 %v9841
        %10111 = vmatpush1.bf16.msra.mxu0 %v9840
        %10112 = vmatprep.subr.bf16.mxu0 %v9901
        %10113 = vmatpush2.bf16.msra.mxu0 %v9900
        %10114 = vmatprep.subr.bf16.mxu0 %v9897
        %10115 = vmatpush2.bf16.msra.mxu0 %v9896
        %10116 = vmatprep.subr.bf16.mxu0 %v9893
        %10117 = vmatpush2.bf16.msra.mxu0 %v9892
        %10118 = vmatprep.subr.bf16.mxu0 %v9889
        %10119 = vmatpush2.bf16.msra.mxu0 %v9888
        %10120 = vmatprep.subr.bf16.mxu0 %v9885
        %10121 = vmatpush2.bf16.msra.mxu0 %v9884
        %10122 = vmatprep.subr.bf16.mxu0 %v9881
        %10123 = vmatpush2.bf16.msra.mxu0 %v9880
        %10124 = vmatprep.subr.bf16.mxu0 %v9877
        %10125 = vmatpush2.bf16.msra.mxu0 %v9876
        %10126 = vmatprep.subr.bf16.mxu0 %v9873
        %10127 = vmatpush2.bf16.msra.mxu0 %v9872
        %10128 = vmatprep.mubr.bf16.mxu0 %v9301
        %10129 = vmatmul.mubr.bf16.gmra.mxu0 %v9300
        %v10130 = vpop.f32.mrf.mxu0
        %v10131 = vadd.f32 %v9439, %v10130
        %v10132 = vpop.f32.mrf.mxu0
        %v10133 = vadd.f32 %v9443, %v10132
        %v10134 = vpop.f32.mrf.mxu0
        %v10135 = vpop.f32.mrf.mxu0
        %10136 = vdwg.mxu0
        %10137 = vmatprep.subr.bf16.mxu0 %v9933
        %10138 = vmatpush1.bf16.msra.mxu0 %v9932
        %10139 = vmatprep.subr.bf16.mxu0 %v9929
        %10140 = vmatpush1.bf16.msra.mxu0 %v9928
        %10141 = vmatprep.subr.bf16.mxu0 %v9925
        %10142 = vmatpush1.bf16.msra.mxu0 %v9924
        %10143 = vmatprep.subr.bf16.mxu0 %v9921
        %10144 = vmatpush1.bf16.msra.mxu0 %v9920
        %10145 = vmatprep.subr.bf16.mxu0 %v9917
        %10146 = vmatpush1.bf16.msra.mxu0 %v9916
        %10147 = vmatprep.subr.bf16.mxu0 %v9913
        %10148 = vmatpush1.bf16.msra.mxu0 %v9912
        %10149 = vmatprep.subr.bf16.mxu0 %v9909
        %10150 = vmatpush1.bf16.msra.mxu0 %v9908
        %10151 = vmatprep.subr.bf16.mxu0 %v9905
        %10152 = vmatpush1.bf16.msra.mxu0 %v9904
        %10153 = vmatprep.subr.bf16.mxu0 %v9965
        %10154 = vmatpush2.bf16.msra.mxu0 %v9964
        %10155 = vmatprep.subr.bf16.mxu0 %v9961
        %10156 = vmatpush2.bf16.msra.mxu0 %v9960
        %10157 = vmatprep.subr.bf16.mxu0 %v9957
        %10158 = vmatpush2.bf16.msra.mxu0 %v9956
        %10159 = vmatprep.subr.bf16.mxu0 %v9953
        %10160 = vmatpush2.bf16.msra.mxu0 %v9952
        %10161 = vmatprep.subr.bf16.mxu0 %v9949
        %10162 = vmatpush2.bf16.msra.mxu0 %v9948
        %10163 = vmatprep.subr.bf16.mxu0 %v9945
        %10164 = vmatpush2.bf16.msra.mxu0 %v9944
        %10165 = vmatprep.subr.bf16.mxu0 %v9941
        %10166 = vmatpush2.bf16.msra.mxu0 %v9940
        %10167 = vmatprep.subr.bf16.mxu0 %v9937
        %10168 = vmatpush2.bf16.msra.mxu0 %v9936
        %10169 = vmatprep.mubr.bf16.mxu0 %v9303
        %10170 = vmatmul.mubr.bf16.gmra.mxu0 %v9302
        %v10171 = vpop.f32.mrf.mxu0
        %v10172 = vadd.f32 %v10131, %v10171
        %v10173 = vpop.f32.mrf.mxu0
        %v10174 = vadd.f32 %v10133, %v10173
        %v10175 = vpop.f32.mrf.mxu0
        %v10176 = vpop.f32.mrf.mxu0
        %10177 = vdwg.mxu0
        %10178 = vmatprep.subr.bf16.mxu0 %v9871
        %10179 = vmatpush1.bf16.msra.mxu0 %v9870
        %10180 = vmatprep.subr.bf16.mxu0 %v9867
        %10181 = vmatpush1.bf16.msra.mxu0 %v9866
        %10182 = vmatprep.subr.bf16.mxu0 %v9863
        %10183 = vmatpush1.bf16.msra.mxu0 %v9862
        %10184 = vmatprep.subr.bf16.mxu0 %v9859
        %10185 = vmatpush1.bf16.msra.mxu0 %v9858
        %10186 = vmatprep.subr.bf16.mxu0 %v9855
        %10187 = vmatpush1.bf16.msra.mxu0 %v9854
        %10188 = vmatprep.subr.bf16.mxu0 %v9851
        %10189 = vmatpush1.bf16.msra.mxu0 %v9850
        %10190 = vmatprep.subr.bf16.mxu0 %v9847
        %10191 = vmatpush1.bf16.msra.mxu0 %v9846
        %10192 = vmatprep.subr.bf16.mxu0 %v9843
        %10193 = vmatpush1.bf16.msra.mxu0 %v9842
        %10194 = vmatprep.subr.bf16.mxu0 %v9903
        %10195 = vmatpush2.bf16.msra.mxu0 %v9902
        %10196 = vmatprep.subr.bf16.mxu0 %v9899
        %10197 = vmatpush2.bf16.msra.mxu0 %v9898
        %10198 = vmatprep.subr.bf16.mxu0 %v9895
        %10199 = vmatpush2.bf16.msra.mxu0 %v9894
        %10200 = vmatprep.subr.bf16.mxu0 %v9891
        %10201 = vmatpush2.bf16.msra.mxu0 %v9890
        %10202 = vmatprep.subr.bf16.mxu0 %v9887
        %10203 = vmatpush2.bf16.msra.mxu0 %v9886
        %10204 = vmatprep.subr.bf16.mxu0 %v9883
        %10205 = vmatpush2.bf16.msra.mxu0 %v9882
        %10206 = vmatprep.subr.bf16.mxu0 %v9879
        %10207 = vmatpush2.bf16.msra.mxu0 %v9878
        %10208 = vmatprep.subr.bf16.mxu0 %v9875
        %10209 = vmatpush2.bf16.msra.mxu0 %v9874
        %10210 = vmatprep.mubr.bf16.mxu0 %v9301
        %10211 = vmatmul.mubr.bf16.gmra.mxu0 %v9300
        %v10212 = vpop.f32.mrf.mxu0
        %v10213 = vadd.f32 %v9447, %v10212
        %v10214 = vpop.f32.mrf.mxu0
        %v10215 = vadd.f32 %v9451, %v10214
        %v10216 = vpop.f32.mrf.mxu0
        %v10217 = vpop.f32.mrf.mxu0
        %10218 = vdwg.mxu0
        %10219 = vmatprep.subr.bf16.mxu0 %v9935
        %10220 = vmatpush1.bf16.msra.mxu0 %v9934
        %10221 = vmatprep.subr.bf16.mxu0 %v9931
        %10222 = vmatpush1.bf16.msra.mxu0 %v9930
        %10223 = vmatprep.subr.bf16.mxu0 %v9927
        %10224 = vmatpush1.bf16.msra.mxu0 %v9926
        %10225 = vmatprep.subr.bf16.mxu0 %v9923
        %10226 = vmatpush1.bf16.msra.mxu0 %v9922
        %10227 = vmatprep.subr.bf16.mxu0 %v9919
        %10228 = vmatpush1.bf16.msra.mxu0 %v9918
        %10229 = vmatprep.subr.bf16.mxu0 %v9915
        %10230 = vmatpush1.bf16.msra.mxu0 %v9914
        %10231 = vmatprep.subr.bf16.mxu0 %v9911
        %10232 = vmatpush1.bf16.msra.mxu0 %v9910
        %10233 = vmatprep.subr.bf16.mxu0 %v9907
        %10234 = vmatpush1.bf16.msra.mxu0 %v9906
        %10235 = vmatprep.subr.bf16.mxu0 %v9967
        %10236 = vmatpush2.bf16.msra.mxu0 %v9966
        %10237 = vmatprep.subr.bf16.mxu0 %v9963
        %10238 = vmatpush2.bf16.msra.mxu0 %v9962
        %10239 = vmatprep.subr.bf16.mxu0 %v9959
        %10240 = vmatpush2.bf16.msra.mxu0 %v9958
        %10241 = vmatprep.subr.bf16.mxu0 %v9955
        %10242 = vmatpush2.bf16.msra.mxu0 %v9954
        %10243 = vmatprep.subr.bf16.mxu0 %v9951
        %10244 = vmatpush2.bf16.msra.mxu0 %v9950
        %10245 = vmatprep.subr.bf16.mxu0 %v9947
        %10246 = vmatpush2.bf16.msra.mxu0 %v9946
        %10247 = vmatprep.subr.bf16.mxu0 %v9943
        %10248 = vmatpush2.bf16.msra.mxu0 %v9942
        %10249 = vmatprep.subr.bf16.mxu0 %v9939
        %10250 = vmatpush2.bf16.msra.mxu0 %v9938
        %10251 = vmatprep.mubr.bf16.mxu0 %v9303
        %10252 = vmatmul.mubr.bf16.gmra.mxu0 %v9302
        %v10253 = vpop.f32.mrf.mxu0
        %v10254 = vadd.f32 %v10213, %v10253
        %v10255 = vpop.f32.mrf.mxu0
        %v10256 = vadd.f32 %v10215, %v10255
        %v10257 = vpop.f32.mrf.mxu0
        %v10258 = vpop.f32.mrf.mxu0
        %10259 = vdwg.mxu0
        %v10260 = vtanh.pop %v10172
        %v10261 = vtanh.pop %v10174
        %v10262 = vtanh.pop %v10254
        %v10263 = vtanh.pop %v10256
        %10264 = vst [vmem:[#allocation2] sm:$0xff] %v10260
        %10265 = vst [vmem:[#allocation2 + $0x8] sm:$0xff] %v10261
        %10266 = vst [vmem:[#allocation2 + $0x10] sm:$0xff] %v10262
        %10267 = vst [vmem:[#allocation2 + $0x18] sm:$0xff] %v10263
        %p10268 = scmp.eq.s32.totalorder %s26, 1
        // Predicated region
        $region89: #{tpu_custom_call.1} parent=55 // pred_check
          %p10269 = pneg %p10268
        $region90: #{tpu_custom_call.1} parent=55 // pred_check_branch
          %10271 = sbr.rel (%p10269) target = $region92
        $region91: #{tpu_custom_call.1} parent=55 // pred_region
          %v10272 = vld [vmem:[#allocation2] sm:$0xff]
          %v10273 = vld [vmem:[#allocation2 + $0x8] sm:$0xff]
          %v10274 = vld [vmem:[#allocation2 + $0x10] sm:$0xff]
          %v10275 = vld [vmem:[#allocation2 + $0x18] sm:$0xff]
          %v10276 = vadd.f32 %v10272, %v10273
          %v10277 = vadd.f32 %v10276, %v10274
          %v10278 = vadd.f32 %v10277, %v10275
          %10279 = vadd.xlane.f32.xlu0 %v10278
          %v10280 = vpop.xlane.xlu0 %10279
          %v10281 = vrcp.pop 512.0
          %v10282 = vmul.f32 %v10280, %v10281
          %v10283 = vsub.f32 %v10272, %v10282
          %v10284 = vsub.f32 %v10273, %v10282
          %v10285 = vsub.f32 %v10274, %v10282
          %v10286 = vsub.f32 %v10275, %v10282
          %v10287 = vmul.f32 %v10283, %v10283
          %v10288 = vmul.f32 %v10284, %v10284
          %v10289 = vmul.f32 %v10285, %v10285
          %v10290 = vmul.f32 %v10286, %v10286
          %v10291 = vadd.f32 %v10287, %v10288
          %v10292 = vadd.f32 %v10291, %v10289
          %v10293 = vadd.f32 %v10292, %v10290
          %10294 = vadd.xlane.f32.xlu0 %v10293
          %v10295 = vpop.xlane.xlu0 %10294
          %v10296 = vmul.f32 %v10295, %v10281
          %v10297 = vadd.f32 %v10296, 1e-05
          %v10298 = vrsqrt.pop %v10297
          %v10299 = vmul.f32 %v10283, %v10298
          %v10300 = vmul.f32 %v10284, %v10298
          %v10301 = vmul.f32 %v10285, %v10298
          %v10302 = vmul.f32 %v10286, %v10298
          %v10303 = vld [vmem:[#allocation10] sm:$0xf]
          %v10305 = vlaneseq
          %v10306 = vshrl.u32 %v10305, 7
          %v10307 = vsub.s32 0, %v10306
          %v10308 = vrot.slane %v10303, %v10307
          %v10309 = vlaneseq
          %v10310 = vshrl.u32 %v10309, 7
          %v10311 = vsub.s32 1, %v10310
          %v10312 = vrot.slane %v10303, %v10311
          %v10313 = vlaneseq
          %v10314 = vshrl.u32 %v10313, 7
          %v10315 = vsub.s32 2, %v10314
          %v10316 = vrot.slane %v10303, %v10315
          %v10317 = vlaneseq
          %v10318 = vshrl.u32 %v10317, 7
          %v10319 = vsub.s32 3, %v10318
          %v10320 = vrot.slane %v10303, %v10319
          %v10325 = vmul.f32 %v10299, %v10308
          %v10326 = vmul.f32 %v10300, %v10312
          %v10327 = vmul.f32 %v10301, %v10316
          %v10328 = vmul.f32 %v10302, %v10320
          %v10329 = vld [vmem:[#allocation11] sm:$0xf]
          %v10331 = vlaneseq
          %v10332 = vshrl.u32 %v10331, 7
          %v10333 = vsub.s32 0, %v10332
          %v10334 = vrot.slane %v10329, %v10333
          %v10335 = vlaneseq
          %v10336 = vshrl.u32 %v10335, 7
          %v10337 = vsub.s32 1, %v10336
          %v10338 = vrot.slane %v10329, %v10337
          %v10339 = vlaneseq
          %v10340 = vshrl.u32 %v10339, 7
          %v10341 = vsub.s32 2, %v10340
          %v10342 = vrot.slane %v10329, %v10341
          %v10343 = vlaneseq
          %v10344 = vshrl.u32 %v10343, 7
          %v10345 = vsub.s32 3, %v10344
          %v10346 = vrot.slane %v10329, %v10345
          %v10351 = vadd.f32 %v10325, %v10334
          %v10352 = vadd.f32 %v10326, %v10338
          %v10353 = vadd.f32 %v10327, %v10342
          %v10354 = vadd.f32 %v10328, %v10346
          %v10355 = vld [vmem:[%s7] sm:$0xff]
          %v10356 = vld [vmem:[%s7 + $0x8] sm:$0xff]
          %v10357 = vld [vmem:[%s7 + $0x10] sm:$0xff]
          %v10358 = vld [vmem:[%s7 + $0x18] sm:$0xff]
          %v10359 = vld [vmem:[%s7 + $0x20] sm:$0xff]
          %v10360 = vld [vmem:[%s7 + $0x28] sm:$0xff]
          %v10361 = vld [vmem:[%s7 + $0x30] sm:$0xff]
          %v10362 = vld [vmem:[%s7 + $0x38] sm:$0xff]
          %v10363 = vld [vmem:[%s7 + $0x40] sm:$0xff]
          %v10364 = vld [vmem:[%s7 + $0x48] sm:$0xff]
          %v10365 = vld [vmem:[%s7 + $0x50] sm:$0xff]
          %v10366 = vld [vmem:[%s7 + $0x58] sm:$0xff]
          %v10367 = vld [vmem:[%s7 + $0x60] sm:$0xff]
          %v10368 = vld [vmem:[%s7 + $0x68] sm:$0xff]
          %v10369 = vld [vmem:[%s7 + $0x70] sm:$0xff]
          %v10370 = vld [vmem:[%s7 + $0x78] sm:$0xff]
          %v10371 = vld [vmem:[%s7 + $0x80] sm:$0xff]
          %v10372 = vld [vmem:[%s7 + $0x88] sm:$0xff]
          %v10373 = vld [vmem:[%s7 + $0x90] sm:$0xff]
          %v10374 = vld [vmem:[%s7 + $0x98] sm:$0xff]
          %v10375 = vld [vmem:[%s7 + $0xa0] sm:$0xff]
          %v10376 = vld [vmem:[%s7 + $0xa8] sm:$0xff]
          %v10377 = vld [vmem:[%s7 + $0xb0] sm:$0xff]
          %v10378 = vld [vmem:[%s7 + $0xb8] sm:$0xff]
          %v10379 = vld [vmem:[%s7 + $0xc0] sm:$0xff]
          %v10380 = vld [vmem:[%s7 + $0xc8] sm:$0xff]
          %v10381 = vld [vmem:[%s7 + $0xd0] sm:$0xff]
          %v10382 = vld [vmem:[%s7 + $0xd8] sm:$0xff]
          %v10383 = vld [vmem:[%s7 + $0xe0] sm:$0xff]
          %v10384 = vld [vmem:[%s7 + $0xe8] sm:$0xff]
          %v10385 = vld [vmem:[%s7 + $0xf0] sm:$0xff]
          %v10386 = vld [vmem:[%s7 + $0xf8] sm:$0xff]
          %v10387 = vld [vmem:[%s7 + $0x100] sm:$0xff]
          %v10388 = vld [vmem:[%s7 + $0x108] sm:$0xff]
          %v10389 = vld [vmem:[%s7 + $0x110] sm:$0xff]
          %v10390 = vld [vmem:[%s7 + $0x118] sm:$0xff]
          %v10391 = vld [vmem:[%s7 + $0x120] sm:$0xff]
          %v10392 = vld [vmem:[%s7 + $0x128] sm:$0xff]
          %v10393 = vld [vmem:[%s7 + $0x130] sm:$0xff]
          %v10394 = vld [vmem:[%s7 + $0x138] sm:$0xff]
          %v10395 = vld [vmem:[%s7 + $0x140] sm:$0xff]
          %v10396 = vld [vmem:[%s7 + $0x148] sm:$0xff]
          %v10397 = vld [vmem:[%s7 + $0x150] sm:$0xff]
          %v10398 = vld [vmem:[%s7 + $0x158] sm:$0xff]
          %v10399 = vld [vmem:[%s7 + $0x160] sm:$0xff]
          %v10400 = vld [vmem:[%s7 + $0x168] sm:$0xff]
          %v10401 = vld [vmem:[%s7 + $0x170] sm:$0xff]
          %v10402 = vld [vmem:[%s7 + $0x178] sm:$0xff]
          %v10403 = vld [vmem:[%s7 + $0x180] sm:$0xff]
          %v10404 = vld [vmem:[%s7 + $0x188] sm:$0xff]
          %v10405 = vld [vmem:[%s7 + $0x190] sm:$0xff]
          %v10406 = vld [vmem:[%s7 + $0x198] sm:$0xff]
          %v10407 = vld [vmem:[%s7 + $0x1a0] sm:$0xff]
          %v10408 = vld [vmem:[%s7 + $0x1a8] sm:$0xff]
          %v10409 = vld [vmem:[%s7 + $0x1b0] sm:$0xff]
          %v10410 = vld [vmem:[%s7 + $0x1b8] sm:$0xff]
          %v10411 = vld [vmem:[%s7 + $0x1c0] sm:$0xff]
          %v10412 = vld [vmem:[%s7 + $0x1c8] sm:$0xff]
          %v10413 = vld [vmem:[%s7 + $0x1d0] sm:$0xff]
          %v10414 = vld [vmem:[%s7 + $0x1d8] sm:$0xff]
          %v10415 = vld [vmem:[%s7 + $0x1e0] sm:$0xff]
          %v10416 = vld [vmem:[%s7 + $0x1e8] sm:$0xff]
          %v10417 = vld [vmem:[%s7 + $0x1f0] sm:$0xff]
          %v10418 = vld [vmem:[%s7 + $0x1f8] sm:$0xff]
          %v10419 = vld [vmem:[#allocation13] sm:$0x1]
          %v10421 = vlaneseq
          %v10422 = vshrl.u32 %v10421, 7
          %v10423 = vsub.s32 0, %v10422
          %v10424 = vrot.slane %v10419, %v10423
          %10426 = vmatprep.subr.mxu0 0.0
          %10427 = vmatpush1.msra.mxu0 %v10370
          %10428 = vmatprep.subr.mxu0 0.0
          %10429 = vmatpush1.msra.mxu0 %v10369
          %10430 = vmatprep.subr.mxu0 0.0
          %10431 = vmatpush1.msra.mxu0 %v10368
          %10432 = vmatprep.subr.mxu0 0.0
          %10433 = vmatpush1.msra.mxu0 %v10367
          %10434 = vmatprep.subr.mxu0 0.0
          %10435 = vmatpush1.msra.mxu0 %v10366
          %10436 = vmatprep.subr.mxu0 0.0
          %10437 = vmatpush1.msra.mxu0 %v10365
          %10438 = vmatprep.subr.mxu0 0.0
          %10439 = vmatpush1.msra.mxu0 %v10364
          %10440 = vmatprep.subr.mxu0 0.0
          %10441 = vmatpush1.msra.mxu0 %v10363
          %10442 = vmatprep.subr.mxu0 0.0
          %10443 = vmatpush1.msra.mxu0 %v10362
          %10444 = vmatprep.subr.mxu0 0.0
          %10445 = vmatpush1.msra.mxu0 %v10361
          %10446 = vmatprep.subr.mxu0 0.0
          %10447 = vmatpush1.msra.mxu0 %v10360
          %10448 = vmatprep.subr.mxu0 0.0
          %10449 = vmatpush1.msra.mxu0 %v10359
          %10450 = vmatprep.subr.mxu0 0.0
          %10451 = vmatpush1.msra.mxu0 %v10358
          %10452 = vmatprep.subr.mxu0 0.0
          %10453 = vmatpush1.msra.mxu0 %v10357
          %10454 = vmatprep.subr.mxu0 0.0
          %10455 = vmatpush1.msra.mxu0 %v10356
          %10456 = vmatprep.subr.mxu0 0.0
          %10457 = vmatpush1.msra.mxu0 %v10355
          %10458 = vmatprep.subr.mxu0 0.0
          %10459 = vmatpush2.msra.mxu0 %v10386
          %10460 = vmatprep.subr.mxu0 0.0
          %10461 = vmatpush2.msra.mxu0 %v10385
          %10462 = vmatprep.subr.mxu0 0.0
          %10463 = vmatpush2.msra.mxu0 %v10384
          %10464 = vmatprep.subr.mxu0 0.0
          %10465 = vmatpush2.msra.mxu0 %v10383
          %10466 = vmatprep.subr.mxu0 0.0
          %10467 = vmatpush2.msra.mxu0 %v10382
          %10468 = vmatprep.subr.mxu0 0.0
          %10469 = vmatpush2.msra.mxu0 %v10381
          %10470 = vmatprep.subr.mxu0 0.0
          %10471 = vmatpush2.msra.mxu0 %v10380
          %10472 = vmatprep.subr.mxu0 0.0
          %10473 = vmatpush2.msra.mxu0 %v10379
          %10474 = vmatprep.subr.mxu0 0.0
          %10475 = vmatpush2.msra.mxu0 %v10378
          %10476 = vmatprep.subr.mxu0 0.0
          %10477 = vmatpush2.msra.mxu0 %v10377
          %10478 = vmatprep.subr.mxu0 0.0
          %10479 = vmatpush2.msra.mxu0 %v10376
          %10480 = vmatprep.subr.mxu0 0.0
          %10481 = vmatpush2.msra.mxu0 %v10375
          %10482 = vmatprep.subr.mxu0 0.0
          %10483 = vmatpush2.msra.mxu0 %v10374
          %10484 = vmatprep.subr.mxu0 0.0
          %10485 = vmatpush2.msra.mxu0 %v10373
          %10486 = vmatprep.subr.mxu0 0.0
          %10487 = vmatpush2.msra.mxu0 %v10372
          %10488 = vmatprep.subr.mxu0 0.0
          %10489 = vmatpush2.msra.mxu0 %v10371
          %10490 = vmatprep.mubr.f32.mxu0 %v10352
          %10491 = vmatmul.mubr.f32.gmra.mxu0 %v10351
          %v10492 = vpop.f32.mrf.mxu0
          %v10493 = vadd.f32 %v10424, %v10492
          %v10494 = vpop.f32.mrf.mxu0
          %10495 = vdwg.mxu0
          %10496 = vmatprep.subr.mxu0 0.0
          %10497 = vmatpush1.msra.mxu0 %v10402
          %10498 = vmatprep.subr.mxu0 0.0
          %10499 = vmatpush1.msra.mxu0 %v10401
          %10500 = vmatprep.subr.mxu0 0.0
          %10501 = vmatpush1.msra.mxu0 %v10400
          %10502 = vmatprep.subr.mxu0 0.0
          %10503 = vmatpush1.msra.mxu0 %v10399
          %10504 = vmatprep.subr.mxu0 0.0
          %10505 = vmatpush1.msra.mxu0 %v10398
          %10506 = vmatprep.subr.mxu0 0.0
          %10507 = vmatpush1.msra.mxu0 %v10397
          %10508 = vmatprep.subr.mxu0 0.0
          %10509 = vmatpush1.msra.mxu0 %v10396
          %10510 = vmatprep.subr.mxu0 0.0
          %10511 = vmatpush1.msra.mxu0 %v10395
          %10512 = vmatprep.subr.mxu0 0.0
          %10513 = vmatpush1.msra.mxu0 %v10394
          %10514 = vmatprep.subr.mxu0 0.0
          %10515 = vmatpush1.msra.mxu0 %v10393
          %10516 = vmatprep.subr.mxu0 0.0
          %10517 = vmatpush1.msra.mxu0 %v10392
          %10518 = vmatprep.subr.mxu0 0.0
          %10519 = vmatpush1.msra.mxu0 %v10391
          %10520 = vmatprep.subr.mxu0 0.0
          %10521 = vmatpush1.msra.mxu0 %v10390
          %10522 = vmatprep.subr.mxu0 0.0
          %10523 = vmatpush1.msra.mxu0 %v10389
          %10524 = vmatprep.subr.mxu0 0.0
          %10525 = vmatpush1.msra.mxu0 %v10388
          %10526 = vmatprep.subr.mxu0 0.0
          %10527 = vmatpush1.msra.mxu0 %v10387
          %10528 = vmatprep.subr.mxu0 0.0
          %10529 = vmatpush2.msra.mxu0 %v10418
          %10530 = vmatprep.subr.mxu0 0.0
          %10531 = vmatpush2.msra.mxu0 %v10417
          %10532 = vmatprep.subr.mxu0 0.0
          %10533 = vmatpush2.msra.mxu0 %v10416
          %10534 = vmatprep.subr.mxu0 0.0
          %10535 = vmatpush2.msra.mxu0 %v10415
          %10536 = vmatprep.subr.mxu0 0.0
          %10537 = vmatpush2.msra.mxu0 %v10414
          %10538 = vmatprep.subr.mxu0 0.0
          %10539 = vmatpush2.msra.mxu0 %v10413
          %10540 = vmatprep.subr.mxu0 0.0
          %10541 = vmatpush2.msra.mxu0 %v10412
          %10542 = vmatprep.subr.mxu0 0.0
          %10543 = vmatpush2.msra.mxu0 %v10411
          %10544 = vmatprep.subr.mxu0 0.0
          %10545 = vmatpush2.msra.mxu0 %v10410
          %10546 = vmatprep.subr.mxu0 0.0
          %10547 = vmatpush2.msra.mxu0 %v10409
          %10548 = vmatprep.subr.mxu0 0.0
          %10549 = vmatpush2.msra.mxu0 %v10408
          %10550 = vmatprep.subr.mxu0 0.0
          %10551 = vmatpush2.msra.mxu0 %v10407
          %10552 = vmatprep.subr.mxu0 0.0
          %10553 = vmatpush2.msra.mxu0 %v10406
          %10554 = vmatprep.subr.mxu0 0.0
          %10555 = vmatpush2.msra.mxu0 %v10405
          %10556 = vmatprep.subr.mxu0 0.0
          %10557 = vmatpush2.msra.mxu0 %v10404
          %10558 = vmatprep.subr.mxu0 0.0
          %10559 = vmatpush2.msra.mxu0 %v10403
          %10560 = vmatprep.mubr.f32.mxu0 %v10354
          %10561 = vmatmul.mubr.f32.gmra.mxu0 %v10353
          %v10562 = vpop.f32.mrf.mxu0
          %v10563 = vadd.f32 %v10493, %v10562
          %v10564 = vpop.f32.mrf.mxu0
          %10565 = vdwg.mxu0
          %vm10566 = vcmask 31744
          %10567 = vst.msk [vmem:[%s9] sm:$0xff] %vm10566, %v10563
        $region92: #{tpu_custom_call.1} parent=55 // pred_fallthru
          _
        // Predicated region
        $region93: #{tpu_custom_call.1} parent=55 // pred_check
          %p10568 = pneg %p238
        $region94: #{tpu_custom_call.1} parent=55 // pred_check_branch
          %10570 = sbr.rel (%p10568) target = $region96
        $region95: #{tpu_custom_call.1} parent=55 // pred_region
          _
        $region96: #{tpu_custom_call.1} parent=55 // pred_fallthru
          _
        // Predicated region
        $region97: #{tpu_custom_call.1} parent=55 // pred_check
          %p10571 = pneg %p238
        $region98: #{tpu_custom_call.1} parent=55 // pred_check_branch
          %10573 = sbr.rel (%p10571) target = $region100
        $region99: #{tpu_custom_call.1} parent=55 // pred_region
          _
        $region100: #{tpu_custom_call.1} parent=55 // pred_fallthru
          _
      $region56: #{tpu_custom_call.1} parent=5 // pred_fallthru
        _
      %p10574 = scmp.le.s32.totalorder 2, %s21
      // Predicated region
      $region101: #{tpu_custom_call.1} parent=5 // pred_check
        %p10575 = pneg %p10574
      $region102: #{tpu_custom_call.1} parent=5 // pred_check_branch
        %10577 = sbr.rel (%p10575) target = $region104
      $region103: #{tpu_custom_call.1} parent=5 // pred_region
        %s10578 = ssub.s32 %s21, 2
      $region104: #{tpu_custom_call.1} parent=5 // pred_fallthru
        _
    $region6: #{tpu_custom_call.1} parent=1 // loop_footer
      %s25 = sadd.s32 1, %s21
    $region7: #{tpu_custom_call.1} parent=1 // loop_footer_branch
      %20 = sbr.rel target = $region3
    $region8: #{tpu_custom_call.1} parent=1 // loop_exit
      _
    %10579 = vsyncpa [#allocation4], 1
    %s10580 = scalar_lea.sflag [#allocation4], 1
    %10581 = vsyncpa %s10580, 1
    %10582 = vsyncpa [#allocation6], 1
    %10583 = vsyncpa [#allocation9], 1
    %s10584 = scalar_lea.sflag [#allocation9], 1
    %10585 = vsyncpa %s10584, 1
    %10586 = vsyncpa [#allocation12], 1

</llo_original>
